<compile_context>
chip_gen: v7x
topology: tpu7x:2x2x1
jax: 0.10.0
libtpu: 0.0.40
codegen_flags: <defaults>
</compile_context>

<pallas_src>
import functools

import numpy as np
import jax
import jax.numpy as jnp
from jax.experimental import pallas as pl
from jax.experimental.pallas import tpu as pltpu

F32 = jnp.float32
BF16 = jnp.bfloat16


# ---------------------------------------------------------------------------
# kernel-body helpers (operate on VMEM values)
# ---------------------------------------------------------------------------
def _leaky(v):
    return jnp.where(v > 0, v, 0.01 * v)            # nn.LeakyReLU default slope


def _bn_cols(x, gamma, beta, eps=1e-5):
    """Training-mode BatchNorm over the rows of a (rows, C) channels-last slab
    (rows == N*H*W), centered two-pass variance like torch.nn.BatchNorm2d."""
    rows = x.shape[0]
    mean = jnp.sum(x, axis=0, keepdims=True) / rows
    xc = x - mean
    var = jnp.sum(xc * xc, axis=0, keepdims=True) / rows
    return xc * jax.lax.rsqrt(var + eps) * gamma + beta


# ---------------------------------------------------------------------------
# transposed GEMM kernel:  Y^T = act(W @ patches^T + bias)
# ---------------------------------------------------------------------------
def _make_gemm_t_kernel(act):
    def kernel(a_ref, b_ref, bias_ref, o_ref):
        y = jnp.dot(a_ref[...], b_ref[...], preferred_element_type=F32)
        y = y + bias_ref[...]
        if act == "leaky_relu":
            y = _leaky(y)
        elif act == "sigmoid":
            y = jax.nn.sigmoid(y)
        o_ref[...] = y.astype(o_ref.dtype)
    return kernel


def _gemm_t(a, b, bias_col, act, out_dtype, row_split=2):
    """A:(M,K) rows = output channels (bf16), B:(K,N) patches^T (bf16, N%128==0),
    bias:(M,1) f32.  Output (M,N) is lane-dense on the long location dimension.
    The M rows are sharded over a row_split-wide parallel grid (both TCs on v7x;
    ~one extra 0.35us grid step on v5e/v6e).  The B block index is constant so it
    is DMA'd only once."""
    M, K = a.shape
    N = b.shape[1]
    assert M % row_split == 0 and (M // row_split) % 8 == 0 and N % 128 == 0
    bm = M // row_split
    return pl.pallas_call(
        _make_gemm_t_kernel(act),
        out_shape=jax.ShapeDtypeStruct((M, N), out_dtype),
        grid=(row_split,),
        in_specs=[pl.BlockSpec((bm, K), lambda i: (i, 0)),
                  pl.BlockSpec((K, N), lambda i: (0, 0)),
                  pl.BlockSpec((bm, 1), lambda i: (i, 0))],
        out_specs=pl.BlockSpec((bm, N), lambda i: (i, 0)),
        compiler_params=pltpu.CompilerParams(
            dimension_semantics=("parallel",)),
    )(a, b, bias_col)


# ---------------------------------------------------------------------------
# dt2 (single-block, lane-dense N=256) GEMM kernel
# ---------------------------------------------------------------------------
def _dt2_kernel(p_ref, w_ref, b_ref, o_ref):
    y = jnp.dot(p_ref[...], w_ref[...], preferred_element_type=F32) + b_ref[...]
    o_ref[...] = _leaky(y).astype(o_ref.dtype)


def _dt2_gemm(patches, wall, bias_row):
    M, K = patches.shape
    N = wall.shape[1]
    return pl.pallas_call(
        _dt2_kernel,
        out_shape=jax.ShapeDtypeStruct((M, N), BF16),
        grid=(1,),
        in_specs=[pl.BlockSpec((M, K), lambda i: (0, 0)),
                  pl.BlockSpec((K, N), lambda i: (0, 0)),
                  pl.BlockSpec((1, N), lambda i: (0, 0))],
        out_specs=pl.BlockSpec((M, N), lambda i: (0, 0)),
    )(patches, wall, bias_row)


# ---------------------------------------------------------------------------
# fused middle kernel: ec2+ebn2, ec3+ebn3, encoder MLP, reparameterize,
# decoder MLP, dbn0, dt1+LeakyReLU, dbn1 — everything VMEM resident.
# ---------------------------------------------------------------------------
def _middle_kernel(p2, w2t, b2, g2, be2,
                   w3r, mask, sel, pool, b3, g3, be3,
                   wf1, bf1, wf2, bf2, wf3, bf3, eps,
                   wd1, bd1, wd2, bd2, wd3, bd3, g0, be0,
                   wt1, bt1, poolc, bcastc, g1r, be1r,
                   q_ref, d1_ref):
    def bdot(a, w_ref):
        return jnp.dot(a.astype(BF16), w_ref[...], preferred_element_type=F32)

    def fdot(a, b):
        return jnp.dot(a, b, preferred_element_type=F32)

    # ---- ec2 conv (as GEMM) -> BatchNorm2d(32) -> LeakyReLU ------------------
    y2 = jnp.dot(p2[...], w2t[...], preferred_element_type=F32) + b2[...]
    y2 = _leaky(_bn_cols(y2, g2[...], be2[...]))            # (B*16, 32)
    # ---- ec3 conv: contract over (channel, position) with a constant block-
    # diagonal mask (no in-kernel reshapes) -> BatchNorm2d(64) -> LeakyReLU ----
    u = bdot(y2, w3r) * mask[...]                           # (B*16, 64*16)
    h = fdot(fdot(sel[...], u), pool[...]) + b3[...]        # (B, 64)
    h = _leaky(_bn_cols(h, g3[...], be3[...]))
    # ---- encoder MLP ---------------------------------------------------------
    h = jnp.maximum(bdot(h, wf1) + bf1[...], 0.0)
    h = jnp.maximum(bdot(h, wf2) + bf2[...], 0.0)
    q = bdot(h, wf3) + bf3[...]                             # (B, 2*nz)
    q_ref[...] = q
    # ---- reparameterize ------------------------------------------------------
    nz = eps.shape[1]
    z = q[:, :nz] + jnp.exp(q[:, nz:]) * eps[...]
    # ---- decoder MLP ---------------------------------------------------------
    d = jnp.maximum(bdot(z, wd1) + bd1[...], 0.0)
    d = jnp.maximum(bdot(d, wd2) + bd2[...], 0.0)
    d = bdot(d, wd3) + bd3[...]                             # (B, 64)
    d = _bn_cols(d, g0[...], be0[...])                      # dbn0 (1x1 spatial)
    # ---- dt1: ConvTranspose2d(64,32,4,2) on a 1x1 input == one GEMM whose
    # columns are the packed (cout, oh, ow) 4x4x32 map ----
    y1 = _leaky(bdot(d, wt1) + bt1[...])                    # (B, 512)
    # ---- dbn1: BatchNorm2d(32) over (n, oh, ow) via constant pooling matrices
    cnt = y1.shape[0] * 16.0
    pooled = fdot(y1, poolc[...])                           # (B, 32)
    mean_c = jnp.sum(pooled, axis=0, keepdims=True) / cnt
    yc = y1 - fdot(mean_c, bcastc[...])
    var_c = jnp.sum(fdot(yc * yc, poolc[...]), axis=0, keepdims=True) / cnt
    inv = fdot(jax.lax.rsqrt(var_c + 1e-5), bcastc[...])
    d1_ref[...] = (yc * inv * g1r[...] + be1r[...]).astype(d1_ref.dtype)


def _fused_middle(patches2, eps_noise, p):
    B, nz = eps_noise.shape
    R = B * 16
    # compile-time constant structural matrices (built with numpy)
    mask = (np.arange(R)[:, None] % 16 == np.arange(1024)[None, :] % 16
            ).astype(np.float32)                               # (R, 1024)
    sel = (np.arange(R)[None, :] // 16 == np.arange(B)[:, None]
           ).astype(np.float32)                                # (B, R)
    pool = np.kron(np.eye(64, dtype=np.float32), np.ones((16, 1), np.float32))
    poolc = np.kron(np.eye(32, dtype=np.float32), np.ones((16, 1), np.float32))
    bcastc = np.ascontiguousarray(poolc.T)

    def row(v):
        return jnp.asarray(v).astype(F32).reshape(1, -1)

    # ec2 weight reordered to the (a, b2, c1, rh, rw) patch feature order
    w2t = (p["ec2_w"].reshape(32, 16, 2, 4, 2, 4).transpose(0, 2, 4, 1, 3, 5)
           .reshape(32, 1024).T.astype(BF16))                  # (1024, 32)
    # ec3 weight as W3r[c2, o*16 + pos] = ec3_w[o, c2, pos]
    w3r = (p["ec3_w"].reshape(64, 32, 16).transpose(1, 0, 2)
           .reshape(32, 1024).astype(BF16))
    # dt1 weight: columns packed (cout, oh, ow)
    wt1 = p["dt1_w"].reshape(64, 512).astype(BF16)

    operands = (
        patches2.astype(BF16),
        w2t, row(p["ec2_b"]), row(p["ebn2_g"]), row(p["ebn2_b"]),
        w3r, jnp.asarray(mask), jnp.asarray(sel), jnp.asarray(pool),
        row(p["ec3_b"]), row(p["ebn3_g"]), row(p["ebn3_b"]),
        p["ef1_w"].T.astype(BF16), row(p["ef1_b"]),
        p["ef2_w"].T.astype(BF16), row(p["ef2_b"]),
        p["ef3_w"].T.astype(BF16), row(p["ef3_b"]),
        eps_noise.astype(F32),
        p["df1_w"].T.astype(BF16), row(p["df1_b"]),
        p["df2_w"].T.astype(BF16), row(p["df2_b"]),
        p["df3_w"].T.astype(BF16), row(p["df3_b"]),
        row(p["dbn0_g"]), row(p["dbn0_b"]),
        wt1, row(jnp.repeat(p["dt1_b"], 16)),
        jnp.asarray(poolc), jnp.asarray(bcastc),
        row(jnp.repeat(p["dbn1_g"], 16)), row(jnp.repeat(p["dbn1_b"], 16)),
    )
    in_specs = [pl.BlockSpec(op.shape, lambda i: (0, 0)) for op in operands]
    q, d1 = pl.pallas_call(
        _middle_kernel,
        out_shape=(jax.ShapeDtypeStruct((B, 2 * nz), F32),
                   jax.ShapeDtypeStruct((B, 512), BF16)),
        grid=(1,),
        in_specs=in_specs,
        out_specs=(pl.BlockSpec((B, 2 * nz), lambda i: (0, 0)),
                   pl.BlockSpec((B, 512), lambda i: (0, 0))),
    )(*operands)
    return q, d1


# ---------------------------------------------------------------------------
# XLA glue: space-to-depth im2col (k % s == 0) and sub-pixel weight packing
# ---------------------------------------------------------------------------
def _ec1_patches_T(x):
    """Conv1 (k=16, s=4) patches^T: (768, pad128(B*441)) bf16; feature rows are
    ordered (a, b2, c, rh, rw) with i=4a+rh, j=4b2+rw (the weight is reordered
    to match).  Only 16 window slices are needed thanks to space-to-depth."""
    B = x.shape[0]
    xb = x.astype(BF16).reshape(B, 3, 24, 4, 24, 4)        # (b, c, h4, rh, w4, rw)
    xb = xb.transpose(1, 3, 5, 0, 2, 4)                    # (c, rh, rw, b, h4, w4)
    wins = [xb[:, :, :, :, a:a + 21, b2:b2 + 21]
            for a in range(4) for b2 in range(4)]
    pT = jnp.stack(wins, axis=0).reshape(768, B * 441)     # rows (a, b2, c, rh, rw)
    m = B * 441
    mp = -(-m // 128) * 128
    return jnp.pad(pT, ((0, 0), (0, mp - m))), m


def _ec2_patches(e1):
    """Conv2 (k=8, s=4) patches from the channel-major (16, B, 21, 21) ec1 map:
    (B*16, 1024) with feature order (a, b2, c1, rh, rw)."""
    B = e1.shape[1]
    g = e1[:, :, :20, :20].reshape(16, B, 5, 4, 5, 4)      # (c1, b, gh, rh, gw, rw)
    wins = [g[:, :, a:a + 4, :, b2:b2 + 4, :]
            for a in range(2) for b2 in range(2)]
    s = jnp.stack(wins, axis=0)                            # (ab, c1, b, oh2, rh, ow2, rw)
    s = s.transpose(2, 3, 5, 0, 1, 4, 6)                   # (b, oh2, ow2, ab, c1, rh, rw)
    return s.reshape(B * 16, 1024)


def _dt2_patches(d1):
    """dt2 sub-pixel patches from the dt1 output (B, 512) [cols (cout, oh, ow)]:
    (B*36, 128) with feature order (di, dj, c)."""
    B = d1.shape[0]
    m = d1.reshape(B, 32, 4, 4)
    m = jnp.pad(m, ((0, 0), (0, 0), (1, 2), (1, 2)))       # (B, 32, 7, 7)
    wins = [m[:, :, di:di + 6, dj:dj + 6] for di in range(2) for dj in range(2)]
    s = jnp.stack(wins, axis=0)                            # (didj, b, c, mh, mw)
    s = s.transpose(1, 3, 4, 0, 2)                         # (b, mh, mw, didj, c)
    return s.reshape(B * 36, 128)


def _dt2_to_map(y, B):
    """dt2 GEMM output (B*36, 256) [cols (rh, rw, c)] -> channel-major (16, B, 21, 21)."""
    t = y.reshape(B, 6, 6, 4, 4, 16).transpose(5, 0, 1, 3, 2, 4)   # (c, b, mh, rh, mw, rw)
    return t.reshape(16, B, 24, 24)[:, :, :21, :21]


def _dt3_patches_T(d2):
    """dt3 sub-pixel patches^T: (256, pad128(B*576)); rows (c, uh, uw), cols (b, mh, mw)."""
    B = d2.shape[1]
    m = jnp.pad(d2, ((0, 0), (0, 0), (3, 3), (3, 3)))      # (16, B, 27, 27)
    wins = [m[:, :, i:i + 24, j:j + 24] for i in range(4) for j in range(4)]
    s = jnp.stack(wins, axis=1)                            # (c, ij, b, 24, 24)
    pT = s.reshape(256, B * 576)
    n = B * 576
    npad = -(-n // 128) * 128
    return jnp.pad(pT, ((0, 0), (0, npad - n))), n


def _dt2_wall(w):
    """ConvTranspose2d(32,16,k=8,s=4) sub-pixel weight: (128, 256), rows (uh, uw, cin),
    columns packed (rh, rw, cout)."""
    blocks = []
    for rh in range(4):
        for rw in range(4):
            g = jnp.flip(w[:, :, rh::4, rw::4], axis=(2, 3))   # (cin, cout, 2, 2)
            blocks.append(g.transpose(2, 3, 0, 1).reshape(128, 16))
    return jnp.concatenate(blocks, axis=1)


def _dt3_wall_T(w):
    """ConvTranspose2d(16,3,k=16,s=4) sub-pixel weight, transposed: (48, 256),
    rows packed (rh, rw, cout), columns (cin, uh, uw)."""
    blocks = []
    for rh in range(4):
        for rw in range(4):
            g = jnp.flip(w[:, :, rh::4, rw::4], axis=(2, 3))   # (cin, cout, 4, 4)
            blocks.append(g.transpose(1, 0, 2, 3).reshape(3, 256))
    return jnp.concatenate(blocks, axis=0)


# ---------------------------------------------------------------------------
# Parameters (deterministic, PyTorch-default-style uniform init)
# ---------------------------------------------------------------------------
def _uniform(key, shape, fan_in):
    bound = 1.0 / float(fan_in) ** 0.5
    return jax.random.uniform(key, shape, jnp.float32, -bound, bound)


def init_params(key, hidden_dim=32, latent_dim=8):
    ks = iter(jax.random.split(key, 40))
    p = {}
    # ---- encoder convs ----
    p["ec1_w"] = _uniform(next(ks), (16, 3, 16, 16), 3 * 16 * 16)
    p["ec1_b"] = _uniform(next(ks), (16,), 3 * 16 * 16)
    p["ec2_w"] = _uniform(next(ks), (32, 16, 8, 8), 16 * 8 * 8)
    p["ec2_b"] = _uniform(next(ks), (32,), 16 * 8 * 8)
    p["ebn2_g"], p["ebn2_b"] = jnp.ones((32,)), jnp.zeros((32,))
    p["ec3_w"] = _uniform(next(ks), (64, 32, 4, 4), 32 * 4 * 4)
    p["ec3_b"] = _uniform(next(ks), (64,), 32 * 4 * 4)
    p["ebn3_g"], p["ebn3_b"] = jnp.ones((64,)), jnp.zeros((64,))
    # ---- encoder MLP (intermediate_size = 64) ----
    p["ef1_w"] = _uniform(next(ks), (hidden_dim, 64), 64)
    p["ef1_b"] = _uniform(next(ks), (hidden_dim,), 64)
    p["ef2_w"] = _uniform(next(ks), (hidden_dim, hidden_dim), hidden_dim)
    p["ef2_b"] = _uniform(next(ks), (hidden_dim,), hidden_dim)
    p["ef3_w"] = _uniform(next(ks), (2 * latent_dim, hidden_dim), hidden_dim)
    p["ef3_b"] = _uniform(next(ks), (2 * latent_dim,), hidden_dim)
    # ---- decoder MLP ----
    p["df1_w"] = _uniform(next(ks), (hidden_dim, latent_dim), latent_dim)
    p["df1_b"] = _uniform(next(ks), (hidden_dim,), latent_dim)
    p["df2_w"] = _uniform(next(ks), (hidden_dim, hidden_dim), hidden_dim)
    p["df2_b"] = _uniform(next(ks), (hidden_dim,), hidden_dim)
    p["df3_w"] = _uniform(next(ks), (64, hidden_dim), hidden_dim)
    p["df3_b"] = _uniform(next(ks), (64,), hidden_dim)
    # ---- decoder conv-transposes ----
    p["dbn0_g"], p["dbn0_b"] = jnp.ones((64,)), jnp.zeros((64,))
    p["dt1_w"] = _uniform(next(ks), (64, 32, 4, 4), 64 * 4 * 4)
    p["dt1_b"] = _uniform(next(ks), (32,), 64 * 4 * 4)
    p["dbn1_g"], p["dbn1_b"] = jnp.ones((32,)), jnp.zeros((32,))
    p["dt2_w"] = _uniform(next(ks), (32, 16, 8, 8), 32 * 8 * 8)
    p["dt2_b"] = _uniform(next(ks), (16,), 32 * 8 * 8)
    p["dt3_w"] = _uniform(next(ks), (16, 3, 16, 16), 16 * 16 * 16)
    p["dt3_b"] = _uniform(next(ks), (3,), 16 * 16 * 16)
    return p


# ---------------------------------------------------------------------------
# Forward (== RawImageVAE.forward)
# ---------------------------------------------------------------------------
@functools.partial(jax.jit, static_argnames=("latent_dim",))
def raw_image_vae_forward(params, x, eps_noise, latent_dim=8):
    p = params
    B, C, H, W = x.shape
    assert (C, H, W) == (3, 96, 96), "glue below is specialised to 3x96x96 inputs"
    assert eps_noise.shape == (B, latent_dim)

    # ---- encoder conv1: transposed, lane-dense GEMM over both TCs ------------
    pT1, m1 = _ec1_patches_T(x)
    w1 = (p["ec1_w"].reshape(16, 3, 4, 4, 4, 4).transpose(0, 2, 4, 1, 3, 5)
          .reshape(16, 768).astype(BF16))
    b1 = p["ec1_b"].astype(F32).reshape(16, 1)
    e1 = _gemm_t(w1, pT1, b1, "leaky_relu", F32, row_split=2)      # (16, pad)
    e1 = e1[:, :m1].reshape(16, B, 21, 21)                         # channel-major

    # ---- fused middle section (one kernel) ------------------------------------
    patches2 = _ec2_patches(e1)                                    # (B*16, 1024)
    q, d1 = _fused_middle(patches2, eps_noise, p)                  # (B, 2nz), (B, 512)

    # ---- dt2: ConvTranspose2d(32,16,k8,s4,op=1) as one sub-pixel GEMM ---------
    pat_d2 = _dt2_patches(d1)                                      # (B*36, 128)
    wall2 = _dt2_wall(p["dt2_w"]).astype(BF16)                     # (128, 256)
    bias2 = jnp.tile(p["dt2_b"], 16).reshape(1, 256).astype(F32)
    y2 = _dt2_gemm(pat_d2, wall2, bias2)                           # (B*36, 256)
    d2 = _dt2_to_map(y2, B)                                        # (16, B, 21, 21)

    # ---- dt3: ConvTranspose2d(16,3,k16,s4) transposed, lane-dense GEMM --------
    pT3, m3 = _dt3_patches_T(d2)                                   # (256, pad)
    wall3T = _dt3_wall_T(p["dt3_w"]).astype(BF16)                  # (48, 256)
    bias3 = jnp.tile(p["dt3_b"], 16).reshape(48, 1).astype(F32)
    yT = _gemm_t(wall3T, pT3, bias3, "sigmoid", F32, row_split=2)  # (48, pad)
    rec = yT[:, :m3].reshape(4, 4, 3, B, 24, 24)
    rec = rec.transpose(3, 2, 4, 0, 5, 1).reshape(B, 3, 96, 96)    # NCHW assembly
    return {"q": q, "rec": rec}


if __name__ == "__main__":
    # input_dim = [3, 96, 96]; hidden_dim = 32, latent_dim = 8, batch = 2.
    key = jax.random.PRNGKey(0)
    k_params, k_x, k_eps = jax.random.split(key, 3)
    params = init_params(k_params, hidden_dim=32, latent_dim=8)
    x = jax.random.uniform(k_x, (2, 3, 96, 96), jnp.float32)
    eps_noise = jax.random.normal(k_eps, (2, 8), jnp.float32)

    out = raw_image_vae_forward(params, x, eps_noise, latent_dim=8)
    jax.block_until_ready(out)

    assert out["q"].shape == (2, 16)
    assert out["rec"].shape == (2, 3, 96, 96)
    assert bool(jnp.all(jnp.isfinite(out["q"])))
    assert bool(jnp.all((out["rec"] >= 0.0) & (out["rec"] <= 1.0)))
    print("KERNEL_OK")
</pallas_src>

<mosaic_0001>
module attributes {stable_mosaic.version = 11 : i64} {
  func.func @kernel(%arg0: i32, %arg1: memref<8x768xbf16, #tpu.memory_space<vmem>>, %arg2: memref<768x896xbf16, #tpu.memory_space<vmem>>, %arg3: memref<8x1xf32, #tpu.memory_space<vmem>>, %arg4: memref<8x896xf32, #tpu.memory_space<vmem>>) attributes {dimension_semantics = [#tpu.dimension_semantics<parallel>], iteration_bounds = array<i64: 2>, scalar_prefetch = 0 : i64, scratch_operands = 0 : i64, tpu.core_type = #tpu.core_type<tc>, window_params = [{transform_indices = @transform_0, window_bounds = array<i64: 8, 768>}, {pipeline_mode = #tpu.pipeline_mode<synchronous>, transform_indices = @transform_1, window_bounds = array<i64: 768, 896>}, {transform_indices = @transform_2, window_bounds = array<i64: 8, 1>}, {transform_indices = @transform_3, window_bounds = array<i64: 8, 896>}]} {
    %c0 = arith.constant 0 : index
    %c0_0 = arith.constant 0 : index
    %0 = vector.load %arg1[%c0, %c0_0] : memref<8x768xbf16, #tpu.memory_space<vmem>>, vector<8x768xbf16>
    %c0_1 = arith.constant 0 : index
    %c0_2 = arith.constant 0 : index
    %1 = vector.load %arg2[%c0_1, %c0_2] : memref<768x896xbf16, #tpu.memory_space<vmem>>, vector<768x896xbf16>
    %cst = arith.constant dense<0.000000e+00> : vector<8x896xf32>
    %2 = tpu.matmul %0, %1, %cst {dimension_numbers = #tpu.dot_dimension_numbers<[1], [0], [0], [1], [0, 0, 1, 1], [], []>} : vector<8x768xbf16>, vector<768x896xbf16>, vector<8x896xf32> -> vector<8x896xf32>
    %c0_3 = arith.constant 0 : index
    %c0_4 = arith.constant 0 : index
    %3 = vector.load %arg3[%c0_3, %c0_4] : memref<8x1xf32, #tpu.memory_space<vmem>>, vector<8x1xf32>
    %4 = vector.broadcast %3 : vector<8x1xf32> to vector<8x896xf32>
    %5 = arith.addf %2, %4 : vector<8x896xf32>
    %cst_5 = arith.constant 0.000000e+00 : f32
    %6 = vector.broadcast %cst_5 : f32 to vector<8x896xf32>
    %7 = arith.cmpf ogt, %5, %6 : vector<8x896xf32>
    %cst_6 = arith.constant 0.00999999977 : f32
    %8 = vector.broadcast %cst_6 : f32 to vector<8x896xf32>
    %9 = arith.mulf %8, %5 : vector<8x896xf32>
    %10 = arith.select %7, %5, %9 : vector<8x896xi1>, vector<8x896xf32>
    %c0_7 = arith.constant 0 : index
    %c0_8 = arith.constant 0 : index
    %11 = vector.load %arg4[%c0_7, %c0_8] : memref<8x896xf32, #tpu.memory_space<vmem>>, vector<8x896xf32>
    tpu.vector_store %arg4[%c0_7, %c0_8], %10 {strides = array<i32>} : memref<8x896xf32, #tpu.memory_space<vmem>>, vector<8x896xf32>,
    return
  }
  func.func @transform_0(%arg0: i32) -> (i32, i32) {
    %c0_i32 = arith.constant 0 : i32
    %c0_i32_0 = arith.constant 0 : i32
    return %arg0, %c0_i32 : i32, i32
  }
  func.func @transform_1(%arg0: i32) -> (i32, i32) {
    %c0_i32 = arith.constant 0 : i32
    %c0_i32_0 = arith.constant 0 : i32
    %c0_i32_1 = arith.constant 0 : i32
    return %c0_i32, %c0_i32_0 : i32, i32
  }
  func.func @transform_2(%arg0: i32) -> (i32, i32) {
    %c0_i32 = arith.constant 0 : i32
    %c0_i32_0 = arith.constant 0 : i32
    return %arg0, %c0_i32 : i32, i32
  }
  func.func @transform_3(%arg0: i32) -> (i32, i32) {
    %c0_i32 = arith.constant 0 : i32
    %c0_i32_0 = arith.constant 0 : i32
    return %arg0, %c0_i32 : i32, i32
  }
}

module attributes {stable_mosaic.version = 11 : i64} {
  func.func @_middle_kernel(%arg0: i32, %arg1: memref<32x1024xbf16, #tpu.memory_space<vmem>>, %arg2: memref<1024x32xbf16, #tpu.memory_space<vmem>>, %arg3: memref<1x32xf32, #tpu.memory_space<vmem>>, %arg4: memref<1x32xf32, #tpu.memory_space<vmem>>, %arg5: memref<1x32xf32, #tpu.memory_space<vmem>>, %arg6: memref<32x1024xbf16, #tpu.memory_space<vmem>>, %arg7: memref<32x1024xf32, #tpu.memory_space<vmem>>, %arg8: memref<2x32xf32, #tpu.memory_space<vmem>>, %arg9: memref<1024x64xf32, #tpu.memory_space<vmem>>, %arg10: memref<1x64xf32, #tpu.memory_space<vmem>>, %arg11: memref<1x64xf32, #tpu.memory_space<vmem>>, %arg12: memref<1x64xf32, #tpu.memory_space<vmem>>, %arg13: memref<64x32xbf16, #tpu.memory_space<vmem>>, %arg14: memref<1x32xf32, #tpu.memory_space<vmem>>, %arg15: memref<32x32xbf16, #tpu.memory_space<vmem>>, %arg16: memref<1x32xf32, #tpu.memory_space<vmem>>, %arg17: memref<32x16xbf16, #tpu.memory_space<vmem>>, %arg18: memref<1x16xf32, #tpu.memory_space<vmem>>, %arg19: memref<2x8xf32, #tpu.memory_space<vmem>>, %arg20: memref<8x32xbf16, #tpu.memory_space<vmem>>, %arg21: memref<1x32xf32, #tpu.memory_space<vmem>>, %arg22: memref<32x32xbf16, #tpu.memory_space<vmem>>, %arg23: memref<1x32xf32, #tpu.memory_space<vmem>>, %arg24: memref<32x64xbf16, #tpu.memory_space<vmem>>, %arg25: memref<1x64xf32, #tpu.memory_space<vmem>>, %arg26: memref<1x64xf32, #tpu.memory_space<vmem>>, %arg27: memref<1x64xf32, #tpu.memory_space<vmem>>, %arg28: memref<64x512xbf16, #tpu.memory_space<vmem>>, %arg29: memref<1x512xf32, #tpu.memory_space<vmem>>, %arg30: memref<512x32xf32, #tpu.memory_space<vmem>>, %arg31: memref<32x512xf32, #tpu.memory_space<vmem>>, %arg32: memref<1x512xf32, #tpu.memory_space<vmem>>, %arg33: memref<1x512xf32, #tpu.memory_space<vmem>>, %arg34: memref<2x16xf32, #tpu.memory_space<vmem>>, %arg35: memref<2x512xbf16, #tpu.memory_space<vmem>>) attributes {dimension_semantics = [#tpu.dimension_semantics<arbitrary>], iteration_bounds = array<i64: 1>, scalar_prefetch = 0 : i64, scratch_operands = 0 : i64, tpu.core_type = #tpu.core_type<tc>, window_params = [{pipeline_mode = #tpu.pipeline_mode<synchronous>, transform_indices = @transform_0, window_bounds = array<i64: 32, 1024>}, {pipeline_mode = #tpu.pipeline_mode<synchronous>, transform_indices = @transform_1, window_bounds = array<i64: 1024, 32>}, {pipeline_mode = #tpu.pipeline_mode<synchronous>, transform_indices = @transform_2, window_bounds = array<i64: 1, 32>}, {pipeline_mode = #tpu.pipeline_mode<synchronous>, transform_indices = @transform_3, window_bounds = array<i64: 1, 32>}, {pipeline_mode = #tpu.pipeline_mode<synchronous>, transform_indices = @transform_4, window_bounds = array<i64: 1, 32>}, {pipeline_mode = #tpu.pipeline_mode<synchronous>, transform_indices = @transform_5, window_bounds = array<i64: 32, 1024>}, {pipeline_mode = #tpu.pipeline_mode<synchronous>, transform_indices = @transform_6, window_bounds = array<i64: 32, 1024>}, {pipeline_mode = #tpu.pipeline_mode<synchronous>, transform_indices = @transform_7, window_bounds = array<i64: 2, 32>}, {pipeline_mode = #tpu.pipeline_mode<synchronous>, transform_indices = @transform_8, window_bounds = array<i64: 1024, 64>}, {pipeline_mode = #tpu.pipeline_mode<synchronous>, transform_indices = @transform_9, window_bounds = array<i64: 1, 64>}, {pipeline_mode = #tpu.pipeline_mode<synchronous>, transform_indices = @transform_10, window_bounds = array<i64: 1, 64>}, {pipeline_mode = #tpu.pipeline_mode<synchronous>, transform_indices = @transform_11, window_bounds = array<i64: 1, 64>}, {pipeline_mode = #tpu.pipeline_mode<synchronous>, transform_indices = @transform_12, window_bounds = array<i64: 64, 32>}, {pipeline_mode = #tpu.pipeline_mode<synchronous>, transform_indices = @transform_13, window_bounds = array<i64: 1, 32>}, {pipeline_mode = #tpu.pipeline_mode<synchronous>, transform_indices = @transform_14, window_bounds = array<i64: 32, 32>}, {pipeline_mode = #tpu.pipeline_mode<synchronous>, transform_indices = @transform_15, window_bounds = array<i64: 1, 32>}, {pipeline_mode = #tpu.pipeline_mode<synchronous>, transform_indices = @transform_16, window_bounds = array<i64: 32, 16>}, {pipeline_mode = #tpu.pipeline_mode<synchronous>, transform_indices = @transform_17, window_bounds = array<i64: 1, 16>}, {pipeline_mode = #tpu.pipeline_mode<synchronous>, transform_indices = @transform_18, window_bounds = array<i64: 2, 8>}, {pipeline_mode = #tpu.pipeline_mode<synchronous>, transform_indices = @transform_19, window_bounds = array<i64: 8, 32>}, {pipeline_mode = #tpu.pipeline_mode<synchronous>, transform_indices = @transform_20, window_bounds = array<i64: 1, 32>}, {pipeline_mode = #tpu.pipeline_mode<synchronous>, transform_indices = @transform_21, window_bounds = array<i64: 32, 32>}, {pipeline_mode = #tpu.pipeline_mode<synchronous>, transform_indices = @transform_22, window_bounds = array<i64: 1, 32>}, {pipeline_mode = #tpu.pipeline_mode<synchronous>, transform_indices = @transform_23, window_bounds = array<i64: 32, 64>}, {pipeline_mode = #tpu.pipeline_mode<synchronous>, transform_indices = @transform_24, window_bounds = array<i64: 1, 64>}, {pipeline_mode = #tpu.pipeline_mode<synchronous>, transform_indices = @transform_25, window_bounds = array<i64: 1, 64>}, {pipeline_mode = #tpu.pipeline_mode<synchronous>, transform_indices = @transform_26, window_bounds = array<i64: 1, 64>}, {pipeline_mode = #tpu.pipeline_mode<synchronous>, transform_indices = @transform_27, window_bounds = array<i64: 64, 512>}, {pipeline_mode = #tpu.pipeline_mode<synchronous>, transform_indices = @transform_28, window_bounds = array<i64: 1, 512>}, {pipeline_mode = #tpu.pipeline_mode<synchronous>, transform_indices = @transform_29, window_bounds = array<i64: 512, 32>}, {pipeline_mode = #tpu.pipeline_mode<synchronous>, transform_indices = @transform_30, window_bounds = array<i64: 32, 512>}, {pipeline_mode = #tpu.pipeline_mode<synchronous>, transform_indices = @transform_31, window_bounds = array<i64: 1, 512>}, {pipeline_mode = #tpu.pipeline_mode<synchronous>, transform_indices = @transform_32, window_bounds = array<i64: 1, 512>}, {pipeline_mode = #tpu.pipeline_mode<synchronous>, transform_indices = @transform_33, window_bounds = array<i64: 2, 16>}, {pipeline_mode = #tpu.pipeline_mode<synchronous>, transform_indices = @transform_34, window_bounds = array<i64: 2, 512>}]} {
    %c0 = arith.constant 0 : index
    %c0_0 = arith.constant 0 : index
    %0 = vector.load %arg1[%c0, %c0_0] : memref<32x1024xbf16, #tpu.memory_space<vmem>>, vector<32x1024xbf16>
    %c0_1 = arith.constant 0 : index
    %c0_2 = arith.constant 0 : index
    %1 = vector.load %arg2[%c0_1, %c0_2] : memref<1024x32xbf16, #tpu.memory_space<vmem>>, vector<1024x32xbf16>
    %cst = arith.constant dense<0.000000e+00> : vector<32x32xf32>
    %2 = tpu.matmul %0, %1, %cst {dimension_numbers = #tpu.dot_dimension_numbers<[1], [0], [0], [1], [0, 0, 1, 1], [], []>} : vector<32x1024xbf16>, vector<1024x32xbf16>, vector<32x32xf32> -> vector<32x32xf32>
    %c0_3 = arith.constant 0 : index
    %c0_4 = arith.constant 0 : index
    %3 = vector.load %arg3[%c0_3, %c0_4] : memref<1x32xf32, #tpu.memory_space<vmem>>, vector<1x32xf32>
    %4 = vector.broadcast %3 : vector<1x32xf32> to vector<32x32xf32>
    %5 = arith.addf %2, %4 : vector<32x32xf32>
    %c0_5 = arith.constant 0 : index
    %c0_6 = arith.constant 0 : index
    %6 = vector.load %arg4[%c0_5, %c0_6] : memref<1x32xf32, #tpu.memory_space<vmem>>, vector<1x32xf32>
    %c0_7 = arith.constant 0 : index
    %c0_8 = arith.constant 0 : index
    %7 = vector.load %arg5[%c0_7, %c0_8] : memref<1x32xf32, #tpu.memory_space<vmem>>, vector<1x32xf32>
    %cst_9 = arith.constant dense<0.000000e+00> : vector<32xf32>
    %8 = vector.multi_reduction <add>, %5, %cst_9 [0] : vector<32x32xf32> to vector<32xf32>
    %9 = vector.shape_cast %8 : vector<32xf32> to vector<1x32xf32>
    %cst_10 = arith.constant 3.200000e+01 : f32
    %10 = vector.broadcast %cst_10 : f32 to vector<1x32xf32>
    %11 = arith.divf %9, %10 : vector<1x32xf32>
    %12 = vector.broadcast %11 : vector<1x32xf32> to vector<32x32xf32>
    %13 = arith.subf %5, %12 : vector<32x32xf32>
    %14 = arith.mulf %13, %13 : vector<32x32xf32>
    %cst_11 = arith.constant dense<0.000000e+00> : vector<32xf32>
    %15 = vector.multi_reduction <add>, %14, %cst_11 [0] : vector<32x32xf32> to vector<32xf32>
    %16 = vector.shape_cast %15 : vector<32xf32> to vector<1x32xf32>
    %cst_12 = arith.constant 3.200000e+01 : f32
    %17 = vector.broadcast %cst_12 : f32 to vector<1x32xf32>
    %18 = arith.divf %16, %17 : vector<1x32xf32>
    %cst_13 = arith.constant 9.99999974E-6 : f32
    %19 = vector.broadcast %cst_13 : f32 to vector<1x32xf32>
    %20 = arith.addf %18, %19 : vector<1x32xf32>
    %21 = math.rsqrt %20 : vector<1x32xf32>
    %22 = vector.broadcast %21 : vector<1x32xf32> to vector<32x32xf32>
    %23 = arith.mulf %13, %22 : vector<32x32xf32>
    %24 = vector.broadcast %6 : vector<1x32xf32> to vector<32x32xf32>
    %25 = arith.mulf %23, %24 : vector<32x32xf32>
    %26 = vector.broadcast %7 : vector<1x32xf32> to vector<32x32xf32>
    %27 = arith.addf %25, %26 : vector<32x32xf32>
    %cst_14 = arith.constant 0.000000e+00 : f32
    %28 = vector.broadcast %cst_14 : f32 to vector<32x32xf32>
    %29 = arith.cmpf ogt, %27, %28 : vector<32x32xf32>
    %cst_15 = arith.constant 0.00999999977 : f32
    %30 = vector.broadcast %cst_15 : f32 to vector<32x32xf32>
    %31 = arith.mulf %30, %27 : vector<32x32xf32>
    %32 = arith.select %29, %27, %31 : vector<32x32xi1>, vector<32x32xf32>
    %33 = arith.truncf %32 : vector<32x32xf32> to vector<32x32xbf16>
    %c0_16 = arith.constant 0 : index
    %c0_17 = arith.constant 0 : index
    %34 = vector.load %arg6[%c0_16, %c0_17] : memref<32x1024xbf16, #tpu.memory_space<vmem>>, vector<32x1024xbf16>
    %cst_18 = arith.constant dense<0.000000e+00> : vector<32x1024xf32>
    %35 = tpu.matmul %33, %34, %cst_18 {dimension_numbers = #tpu.dot_dimension_numbers<[1], [0], [0], [1], [0, 0, 1, 1], [], []>} : vector<32x32xbf16>, vector<32x1024xbf16>, vector<32x1024xf32> -> vector<32x1024xf32>
    %c0_19 = arith.constant 0 : index
    %c0_20 = arith.constant 0 : index
    %36 = vector.load %arg7[%c0_19, %c0_20] : memref<32x1024xf32, #tpu.memory_space<vmem>>, vector<32x1024xf32>
    %37 = arith.mulf %35, %36 : vector<32x1024xf32>
    %c0_21 = arith.constant 0 : index
    %c0_22 = arith.constant 0 : index
    %38 = vector.load %arg8[%c0_21, %c0_22] : memref<2x32xf32, #tpu.memory_space<vmem>>, vector<2x32xf32>
    %cst_23 = arith.constant dense<0.000000e+00> : vector<2x1024xf32>
    %39 = tpu.matmul %38, %37, %cst_23 {dimension_numbers = #tpu.dot_dimension_numbers<[1], [0], [0], [1], [0, 0, 1, 1], [], []>} : vector<2x32xf32>, vector<32x1024xf32>, vector<2x1024xf32> -> vector<2x1024xf32>
    %c0_24 = arith.constant 0 : index
    %c0_25 = arith.constant 0 : index
    %40 = vector.load %arg9[%c0_24, %c0_25] : memref<1024x64xf32, #tpu.memory_space<vmem>>, vector<1024x64xf32>
    %cst_26 = arith.constant dense<0.000000e+00> : vector<2x64xf32>
    %41 = tpu.matmul %39, %40, %cst_26 {dimension_numbers = #tpu.dot_dimension_numbers<[1], [0], [0], [1], [0, 0, 1, 1], [], []>} : vector<2x1024xf32>, vector<1024x64xf32>, vector<2x64xf32> -> vector<2x64xf32>
    %c0_27 = arith.constant 0 : index
    %c0_28 = arith.constant 0 : index
    %42 = vector.load %arg10[%c0_27, %c0_28] : memref<1x64xf32, #tpu.memory_space<vmem>>, vector<1x64xf32>
    %43 = vector.broadcast %42 : vector<1x64xf32> to vector<2x64xf32>
    %44 = arith.addf %41, %43 : vector<2x64xf32>
    %c0_29 = arith.constant 0 : index
    %c0_30 = arith.constant 0 : index
    %45 = vector.load %arg11[%c0_29, %c0_30] : memref<1x64xf32, #tpu.memory_space<vmem>>, vector<1x64xf32>
    %c0_31 = arith.constant 0 : index
    %c0_32 = arith.constant 0 : index
    %46 = vector.load %arg12[%c0_31, %c0_32] : memref<1x64xf32, #tpu.memory_space<vmem>>, vector<1x64xf32>
    %cst_33 = arith.constant dense<0.000000e+00> : vector<64xf32>
    %47 = vector.multi_reduction <add>, %44, %cst_33 [0] : vector<2x64xf32> to vector<64xf32>
    %48 = vector.shape_cast %47 : vector<64xf32> to vector<1x64xf32>
    %cst_34 = arith.constant 2.000000e+00 : f32
    %49 = vector.broadcast %cst_34 : f32 to vector<1x64xf32>
    %50 = arith.divf %48, %49 : vector<1x64xf32>
    %51 = vector.broadcast %50 : vector<1x64xf32> to vector<2x64xf32>
    %52 = arith.subf %44, %51 : vector<2x64xf32>
    %53 = arith.mulf %52, %52 : vector<2x64xf32>
    %cst_35 = arith.constant dense<0.000000e+00> : vector<64xf32>
    %54 = vector.multi_reduction <add>, %53, %cst_35 [0] : vector<2x64xf32> to vector<64xf32>
    %55 = vector.shape_cast %54 : vector<64xf32> to vector<1x64xf32>
    %cst_36 = arith.constant 2.000000e+00 : f32
    %56 = vector.broadcast %cst_36 : f32 to vector<1x64xf32>
    %57 = arith.divf %55, %56 : vector<1x64xf32>
    %cst_37 = arith.constant 9.99999974E-6 : f32
    %58 = vector.broadcast %cst_37 : f32 to vector<1x64xf32>
    %59 = arith.addf %57, %58 : vector<1x64xf32>
    %60 = math.rsqrt %59 : vector<1x64xf32>
    %61 = vector.broadcast %60 : vector<1x64xf32> to vector<2x64xf32>
    %62 = arith.mulf %52, %61 : vector<2x64xf32>
    %63 = vector.broadcast %45 : vector<1x64xf32> to vector<2x64xf32>
    %64 = arith.mulf %62, %63 : vector<2x64xf32>
    %65 = vector.broadcast %46 : vector<1x64xf32> to vector<2x64xf32>
    %66 = arith.addf %64, %65 : vector<2x64xf32>
    %cst_38 = arith.constant 0.000000e+00 : f32
    %67 = vector.broadcast %cst_38 : f32 to vector<2x64xf32>
    %68 = arith.cmpf ogt, %66, %67 : vector<2x64xf32>
    %cst_39 = arith.constant 0.00999999977 : f32
    %69 = vector.broadcast %cst_39 : f32 to vector<2x64xf32>
    %70 = arith.mulf %69, %66 : vector<2x64xf32>
    %71 = arith.select %68, %66, %70 : vector<2x64xi1>, vector<2x64xf32>
    %72 = arith.truncf %71 : vector<2x64xf32> to vector<2x64xbf16>
    %c0_40 = arith.constant 0 : index
    %c0_41 = arith.constant 0 : index
    %73 = vector.load %arg13[%c0_40, %c0_41] : memref<64x32xbf16, #tpu.memory_space<vmem>>, vector<64x32xbf16>
    %cst_42 = arith.constant dense<0.000000e+00> : vector<2x32xf32>
    %74 = tpu.matmul %72, %73, %cst_42 {dimension_numbers = #tpu.dot_dimension_numbers<[1], [0], [0], [1], [0, 0, 1, 1], [], []>} : vector<2x64xbf16>, vector<64x32xbf16>, vector<2x32xf32> -> vector<2x32xf32>
    %c0_43 = arith.constant 0 : index
    %c0_44 = arith.constant 0 : index
    %75 = vector.load %arg14[%c0_43, %c0_44] : memref<1x32xf32, #tpu.memory_space<vmem>>, vector<1x32xf32>
    %76 = vector.broadcast %75 : vector<1x32xf32> to vector<2x32xf32>
    %77 = arith.addf %74, %76 : vector<2x32xf32>
    %cst_45 = arith.constant 0.000000e+00 : f32
    %78 = vector.broadcast %cst_45 : f32 to vector<2x32xf32>
    %79 = arith.maximumf %77, %78 : vector<2x32xf32>
    %80 = arith.truncf %79 : vector<2x32xf32> to vector<2x32xbf16>
    %c0_46 = arith.constant 0 : index
    %c0_47 = arith.constant 0 : index
    %81 = vector.load %arg15[%c0_46, %c0_47] : memref<32x32xbf16, #tpu.memory_space<vmem>>, vector<32x32xbf16>
    %cst_48 = arith.constant dense<0.000000e+00> : vector<2x32xf32>
    %82 = tpu.matmul %80, %81, %cst_48 {dimension_numbers = #tpu.dot_dimension_numbers<[1], [0], [0], [1], [0, 0, 1, 1], [], []>} : vector<2x32xbf16>, vector<32x32xbf16>, vector<2x32xf32> -> vector<2x32xf32>
    %c0_49 = arith.constant 0 : index
    %c0_50 = arith.constant 0 : index
    %83 = vector.load %arg16[%c0_49, %c0_50] : memref<1x32xf32, #tpu.memory_space<vmem>>, vector<1x32xf32>
    %84 = vector.broadcast %83 : vector<1x32xf32> to vector<2x32xf32>
    %85 = arith.addf %82, %84 : vector<2x32xf32>
    %cst_51 = arith.constant 0.000000e+00 : f32
    %86 = vector.broadcast %cst_51 : f32 to vector<2x32xf32>
    %87 = arith.maximumf %85, %86 : vector<2x32xf32>
    %88 = arith.truncf %87 : vector<2x32xf32> to vector<2x32xbf16>
    %c0_52 = arith.constant 0 : index
    %c0_53 = arith.constant 0 : index
    %89 = vector.load %arg17[%c0_52, %c0_53] : memref<32x16xbf16, #tpu.memory_space<vmem>>, vector<32x16xbf16>
    %cst_54 = arith.constant dense<0.000000e+00> : vector<2x16xf32>
    %90 = tpu.matmul %88, %89, %cst_54 {dimension_numbers = #tpu.dot_dimension_numbers<[1], [0], [0], [1], [0, 0, 1, 1], [], []>} : vector<2x32xbf16>, vector<32x16xbf16>, vector<2x16xf32> -> vector<2x16xf32>
    %c0_55 = arith.constant 0 : index
    %c0_56 = arith.constant 0 : index
    %91 = vector.load %arg18[%c0_55, %c0_56] : memref<1x16xf32, #tpu.memory_space<vmem>>, vector<1x16xf32>
    %92 = vector.broadcast %91 : vector<1x16xf32> to vector<2x16xf32>
    %93 = arith.addf %90, %92 : vector<2x16xf32>
    %c0_57 = arith.constant 0 : index
    %c0_58 = arith.constant 0 : index
    %94 = vector.load %arg34[%c0_57, %c0_58] : memref<2x16xf32, #tpu.memory_space<vmem>>, vector<2x16xf32>
    tpu.vector_store %arg34[%c0_57, %c0_58], %93 {strides = array<i32>} : memref<2x16xf32, #tpu.memory_space<vmem>>, vector<2x16xf32>,
    %95 = vector.extract_strided_slice %93 {offsets = [0, 0], sizes = [2, 8], strides = [1, 1]} : vector<2x16xf32> to vector<2x8xf32>
    %96 = vector.extract_strided_slice %93 {offsets = [0, 8], sizes = [2, 8], strides = [1, 1]} : vector<2x16xf32> to vector<2x8xf32>
    %97 = math.exp %96 : vector<2x8xf32>
    %c0_59 = arith.constant 0 : index
    %c0_60 = arith.constant 0 : index
    %98 = vector.load %arg19[%c0_59, %c0_60] : memref<2x8xf32, #tpu.memory_space<vmem>>, vector<2x8xf32>
    %99 = arith.mulf %97, %98 : vector<2x8xf32>
    %100 = arith.addf %95, %99 : vector<2x8xf32>
    %101 = arith.truncf %100 : vector<2x8xf32> to vector<2x8xbf16>
    %c0_61 = arith.constant 0 : index
    %c0_62 = arith.constant 0 : index
    %102 = vector.load %arg20[%c0_61, %c0_62] : memref<8x32xbf16, #tpu.memory_space<vmem>>, vector<8x32xbf16>
    %cst_63 = arith.constant dense<0.000000e+00> : vector<2x32xf32>
    %103 = tpu.matmul %101, %102, %cst_63 {dimension_numbers = #tpu.dot_dimension_numbers<[1], [0], [0], [1], [0, 0, 1, 1], [], []>} : vector<2x8xbf16>, vector<8x32xbf16>, vector<2x32xf32> -> vector<2x32xf32>
    %c0_64 = arith.constant 0 : index
    %c0_65 = arith.constant 0 : index
    %104 = vector.load %arg21[%c0_64, %c0_65] : memref<1x32xf32, #tpu.memory_space<vmem>>, vector<1x32xf32>
    %105 = vector.broadcast %104 : vector<1x32xf32> to vector<2x32xf32>
    %106 = arith.addf %103, %105 : vector<2x32xf32>
    %cst_66 = arith.constant 0.000000e+00 : f32
    %107 = vector.broadcast %cst_66 : f32 to vector<2x32xf32>
    %108 = arith.maximumf %106, %107 : vector<2x32xf32>
    %109 = arith.truncf %108 : vector<2x32xf32> to vector<2x32xbf16>
    %c0_67 = arith.constant 0 : index
    %c0_68 = arith.constant 0 : index
    %110 = vector.load %arg22[%c0_67, %c0_68] : memref<32x32xbf16, #tpu.memory_space<vmem>>, vector<32x32xbf16>
    %cst_69 = arith.constant dense<0.000000e+00> : vector<2x32xf32>
    %111 = tpu.matmul %109, %110, %cst_69 {dimension_numbers = #tpu.dot_dimension_numbers<[1], [0], [0], [1], [0, 0, 1, 1], [], []>} : vector<2x32xbf16>, vector<32x32xbf16>, vector<2x32xf32> -> vector<2x32xf32>
    %c0_70 = arith.constant 0 : index
    %c0_71 = arith.constant 0 : index
    %112 = vector.load %arg23[%c0_70, %c0_71] : memref<1x32xf32, #tpu.memory_space<vmem>>, vector<1x32xf32>
    %113 = vector.broadcast %112 : vector<1x32xf32> to vector<2x32xf32>
    %114 = arith.addf %111, %113 : vector<2x32xf32>
    %cst_72 = arith.constant 0.000000e+00 : f32
    %115 = vector.broadcast %cst_72 : f32 to vector<2x32xf32>
    %116 = arith.maximumf %114, %115 : vector<2x32xf32>
    %117 = arith.truncf %116 : vector<2x32xf32> to vector<2x32xbf16>
    %c0_73 = arith.constant 0 : index
    %c0_74 = arith.constant 0 : index
    %118 = vector.load %arg24[%c0_73, %c0_74] : memref<32x64xbf16, #tpu.memory_space<vmem>>, vector<32x64xbf16>
    %cst_75 = arith.constant dense<0.000000e+00> : vector<2x64xf32>
    %119 = tpu.matmul %117, %118, %cst_75 {dimension_numbers = #tpu.dot_dimension_numbers<[1], [0], [0], [1], [0, 0, 1, 1], [], []>} : vector<2x32xbf16>, vector<32x64xbf16>, vector<2x64xf32> -> vector<2x64xf32>
    %c0_76 = arith.constant 0 : index
    %c0_77 = arith.constant 0 : index
    %120 = vector.load %arg25[%c0_76, %c0_77] : memref<1x64xf32, #tpu.memory_space<vmem>>, vector<1x64xf32>
    %121 = vector.broadcast %120 : vector<1x64xf32> to vector<2x64xf32>
    %122 = arith.addf %119, %121 : vector<2x64xf32>
    %c0_78 = arith.constant 0 : index
    %c0_79 = arith.constant 0 : index
    %123 = vector.load %arg26[%c0_78, %c0_79] : memref<1x64xf32, #tpu.memory_space<vmem>>, vector<1x64xf32>
    %c0_80 = arith.constant 0 : index
    %c0_81 = arith.constant 0 : index
    %124 = vector.load %arg27[%c0_80, %c0_81] : memref<1x64xf32, #tpu.memory_space<vmem>>, vector<1x64xf32>
    %cst_82 = arith.constant dense<0.000000e+00> : vector<64xf32>
    %125 = vector.multi_reduction <add>, %122, %cst_82 [0] : vector<2x64xf32> to vector<64xf32>
    %126 = vector.shape_cast %125 : vector<64xf32> to vector<1x64xf32>
    %cst_83 = arith.constant 2.000000e+00 : f32
    %127 = vector.broadcast %cst_83 : f32 to vector<1x64xf32>
    %128 = arith.divf %126, %127 : vector<1x64xf32>
    %129 = vector.broadcast %128 : vector<1x64xf32> to vector<2x64xf32>
    %130 = arith.subf %122, %129 : vector<2x64xf32>
    %131 = arith.mulf %130, %130 : vector<2x64xf32>
    %cst_84 = arith.constant dense<0.000000e+00> : vector<64xf32>
    %132 = vector.multi_reduction <add>, %131, %cst_84 [0] : vector<2x64xf32> to vector<64xf32>
    %133 = vector.shape_cast %132 : vector<64xf32> to vector<1x64xf32>
    %cst_85 = arith.constant 2.000000e+00 : f32
    %134 = vector.broadcast %cst_85 : f32 to vector<1x64xf32>
    %135 = arith.divf %133, %134 : vector<1x64xf32>
    %cst_86 = arith.constant 9.99999974E-6 : f32
    %136 = vector.broadcast %cst_86 : f32 to vector<1x64xf32>
    %137 = arith.addf %135, %136 : vector<1x64xf32>
    %138 = math.rsqrt %137 : vector<1x64xf32>
    %139 = vector.broadcast %138 : vector<1x64xf32> to vector<2x64xf32>
    %140 = arith.mulf %130, %139 : vector<2x64xf32>
    %141 = vector.broadcast %123 : vector<1x64xf32> to vector<2x64xf32>
    %142 = arith.mulf %140, %141 : vector<2x64xf32>
    %143 = vector.broadcast %124 : vector<1x64xf32> to vector<2x64xf32>
    %144 = arith.addf %142, %143 : vector<2x64xf32>
    %145 = arith.truncf %144 : vector<2x64xf32> to vector<2x64xbf16>
    %c0_87 = arith.constant 0 : index
    %c0_88 = arith.constant 0 : index
    %146 = vector.load %arg28[%c0_87, %c0_88] : memref<64x512xbf16, #tpu.memory_space<vmem>>, vector<64x512xbf16>
    %cst_89 = arith.constant dense<0.000000e+00> : vector<2x512xf32>
    %147 = tpu.matmul %145, %146, %cst_89 {dimension_numbers = #tpu.dot_dimension_numbers<[1], [0], [0], [1], [0, 0, 1, 1], [], []>} : vector<2x64xbf16>, vector<64x512xbf16>, vector<2x512xf32> -> vector<2x512xf32>
    %c0_90 = arith.constant 0 : index
    %c0_91 = arith.constant 0 : index
    %148 = vector.load %arg29[%c0_90, %c0_91] : memref<1x512xf32, #tpu.memory_space<vmem>>, vector<1x512xf32>
    %149 = vector.broadcast %148 : vector<1x512xf32> to vector<2x512xf32>
    %150 = arith.addf %147, %149 : vector<2x512xf32>
    %cst_92 = arith.constant 0.000000e+00 : f32
    %151 = vector.broadcast %cst_92 : f32 to vector<2x512xf32>
    %152 = arith.cmpf ogt, %150, %151 : vector<2x512xf32>
    %cst_93 = arith.constant 0.00999999977 : f32
    %153 = vector.broadcast %cst_93 : f32 to vector<2x512xf32>
    %154 = arith.mulf %153, %150 : vector<2x512xf32>
    %155 = arith.select %152, %150, %154 : vector<2x512xi1>, vector<2x512xf32>
    %c0_94 = arith.constant 0 : index
    %c0_95 = arith.constant 0 : index
    %156 = vector.load %arg30[%c0_94, %c0_95] : memref<512x32xf32, #tpu.memory_space<vmem>>, vector<512x32xf32>
    %cst_96 = arith.constant dense<0.000000e+00> : vector<2x32xf32>
    %157 = tpu.matmul %155, %156, %cst_96 {dimension_numbers = #tpu.dot_dimension_numbers<[1], [0], [0], [1], [0, 0, 1, 1], [], []>} : vector<2x512xf32>, vector<512x32xf32>, vector<2x32xf32> -> vector<2x32xf32>
    %cst_97 = arith.constant dense<0.000000e+00> : vector<32xf32>
    %158 = vector.multi_reduction <add>, %157, %cst_97 [0] : vector<2x32xf32> to vector<32xf32>
    %159 = vector.shape_cast %158 : vector<32xf32> to vector<1x32xf32>
    %cst_98 = arith.constant 3.200000e+01 : f32
    %160 = vector.broadcast %cst_98 : f32 to vector<1x32xf32>
    %161 = arith.divf %159, %160 : vector<1x32xf32>
    %c0_99 = arith.constant 0 : index
    %c0_100 = arith.constant 0 : index
    %162 = vector.load %arg31[%c0_99, %c0_100] : memref<32x512xf32, #tpu.memory_space<vmem>>, vector<32x512xf32>
    %cst_101 = arith.constant dense<0.000000e+00> : vector<1x512xf32>
    %163 = tpu.matmul %161, %162, %cst_101 {dimension_numbers = #tpu.dot_dimension_numbers<[1], [0], [0], [1], [0, 0, 1, 1], [], []>} : vector<1x32xf32>, vector<32x512xf32>, vector<1x512xf32> -> vector<1x512xf32>
    %164 = vector.broadcast %163 : vector<1x512xf32> to vector<2x512xf32>
    %165 = arith.subf %155, %164 : vector<2x512xf32>
    %166 = arith.mulf %165, %165 : vector<2x512xf32>
    %c0_102 = arith.constant 0 : index
    %c0_103 = arith.constant 0 : index
    %167 = vector.load %arg30[%c0_102, %c0_103] : memref<512x32xf32, #tpu.memory_space<vmem>>, vector<512x32xf32>
    %cst_104 = arith.constant dense<0.000000e+00> : vector<2x32xf32>
    %168 = tpu.matmul %166, %167, %cst_104 {dimension_numbers = #tpu.dot_dimension_numbers<[1], [0], [0], [1], [0, 0, 1, 1], [], []>} : vector<2x512xf32>, vector<512x32xf32>, vector<2x32xf32> -> vector<2x32xf32>
    %cst_105 = arith.constant dense<0.000000e+00> : vector<32xf32>
    %169 = vector.multi_reduction <add>, %168, %cst_105 [0] : vector<2x32xf32> to vector<32xf32>
    %170 = vector.shape_cast %169 : vector<32xf32> to vector<1x32xf32>
    %cst_106 = arith.constant 3.200000e+01 : f32
    %171 = vector.broadcast %cst_106 : f32 to vector<1x32xf32>
    %172 = arith.divf %170, %171 : vector<1x32xf32>
    %cst_107 = arith.constant 9.99999974E-6 : f32
    %173 = vector.broadcast %cst_107 : f32 to vector<1x32xf32>
    %174 = arith.addf %172, %173 : vector<1x32xf32>
    %175 = math.rsqrt %174 : vector<1x32xf32>
    %c0_108 = arith.constant 0 : index
    %c0_109 = arith.constant 0 : index
    %176 = vector.load %arg31[%c0_108, %c0_109] : memref<32x512xf32, #tpu.memory_space<vmem>>, vector<32x512xf32>
    %cst_110 = arith.constant dense<0.000000e+00> : vector<1x512xf32>
    %177 = tpu.matmul %175, %176, %cst_110 {dimension_numbers = #tpu.dot_dimension_numbers<[1], [0], [0], [1], [0, 0, 1, 1], [], []>} : vector<1x32xf32>, vector<32x512xf32>, vector<1x512xf32> -> vector<1x512xf32>
    %178 = vector.broadcast %177 : vector<1x512xf32> to vector<2x512xf32>
    %179 = arith.mulf %165, %178 : vector<2x512xf32>
    %c0_111 = arith.constant 0 : index
    %c0_112 = arith.constant 0 : index
    %180 = vector.load %arg32[%c0_111, %c0_112] : memref<1x512xf32, #tpu.memory_space<vmem>>, vector<1x512xf32>
    %181 = vector.broadcast %180 : vector<1x512xf32> to vector<2x512xf32>
    %182 = arith.mulf %179, %181 : vector<2x512xf32>
    %c0_113 = arith.constant 0 : index
    %c0_114 = arith.constant 0 : index
    %183 = vector.load %arg33[%c0_113, %c0_114] : memref<1x512xf32, #tpu.memory_space<vmem>>, vector<1x512xf32>
    %184 = vector.broadcast %183 : vector<1x512xf32> to vector<2x512xf32>
    %185 = arith.addf %182, %184 : vector<2x512xf32>
    %186 = arith.truncf %185 : vector<2x512xf32> to vector<2x512xbf16>
    %c0_115 = arith.constant 0 : index
    %c0_116 = arith.constant 0 : index
    %187 = vector.load %arg35[%c0_115, %c0_116] : memref<2x512xbf16, #tpu.memory_space<vmem>>, vector<2x512xbf16>
    tpu.vector_store %arg35[%c0_115, %c0_116], %186 {strides = array<i32>} : memref<2x512xbf16, #tpu.memory_space<vmem>>, vector<2x512xbf16>,
    return
  }
  func.func @transform_0(%arg0: i32) -> (i32, i32) {
    %c0_i32 = arith.constant 0 : i32
    %c0_i32_0 = arith.constant 0 : i32
    %c0_i32_1 = arith.constant 0 : i32
    return %c0_i32, %c0_i32_0 : i32, i32
  }
  func.func @transform_1(%arg0: i32) -> (i32, i32) {
    %c0_i32 = arith.constant 0 : i32
    %c0_i32_0 = arith.constant 0 : i32
    %c0_i32_1 = arith.constant 0 : i32
    return %c0_i32, %c0_i32_0 : i32, i32
  }
  func.func @transform_2(%arg0: i32) -> (i32, i32) {
    %c0_i32 = arith.constant 0 : i32
    %c0_i32_0 = arith.constant 0 : i32
    %c0_i32_1 = arith.constant 0 : i32
    return %c0_i32, %c0_i32_0 : i32, i32
  }
  func.func @transform_3(%arg0: i32) -> (i32, i32) {
    %c0_i32 = arith.constant 0 : i32
    %c0_i32_0 = arith.constant 0 : i32
    %c0_i32_1 = arith.constant 0 : i32
    return %c0_i32, %c0_i32_0 : i32, i32
  }
  func.func @transform_4(%arg0: i32) -> (i32, i32) {
    %c0_i32 = arith.constant 0 : i32
    %c0_i32_0 = arith.constant 0 : i32
    %c0_i32_1 = arith.constant 0 : i32
    return %c0_i32, %c0_i32_0 : i32, i32
  }
  func.func @transform_5(%arg0: i32) -> (i32, i32) {
    %c0_i32 = arith.constant 0 : i32
    %c0_i32_0 = arith.constant 0 : i32
    %c0_i32_1 = arith.constant 0 : i32
    return %c0_i32, %c0_i32_0 : i32, i32
  }
  func.func @transform_6(%arg0: i32) -> (i32, i32) {
    %c0_i32 = arith.constant 0 : i32
    %c0_i32_0 = arith.constant 0 : i32
    %c0_i32_1 = arith.constant 0 : i32
    return %c0_i32, %c0_i32_0 : i32, i32
  }
  func.func @transform_7(%arg0: i32) -> (i32, i32) {
    %c0_i32 = arith.constant 0 : i32
    %c0_i32_0 = arith.constant 0 : i32
    %c0_i32_1 = arith.constant 0 : i32
    return %c0_i32, %c0_i32_0 : i32, i32
  }
  func.func @transform_8(%arg0: i32) -> (i32, i32) {
    %c0_i32 = arith.constant 0 : i32
    %c0_i32_0 = arith.constant 0 : i32
    %c0_i32_1 = arith.constant 0 : i32
    return %c0_i32, %c0_i32_0 : i32, i32
  }
  func.func @transform_9(%arg0: i32) -> (i32, i32) {
    %c0_i32 = arith.constant 0 : i32
    %c0_i32_0 = arith.constant 0 : i32
    %c0_i32_1 = arith.constant 0 : i32
    return %c0_i32, %c0_i32_0 : i32, i32
  }
  func.func @transform_10(%arg0: i32) -> (i32, i32) {
    %c0_i32 = arith.constant 0 : i32
    %c0_i32_0 = arith.constant 0 : i32
    %c0_i32_1 = arith.constant 0 : i32
    return %c0_i32, %c0_i32_0 : i32, i32
  }
  func.func @transform_11(%arg0: i32) -> (i32, i32) {
    %c0_i32 = arith.constant 0 : i32
    %c0_i32_0 = arith.constant 0 : i32
    %c0_i32_1 = arith.constant 0 : i32
    return %c0_i32, %c0_i32_0 : i32, i32
  }
  func.func @transform_12(%arg0: i32) -> (i32, i32) {
    %c0_i32 = arith.constant 0 : i32
    %c0_i32_0 = arith.constant 0 : i32
    %c0_i32_1 = arith.constant 0 : i32
    return %c0_i32, %c0_i32_0 : i32, i32
  }
  func.func @transform_13(%arg0: i32) -> (i32, i32) {
    %c0_i32 = arith.constant 0 : i32
    %c0_i32_0 = arith.constant 0 : i32
    %c0_i32_1 = arith.constant 0 : i32
    return %c0_i32, %c0_i32_0 : i32, i32
  }
  func.func @transform_14(%arg0: i32) -> (i32, i32) {
    %c0_i32 = arith.constant 0 : i32
    %c0_i32_0 = arith.constant 0 : i32
    %c0_i32_1 = arith.constant 0 : i32
    return %c0_i32, %c0_i32_0 : i32, i32
  }
  func.func @transform_15(%arg0: i32) -> (i32, i32) {
    %c0_i32 = arith.constant 0 : i32
    %c0_i32_0 = arith.constant 0 : i32
    %c0_i32_1 = arith.constant 0 : i32
    return %c0_i32, %c0_i32_0 : i32, i32
  }
  func.func @transform_16(%arg0: i32) -> (i32, i32) {
    %c0_i32 = arith.constant 0 : i32
    %c0_i32_0 = arith.constant 0 : i32
    %c0_i32_1 = arith.constant 0 : i32
    return %c0_i32, %c0_i32_0 : i32, i32
  }
  func.func @transform_17(%arg0: i32) -> (i32, i32) {
    %c0_i32 = arith.constant 0 : i32
    %c0_i32_0 = arith.constant 0 : i32
    %c0_i32_1 = arith.constant 0 : i32
    return %c0_i32, %c0_i32_0 : i32, i32
  }
  func.func @transform_18(%arg0: i32) -> (i32, i32) {
    %c0_i32 = arith.constant 0 : i32
    %c0_i32_0 = arith.constant 0 : i32
    %c0_i32_1 = arith.constant 0 : i32
    return %c0_i32, %c0_i32_0 : i32, i32
  }
  func.func @transform_19(%arg0: i32) -> (i32, i32) {
    %c0_i32 = arith.constant 0 : i32
    %c0_i32_0 = arith.constant 0 : i32
    %c0_i32_1 = arith.constant 0 : i32
    return %c0_i32, %c0_i32_0 : i32, i32
  }
  func.func @transform_20(%arg0: i32) -> (i32, i32) {
    %c0_i32 = arith.constant 0 : i32
    %c0_i32_0 = arith.constant 0 : i32
    %c0_i32_1 = arith.constant 0 : i32
    return %c0_i32, %c0_i32_0 : i32, i32
  }
  func.func @transform_21(%arg0: i32) -> (i32, i32) {
    %c0_i32 = arith.constant 0 : i32
    %c0_i32_0 = arith.constant 0 : i32
    %c0_i32_1 = arith.constant 0 : i32
    return %c0_i32, %c0_i32_0 : i32, i32
  }
  func.func @transform_22(%arg0: i32) -> (i32, i32) {
    %c0_i32 = arith.constant 0 : i32
    %c0_i32_0 = arith.constant 0 : i32
    %c0_i32_1 = arith.constant 0 : i32
    return %c0_i32, %c0_i32_0 : i32, i32
  }
  func.func @transform_23(%arg0: i32) -> (i32, i32) {
    %c0_i32 = arith.constant 0 : i32
    %c0_i32_0 = arith.constant 0 : i32
    %c0_i32_1 = arith.constant 0 : i32
    return %c0_i32, %c0_i32_0 : i32, i32
  }
  func.func @transform_24(%arg0: i32) -> (i32, i32) {
    %c0_i32 = arith.constant 0 : i32
    %c0_i32_0 = arith.constant 0 : i32
    %c0_i32_1 = arith.constant 0 : i32
    return %c0_i32, %c0_i32_0 : i32, i32
  }
  func.func @transform_25(%arg0: i32) -> (i32, i32) {
    %c0_i32 = arith.constant 0 : i32
    %c0_i32_0 = arith.constant 0 : i32
    %c0_i32_1 = arith.constant 0 : i32
    return %c0_i32, %c0_i32_0 : i32, i32
  }
  func.func @transform_26(%arg0: i32) -> (i32, i32) {
    %c0_i32 = arith.constant 0 : i32
    %c0_i32_0 = arith.constant 0 : i32
    %c0_i32_1 = arith.constant 0 : i32
    return %c0_i32, %c0_i32_0 : i32, i32
  }
  func.func @transform_27(%arg0: i32) -> (i32, i32) {
    %c0_i32 = arith.constant 0 : i32
    %c0_i32_0 = arith.constant 0 : i32
    %c0_i32_1 = arith.constant 0 : i32
    return %c0_i32, %c0_i32_0 : i32, i32
  }
  func.func @transform_28(%arg0: i32) -> (i32, i32) {
    %c0_i32 = arith.constant 0 : i32
    %c0_i32_0 = arith.constant 0 : i32
    %c0_i32_1 = arith.constant 0 : i32
    return %c0_i32, %c0_i32_0 : i32, i32
  }
  func.func @transform_29(%arg0: i32) -> (i32, i32) {
    %c0_i32 = arith.constant 0 : i32
    %c0_i32_0 = arith.constant 0 : i32
    %c0_i32_1 = arith.constant 0 : i32
    return %c0_i32, %c0_i32_0 : i32, i32
  }
  func.func @transform_30(%arg0: i32) -> (i32, i32) {
    %c0_i32 = arith.constant 0 : i32
    %c0_i32_0 = arith.constant 0 : i32
    %c0_i32_1 = arith.constant 0 : i32
    return %c0_i32, %c0_i32_0 : i32, i32
  }
  func.func @transform_31(%arg0: i32) -> (i32, i32) {
    %c0_i32 = arith.constant 0 : i32
    %c0_i32_0 = arith.constant 0 : i32
    %c0_i32_1 = arith.constant 0 : i32
    return %c0_i32, %c0_i32_0 : i32, i32
  }
  func.func @transform_32(%arg0: i32) -> (i32, i32) {
    %c0_i32 = arith.constant 0 : i32
    %c0_i32_0 = arith.constant 0 : i32
    %c0_i32_1 = arith.constant 0 : i32
    return %c0_i32, %c0_i32_0 : i32, i32
  }
  func.func @transform_33(%arg0: i32) -> (i32, i32) {
    %c0_i32 = arith.constant 0 : i32
    %c0_i32_0 = arith.constant 0 : i32
    %c0_i32_1 = arith.constant 0 : i32
    return %c0_i32, %c0_i32_0 : i32, i32
  }
  func.func @transform_34(%arg0: i32) -> (i32, i32) {
    %c0_i32 = arith.constant 0 : i32
    %c0_i32_0 = arith.constant 0 : i32
    %c0_i32_1 = arith.constant 0 : i32
    return %c0_i32, %c0_i32_0 : i32, i32
  }
}

module attributes {stable_mosaic.version = 11 : i64} {
  func.func @_dt2_kernel(%arg0: i32, %arg1: memref<72x128xbf16, #tpu.memory_space<vmem>>, %arg2: memref<128x256xbf16, #tpu.memory_space<vmem>>, %arg3: memref<1x256xf32, #tpu.memory_space<vmem>>, %arg4: memref<72x256xbf16, #tpu.memory_space<vmem>>) attributes {dimension_semantics = [#tpu.dimension_semantics<arbitrary>], iteration_bounds = array<i64: 1>, scalar_prefetch = 0 : i64, scratch_operands = 0 : i64, tpu.core_type = #tpu.core_type<tc>, window_params = [{pipeline_mode = #tpu.pipeline_mode<synchronous>, transform_indices = @transform_0, window_bounds = array<i64: 72, 128>}, {pipeline_mode = #tpu.pipeline_mode<synchronous>, transform_indices = @transform_1, window_bounds = array<i64: 128, 256>}, {pipeline_mode = #tpu.pipeline_mode<synchronous>, transform_indices = @transform_2, window_bounds = array<i64: 1, 256>}, {pipeline_mode = #tpu.pipeline_mode<synchronous>, transform_indices = @transform_3, window_bounds = array<i64: 72, 256>}]} {
    %c0 = arith.constant 0 : index
    %c0_0 = arith.constant 0 : index
    %0 = vector.load %arg1[%c0, %c0_0] : memref<72x128xbf16, #tpu.memory_space<vmem>>, vector<72x128xbf16>
    %c0_1 = arith.constant 0 : index
    %c0_2 = arith.constant 0 : index
    %1 = vector.load %arg2[%c0_1, %c0_2] : memref<128x256xbf16, #tpu.memory_space<vmem>>, vector<128x256xbf16>
    %cst = arith.constant dense<0.000000e+00> : vector<72x256xf32>
    %2 = tpu.matmul %0, %1, %cst {dimension_numbers = #tpu.dot_dimension_numbers<[1], [0], [0], [1], [0, 0, 1, 1], [], []>} : vector<72x128xbf16>, vector<128x256xbf16>, vector<72x256xf32> -> vector<72x256xf32>
    %c0_3 = arith.constant 0 : index
    %c0_4 = arith.constant 0 : index
    %3 = vector.load %arg3[%c0_3, %c0_4] : memref<1x256xf32, #tpu.memory_space<vmem>>, vector<1x256xf32>
    %4 = vector.broadcast %3 : vector<1x256xf32> to vector<72x256xf32>
    %5 = arith.addf %2, %4 : vector<72x256xf32>
    %cst_5 = arith.constant 0.000000e+00 : f32
    %6 = vector.broadcast %cst_5 : f32 to vector<72x256xf32>
    %7 = arith.cmpf ogt, %5, %6 : vector<72x256xf32>
    %cst_6 = arith.constant 0.00999999977 : f32
    %8 = vector.broadcast %cst_6 : f32 to vector<72x256xf32>
    %9 = arith.mulf %8, %5 : vector<72x256xf32>
    %10 = arith.select %7, %5, %9 : vector<72x256xi1>, vector<72x256xf32>
    %11 = arith.truncf %10 : vector<72x256xf32> to vector<72x256xbf16>
    %c0_7 = arith.constant 0 : index
    %c0_8 = arith.constant 0 : index
    %12 = vector.load %arg4[%c0_7, %c0_8] : memref<72x256xbf16, #tpu.memory_space<vmem>>, vector<72x256xbf16>
    tpu.vector_store %arg4[%c0_7, %c0_8], %11 {strides = array<i32>} : memref<72x256xbf16, #tpu.memory_space<vmem>>, vector<72x256xbf16>,
    return
  }
  func.func @transform_0(%arg0: i32) -> (i32, i32) {
    %c0_i32 = arith.constant 0 : i32
    %c0_i32_0 = arith.constant 0 : i32
    %c0_i32_1 = arith.constant 0 : i32
    return %c0_i32, %c0_i32_0 : i32, i32
  }
  func.func @transform_1(%arg0: i32) -> (i32, i32) {
    %c0_i32 = arith.constant 0 : i32
    %c0_i32_0 = arith.constant 0 : i32
    %c0_i32_1 = arith.constant 0 : i32
    return %c0_i32, %c0_i32_0 : i32, i32
  }
  func.func @transform_2(%arg0: i32) -> (i32, i32) {
    %c0_i32 = arith.constant 0 : i32
    %c0_i32_0 = arith.constant 0 : i32
    %c0_i32_1 = arith.constant 0 : i32
    return %c0_i32, %c0_i32_0 : i32, i32
  }
  func.func @transform_3(%arg0: i32) -> (i32, i32) {
    %c0_i32 = arith.constant 0 : i32
    %c0_i32_0 = arith.constant 0 : i32
    %c0_i32_1 = arith.constant 0 : i32
    return %c0_i32, %c0_i32_0 : i32, i32
  }
}

module attributes {stable_mosaic.version = 11 : i64} {
  func.func @kernel(%arg0: i32, %arg1: memref<24x256xbf16, #tpu.memory_space<vmem>>, %arg2: memref<256x1152xbf16, #tpu.memory_space<vmem>>, %arg3: memref<24x1xf32, #tpu.memory_space<vmem>>, %arg4: memref<24x1152xf32, #tpu.memory_space<vmem>>) attributes {dimension_semantics = [#tpu.dimension_semantics<parallel>], iteration_bounds = array<i64: 2>, scalar_prefetch = 0 : i64, scratch_operands = 0 : i64, tpu.core_type = #tpu.core_type<tc>, window_params = [{transform_indices = @transform_0, window_bounds = array<i64: 24, 256>}, {pipeline_mode = #tpu.pipeline_mode<synchronous>, transform_indices = @transform_1, window_bounds = array<i64: 256, 1152>}, {transform_indices = @transform_2, window_bounds = array<i64: 24, 1>}, {transform_indices = @transform_3, window_bounds = array<i64: 24, 1152>}]} {
    %c0 = arith.constant 0 : index
    %c0_0 = arith.constant 0 : index
    %0 = vector.load %arg1[%c0, %c0_0] : memref<24x256xbf16, #tpu.memory_space<vmem>>, vector<24x256xbf16>
    %c0_1 = arith.constant 0 : index
    %c0_2 = arith.constant 0 : index
    %1 = vector.load %arg2[%c0_1, %c0_2] : memref<256x1152xbf16, #tpu.memory_space<vmem>>, vector<256x1152xbf16>
    %cst = arith.constant dense<0.000000e+00> : vector<24x1152xf32>
    %2 = tpu.matmul %0, %1, %cst {dimension_numbers = #tpu.dot_dimension_numbers<[1], [0], [0], [1], [0, 0, 1, 1], [], []>} : vector<24x256xbf16>, vector<256x1152xbf16>, vector<24x1152xf32> -> vector<24x1152xf32>
    %c0_3 = arith.constant 0 : index
    %c0_4 = arith.constant 0 : index
    %3 = vector.load %arg3[%c0_3, %c0_4] : memref<24x1xf32, #tpu.memory_space<vmem>>, vector<24x1xf32>
    %4 = vector.broadcast %3 : vector<24x1xf32> to vector<24x1152xf32>
    %5 = arith.addf %2, %4 : vector<24x1152xf32>
    %6 = arith.negf %5 : vector<24x1152xf32>
    %7 = math.exp %6 : vector<24x1152xf32>
    %cst_5 = arith.constant 1.000000e+00 : f32
    %8 = vector.broadcast %cst_5 : f32 to vector<24x1152xf32>
    %9 = arith.addf %8, %7 : vector<24x1152xf32>
    %10 = arith.divf %8, %9 : vector<24x1152xf32>
    %c0_6 = arith.constant 0 : index
    %c0_7 = arith.constant 0 : index
    %11 = vector.load %arg4[%c0_6, %c0_7] : memref<24x1152xf32, #tpu.memory_space<vmem>>, vector<24x1152xf32>
    tpu.vector_store %arg4[%c0_6, %c0_7], %10 {strides = array<i32>} : memref<24x1152xf32, #tpu.memory_space<vmem>>, vector<24x1152xf32>,
    return
  }
  func.func @transform_0(%arg0: i32) -> (i32, i32) {
    %c0_i32 = arith.constant 0 : i32
    %c0_i32_0 = arith.constant 0 : i32
    return %arg0, %c0_i32 : i32, i32
  }
  func.func @transform_1(%arg0: i32) -> (i32, i32) {
    %c0_i32 = arith.constant 0 : i32
    %c0_i32_0 = arith.constant 0 : i32
    %c0_i32_1 = arith.constant 0 : i32
    return %c0_i32, %c0_i32_0 : i32, i32
  }
  func.func @transform_2(%arg0: i32) -> (i32, i32) {
    %c0_i32 = arith.constant 0 : i32
    %c0_i32_0 = arith.constant 0 : i32
    return %arg0, %c0_i32 : i32, i32
  }
  func.func @transform_3(%arg0: i32) -> (i32, i32) {
    %c0_i32 = arith.constant 0 : i32
    %c0_i32_0 = arith.constant 0 : i32
    return %arg0, %c0_i32 : i32, i32
  }
}

</mosaic_0001>

<llo_original>
// kernel: raw_image_vae_forward.4
$region0: #{raw_image_vae_forward.4}
  #allocation0 [shape = 'u32[]', space=smem, size = 0x4, offset = 0x4, fixed_abs, tag = 'smem constant byte address 0x4 - core index']
  #allocation1 [shape = 'u32[144,128]{1,0:T(1,128)}', space=vmem, size = 0x12000, scoped, tag = 'internal scratch']
  %s0 = inlined_call_operand.vmem [shape: bf16[16,768], index: 0, kind: input, shape index: {}]
  %s1 = inlined_call_operand.vmem [shape: bf16[768,896], index: 1, kind: input, shape index: {}]
  %s2 = inlined_call_operand.vmem [shape: f32[16,1], index: 2, kind: input, shape index: {}]
  %s3 = inlined_call_operand.vmem [shape: f32[16,896], index: 3, kind: output, shape index: {}]
  %s4 = sld [smem:[#allocation0]]
  $region45: #{raw_image_vae_forward.4} parent=0
    _
  %s6 = ssub.s32 1, %s4
  %s7 = scalar_select 0, %s6, %s4
  loop: start=0, step=1, limit=4
  $region2: #{raw_image_vae_forward.4} parent=0 // loop_pre_header
    _
  $region3: #{raw_image_vae_forward.4} parent=0 // loop_header
    %s9 = sphi 0, %s13
    %p10 = scmp.ge.s32.totalorder %s9, 4
    %s19 = sphi 0, %s21
    %s22 = sphi 0, %s19
    %s23 = sphi 0, %s22
    %s39 = sphi 0, %s23
    %s43 = sphi 0, %s43
    %s45 = sphi 0, %s43
    %s46 = sphi 0, %s45
    %s60 = sphi 0, %s46
    %s66 = sphi 0, %s68
    %s69 = sphi 0, %s66
    %s70 = sphi 0, %s69
    %s86 = sphi 0, %s70
    %s92 = sphi 0, %s94
    %s95 = sphi 0, %s92
    %s96 = sphi 0, %s95
    %s112 = sphi 0, %s96
  $region4: #{raw_image_vae_forward.4} parent=0 // loop_header_branch
    %12 = sbr.rel (%p10) target = $region8
  $region5: #{raw_image_vae_forward.4} parent=0 // loop_body
    %s14 = ssub.s32 %s9, 1
    %s15 = ssub.s32 %s9, 2
    %s16 = sadd.s32 %s9, 1
    %s17 = ssub.s32 %s9, %s16
    %p18 = scmp.eq.s32.totalorder %s17, 0
    %s20 = sadd.s32 %s19, 1
    %s21 = scalar_select %p18, %s19, %s20
    %p24 = pneg %p18
    %p25 = scmp.eq.s32.totalorder %s9, 1
    %p26 = por %p24, %p25
    %p27 = scmp.ne.s32.totalorder %s19, %s22
    %p28 = scmp.eq.s32.totalorder %s9, 0
    %p29 = por %p27, %p28
    %p30 = scmp.ne.s32.totalorder %s19, %s22
    %p31 = scmp.eq.s32.totalorder %s14, 1
    %p32 = por %p30, %p31
    %p33 = scmp.ne.s32.totalorder %s22, %s23
    %p34 = scmp.eq.s32.totalorder %s14, 0
    %p35 = por %p33, %p34
    %p36 = scmp.ne.s32.totalorder %s22, %s23
    %p37 = scmp.eq.s32.totalorder %s15, 1
    %p38 = por %p36, %p37
    %p40 = scmp.ne.s32.totalorder %s23, %s39
    %p41 = scmp.eq.s32.totalorder %s15, 0
    %p42 = por %p40, %p41
    %s44 = sadd.s32 %s43, 1
    %p47 = scmp.eq.s32.totalorder %s9, 1
    %p48 = scmp.ne.s32.totalorder %s43, %s45
    %p49 = scmp.eq.s32.totalorder %s9, 0
    %p50 = por %p48, %p49
    %p51 = scmp.ne.s32.totalorder %s43, %s45
    %p52 = scmp.eq.s32.totalorder %s14, 1
    %p53 = por %p51, %p52
    %p54 = scmp.ne.s32.totalorder %s45, %s46
    %p55 = scmp.eq.s32.totalorder %s14, 0
    %p56 = por %p54, %p55
    %p57 = scmp.ne.s32.totalorder %s45, %s46
    %p58 = scmp.eq.s32.totalorder %s15, 1
    %p59 = por %p57, %p58
    %p61 = scmp.ne.s32.totalorder %s46, %s60
    %p62 = scmp.eq.s32.totalorder %s15, 0
    %p63 = por %p61, %p62
    %s64 = ssub.s32 %s9, %s16
    %p65 = scmp.eq.s32.totalorder %s64, 0
    %s67 = sadd.s32 %s66, 1
    %s68 = scalar_select %p65, %s66, %s67
    %p71 = pneg %p65
    %p72 = scmp.eq.s32.totalorder %s9, 1
    %p73 = por %p71, %p72
    %p74 = scmp.ne.s32.totalorder %s66, %s69
    %p75 = scmp.eq.s32.totalorder %s9, 0
    %p76 = por %p74, %p75
    %p77 = scmp.ne.s32.totalorder %s66, %s69
    %p78 = scmp.eq.s32.totalorder %s14, 1
    %p79 = por %p77, %p78
    %p80 = scmp.ne.s32.totalorder %s69, %s70
    %p81 = scmp.eq.s32.totalorder %s14, 0
    %p82 = por %p80, %p81
    %p83 = scmp.ne.s32.totalorder %s69, %s70
    %p84 = scmp.eq.s32.totalorder %s15, 1
    %p85 = por %p83, %p84
    %p87 = scmp.ne.s32.totalorder %s70, %s86
    %p88 = scmp.eq.s32.totalorder %s15, 0
    %p89 = por %p87, %p88
    %s90 = ssub.s32 %s9, %s16
    %p91 = scmp.eq.s32.totalorder %s90, 0
    %s93 = sadd.s32 %s92, 1
    %s94 = scalar_select %p91, %s92, %s93
    %p97 = pneg %p91
    %p98 = scmp.eq.s32.totalorder %s9, 1
    %p99 = por %p97, %p98
    %p100 = scmp.ne.s32.totalorder %s92, %s95
    %p101 = scmp.eq.s32.totalorder %s9, 0
    %p102 = por %p100, %p101
    %p103 = scmp.ne.s32.totalorder %s92, %s95
    %p104 = scmp.eq.s32.totalorder %s14, 1
    %p105 = por %p103, %p104
    %p106 = scmp.ne.s32.totalorder %s95, %s96
    %p107 = scmp.eq.s32.totalorder %s14, 0
    %p108 = por %p106, %p107
    %p109 = scmp.ne.s32.totalorder %s95, %s96
    %p110 = scmp.eq.s32.totalorder %s15, 1
    %p111 = por %p109, %p110
    %p113 = scmp.ne.s32.totalorder %s96, %s112
    %p114 = scmp.eq.s32.totalorder %s15, 0
    %p115 = por %p113, %p114
    %p116 = scmp.le.s32.totalorder 1, %s9
    %p117 = scmp.lt.s32.totalorder %s9, 3
    %p118 = pnand %p116, %p117
    %p119 = pneg %p118
    // Predicated region
    $region9: #{raw_image_vae_forward.4} parent=5 // pred_check
      _
    $region10: #{raw_image_vae_forward.4} parent=5 // pred_check_branch
      %121 = sbr.rel (%p118) target = $region12
    $region11: #{raw_image_vae_forward.4} parent=5 // pred_region
      %s122 = ssub.s32 %s9, 1
      // Predicated region
      $region13: #{raw_image_vae_forward.4} parent=11 // pred_check
        %p123 = pneg %p56
      $region14: #{raw_image_vae_forward.4} parent=11 // pred_check_branch
        %125 = sbr.rel (%p123) target = $region16
      $region15: #{raw_image_vae_forward.4} parent=11 // pred_region
        _
      $region16: #{raw_image_vae_forward.4} parent=11 // pred_fallthru
        _
    $region12: #{raw_image_vae_forward.4} parent=5 // pred_fallthru
      _
    %p126 = scmp.lt.s32.totalorder %s9, 2
    // Predicated region
    $region17: #{raw_image_vae_forward.4} parent=5 // pred_check
      %p127 = pneg %p126
    $region18: #{raw_image_vae_forward.4} parent=5 // pred_check_branch
      %129 = sbr.rel (%p127) target = $region20
    $region19: #{raw_image_vae_forward.4} parent=5 // pred_region
      // Predicated region
      $region21: #{raw_image_vae_forward.4} parent=19 // pred_check
        %p130 = pneg %p29
      $region22: #{raw_image_vae_forward.4} parent=19 // pred_check_branch
        %132 = sbr.rel (%p130) target = $region24
      $region23: #{raw_image_vae_forward.4} parent=19 // pred_region
        %p133 = scmp.lt.s32.totalorder %s9, 1
        %s134 = scalar_select %p133, %s9, 1
        %s135 = smul.addr %s134, 6
        %s136 = smul.addr %s135, 4
        %s137 = scalar_lea.vmem %s0, %s136
      $region24: #{raw_image_vae_forward.4} parent=19 // pred_fallthru
        _
      // Predicated region
      $region25: #{raw_image_vae_forward.4} parent=19 // pred_check
        %p138 = pneg %p76
      $region26: #{raw_image_vae_forward.4} parent=19 // pred_check_branch
        %140 = sbr.rel (%p138) target = $region28
      $region27: #{raw_image_vae_forward.4} parent=19 // pred_region
        %p141 = scmp.lt.s32.totalorder %s9, 1
        %s142 = scalar_select %p141, %s9, 1
        %s143 = smul.addr %s142, 8
        %s144 = scalar_lea.vmem %s2, %s143
      $region28: #{raw_image_vae_forward.4} parent=19 // pred_fallthru
        _
    $region20: #{raw_image_vae_forward.4} parent=5 // pred_fallthru
      _
    %p145 = scmp.le.s32.totalorder 1, %s9
    %p146 = scmp.lt.s32.totalorder %s9, 3
    %p147 = pnand %p145, %p146
    %p148 = pneg %p147
    // Predicated region
    $region29: #{raw_image_vae_forward.4} parent=5 // pred_check
      _
    $region30: #{raw_image_vae_forward.4} parent=5 // pred_check_branch
      %150 = sbr.rel (%p147) target = $region32
    $region31: #{raw_image_vae_forward.4} parent=5 // pred_region
      %s151 = ssub.s32 %s9, 1
      %p152 = scmp.lt.s32.totalorder %s14, 1
      %s153 = scalar_select %p152, %s14, 1
      %s154 = smul.addr %s153, 6
      %s155 = smul.addr %s154, 4
      %s156 = scalar_lea.vmem %s0, %s155
      %p157 = pneg %p35
      %p158 = pneg %p32
      %p159 = pneg %p56
      %p160 = pneg %p53
      %p161 = scmp.lt.s32.totalorder %s14, 1
      %s162 = scalar_select %p161, %s14, 1
      %s163 = smul.addr %s162, 8
      %s164 = scalar_lea.vmem %s2, %s163
      %p165 = pneg %p82
      %p166 = pneg %p79
      %p167 = pneg %p108
      %p168 = pneg %p105
      %p169 = scmp.lt.s32.totalorder %s14, 1
      %s170 = scalar_select %p169, %s14, 1
      %s171 = smul.addr %s170, 7
      %s172 = smul.addr %s171, 8
      %s173 = scalar_lea.vmem %s3, %s172
      %p174 = scmp.lt.s32.totalorder %s14, 1
      %s175 = scalar_select %p174, %s14, 1
      %s176 = smul.addr %s175, 6
      %s177 = smul.addr %s176, 4
      %s178 = scalar_lea.vmem %s0, %s177
      %p179 = scmp.lt.s32.totalorder %s14, 1
      %s180 = scalar_select %p179, %s14, 1
      %s181 = smul.addr %s180, 8
      %s182 = scalar_lea.vmem %s2, %s181
      %p183 = scmp.lt.s32.totalorder %s14, 1
      %s184 = scalar_select %p183, %s14, 1
      %s185 = smul.addr %s184, 7
      %s186 = smul.addr %s185, 8
      %s187 = scalar_lea.vmem %s3, %s186
      %v189 = vld [vmem:[%s178] sm:$0xff]
      %v190 = vld [vmem:[%s178 + $0x8] sm:$0xff]
      %v191 = vld [vmem:[%s178 + $0x10] sm:$0xff]
      %v192 = vld [vmem:[%s1] sm:$0xff]
      %v193 = vld [vmem:[%s1 + $0x8] sm:$0xff]
      %v194 = vld [vmem:[%s1 + $0x10] sm:$0xff]
      %v195 = vld [vmem:[%s1 + $0x18] sm:$0xf]
      %v196 = vld [vmem:[%s1 + $0x1c] sm:$0xff]
      %v197 = vld [vmem:[%s1 + $0x24] sm:$0xff]
      %v198 = vld [vmem:[%s1 + $0x2c] sm:$0xff]
      %v199 = vld [vmem:[%s1 + $0x34] sm:$0xf]
      %v200 = vld [vmem:[%s1 + $0x38] sm:$0xff]
      %v201 = vld [vmem:[%s1 + $0x40] sm:$0xff]
      %v202 = vld [vmem:[%s1 + $0x48] sm:$0xff]
      %v203 = vld [vmem:[%s1 + $0x50] sm:$0xf]
      %v204 = vld [vmem:[%s1 + $0x54] sm:$0xff]
      %v205 = vld [vmem:[%s1 + $0x5c] sm:$0xff]
      %v206 = vld [vmem:[%s1 + $0x64] sm:$0xff]
      %v207 = vld [vmem:[%s1 + $0x6c] sm:$0xf]
      %v208 = vld [vmem:[%s1 + $0x70] sm:$0xff]
      %v209 = vld [vmem:[%s1 + $0x78] sm:$0xff]
      %v210 = vld [vmem:[%s1 + $0x80] sm:$0xff]
      %v211 = vld [vmem:[%s1 + $0x88] sm:$0xf]
      %v212 = vld [vmem:[%s1 + $0x8c] sm:$0xff]
      %v213 = vld [vmem:[%s1 + $0x94] sm:$0xff]
      %v214 = vld [vmem:[%s1 + $0x9c] sm:$0xff]
      %v215 = vld [vmem:[%s1 + $0xa4] sm:$0xf]
      %v216 = vld [vmem:[%s1 + $0xa8] sm:$0xff]
      %v217 = vld [vmem:[%s1 + $0xb0] sm:$0xff]
      %v218 = vld [vmem:[%s1 + $0xb8] sm:$0xff]
      %v219 = vld [vmem:[%s1 + $0xc0] sm:$0xf]
      %v220 = vld [vmem:[%s1 + $0xc4] sm:$0xff]
      %v221 = vld [vmem:[%s1 + $0xcc] sm:$0xff]
      %v222 = vld [vmem:[%s1 + $0xd4] sm:$0xff]
      %v223 = vld [vmem:[%s1 + $0xdc] sm:$0xf]
      %v224 = vld [vmem:[%s1 + $0xe0] sm:$0xff]
      %v225 = vld [vmem:[%s1 + $0xe8] sm:$0xff]
      %v226 = vld [vmem:[%s1 + $0xf0] sm:$0xff]
      %v227 = vld [vmem:[%s1 + $0xf8] sm:$0xf]
      %v228 = vld [vmem:[%s1 + $0xfc] sm:$0xff]
      %v229 = vld [vmem:[%s1 + $0x104] sm:$0xff]
      %v230 = vld [vmem:[%s1 + $0x10c] sm:$0xff]
      %v231 = vld [vmem:[%s1 + $0x114] sm:$0xf]
      %v232 = vld [vmem:[%s1 + $0x118] sm:$0xff]
      %v233 = vld [vmem:[%s1 + $0x120] sm:$0xff]
      %v234 = vld [vmem:[%s1 + $0x128] sm:$0xff]
      %v235 = vld [vmem:[%s1 + $0x130] sm:$0xf]
      %v236 = vld [vmem:[%s1 + $0x134] sm:$0xff]
      %v237 = vld [vmem:[%s1 + $0x13c] sm:$0xff]
      %v238 = vld [vmem:[%s1 + $0x144] sm:$0xff]
      %v239 = vld [vmem:[%s1 + $0x14c] sm:$0xf]
      %v240 = vld [vmem:[%s1 + $0x150] sm:$0xff]
      %v241 = vld [vmem:[%s1 + $0x158] sm:$0xff]
      %v242 = vld [vmem:[%s1 + $0x160] sm:$0xff]
      %v243 = vld [vmem:[%s1 + $0x168] sm:$0xf]
      %v244 = vld [vmem:[%s1 + $0x16c] sm:$0xff]
      %v245 = vld [vmem:[%s1 + $0x174] sm:$0xff]
      %v246 = vld [vmem:[%s1 + $0x17c] sm:$0xff]
      %v247 = vld [vmem:[%s1 + $0x184] sm:$0xf]
      %v248 = vld [vmem:[%s1 + $0x188] sm:$0xff]
      %v249 = vld [vmem:[%s1 + $0x190] sm:$0xff]
      %v250 = vld [vmem:[%s1 + $0x198] sm:$0xff]
      %v251 = vld [vmem:[%s1 + $0x1a0] sm:$0xf]
      %v252 = vld [vmem:[%s1 + $0x1a4] sm:$0xff]
      %v253 = vld [vmem:[%s1 + $0x1ac] sm:$0xff]
      %v254 = vld [vmem:[%s1 + $0x1b4] sm:$0xff]
      %v255 = vld [vmem:[%s1 + $0x1bc] sm:$0xf]
      %v256 = vld [vmem:[%s1 + $0x1c0] sm:$0xff]
      %v257 = vld [vmem:[%s1 + $0x1c8] sm:$0xff]
      %v258 = vld [vmem:[%s1 + $0x1d0] sm:$0xff]
      %v259 = vld [vmem:[%s1 + $0x1d8] sm:$0xf]
      %v260 = vld [vmem:[%s1 + $0x1dc] sm:$0xff]
      %v261 = vld [vmem:[%s1 + $0x1e4] sm:$0xff]
      %v262 = vld [vmem:[%s1 + $0x1ec] sm:$0xff]
      %v263 = vld [vmem:[%s1 + $0x1f4] sm:$0xf]
      %v264 = vld [vmem:[%s1 + $0x1f8] sm:$0xff]
      %v265 = vld [vmem:[%s1 + $0x200] sm:$0xff]
      %v266 = vld [vmem:[%s1 + $0x208] sm:$0xff]
      %v267 = vld [vmem:[%s1 + $0x210] sm:$0xf]
      %v268 = vld [vmem:[%s1 + $0x214] sm:$0xff]
      %v269 = vld [vmem:[%s1 + $0x21c] sm:$0xff]
      %v270 = vld [vmem:[%s1 + $0x224] sm:$0xff]
      %v271 = vld [vmem:[%s1 + $0x22c] sm:$0xf]
      %v272 = vld [vmem:[%s1 + $0x230] sm:$0xff]
      %v273 = vld [vmem:[%s1 + $0x238] sm:$0xff]
      %v274 = vld [vmem:[%s1 + $0x240] sm:$0xff]
      %v275 = vld [vmem:[%s1 + $0x248] sm:$0xf]
      %v276 = vld [vmem:[%s1 + $0x24c] sm:$0xff]
      %v277 = vld [vmem:[%s1 + $0x254] sm:$0xff]
      %v278 = vld [vmem:[%s1 + $0x25c] sm:$0xff]
      %v279 = vld [vmem:[%s1 + $0x264] sm:$0xf]
      %v280 = vld [vmem:[%s1 + $0x268] sm:$0xff]
      %v281 = vld [vmem:[%s1 + $0x270] sm:$0xff]
      %v282 = vld [vmem:[%s1 + $0x278] sm:$0xff]
      %v283 = vld [vmem:[%s1 + $0x280] sm:$0xf]
      %v284 = vld [vmem:[%s1 + $0x284] sm:$0xff]
      %v285 = vld [vmem:[%s1 + $0x28c] sm:$0xff]
      %v286 = vld [vmem:[%s1 + $0x294] sm:$0xff]
      %v287 = vld [vmem:[%s1 + $0x29c] sm:$0xf]
      %v288 = vld [vmem:[%s1 + $0x2a0] sm:$0xff]
      %v289 = vld [vmem:[%s1 + $0x2a8] sm:$0xff]
      %v290 = vld [vmem:[%s1 + $0x2b0] sm:$0xff]
      %v291 = vld [vmem:[%s1 + $0x2b8] sm:$0xf]
      %v292 = vld [vmem:[%s1 + $0x2bc] sm:$0xff]
      %v293 = vld [vmem:[%s1 + $0x2c4] sm:$0xff]
      %v294 = vld [vmem:[%s1 + $0x2cc] sm:$0xff]
      %v295 = vld [vmem:[%s1 + $0x2d4] sm:$0xf]
      %v296 = vld [vmem:[%s1 + $0x2d8] sm:$0xff]
      %v297 = vld [vmem:[%s1 + $0x2e0] sm:$0xff]
      %v298 = vld [vmem:[%s1 + $0x2e8] sm:$0xff]
      %v299 = vld [vmem:[%s1 + $0x2f0] sm:$0xf]
      %v300 = vld [vmem:[%s1 + $0x2f4] sm:$0xff]
      %v301 = vld [vmem:[%s1 + $0x2fc] sm:$0xff]
      %v302 = vld [vmem:[%s1 + $0x304] sm:$0xff]
      %v303 = vld [vmem:[%s1 + $0x30c] sm:$0xf]
      %v304 = vld [vmem:[%s1 + $0x310] sm:$0xff]
      %v305 = vld [vmem:[%s1 + $0x318] sm:$0xff]
      %v306 = vld [vmem:[%s1 + $0x320] sm:$0xff]
      %v307 = vld [vmem:[%s1 + $0x328] sm:$0xf]
      %v308 = vld [vmem:[%s1 + $0x32c] sm:$0xff]
      %v309 = vld [vmem:[%s1 + $0x334] sm:$0xff]
      %v310 = vld [vmem:[%s1 + $0x33c] sm:$0xff]
      %v311 = vld [vmem:[%s1 + $0x344] sm:$0xf]
      %v312 = vld [vmem:[%s1 + $0x348] sm:$0xff]
      %v313 = vld [vmem:[%s1 + $0x350] sm:$0xff]
      %v314 = vld [vmem:[%s1 + $0x358] sm:$0xff]
      %v315 = vld [vmem:[%s1 + $0x360] sm:$0xf]
      %v316 = vld [vmem:[%s1 + $0x364] sm:$0xff]
      %v317 = vld [vmem:[%s1 + $0x36c] sm:$0xff]
      %v318 = vld [vmem:[%s1 + $0x374] sm:$0xff]
      %v319 = vld [vmem:[%s1 + $0x37c] sm:$0xf]
      %v320 = vld [vmem:[%s1 + $0x380] sm:$0xff]
      %v321 = vld [vmem:[%s1 + $0x388] sm:$0xff]
      %v322 = vld [vmem:[%s1 + $0x390] sm:$0xff]
      %v323 = vld [vmem:[%s1 + $0x398] sm:$0xf]
      %v324 = vld [vmem:[%s1 + $0x39c] sm:$0xff]
      %v325 = vld [vmem:[%s1 + $0x3a4] sm:$0xff]
      %v326 = vld [vmem:[%s1 + $0x3ac] sm:$0xff]
      %v327 = vld [vmem:[%s1 + $0x3b4] sm:$0xf]
      %v328 = vld [vmem:[%s1 + $0x3b8] sm:$0xff]
      %v329 = vld [vmem:[%s1 + $0x3c0] sm:$0xff]
      %v330 = vld [vmem:[%s1 + $0x3c8] sm:$0xff]
      %v331 = vld [vmem:[%s1 + $0x3d0] sm:$0xf]
      %v332 = vld [vmem:[%s1 + $0x3d4] sm:$0xff]
      %v333 = vld [vmem:[%s1 + $0x3dc] sm:$0xff]
      %v334 = vld [vmem:[%s1 + $0x3e4] sm:$0xff]
      %v335 = vld [vmem:[%s1 + $0x3ec] sm:$0xf]
      %v336 = vld [vmem:[%s1 + $0x3f0] sm:$0xff]
      %v337 = vld [vmem:[%s1 + $0x3f8] sm:$0xff]
      %v338 = vld [vmem:[%s1 + $0x400] sm:$0xff]
      %v339 = vld [vmem:[%s1 + $0x408] sm:$0xf]
      %v340 = vld [vmem:[%s1 + $0x40c] sm:$0xff]
      %v341 = vld [vmem:[%s1 + $0x414] sm:$0xff]
      %v342 = vld [vmem:[%s1 + $0x41c] sm:$0xff]
      %v343 = vld [vmem:[%s1 + $0x424] sm:$0xf]
      %v344 = vld [vmem:[%s1 + $0x428] sm:$0xff]
      %v345 = vld [vmem:[%s1 + $0x430] sm:$0xff]
      %v346 = vld [vmem:[%s1 + $0x438] sm:$0xff]
      %v347 = vld [vmem:[%s1 + $0x440] sm:$0xf]
      %v348 = vld [vmem:[%s1 + $0x444] sm:$0xff]
      %v349 = vld [vmem:[%s1 + $0x44c] sm:$0xff]
      %v350 = vld [vmem:[%s1 + $0x454] sm:$0xff]
      %v351 = vld [vmem:[%s1 + $0x45c] sm:$0xf]
      %v352 = vld [vmem:[%s1 + $0x460] sm:$0xff]
      %v353 = vld [vmem:[%s1 + $0x468] sm:$0xff]
      %v354 = vld [vmem:[%s1 + $0x470] sm:$0xff]
      %v355 = vld [vmem:[%s1 + $0x478] sm:$0xf]
      %v356 = vld [vmem:[%s1 + $0x47c] sm:$0xff]
      %v357 = vld [vmem:[%s1 + $0x484] sm:$0xff]
      %v358 = vld [vmem:[%s1 + $0x48c] sm:$0xff]
      %v359 = vld [vmem:[%s1 + $0x494] sm:$0xf]
      %v360 = vld [vmem:[%s1 + $0x498] sm:$0xff]
      %v361 = vld [vmem:[%s1 + $0x4a0] sm:$0xff]
      %v362 = vld [vmem:[%s1 + $0x4a8] sm:$0xff]
      %v363 = vld [vmem:[%s1 + $0x4b0] sm:$0xf]
      %v364 = vld [vmem:[%s1 + $0x4b4] sm:$0xff]
      %v365 = vld [vmem:[%s1 + $0x4bc] sm:$0xff]
      %v366 = vld [vmem:[%s1 + $0x4c4] sm:$0xff]
      %v367 = vld [vmem:[%s1 + $0x4cc] sm:$0xf]
      %v368 = vld [vmem:[%s1 + $0x4d0] sm:$0xff]
      %v369 = vld [vmem:[%s1 + $0x4d8] sm:$0xff]
      %v370 = vld [vmem:[%s1 + $0x4e0] sm:$0xff]
      %v371 = vld [vmem:[%s1 + $0x4e8] sm:$0xf]
      %v372 = vld [vmem:[%s1 + $0x4ec] sm:$0xff]
      %v373 = vld [vmem:[%s1 + $0x4f4] sm:$0xff]
      %v374 = vld [vmem:[%s1 + $0x4fc] sm:$0xff]
      %v375 = vld [vmem:[%s1 + $0x504] sm:$0xf]
      %v376 = vld [vmem:[%s1 + $0x508] sm:$0xff]
      %v377 = vld [vmem:[%s1 + $0x510] sm:$0xff]
      %v378 = vld [vmem:[%s1 + $0x518] sm:$0xff]
      %v379 = vld [vmem:[%s1 + $0x520] sm:$0xf]
      %v380 = vld [vmem:[%s1 + $0x524] sm:$0xff]
      %v381 = vld [vmem:[%s1 + $0x52c] sm:$0xff]
      %v382 = vld [vmem:[%s1 + $0x534] sm:$0xff]
      %v383 = vld [vmem:[%s1 + $0x53c] sm:$0xf]
      %v384 = vld [vmem:[%s1 + $0x540] sm:$0xff]
      %v385 = vld [vmem:[%s1 + $0x548] sm:$0xff]
      %v386 = vld [vmem:[%s1 + $0x550] sm:$0xff]
      %v387 = vld [vmem:[%s1 + $0x558] sm:$0xf]
      %v388 = vld [vmem:[%s1 + $0x55c] sm:$0xff]
      %v389 = vld [vmem:[%s1 + $0x564] sm:$0xff]
      %v390 = vld [vmem:[%s1 + $0x56c] sm:$0xff]
      %v391 = vld [vmem:[%s1 + $0x574] sm:$0xf]
      %v392 = vld [vmem:[%s1 + $0x578] sm:$0xff]
      %v393 = vld [vmem:[%s1 + $0x580] sm:$0xff]
      %v394 = vld [vmem:[%s1 + $0x588] sm:$0xff]
      %v395 = vld [vmem:[%s1 + $0x590] sm:$0xf]
      %v396 = vld [vmem:[%s1 + $0x594] sm:$0xff]
      %v397 = vld [vmem:[%s1 + $0x59c] sm:$0xff]
      %v398 = vld [vmem:[%s1 + $0x5a4] sm:$0xff]
      %v399 = vld [vmem:[%s1 + $0x5ac] sm:$0xf]
      %v400 = vld [vmem:[%s1 + $0x5b0] sm:$0xff]
      %v401 = vld [vmem:[%s1 + $0x5b8] sm:$0xff]
      %v402 = vld [vmem:[%s1 + $0x5c0] sm:$0xff]
      %v403 = vld [vmem:[%s1 + $0x5c8] sm:$0xf]
      %v404 = vld [vmem:[%s1 + $0x5cc] sm:$0xff]
      %v405 = vld [vmem:[%s1 + $0x5d4] sm:$0xff]
      %v406 = vld [vmem:[%s1 + $0x5dc] sm:$0xff]
      %v407 = vld [vmem:[%s1 + $0x5e4] sm:$0xf]
      %v408 = vld [vmem:[%s1 + $0x5e8] sm:$0xff]
      %v409 = vld [vmem:[%s1 + $0x5f0] sm:$0xff]
      %v410 = vld [vmem:[%s1 + $0x5f8] sm:$0xff]
      %v411 = vld [vmem:[%s1 + $0x600] sm:$0xf]
      %v412 = vld [vmem:[%s1 + $0x604] sm:$0xff]
      %v413 = vld [vmem:[%s1 + $0x60c] sm:$0xff]
      %v414 = vld [vmem:[%s1 + $0x614] sm:$0xff]
      %v415 = vld [vmem:[%s1 + $0x61c] sm:$0xf]
      %v416 = vld [vmem:[%s1 + $0x620] sm:$0xff]
      %v417 = vld [vmem:[%s1 + $0x628] sm:$0xff]
      %v418 = vld [vmem:[%s1 + $0x630] sm:$0xff]
      %v419 = vld [vmem:[%s1 + $0x638] sm:$0xf]
      %v420 = vld [vmem:[%s1 + $0x63c] sm:$0xff]
      %v421 = vld [vmem:[%s1 + $0x644] sm:$0xff]
      %v422 = vld [vmem:[%s1 + $0x64c] sm:$0xff]
      %v423 = vld [vmem:[%s1 + $0x654] sm:$0xf]
      %v424 = vld [vmem:[%s1 + $0x658] sm:$0xff]
      %v425 = vld [vmem:[%s1 + $0x660] sm:$0xff]
      %v426 = vld [vmem:[%s1 + $0x668] sm:$0xff]
      %v427 = vld [vmem:[%s1 + $0x670] sm:$0xf]
      %v428 = vld [vmem:[%s1 + $0x674] sm:$0xff]
      %v429 = vld [vmem:[%s1 + $0x67c] sm:$0xff]
      %v430 = vld [vmem:[%s1 + $0x684] sm:$0xff]
      %v431 = vld [vmem:[%s1 + $0x68c] sm:$0xf]
      %v432 = vld [vmem:[%s1 + $0x690] sm:$0xff]
      %v433 = vld [vmem:[%s1 + $0x698] sm:$0xff]
      %v434 = vld [vmem:[%s1 + $0x6a0] sm:$0xff]
      %v435 = vld [vmem:[%s1 + $0x6a8] sm:$0xf]
      %v436 = vld [vmem:[%s1 + $0x6ac] sm:$0xff]
      %v437 = vld [vmem:[%s1 + $0x6b4] sm:$0xff]
      %v438 = vld [vmem:[%s1 + $0x6bc] sm:$0xff]
      %v439 = vld [vmem:[%s1 + $0x6c4] sm:$0xf]
      %v440 = vld [vmem:[%s1 + $0x6c8] sm:$0xff]
      %v441 = vld [vmem:[%s1 + $0x6d0] sm:$0xff]
      %v442 = vld [vmem:[%s1 + $0x6d8] sm:$0xff]
      %v443 = vld [vmem:[%s1 + $0x6e0] sm:$0xf]
      %v444 = vld [vmem:[%s1 + $0x6e4] sm:$0xff]
      %v445 = vld [vmem:[%s1 + $0x6ec] sm:$0xff]
      %v446 = vld [vmem:[%s1 + $0x6f4] sm:$0xff]
      %v447 = vld [vmem:[%s1 + $0x6fc] sm:$0xf]
      %v448 = vld [vmem:[%s1 + $0x700] sm:$0xff]
      %v449 = vld [vmem:[%s1 + $0x708] sm:$0xff]
      %v450 = vld [vmem:[%s1 + $0x710] sm:$0xff]
      %v451 = vld [vmem:[%s1 + $0x718] sm:$0xf]
      %v452 = vld [vmem:[%s1 + $0x71c] sm:$0xff]
      %v453 = vld [vmem:[%s1 + $0x724] sm:$0xff]
      %v454 = vld [vmem:[%s1 + $0x72c] sm:$0xff]
      %v455 = vld [vmem:[%s1 + $0x734] sm:$0xf]
      %v456 = vld [vmem:[%s1 + $0x738] sm:$0xff]
      %v457 = vld [vmem:[%s1 + $0x740] sm:$0xff]
      %v458 = vld [vmem:[%s1 + $0x748] sm:$0xff]
      %v459 = vld [vmem:[%s1 + $0x750] sm:$0xf]
      %v460 = vld [vmem:[%s1 + $0x754] sm:$0xff]
      %v461 = vld [vmem:[%s1 + $0x75c] sm:$0xff]
      %v462 = vld [vmem:[%s1 + $0x764] sm:$0xff]
      %v463 = vld [vmem:[%s1 + $0x76c] sm:$0xf]
      %v464 = vld [vmem:[%s1 + $0x770] sm:$0xff]
      %v465 = vld [vmem:[%s1 + $0x778] sm:$0xff]
      %v466 = vld [vmem:[%s1 + $0x780] sm:$0xff]
      %v467 = vld [vmem:[%s1 + $0x788] sm:$0xf]
      %v468 = vld [vmem:[%s1 + $0x78c] sm:$0xff]
      %v469 = vld [vmem:[%s1 + $0x794] sm:$0xff]
      %v470 = vld [vmem:[%s1 + $0x79c] sm:$0xff]
      %v471 = vld [vmem:[%s1 + $0x7a4] sm:$0xf]
      %v472 = vld [vmem:[%s1 + $0x7a8] sm:$0xff]
      %v473 = vld [vmem:[%s1 + $0x7b0] sm:$0xff]
      %v474 = vld [vmem:[%s1 + $0x7b8] sm:$0xff]
      %v475 = vld [vmem:[%s1 + $0x7c0] sm:$0xf]
      %v476 = vld [vmem:[%s1 + $0x7c4] sm:$0xff]
      %v477 = vld [vmem:[%s1 + $0x7cc] sm:$0xff]
      %v478 = vld [vmem:[%s1 + $0x7d4] sm:$0xff]
      %v479 = vld [vmem:[%s1 + $0x7dc] sm:$0xf]
      %v480 = vld [vmem:[%s1 + $0x7e0] sm:$0xff]
      %v481 = vld [vmem:[%s1 + $0x7e8] sm:$0xff]
      %v482 = vld [vmem:[%s1 + $0x7f0] sm:$0xff]
      %v483 = vld [vmem:[%s1 + $0x7f8] sm:$0xf]
      %v484 = vld [vmem:[%s1 + $0x7fc] sm:$0xff]
      %v485 = vld [vmem:[%s1 + $0x804] sm:$0xff]
      %v486 = vld [vmem:[%s1 + $0x80c] sm:$0xff]
      %v487 = vld [vmem:[%s1 + $0x814] sm:$0xf]
      %v488 = vld [vmem:[%s1 + $0x818] sm:$0xff]
      %v489 = vld [vmem:[%s1 + $0x820] sm:$0xff]
      %v490 = vld [vmem:[%s1 + $0x828] sm:$0xff]
      %v491 = vld [vmem:[%s1 + $0x830] sm:$0xf]
      %v492 = vld [vmem:[%s1 + $0x834] sm:$0xff]
      %v493 = vld [vmem:[%s1 + $0x83c] sm:$0xff]
      %v494 = vld [vmem:[%s1 + $0x844] sm:$0xff]
      %v495 = vld [vmem:[%s1 + $0x84c] sm:$0xf]
      %v496 = vld [vmem:[%s1 + $0x850] sm:$0xff]
      %v497 = vld [vmem:[%s1 + $0x858] sm:$0xff]
      %v498 = vld [vmem:[%s1 + $0x860] sm:$0xff]
      %v499 = vld [vmem:[%s1 + $0x868] sm:$0xf]
      %v500 = vld [vmem:[%s1 + $0x86c] sm:$0xff]
      %v501 = vld [vmem:[%s1 + $0x874] sm:$0xff]
      %v502 = vld [vmem:[%s1 + $0x87c] sm:$0xff]
      %v503 = vld [vmem:[%s1 + $0x884] sm:$0xf]
      %v504 = vld [vmem:[%s1 + $0x888] sm:$0xff]
      %v505 = vld [vmem:[%s1 + $0x890] sm:$0xff]
      %v506 = vld [vmem:[%s1 + $0x898] sm:$0xff]
      %v507 = vld [vmem:[%s1 + $0x8a0] sm:$0xf]
      %v508 = vld [vmem:[%s1 + $0x8a4] sm:$0xff]
      %v509 = vld [vmem:[%s1 + $0x8ac] sm:$0xff]
      %v510 = vld [vmem:[%s1 + $0x8b4] sm:$0xff]
      %v511 = vld [vmem:[%s1 + $0x8bc] sm:$0xf]
      %v512 = vld [vmem:[%s1 + $0x8c0] sm:$0xff]
      %v513 = vld [vmem:[%s1 + $0x8c8] sm:$0xff]
      %v514 = vld [vmem:[%s1 + $0x8d0] sm:$0xff]
      %v515 = vld [vmem:[%s1 + $0x8d8] sm:$0xf]
      %v516 = vld [vmem:[%s1 + $0x8dc] sm:$0xff]
      %v517 = vld [vmem:[%s1 + $0x8e4] sm:$0xff]
      %v518 = vld [vmem:[%s1 + $0x8ec] sm:$0xff]
      %v519 = vld [vmem:[%s1 + $0x8f4] sm:$0xf]
      %v520 = vld [vmem:[%s1 + $0x8f8] sm:$0xff]
      %v521 = vld [vmem:[%s1 + $0x900] sm:$0xff]
      %v522 = vld [vmem:[%s1 + $0x908] sm:$0xff]
      %v523 = vld [vmem:[%s1 + $0x910] sm:$0xf]
      %v524 = vld [vmem:[%s1 + $0x914] sm:$0xff]
      %v525 = vld [vmem:[%s1 + $0x91c] sm:$0xff]
      %v526 = vld [vmem:[%s1 + $0x924] sm:$0xff]
      %v527 = vld [vmem:[%s1 + $0x92c] sm:$0xf]
      %v528 = vld [vmem:[%s1 + $0x930] sm:$0xff]
      %v529 = vld [vmem:[%s1 + $0x938] sm:$0xff]
      %v530 = vld [vmem:[%s1 + $0x940] sm:$0xff]
      %v531 = vld [vmem:[%s1 + $0x948] sm:$0xf]
      %v532 = vld [vmem:[%s1 + $0x94c] sm:$0xff]
      %v533 = vld [vmem:[%s1 + $0x954] sm:$0xff]
      %v534 = vld [vmem:[%s1 + $0x95c] sm:$0xff]
      %v535 = vld [vmem:[%s1 + $0x964] sm:$0xf]
      %v536 = vld [vmem:[%s1 + $0x968] sm:$0xff]
      %v537 = vld [vmem:[%s1 + $0x970] sm:$0xff]
      %v538 = vld [vmem:[%s1 + $0x978] sm:$0xff]
      %v539 = vld [vmem:[%s1 + $0x980] sm:$0xf]
      %v540 = vld [vmem:[%s1 + $0x984] sm:$0xff]
      %v541 = vld [vmem:[%s1 + $0x98c] sm:$0xff]
      %v542 = vld [vmem:[%s1 + $0x994] sm:$0xff]
      %v543 = vld [vmem:[%s1 + $0x99c] sm:$0xf]
      %v544 = vld [vmem:[%s1 + $0x9a0] sm:$0xff]
      %v545 = vld [vmem:[%s1 + $0x9a8] sm:$0xff]
      %v546 = vld [vmem:[%s1 + $0x9b0] sm:$0xff]
      %v547 = vld [vmem:[%s1 + $0x9b8] sm:$0xf]
      %v548 = vld [vmem:[%s1 + $0x9bc] sm:$0xff]
      %v549 = vld [vmem:[%s1 + $0x9c4] sm:$0xff]
      %v550 = vld [vmem:[%s1 + $0x9cc] sm:$0xff]
      %v551 = vld [vmem:[%s1 + $0x9d4] sm:$0xf]
      %v552 = vld [vmem:[%s1 + $0x9d8] sm:$0xff]
      %v553 = vld [vmem:[%s1 + $0x9e0] sm:$0xff]
      %v554 = vld [vmem:[%s1 + $0x9e8] sm:$0xff]
      %v555 = vld [vmem:[%s1 + $0x9f0] sm:$0xf]
      %v556 = vld [vmem:[%s1 + $0x9f4] sm:$0xff]
      %v557 = vld [vmem:[%s1 + $0x9fc] sm:$0xff]
      %v558 = vld [vmem:[%s1 + $0xa04] sm:$0xff]
      %v559 = vld [vmem:[%s1 + $0xa0c] sm:$0xf]
      %v560 = vld [vmem:[%s1 + $0xa10] sm:$0xff]
      %v561 = vld [vmem:[%s1 + $0xa18] sm:$0xff]
      %v562 = vld [vmem:[%s1 + $0xa20] sm:$0xff]
      %v563 = vld [vmem:[%s1 + $0xa28] sm:$0xf]
      %v564 = vld [vmem:[%s1 + $0xa2c] sm:$0xff]
      %v565 = vld [vmem:[%s1 + $0xa34] sm:$0xff]
      %v566 = vld [vmem:[%s1 + $0xa3c] sm:$0xff]
      %v567 = vld [vmem:[%s1 + $0xa44] sm:$0xf]
      %v568 = vld [vmem:[%s1 + $0xa48] sm:$0xff]
      %v569 = vld [vmem:[%s1 + $0xa50] sm:$0xff]
      %v570 = vld [vmem:[%s1 + $0xa58] sm:$0xff]
      %v571 = vld [vmem:[%s1 + $0xa60] sm:$0xf]
      %v572 = vld [vmem:[%s1 + $0xa64] sm:$0xff]
      %v573 = vld [vmem:[%s1 + $0xa6c] sm:$0xff]
      %v574 = vld [vmem:[%s1 + $0xa74] sm:$0xff]
      %v575 = vld [vmem:[%s1 + $0xa7c] sm:$0xf]
      %v576 = vld [vmem:[%s182] sm:$0xff]
      %578 = vset.pattern.permute.xlu0 0
      %579 = vperm.xlu0 %578, %v576
      %v580 = vpop.permute.xlu0 %579
      %v585 = vunpack.c.l.b16 %v189
      %v586 = vunpack.c.h.b16 %v189
      %v587 = vunpack.c.l.b16 %v190
      %v588 = vunpack.c.h.b16 %v190
      %v589 = vunpack.c.l.b16 %v191
      %v590 = vunpack.c.h.b16 %v191
      %v591 = vpack.c.b16 %v585, %v585
      %v592 = vpack.c.b16 %v586, %v586
      %v593 = vpack.c.b16 %v587, %v587
      %v594 = vpack.c.b16 %v588, %v588
      %v595 = vpack.c.b16 %v589, %v589
      %v596 = vpack.c.b16 %v590, %v590
      %v987 = vunpack.c.l.b16 %v192
      %v988 = vunpack.c.h.b16 %v192
      %v989 = vunpack.c.l.b16 %v193
      %v990 = vunpack.c.h.b16 %v193
      %v991 = vunpack.c.l.b16 %v194
      %v992 = vunpack.c.h.b16 %v194
      %v993 = vunpack.c.l.b16 %v195
      %v994 = vunpack.c.l.b16 %v196
      %v995 = vunpack.c.h.b16 %v196
      %v996 = vunpack.c.l.b16 %v197
      %v997 = vunpack.c.h.b16 %v197
      %v998 = vunpack.c.l.b16 %v198
      %v999 = vunpack.c.h.b16 %v198
      %v1000 = vunpack.c.l.b16 %v199
      %v1001 = vunpack.c.l.b16 %v200
      %v1002 = vunpack.c.h.b16 %v200
      %v1003 = vunpack.c.l.b16 %v201
      %v1004 = vunpack.c.h.b16 %v201
      %v1005 = vunpack.c.l.b16 %v202
      %v1006 = vunpack.c.h.b16 %v202
      %v1007 = vunpack.c.l.b16 %v203
      %v1008 = vunpack.c.l.b16 %v204
      %v1009 = vunpack.c.h.b16 %v204
      %v1010 = vunpack.c.l.b16 %v205
      %v1011 = vunpack.c.h.b16 %v205
      %v1012 = vunpack.c.l.b16 %v206
      %v1013 = vunpack.c.h.b16 %v206
      %v1014 = vunpack.c.l.b16 %v207
      %v1015 = vunpack.c.l.b16 %v208
      %v1016 = vunpack.c.h.b16 %v208
      %v1017 = vunpack.c.l.b16 %v209
      %v1018 = vunpack.c.h.b16 %v209
      %v1019 = vunpack.c.l.b16 %v210
      %v1020 = vunpack.c.h.b16 %v210
      %v1021 = vunpack.c.l.b16 %v211
      %v1022 = vunpack.c.l.b16 %v212
      %v1023 = vunpack.c.h.b16 %v212
      %v1024 = vunpack.c.l.b16 %v213
      %v1025 = vunpack.c.h.b16 %v213
      %v1026 = vunpack.c.l.b16 %v214
      %v1027 = vunpack.c.h.b16 %v214
      %v1028 = vunpack.c.l.b16 %v215
      %v1029 = vunpack.c.l.b16 %v216
      %v1030 = vunpack.c.h.b16 %v216
      %v1031 = vunpack.c.l.b16 %v217
      %v1032 = vunpack.c.h.b16 %v217
      %v1033 = vunpack.c.l.b16 %v218
      %v1034 = vunpack.c.h.b16 %v218
      %v1035 = vunpack.c.l.b16 %v219
      %v1036 = vunpack.c.l.b16 %v220
      %v1037 = vunpack.c.h.b16 %v220
      %v1038 = vunpack.c.l.b16 %v221
      %v1039 = vunpack.c.h.b16 %v221
      %v1040 = vunpack.c.l.b16 %v222
      %v1041 = vunpack.c.h.b16 %v222
      %v1042 = vunpack.c.l.b16 %v223
      %v1043 = vunpack.c.l.b16 %v224
      %v1044 = vunpack.c.h.b16 %v224
      %v1045 = vunpack.c.l.b16 %v225
      %v1046 = vunpack.c.h.b16 %v225
      %v1047 = vunpack.c.l.b16 %v226
      %v1048 = vunpack.c.h.b16 %v226
      %v1049 = vunpack.c.l.b16 %v227
      %v1050 = vunpack.c.l.b16 %v228
      %v1051 = vunpack.c.h.b16 %v228
      %v1052 = vunpack.c.l.b16 %v229
      %v1053 = vunpack.c.h.b16 %v229
      %v1054 = vunpack.c.l.b16 %v230
      %v1055 = vunpack.c.h.b16 %v230
      %v1056 = vunpack.c.l.b16 %v231
      %v1057 = vunpack.c.l.b16 %v232
      %v1058 = vunpack.c.h.b16 %v232
      %v1059 = vunpack.c.l.b16 %v233
      %v1060 = vunpack.c.h.b16 %v233
      %v1061 = vunpack.c.l.b16 %v234
      %v1062 = vunpack.c.h.b16 %v234
      %v1063 = vunpack.c.l.b16 %v235
      %v1064 = vunpack.c.l.b16 %v236
      %v1065 = vunpack.c.h.b16 %v236
      %v1066 = vunpack.c.l.b16 %v237
      %v1067 = vunpack.c.h.b16 %v237
      %v1068 = vunpack.c.l.b16 %v238
      %v1069 = vunpack.c.h.b16 %v238
      %v1070 = vunpack.c.l.b16 %v239
      %v1071 = vunpack.c.l.b16 %v240
      %v1072 = vunpack.c.h.b16 %v240
      %v1073 = vunpack.c.l.b16 %v241
      %v1074 = vunpack.c.h.b16 %v241
      %v1075 = vunpack.c.l.b16 %v242
      %v1076 = vunpack.c.h.b16 %v242
      %v1077 = vunpack.c.l.b16 %v243
      %v1078 = vunpack.c.l.b16 %v244
      %v1079 = vunpack.c.h.b16 %v244
      %v1080 = vunpack.c.l.b16 %v245
      %v1081 = vunpack.c.h.b16 %v245
      %v1082 = vunpack.c.l.b16 %v246
      %v1083 = vunpack.c.h.b16 %v246
      %v1084 = vunpack.c.l.b16 %v247
      %v1085 = vunpack.c.l.b16 %v248
      %v1086 = vunpack.c.h.b16 %v248
      %v1087 = vunpack.c.l.b16 %v249
      %v1088 = vunpack.c.h.b16 %v249
      %v1089 = vunpack.c.l.b16 %v250
      %v1090 = vunpack.c.h.b16 %v250
      %v1091 = vunpack.c.l.b16 %v251
      %v1092 = vunpack.c.l.b16 %v252
      %v1093 = vunpack.c.h.b16 %v252
      %v1094 = vunpack.c.l.b16 %v253
      %v1095 = vunpack.c.h.b16 %v253
      %v1096 = vunpack.c.l.b16 %v254
      %v1097 = vunpack.c.h.b16 %v254
      %v1098 = vunpack.c.l.b16 %v255
      %v1099 = vunpack.c.l.b16 %v256
      %v1100 = vunpack.c.h.b16 %v256
      %v1101 = vunpack.c.l.b16 %v257
      %v1102 = vunpack.c.h.b16 %v257
      %v1103 = vunpack.c.l.b16 %v258
      %v1104 = vunpack.c.h.b16 %v258
      %v1105 = vunpack.c.l.b16 %v259
      %v1106 = vunpack.c.l.b16 %v260
      %v1107 = vunpack.c.h.b16 %v260
      %v1108 = vunpack.c.l.b16 %v261
      %v1109 = vunpack.c.h.b16 %v261
      %v1110 = vunpack.c.l.b16 %v262
      %v1111 = vunpack.c.h.b16 %v262
      %v1112 = vunpack.c.l.b16 %v263
      %v1113 = vunpack.c.l.b16 %v264
      %v1114 = vunpack.c.h.b16 %v264
      %v1115 = vunpack.c.l.b16 %v265
      %v1116 = vunpack.c.h.b16 %v265
      %v1117 = vunpack.c.l.b16 %v266
      %v1118 = vunpack.c.h.b16 %v266
      %v1119 = vunpack.c.l.b16 %v267
      %v1120 = vunpack.c.l.b16 %v268
      %v1121 = vunpack.c.h.b16 %v268
      %v1122 = vunpack.c.l.b16 %v269
      %v1123 = vunpack.c.h.b16 %v269
      %v1124 = vunpack.c.l.b16 %v270
      %v1125 = vunpack.c.h.b16 %v270
      %v1126 = vunpack.c.l.b16 %v271
      %v1127 = vunpack.c.l.b16 %v272
      %v1128 = vunpack.c.h.b16 %v272
      %v1129 = vunpack.c.l.b16 %v273
      %v1130 = vunpack.c.h.b16 %v273
      %v1131 = vunpack.c.l.b16 %v274
      %v1132 = vunpack.c.h.b16 %v274
      %v1133 = vunpack.c.l.b16 %v275
      %v1134 = vunpack.c.l.b16 %v276
      %v1135 = vunpack.c.h.b16 %v276
      %v1136 = vunpack.c.l.b16 %v277
      %v1137 = vunpack.c.h.b16 %v277
      %v1138 = vunpack.c.l.b16 %v278
      %v1139 = vunpack.c.h.b16 %v278
      %v1140 = vunpack.c.l.b16 %v279
      %v1141 = vunpack.c.l.b16 %v280
      %v1142 = vunpack.c.h.b16 %v280
      %v1143 = vunpack.c.l.b16 %v281
      %v1144 = vunpack.c.h.b16 %v281
      %v1145 = vunpack.c.l.b16 %v282
      %v1146 = vunpack.c.h.b16 %v282
      %v1147 = vunpack.c.l.b16 %v283
      %v1148 = vunpack.c.l.b16 %v284
      %v1149 = vunpack.c.h.b16 %v284
      %v1150 = vunpack.c.l.b16 %v285
      %v1151 = vunpack.c.h.b16 %v285
      %v1152 = vunpack.c.l.b16 %v286
      %v1153 = vunpack.c.h.b16 %v286
      %v1154 = vunpack.c.l.b16 %v287
      %v1155 = vunpack.c.l.b16 %v288
      %v1156 = vunpack.c.h.b16 %v288
      %v1157 = vunpack.c.l.b16 %v289
      %v1158 = vunpack.c.h.b16 %v289
      %v1159 = vunpack.c.l.b16 %v290
      %v1160 = vunpack.c.h.b16 %v290
      %v1161 = vunpack.c.l.b16 %v291
      %v1162 = vunpack.c.l.b16 %v292
      %v1163 = vunpack.c.h.b16 %v292
      %v1164 = vunpack.c.l.b16 %v293
      %v1165 = vunpack.c.h.b16 %v293
      %v1166 = vunpack.c.l.b16 %v294
      %v1167 = vunpack.c.h.b16 %v294
      %v1168 = vunpack.c.l.b16 %v295
      %v1169 = vunpack.c.l.b16 %v296
      %v1170 = vunpack.c.h.b16 %v296
      %v1171 = vunpack.c.l.b16 %v297
      %v1172 = vunpack.c.h.b16 %v297
      %v1173 = vunpack.c.l.b16 %v298
      %v1174 = vunpack.c.h.b16 %v298
      %v1175 = vunpack.c.l.b16 %v299
      %v1176 = vunpack.c.l.b16 %v300
      %v1177 = vunpack.c.h.b16 %v300
      %v1178 = vunpack.c.l.b16 %v301
      %v1179 = vunpack.c.h.b16 %v301
      %v1180 = vunpack.c.l.b16 %v302
      %v1181 = vunpack.c.h.b16 %v302
      %v1182 = vunpack.c.l.b16 %v303
      %v1183 = vunpack.c.l.b16 %v304
      %v1184 = vunpack.c.h.b16 %v304
      %v1185 = vunpack.c.l.b16 %v305
      %v1186 = vunpack.c.h.b16 %v305
      %v1187 = vunpack.c.l.b16 %v306
      %v1188 = vunpack.c.h.b16 %v306
      %v1189 = vunpack.c.l.b16 %v307
      %v1190 = vunpack.c.l.b16 %v308
      %v1191 = vunpack.c.h.b16 %v308
      %v1192 = vunpack.c.l.b16 %v309
      %v1193 = vunpack.c.h.b16 %v309
      %v1194 = vunpack.c.l.b16 %v310
      %v1195 = vunpack.c.h.b16 %v310
      %v1196 = vunpack.c.l.b16 %v311
      %v1197 = vunpack.c.l.b16 %v312
      %v1198 = vunpack.c.h.b16 %v312
      %v1199 = vunpack.c.l.b16 %v313
      %v1200 = vunpack.c.h.b16 %v313
      %v1201 = vunpack.c.l.b16 %v314
      %v1202 = vunpack.c.h.b16 %v314
      %v1203 = vunpack.c.l.b16 %v315
      %v1204 = vunpack.c.l.b16 %v316
      %v1205 = vunpack.c.h.b16 %v316
      %v1206 = vunpack.c.l.b16 %v317
      %v1207 = vunpack.c.h.b16 %v317
      %v1208 = vunpack.c.l.b16 %v318
      %v1209 = vunpack.c.h.b16 %v318
      %v1210 = vunpack.c.l.b16 %v319
      %v1211 = vunpack.c.l.b16 %v320
      %v1212 = vunpack.c.h.b16 %v320
      %v1213 = vunpack.c.l.b16 %v321
      %v1214 = vunpack.c.h.b16 %v321
      %v1215 = vunpack.c.l.b16 %v322
      %v1216 = vunpack.c.h.b16 %v322
      %v1217 = vunpack.c.l.b16 %v323
      %v1218 = vunpack.c.l.b16 %v324
      %v1219 = vunpack.c.h.b16 %v324
      %v1220 = vunpack.c.l.b16 %v325
      %v1221 = vunpack.c.h.b16 %v325
      %v1222 = vunpack.c.l.b16 %v326
      %v1223 = vunpack.c.h.b16 %v326
      %v1224 = vunpack.c.l.b16 %v327
      %v1225 = vunpack.c.l.b16 %v328
      %v1226 = vunpack.c.h.b16 %v328
      %v1227 = vunpack.c.l.b16 %v329
      %v1228 = vunpack.c.h.b16 %v329
      %v1229 = vunpack.c.l.b16 %v330
      %v1230 = vunpack.c.h.b16 %v330
      %v1231 = vunpack.c.l.b16 %v331
      %v1232 = vunpack.c.l.b16 %v332
      %v1233 = vunpack.c.h.b16 %v332
      %v1234 = vunpack.c.l.b16 %v333
      %v1235 = vunpack.c.h.b16 %v333
      %v1236 = vunpack.c.l.b16 %v334
      %v1237 = vunpack.c.h.b16 %v334
      %v1238 = vunpack.c.l.b16 %v335
      %v1239 = vunpack.c.l.b16 %v336
      %v1240 = vunpack.c.h.b16 %v336
      %v1241 = vunpack.c.l.b16 %v337
      %v1242 = vunpack.c.h.b16 %v337
      %v1243 = vunpack.c.l.b16 %v338
      %v1244 = vunpack.c.h.b16 %v338
      %v1245 = vunpack.c.l.b16 %v339
      %v1246 = vunpack.c.l.b16 %v340
      %v1247 = vunpack.c.h.b16 %v340
      %v1248 = vunpack.c.l.b16 %v341
      %v1249 = vunpack.c.h.b16 %v341
      %v1250 = vunpack.c.l.b16 %v342
      %v1251 = vunpack.c.h.b16 %v342
      %v1252 = vunpack.c.l.b16 %v343
      %v1253 = vunpack.c.l.b16 %v344
      %v1254 = vunpack.c.h.b16 %v344
      %v1255 = vunpack.c.l.b16 %v345
      %v1256 = vunpack.c.h.b16 %v345
      %v1257 = vunpack.c.l.b16 %v346
      %v1258 = vunpack.c.h.b16 %v346
      %v1259 = vunpack.c.l.b16 %v347
      %v1260 = vunpack.c.l.b16 %v348
      %v1261 = vunpack.c.h.b16 %v348
      %v1262 = vunpack.c.l.b16 %v349
      %v1263 = vunpack.c.h.b16 %v349
      %v1264 = vunpack.c.l.b16 %v350
      %v1265 = vunpack.c.h.b16 %v350
      %v1266 = vunpack.c.l.b16 %v351
      %v1267 = vunpack.c.l.b16 %v352
      %v1268 = vunpack.c.h.b16 %v352
      %v1269 = vunpack.c.l.b16 %v353
      %v1270 = vunpack.c.h.b16 %v353
      %v1271 = vunpack.c.l.b16 %v354
      %v1272 = vunpack.c.h.b16 %v354
      %v1273 = vunpack.c.l.b16 %v355
      %v1274 = vunpack.c.l.b16 %v356
      %v1275 = vunpack.c.h.b16 %v356
      %v1276 = vunpack.c.l.b16 %v357
      %v1277 = vunpack.c.h.b16 %v357
      %v1278 = vunpack.c.l.b16 %v358
      %v1279 = vunpack.c.h.b16 %v358
      %v1280 = vunpack.c.l.b16 %v359
      %v1281 = vunpack.c.l.b16 %v360
      %v1282 = vunpack.c.h.b16 %v360
      %v1283 = vunpack.c.l.b16 %v361
      %v1284 = vunpack.c.h.b16 %v361
      %v1285 = vunpack.c.l.b16 %v362
      %v1286 = vunpack.c.h.b16 %v362
      %v1287 = vunpack.c.l.b16 %v363
      %v1288 = vunpack.c.l.b16 %v364
      %v1289 = vunpack.c.h.b16 %v364
      %v1290 = vunpack.c.l.b16 %v365
      %v1291 = vunpack.c.h.b16 %v365
      %v1292 = vunpack.c.l.b16 %v366
      %v1293 = vunpack.c.h.b16 %v366
      %v1294 = vunpack.c.l.b16 %v367
      %v1295 = vunpack.c.l.b16 %v368
      %v1296 = vunpack.c.h.b16 %v368
      %v1297 = vunpack.c.l.b16 %v369
      %v1298 = vunpack.c.h.b16 %v369
      %v1299 = vunpack.c.l.b16 %v370
      %v1300 = vunpack.c.h.b16 %v370
      %v1301 = vunpack.c.l.b16 %v371
      %v1302 = vunpack.c.l.b16 %v372
      %v1303 = vunpack.c.h.b16 %v372
      %v1304 = vunpack.c.l.b16 %v373
      %v1305 = vunpack.c.h.b16 %v373
      %v1306 = vunpack.c.l.b16 %v374
      %v1307 = vunpack.c.h.b16 %v374
      %v1308 = vunpack.c.l.b16 %v375
      %v1309 = vunpack.c.l.b16 %v376
      %v1310 = vunpack.c.h.b16 %v376
      %v1311 = vunpack.c.l.b16 %v377
      %v1312 = vunpack.c.h.b16 %v377
      %v1313 = vunpack.c.l.b16 %v378
      %v1314 = vunpack.c.h.b16 %v378
      %v1315 = vunpack.c.l.b16 %v379
      %v1316 = vunpack.c.l.b16 %v380
      %v1317 = vunpack.c.h.b16 %v380
      %v1318 = vunpack.c.l.b16 %v381
      %v1319 = vunpack.c.h.b16 %v381
      %v1320 = vunpack.c.l.b16 %v382
      %v1321 = vunpack.c.h.b16 %v382
      %v1322 = vunpack.c.l.b16 %v383
      %v1323 = vunpack.c.l.b16 %v384
      %v1324 = vunpack.c.h.b16 %v384
      %v1325 = vunpack.c.l.b16 %v385
      %v1326 = vunpack.c.h.b16 %v385
      %v1327 = vunpack.c.l.b16 %v386
      %v1328 = vunpack.c.h.b16 %v386
      %v1329 = vunpack.c.l.b16 %v387
      %v1330 = vunpack.c.l.b16 %v388
      %v1331 = vunpack.c.h.b16 %v388
      %v1332 = vunpack.c.l.b16 %v389
      %v1333 = vunpack.c.h.b16 %v389
      %v1334 = vunpack.c.l.b16 %v390
      %v1335 = vunpack.c.h.b16 %v390
      %v1336 = vunpack.c.l.b16 %v391
      %v1337 = vunpack.c.l.b16 %v392
      %v1338 = vunpack.c.h.b16 %v392
      %v1339 = vunpack.c.l.b16 %v393
      %v1340 = vunpack.c.h.b16 %v393
      %v1341 = vunpack.c.l.b16 %v394
      %v1342 = vunpack.c.h.b16 %v394
      %v1343 = vunpack.c.l.b16 %v395
      %v1344 = vunpack.c.l.b16 %v396
      %v1345 = vunpack.c.h.b16 %v396
      %v1346 = vunpack.c.l.b16 %v397
      %v1347 = vunpack.c.h.b16 %v397
      %v1348 = vunpack.c.l.b16 %v398
      %v1349 = vunpack.c.h.b16 %v398
      %v1350 = vunpack.c.l.b16 %v399
      %v1351 = vunpack.c.l.b16 %v400
      %v1352 = vunpack.c.h.b16 %v400
      %v1353 = vunpack.c.l.b16 %v401
      %v1354 = vunpack.c.h.b16 %v401
      %v1355 = vunpack.c.l.b16 %v402
      %v1356 = vunpack.c.h.b16 %v402
      %v1357 = vunpack.c.l.b16 %v403
      %v1358 = vunpack.c.l.b16 %v404
      %v1359 = vunpack.c.h.b16 %v404
      %v1360 = vunpack.c.l.b16 %v405
      %v1361 = vunpack.c.h.b16 %v405
      %v1362 = vunpack.c.l.b16 %v406
      %v1363 = vunpack.c.h.b16 %v406
      %v1364 = vunpack.c.l.b16 %v407
      %v1365 = vunpack.c.l.b16 %v408
      %v1366 = vunpack.c.h.b16 %v408
      %v1367 = vunpack.c.l.b16 %v409
      %v1368 = vunpack.c.h.b16 %v409
      %v1369 = vunpack.c.l.b16 %v410
      %v1370 = vunpack.c.h.b16 %v410
      %v1371 = vunpack.c.l.b16 %v411
      %v1372 = vunpack.c.l.b16 %v412
      %v1373 = vunpack.c.h.b16 %v412
      %v1374 = vunpack.c.l.b16 %v413
      %v1375 = vunpack.c.h.b16 %v413
      %v1376 = vunpack.c.l.b16 %v414
      %v1377 = vunpack.c.h.b16 %v414
      %v1378 = vunpack.c.l.b16 %v415
      %v1379 = vunpack.c.l.b16 %v416
      %v1380 = vunpack.c.h.b16 %v416
      %v1381 = vunpack.c.l.b16 %v417
      %v1382 = vunpack.c.h.b16 %v417
      %v1383 = vunpack.c.l.b16 %v418
      %v1384 = vunpack.c.h.b16 %v418
      %v1385 = vunpack.c.l.b16 %v419
      %v1386 = vunpack.c.l.b16 %v420
      %v1387 = vunpack.c.h.b16 %v420
      %v1388 = vunpack.c.l.b16 %v421
      %v1389 = vunpack.c.h.b16 %v421
      %v1390 = vunpack.c.l.b16 %v422
      %v1391 = vunpack.c.h.b16 %v422
      %v1392 = vunpack.c.l.b16 %v423
      %v1393 = vunpack.c.l.b16 %v424
      %v1394 = vunpack.c.h.b16 %v424
      %v1395 = vunpack.c.l.b16 %v425
      %v1396 = vunpack.c.h.b16 %v425
      %v1397 = vunpack.c.l.b16 %v426
      %v1398 = vunpack.c.h.b16 %v426
      %v1399 = vunpack.c.l.b16 %v427
      %v1400 = vunpack.c.l.b16 %v428
      %v1401 = vunpack.c.h.b16 %v428
      %v1402 = vunpack.c.l.b16 %v429
      %v1403 = vunpack.c.h.b16 %v429
      %v1404 = vunpack.c.l.b16 %v430
      %v1405 = vunpack.c.h.b16 %v430
      %v1406 = vunpack.c.l.b16 %v431
      %v1407 = vunpack.c.l.b16 %v432
      %v1408 = vunpack.c.h.b16 %v432
      %v1409 = vunpack.c.l.b16 %v433
      %v1410 = vunpack.c.h.b16 %v433
      %v1411 = vunpack.c.l.b16 %v434
      %v1412 = vunpack.c.h.b16 %v434
      %v1413 = vunpack.c.l.b16 %v435
      %v1414 = vunpack.c.l.b16 %v436
      %v1415 = vunpack.c.h.b16 %v436
      %v1416 = vunpack.c.l.b16 %v437
      %v1417 = vunpack.c.h.b16 %v437
      %v1418 = vunpack.c.l.b16 %v438
      %v1419 = vunpack.c.h.b16 %v438
      %v1420 = vunpack.c.l.b16 %v439
      %v1421 = vunpack.c.l.b16 %v440
      %v1422 = vunpack.c.h.b16 %v440
      %v1423 = vunpack.c.l.b16 %v441
      %v1424 = vunpack.c.h.b16 %v441
      %v1425 = vunpack.c.l.b16 %v442
      %v1426 = vunpack.c.h.b16 %v442
      %v1427 = vunpack.c.l.b16 %v443
      %v1428 = vunpack.c.l.b16 %v444
      %v1429 = vunpack.c.h.b16 %v444
      %v1430 = vunpack.c.l.b16 %v445
      %v1431 = vunpack.c.h.b16 %v445
      %v1432 = vunpack.c.l.b16 %v446
      %v1433 = vunpack.c.h.b16 %v446
      %v1434 = vunpack.c.l.b16 %v447
      %v1435 = vunpack.c.l.b16 %v448
      %v1436 = vunpack.c.h.b16 %v448
      %v1437 = vunpack.c.l.b16 %v449
      %v1438 = vunpack.c.h.b16 %v449
      %v1439 = vunpack.c.l.b16 %v450
      %v1440 = vunpack.c.h.b16 %v450
      %v1441 = vunpack.c.l.b16 %v451
      %v1442 = vunpack.c.l.b16 %v452
      %v1443 = vunpack.c.h.b16 %v452
      %v1444 = vunpack.c.l.b16 %v453
      %v1445 = vunpack.c.h.b16 %v453
      %v1446 = vunpack.c.l.b16 %v454
      %v1447 = vunpack.c.h.b16 %v454
      %v1448 = vunpack.c.l.b16 %v455
      %v1449 = vunpack.c.l.b16 %v456
      %v1450 = vunpack.c.h.b16 %v456
      %v1451 = vunpack.c.l.b16 %v457
      %v1452 = vunpack.c.h.b16 %v457
      %v1453 = vunpack.c.l.b16 %v458
      %v1454 = vunpack.c.h.b16 %v458
      %v1455 = vunpack.c.l.b16 %v459
      %v1456 = vunpack.c.l.b16 %v460
      %v1457 = vunpack.c.h.b16 %v460
      %v1458 = vunpack.c.l.b16 %v461
      %v1459 = vunpack.c.h.b16 %v461
      %v1460 = vunpack.c.l.b16 %v462
      %v1461 = vunpack.c.h.b16 %v462
      %v1462 = vunpack.c.l.b16 %v463
      %v1463 = vunpack.c.l.b16 %v464
      %v1464 = vunpack.c.h.b16 %v464
      %v1465 = vunpack.c.l.b16 %v465
      %v1466 = vunpack.c.h.b16 %v465
      %v1467 = vunpack.c.l.b16 %v466
      %v1468 = vunpack.c.h.b16 %v466
      %v1469 = vunpack.c.l.b16 %v467
      %v1470 = vunpack.c.l.b16 %v468
      %v1471 = vunpack.c.h.b16 %v468
      %v1472 = vunpack.c.l.b16 %v469
      %v1473 = vunpack.c.h.b16 %v469
      %v1474 = vunpack.c.l.b16 %v470
      %v1475 = vunpack.c.h.b16 %v470
      %v1476 = vunpack.c.l.b16 %v471
      %v1477 = vunpack.c.l.b16 %v472
      %v1478 = vunpack.c.h.b16 %v472
      %v1479 = vunpack.c.l.b16 %v473
      %v1480 = vunpack.c.h.b16 %v473
      %v1481 = vunpack.c.l.b16 %v474
      %v1482 = vunpack.c.h.b16 %v474
      %v1483 = vunpack.c.l.b16 %v475
      %v1484 = vunpack.c.l.b16 %v476
      %v1485 = vunpack.c.h.b16 %v476
      %v1486 = vunpack.c.l.b16 %v477
      %v1487 = vunpack.c.h.b16 %v477
      %v1488 = vunpack.c.l.b16 %v478
      %v1489 = vunpack.c.h.b16 %v478
      %v1490 = vunpack.c.l.b16 %v479
      %v1491 = vunpack.c.l.b16 %v480
      %v1492 = vunpack.c.h.b16 %v480
      %v1493 = vunpack.c.l.b16 %v481
      %v1494 = vunpack.c.h.b16 %v481
      %v1495 = vunpack.c.l.b16 %v482
      %v1496 = vunpack.c.h.b16 %v482
      %v1497 = vunpack.c.l.b16 %v483
      %v1498 = vunpack.c.l.b16 %v484
      %v1499 = vunpack.c.h.b16 %v484
      %v1500 = vunpack.c.l.b16 %v485
      %v1501 = vunpack.c.h.b16 %v485
      %v1502 = vunpack.c.l.b16 %v486
      %v1503 = vunpack.c.h.b16 %v486
      %v1504 = vunpack.c.l.b16 %v487
      %v1505 = vunpack.c.l.b16 %v488
      %v1506 = vunpack.c.h.b16 %v488
      %v1507 = vunpack.c.l.b16 %v489
      %v1508 = vunpack.c.h.b16 %v489
      %v1509 = vunpack.c.l.b16 %v490
      %v1510 = vunpack.c.h.b16 %v490
      %v1511 = vunpack.c.l.b16 %v491
      %v1512 = vunpack.c.l.b16 %v492
      %v1513 = vunpack.c.h.b16 %v492
      %v1514 = vunpack.c.l.b16 %v493
      %v1515 = vunpack.c.h.b16 %v493
      %v1516 = vunpack.c.l.b16 %v494
      %v1517 = vunpack.c.h.b16 %v494
      %v1518 = vunpack.c.l.b16 %v495
      %v1519 = vunpack.c.l.b16 %v496
      %v1520 = vunpack.c.h.b16 %v496
      %v1521 = vunpack.c.l.b16 %v497
      %v1522 = vunpack.c.h.b16 %v497
      %v1523 = vunpack.c.l.b16 %v498
      %v1524 = vunpack.c.h.b16 %v498
      %v1525 = vunpack.c.l.b16 %v499
      %v1526 = vunpack.c.l.b16 %v500
      %v1527 = vunpack.c.h.b16 %v500
      %v1528 = vunpack.c.l.b16 %v501
      %v1529 = vunpack.c.h.b16 %v501
      %v1530 = vunpack.c.l.b16 %v502
      %v1531 = vunpack.c.h.b16 %v502
      %v1532 = vunpack.c.l.b16 %v503
      %v1533 = vunpack.c.l.b16 %v504
      %v1534 = vunpack.c.h.b16 %v504
      %v1535 = vunpack.c.l.b16 %v505
      %v1536 = vunpack.c.h.b16 %v505
      %v1537 = vunpack.c.l.b16 %v506
      %v1538 = vunpack.c.h.b16 %v506
      %v1539 = vunpack.c.l.b16 %v507
      %v1540 = vunpack.c.l.b16 %v508
      %v1541 = vunpack.c.h.b16 %v508
      %v1542 = vunpack.c.l.b16 %v509
      %v1543 = vunpack.c.h.b16 %v509
      %v1544 = vunpack.c.l.b16 %v510
      %v1545 = vunpack.c.h.b16 %v510
      %v1546 = vunpack.c.l.b16 %v511
      %v1547 = vunpack.c.l.b16 %v512
      %v1548 = vunpack.c.h.b16 %v512
      %v1549 = vunpack.c.l.b16 %v513
      %v1550 = vunpack.c.h.b16 %v513
      %v1551 = vunpack.c.l.b16 %v514
      %v1552 = vunpack.c.h.b16 %v514
      %v1553 = vunpack.c.l.b16 %v515
      %v1554 = vunpack.c.l.b16 %v516
      %v1555 = vunpack.c.h.b16 %v516
      %v1556 = vunpack.c.l.b16 %v517
      %v1557 = vunpack.c.h.b16 %v517
      %v1558 = vunpack.c.l.b16 %v518
      %v1559 = vunpack.c.h.b16 %v518
      %v1560 = vunpack.c.l.b16 %v519
      %v1561 = vunpack.c.l.b16 %v520
      %v1562 = vunpack.c.h.b16 %v520
      %v1563 = vunpack.c.l.b16 %v521
      %v1564 = vunpack.c.h.b16 %v521
      %v1565 = vunpack.c.l.b16 %v522
      %v1566 = vunpack.c.h.b16 %v522
      %v1567 = vunpack.c.l.b16 %v523
      %v1568 = vunpack.c.l.b16 %v524
      %v1569 = vunpack.c.h.b16 %v524
      %v1570 = vunpack.c.l.b16 %v525
      %v1571 = vunpack.c.h.b16 %v525
      %v1572 = vunpack.c.l.b16 %v526
      %v1573 = vunpack.c.h.b16 %v526
      %v1574 = vunpack.c.l.b16 %v527
      %v1575 = vunpack.c.l.b16 %v528
      %v1576 = vunpack.c.h.b16 %v528
      %v1577 = vunpack.c.l.b16 %v529
      %v1578 = vunpack.c.h.b16 %v529
      %v1579 = vunpack.c.l.b16 %v530
      %v1580 = vunpack.c.h.b16 %v530
      %v1581 = vunpack.c.l.b16 %v531
      %v1582 = vunpack.c.l.b16 %v532
      %v1583 = vunpack.c.h.b16 %v532
      %v1584 = vunpack.c.l.b16 %v533
      %v1585 = vunpack.c.h.b16 %v533
      %v1586 = vunpack.c.l.b16 %v534
      %v1587 = vunpack.c.h.b16 %v534
      %v1588 = vunpack.c.l.b16 %v535
      %v1589 = vunpack.c.l.b16 %v536
      %v1590 = vunpack.c.h.b16 %v536
      %v1591 = vunpack.c.l.b16 %v537
      %v1592 = vunpack.c.h.b16 %v537
      %v1593 = vunpack.c.l.b16 %v538
      %v1594 = vunpack.c.h.b16 %v538
      %v1595 = vunpack.c.l.b16 %v539
      %v1596 = vunpack.c.l.b16 %v540
      %v1597 = vunpack.c.h.b16 %v540
      %v1598 = vunpack.c.l.b16 %v541
      %v1599 = vunpack.c.h.b16 %v541
      %v1600 = vunpack.c.l.b16 %v542
      %v1601 = vunpack.c.h.b16 %v542
      %v1602 = vunpack.c.l.b16 %v543
      %v1603 = vunpack.c.l.b16 %v544
      %v1604 = vunpack.c.h.b16 %v544
      %v1605 = vunpack.c.l.b16 %v545
      %v1606 = vunpack.c.h.b16 %v545
      %v1607 = vunpack.c.l.b16 %v546
      %v1608 = vunpack.c.h.b16 %v546
      %v1609 = vunpack.c.l.b16 %v547
      %v1610 = vunpack.c.l.b16 %v548
      %v1611 = vunpack.c.h.b16 %v548
      %v1612 = vunpack.c.l.b16 %v549
      %v1613 = vunpack.c.h.b16 %v549
      %v1614 = vunpack.c.l.b16 %v550
      %v1615 = vunpack.c.h.b16 %v550
      %v1616 = vunpack.c.l.b16 %v551
      %v1617 = vunpack.c.l.b16 %v552
      %v1618 = vunpack.c.h.b16 %v552
      %v1619 = vunpack.c.l.b16 %v553
      %v1620 = vunpack.c.h.b16 %v553
      %v1621 = vunpack.c.l.b16 %v554
      %v1622 = vunpack.c.h.b16 %v554
      %v1623 = vunpack.c.l.b16 %v555
      %v1624 = vunpack.c.l.b16 %v556
      %v1625 = vunpack.c.h.b16 %v556
      %v1626 = vunpack.c.l.b16 %v557
      %v1627 = vunpack.c.h.b16 %v557
      %v1628 = vunpack.c.l.b16 %v558
      %v1629 = vunpack.c.h.b16 %v558
      %v1630 = vunpack.c.l.b16 %v559
      %v1631 = vunpack.c.l.b16 %v560
      %v1632 = vunpack.c.h.b16 %v560
      %v1633 = vunpack.c.l.b16 %v561
      %v1634 = vunpack.c.h.b16 %v561
      %v1635 = vunpack.c.l.b16 %v562
      %v1636 = vunpack.c.h.b16 %v562
      %v1637 = vunpack.c.l.b16 %v563
      %v1638 = vunpack.c.l.b16 %v564
      %v1639 = vunpack.c.h.b16 %v564
      %v1640 = vunpack.c.l.b16 %v565
      %v1641 = vunpack.c.h.b16 %v565
      %v1642 = vunpack.c.l.b16 %v566
      %v1643 = vunpack.c.h.b16 %v566
      %v1644 = vunpack.c.l.b16 %v567
      %v1645 = vunpack.c.l.b16 %v568
      %v1646 = vunpack.c.h.b16 %v568
      %v1647 = vunpack.c.l.b16 %v569
      %v1648 = vunpack.c.h.b16 %v569
      %v1649 = vunpack.c.l.b16 %v570
      %v1650 = vunpack.c.h.b16 %v570
      %v1651 = vunpack.c.l.b16 %v571
      %v1652 = vunpack.c.l.b16 %v572
      %v1653 = vunpack.c.h.b16 %v572
      %v1654 = vunpack.c.l.b16 %v573
      %v1655 = vunpack.c.h.b16 %v573
      %v1656 = vunpack.c.l.b16 %v574
      %v1657 = vunpack.c.h.b16 %v574
      %v1658 = vunpack.c.l.b16 %v575
      %v1659 = vpack.c.b16 %v994, %v987
      %v1660 = vpack.c.b16 %v995, %v988
      %v1661 = vpack.c.b16 %v996, %v989
      %v1662 = vpack.c.b16 %v997, %v990
      %v1663 = vpack.c.b16 %v998, %v991
      %v1664 = vpack.c.b16 %v999, %v992
      %v1665 = vpack.c.b16 %v1000, %v993
      %v1666 = vpack.c.b16 %v1008, %v1001
      %v1667 = vpack.c.b16 %v1009, %v1002
      %v1668 = vpack.c.b16 %v1010, %v1003
      %v1669 = vpack.c.b16 %v1011, %v1004
      %v1670 = vpack.c.b16 %v1012, %v1005
      %v1671 = vpack.c.b16 %v1013, %v1006
      %v1672 = vpack.c.b16 %v1014, %v1007
      %v1673 = vpack.c.b16 %v1022, %v1015
      %v1674 = vpack.c.b16 %v1023, %v1016
      %v1675 = vpack.c.b16 %v1024, %v1017
      %v1676 = vpack.c.b16 %v1025, %v1018
      %v1677 = vpack.c.b16 %v1026, %v1019
      %v1678 = vpack.c.b16 %v1027, %v1020
      %v1679 = vpack.c.b16 %v1028, %v1021
      %v1680 = vpack.c.b16 %v1036, %v1029
      %v1681 = vpack.c.b16 %v1037, %v1030
      %v1682 = vpack.c.b16 %v1038, %v1031
      %v1683 = vpack.c.b16 %v1039, %v1032
      %v1684 = vpack.c.b16 %v1040, %v1033
      %v1685 = vpack.c.b16 %v1041, %v1034
      %v1686 = vpack.c.b16 %v1042, %v1035
      %v1687 = vpack.c.b16 %v1050, %v1043
      %v1688 = vpack.c.b16 %v1051, %v1044
      %v1689 = vpack.c.b16 %v1052, %v1045
      %v1690 = vpack.c.b16 %v1053, %v1046
      %v1691 = vpack.c.b16 %v1054, %v1047
      %v1692 = vpack.c.b16 %v1055, %v1048
      %v1693 = vpack.c.b16 %v1056, %v1049
      %v1694 = vpack.c.b16 %v1064, %v1057
      %v1695 = vpack.c.b16 %v1065, %v1058
      %v1696 = vpack.c.b16 %v1066, %v1059
      %v1697 = vpack.c.b16 %v1067, %v1060
      %v1698 = vpack.c.b16 %v1068, %v1061
      %v1699 = vpack.c.b16 %v1069, %v1062
      %v1700 = vpack.c.b16 %v1070, %v1063
      %v1701 = vpack.c.b16 %v1078, %v1071
      %v1702 = vpack.c.b16 %v1079, %v1072
      %v1703 = vpack.c.b16 %v1080, %v1073
      %v1704 = vpack.c.b16 %v1081, %v1074
      %v1705 = vpack.c.b16 %v1082, %v1075
      %v1706 = vpack.c.b16 %v1083, %v1076
      %v1707 = vpack.c.b16 %v1084, %v1077
      %v1708 = vpack.c.b16 %v1092, %v1085
      %v1709 = vpack.c.b16 %v1093, %v1086
      %v1710 = vpack.c.b16 %v1094, %v1087
      %v1711 = vpack.c.b16 %v1095, %v1088
      %v1712 = vpack.c.b16 %v1096, %v1089
      %v1713 = vpack.c.b16 %v1097, %v1090
      %v1714 = vpack.c.b16 %v1098, %v1091
      %v1715 = vpack.c.b16 %v1106, %v1099
      %v1716 = vpack.c.b16 %v1107, %v1100
      %v1717 = vpack.c.b16 %v1108, %v1101
      %v1718 = vpack.c.b16 %v1109, %v1102
      %v1719 = vpack.c.b16 %v1110, %v1103
      %v1720 = vpack.c.b16 %v1111, %v1104
      %v1721 = vpack.c.b16 %v1112, %v1105
      %v1722 = vpack.c.b16 %v1120, %v1113
      %v1723 = vpack.c.b16 %v1121, %v1114
      %v1724 = vpack.c.b16 %v1122, %v1115
      %v1725 = vpack.c.b16 %v1123, %v1116
      %v1726 = vpack.c.b16 %v1124, %v1117
      %v1727 = vpack.c.b16 %v1125, %v1118
      %v1728 = vpack.c.b16 %v1126, %v1119
      %v1729 = vpack.c.b16 %v1134, %v1127
      %v1730 = vpack.c.b16 %v1135, %v1128
      %v1731 = vpack.c.b16 %v1136, %v1129
      %v1732 = vpack.c.b16 %v1137, %v1130
      %v1733 = vpack.c.b16 %v1138, %v1131
      %v1734 = vpack.c.b16 %v1139, %v1132
      %v1735 = vpack.c.b16 %v1140, %v1133
      %v1736 = vpack.c.b16 %v1148, %v1141
      %v1737 = vpack.c.b16 %v1149, %v1142
      %v1738 = vpack.c.b16 %v1150, %v1143
      %v1739 = vpack.c.b16 %v1151, %v1144
      %v1740 = vpack.c.b16 %v1152, %v1145
      %v1741 = vpack.c.b16 %v1153, %v1146
      %v1742 = vpack.c.b16 %v1154, %v1147
      %v1743 = vpack.c.b16 %v1162, %v1155
      %v1744 = vpack.c.b16 %v1163, %v1156
      %v1745 = vpack.c.b16 %v1164, %v1157
      %v1746 = vpack.c.b16 %v1165, %v1158
      %v1747 = vpack.c.b16 %v1166, %v1159
      %v1748 = vpack.c.b16 %v1167, %v1160
      %v1749 = vpack.c.b16 %v1168, %v1161
      %v1750 = vpack.c.b16 %v1176, %v1169
      %v1751 = vpack.c.b16 %v1177, %v1170
      %v1752 = vpack.c.b16 %v1178, %v1171
      %v1753 = vpack.c.b16 %v1179, %v1172
      %v1754 = vpack.c.b16 %v1180, %v1173
      %v1755 = vpack.c.b16 %v1181, %v1174
      %v1756 = vpack.c.b16 %v1182, %v1175
      %v1757 = vpack.c.b16 %v1190, %v1183
      %v1758 = vpack.c.b16 %v1191, %v1184
      %v1759 = vpack.c.b16 %v1192, %v1185
      %v1760 = vpack.c.b16 %v1193, %v1186
      %v1761 = vpack.c.b16 %v1194, %v1187
      %v1762 = vpack.c.b16 %v1195, %v1188
      %v1763 = vpack.c.b16 %v1196, %v1189
      %v1764 = vpack.c.b16 %v1204, %v1197
      %v1765 = vpack.c.b16 %v1205, %v1198
      %v1766 = vpack.c.b16 %v1206, %v1199
      %v1767 = vpack.c.b16 %v1207, %v1200
      %v1768 = vpack.c.b16 %v1208, %v1201
      %v1769 = vpack.c.b16 %v1209, %v1202
      %v1770 = vpack.c.b16 %v1210, %v1203
      %v1771 = vpack.c.b16 %v1218, %v1211
      %v1772 = vpack.c.b16 %v1219, %v1212
      %v1773 = vpack.c.b16 %v1220, %v1213
      %v1774 = vpack.c.b16 %v1221, %v1214
      %v1775 = vpack.c.b16 %v1222, %v1215
      %v1776 = vpack.c.b16 %v1223, %v1216
      %v1777 = vpack.c.b16 %v1224, %v1217
      %v1778 = vpack.c.b16 %v1232, %v1225
      %v1779 = vpack.c.b16 %v1233, %v1226
      %v1780 = vpack.c.b16 %v1234, %v1227
      %v1781 = vpack.c.b16 %v1235, %v1228
      %v1782 = vpack.c.b16 %v1236, %v1229
      %v1783 = vpack.c.b16 %v1237, %v1230
      %v1784 = vpack.c.b16 %v1238, %v1231
      %v1785 = vpack.c.b16 %v1246, %v1239
      %v1786 = vpack.c.b16 %v1247, %v1240
      %v1787 = vpack.c.b16 %v1248, %v1241
      %v1788 = vpack.c.b16 %v1249, %v1242
      %v1789 = vpack.c.b16 %v1250, %v1243
      %v1790 = vpack.c.b16 %v1251, %v1244
      %v1791 = vpack.c.b16 %v1252, %v1245
      %v1792 = vpack.c.b16 %v1260, %v1253
      %v1793 = vpack.c.b16 %v1261, %v1254
      %v1794 = vpack.c.b16 %v1262, %v1255
      %v1795 = vpack.c.b16 %v1263, %v1256
      %v1796 = vpack.c.b16 %v1264, %v1257
      %v1797 = vpack.c.b16 %v1265, %v1258
      %v1798 = vpack.c.b16 %v1266, %v1259
      %v1799 = vpack.c.b16 %v1274, %v1267
      %v1800 = vpack.c.b16 %v1275, %v1268
      %v1801 = vpack.c.b16 %v1276, %v1269
      %v1802 = vpack.c.b16 %v1277, %v1270
      %v1803 = vpack.c.b16 %v1278, %v1271
      %v1804 = vpack.c.b16 %v1279, %v1272
      %v1805 = vpack.c.b16 %v1280, %v1273
      %v1806 = vpack.c.b16 %v1288, %v1281
      %v1807 = vpack.c.b16 %v1289, %v1282
      %v1808 = vpack.c.b16 %v1290, %v1283
      %v1809 = vpack.c.b16 %v1291, %v1284
      %v1810 = vpack.c.b16 %v1292, %v1285
      %v1811 = vpack.c.b16 %v1293, %v1286
      %v1812 = vpack.c.b16 %v1294, %v1287
      %v1813 = vpack.c.b16 %v1302, %v1295
      %v1814 = vpack.c.b16 %v1303, %v1296
      %v1815 = vpack.c.b16 %v1304, %v1297
      %v1816 = vpack.c.b16 %v1305, %v1298
      %v1817 = vpack.c.b16 %v1306, %v1299
      %v1818 = vpack.c.b16 %v1307, %v1300
      %v1819 = vpack.c.b16 %v1308, %v1301
      %v1820 = vpack.c.b16 %v1316, %v1309
      %v1821 = vpack.c.b16 %v1317, %v1310
      %v1822 = vpack.c.b16 %v1318, %v1311
      %v1823 = vpack.c.b16 %v1319, %v1312
      %v1824 = vpack.c.b16 %v1320, %v1313
      %v1825 = vpack.c.b16 %v1321, %v1314
      %v1826 = vpack.c.b16 %v1322, %v1315
      %v1827 = vpack.c.b16 %v1330, %v1323
      %v1828 = vpack.c.b16 %v1331, %v1324
      %v1829 = vpack.c.b16 %v1332, %v1325
      %v1830 = vpack.c.b16 %v1333, %v1326
      %v1831 = vpack.c.b16 %v1334, %v1327
      %v1832 = vpack.c.b16 %v1335, %v1328
      %v1833 = vpack.c.b16 %v1336, %v1329
      %v1834 = vpack.c.b16 %v1344, %v1337
      %v1835 = vpack.c.b16 %v1345, %v1338
      %v1836 = vpack.c.b16 %v1346, %v1339
      %v1837 = vpack.c.b16 %v1347, %v1340
      %v1838 = vpack.c.b16 %v1348, %v1341
      %v1839 = vpack.c.b16 %v1349, %v1342
      %v1840 = vpack.c.b16 %v1350, %v1343
      %v1841 = vpack.c.b16 %v1358, %v1351
      %v1842 = vpack.c.b16 %v1359, %v1352
      %v1843 = vpack.c.b16 %v1360, %v1353
      %v1844 = vpack.c.b16 %v1361, %v1354
      %v1845 = vpack.c.b16 %v1362, %v1355
      %v1846 = vpack.c.b16 %v1363, %v1356
      %v1847 = vpack.c.b16 %v1364, %v1357
      %v1848 = vpack.c.b16 %v1372, %v1365
      %v1849 = vpack.c.b16 %v1373, %v1366
      %v1850 = vpack.c.b16 %v1374, %v1367
      %v1851 = vpack.c.b16 %v1375, %v1368
      %v1852 = vpack.c.b16 %v1376, %v1369
      %v1853 = vpack.c.b16 %v1377, %v1370
      %v1854 = vpack.c.b16 %v1378, %v1371
      %v1855 = vpack.c.b16 %v1386, %v1379
      %v1856 = vpack.c.b16 %v1387, %v1380
      %v1857 = vpack.c.b16 %v1388, %v1381
      %v1858 = vpack.c.b16 %v1389, %v1382
      %v1859 = vpack.c.b16 %v1390, %v1383
      %v1860 = vpack.c.b16 %v1391, %v1384
      %v1861 = vpack.c.b16 %v1392, %v1385
      %v1862 = vpack.c.b16 %v1400, %v1393
      %v1863 = vpack.c.b16 %v1401, %v1394
      %v1864 = vpack.c.b16 %v1402, %v1395
      %v1865 = vpack.c.b16 %v1403, %v1396
      %v1866 = vpack.c.b16 %v1404, %v1397
      %v1867 = vpack.c.b16 %v1405, %v1398
      %v1868 = vpack.c.b16 %v1406, %v1399
      %v1869 = vpack.c.b16 %v1414, %v1407
      %v1870 = vpack.c.b16 %v1415, %v1408
      %v1871 = vpack.c.b16 %v1416, %v1409
      %v1872 = vpack.c.b16 %v1417, %v1410
      %v1873 = vpack.c.b16 %v1418, %v1411
      %v1874 = vpack.c.b16 %v1419, %v1412
      %v1875 = vpack.c.b16 %v1420, %v1413
      %v1876 = vpack.c.b16 %v1428, %v1421
      %v1877 = vpack.c.b16 %v1429, %v1422
      %v1878 = vpack.c.b16 %v1430, %v1423
      %v1879 = vpack.c.b16 %v1431, %v1424
      %v1880 = vpack.c.b16 %v1432, %v1425
      %v1881 = vpack.c.b16 %v1433, %v1426
      %v1882 = vpack.c.b16 %v1434, %v1427
      %v1883 = vpack.c.b16 %v1442, %v1435
      %v1884 = vpack.c.b16 %v1443, %v1436
      %v1885 = vpack.c.b16 %v1444, %v1437
      %v1886 = vpack.c.b16 %v1445, %v1438
      %v1887 = vpack.c.b16 %v1446, %v1439
      %v1888 = vpack.c.b16 %v1447, %v1440
      %v1889 = vpack.c.b16 %v1448, %v1441
      %v1890 = vpack.c.b16 %v1456, %v1449
      %v1891 = vpack.c.b16 %v1457, %v1450
      %v1892 = vpack.c.b16 %v1458, %v1451
      %v1893 = vpack.c.b16 %v1459, %v1452
      %v1894 = vpack.c.b16 %v1460, %v1453
      %v1895 = vpack.c.b16 %v1461, %v1454
      %v1896 = vpack.c.b16 %v1462, %v1455
      %v1897 = vpack.c.b16 %v1470, %v1463
      %v1898 = vpack.c.b16 %v1471, %v1464
      %v1899 = vpack.c.b16 %v1472, %v1465
      %v1900 = vpack.c.b16 %v1473, %v1466
      %v1901 = vpack.c.b16 %v1474, %v1467
      %v1902 = vpack.c.b16 %v1475, %v1468
      %v1903 = vpack.c.b16 %v1476, %v1469
      %v1904 = vpack.c.b16 %v1484, %v1477
      %v1905 = vpack.c.b16 %v1485, %v1478
      %v1906 = vpack.c.b16 %v1486, %v1479
      %v1907 = vpack.c.b16 %v1487, %v1480
      %v1908 = vpack.c.b16 %v1488, %v1481
      %v1909 = vpack.c.b16 %v1489, %v1482
      %v1910 = vpack.c.b16 %v1490, %v1483
      %v1911 = vpack.c.b16 %v1498, %v1491
      %v1912 = vpack.c.b16 %v1499, %v1492
      %v1913 = vpack.c.b16 %v1500, %v1493
      %v1914 = vpack.c.b16 %v1501, %v1494
      %v1915 = vpack.c.b16 %v1502, %v1495
      %v1916 = vpack.c.b16 %v1503, %v1496
      %v1917 = vpack.c.b16 %v1504, %v1497
      %v1918 = vpack.c.b16 %v1512, %v1505
      %v1919 = vpack.c.b16 %v1513, %v1506
      %v1920 = vpack.c.b16 %v1514, %v1507
      %v1921 = vpack.c.b16 %v1515, %v1508
      %v1922 = vpack.c.b16 %v1516, %v1509
      %v1923 = vpack.c.b16 %v1517, %v1510
      %v1924 = vpack.c.b16 %v1518, %v1511
      %v1925 = vpack.c.b16 %v1526, %v1519
      %v1926 = vpack.c.b16 %v1527, %v1520
      %v1927 = vpack.c.b16 %v1528, %v1521
      %v1928 = vpack.c.b16 %v1529, %v1522
      %v1929 = vpack.c.b16 %v1530, %v1523
      %v1930 = vpack.c.b16 %v1531, %v1524
      %v1931 = vpack.c.b16 %v1532, %v1525
      %v1932 = vpack.c.b16 %v1540, %v1533
      %v1933 = vpack.c.b16 %v1541, %v1534
      %v1934 = vpack.c.b16 %v1542, %v1535
      %v1935 = vpack.c.b16 %v1543, %v1536
      %v1936 = vpack.c.b16 %v1544, %v1537
      %v1937 = vpack.c.b16 %v1545, %v1538
      %v1938 = vpack.c.b16 %v1546, %v1539
      %v1939 = vpack.c.b16 %v1554, %v1547
      %v1940 = vpack.c.b16 %v1555, %v1548
      %v1941 = vpack.c.b16 %v1556, %v1549
      %v1942 = vpack.c.b16 %v1557, %v1550
      %v1943 = vpack.c.b16 %v1558, %v1551
      %v1944 = vpack.c.b16 %v1559, %v1552
      %v1945 = vpack.c.b16 %v1560, %v1553
      %v1946 = vpack.c.b16 %v1568, %v1561
      %v1947 = vpack.c.b16 %v1569, %v1562
      %v1948 = vpack.c.b16 %v1570, %v1563
      %v1949 = vpack.c.b16 %v1571, %v1564
      %v1950 = vpack.c.b16 %v1572, %v1565
      %v1951 = vpack.c.b16 %v1573, %v1566
      %v1952 = vpack.c.b16 %v1574, %v1567
      %v1953 = vpack.c.b16 %v1582, %v1575
      %v1954 = vpack.c.b16 %v1583, %v1576
      %v1955 = vpack.c.b16 %v1584, %v1577
      %v1956 = vpack.c.b16 %v1585, %v1578
      %v1957 = vpack.c.b16 %v1586, %v1579
      %v1958 = vpack.c.b16 %v1587, %v1580
      %v1959 = vpack.c.b16 %v1588, %v1581
      %v1960 = vpack.c.b16 %v1596, %v1589
      %v1961 = vpack.c.b16 %v1597, %v1590
      %v1962 = vpack.c.b16 %v1598, %v1591
      %v1963 = vpack.c.b16 %v1599, %v1592
      %v1964 = vpack.c.b16 %v1600, %v1593
      %v1965 = vpack.c.b16 %v1601, %v1594
      %v1966 = vpack.c.b16 %v1602, %v1595
      %v1967 = vpack.c.b16 %v1610, %v1603
      %v1968 = vpack.c.b16 %v1611, %v1604
      %v1969 = vpack.c.b16 %v1612, %v1605
      %v1970 = vpack.c.b16 %v1613, %v1606
      %v1971 = vpack.c.b16 %v1614, %v1607
      %v1972 = vpack.c.b16 %v1615, %v1608
      %v1973 = vpack.c.b16 %v1616, %v1609
      %v1974 = vpack.c.b16 %v1624, %v1617
      %v1975 = vpack.c.b16 %v1625, %v1618
      %v1976 = vpack.c.b16 %v1626, %v1619
      %v1977 = vpack.c.b16 %v1627, %v1620
      %v1978 = vpack.c.b16 %v1628, %v1621
      %v1979 = vpack.c.b16 %v1629, %v1622
      %v1980 = vpack.c.b16 %v1630, %v1623
      %v1981 = vpack.c.b16 %v1638, %v1631
      %v1982 = vpack.c.b16 %v1639, %v1632
      %v1983 = vpack.c.b16 %v1640, %v1633
      %v1984 = vpack.c.b16 %v1641, %v1634
      %v1985 = vpack.c.b16 %v1642, %v1635
      %v1986 = vpack.c.b16 %v1643, %v1636
      %v1987 = vpack.c.b16 %v1644, %v1637
      %v1988 = vpack.c.b16 %v1652, %v1645
      %v1989 = vpack.c.b16 %v1653, %v1646
      %v1990 = vpack.c.b16 %v1654, %v1647
      %v1991 = vpack.c.b16 %v1655, %v1648
      %v1992 = vpack.c.b16 %v1656, %v1649
      %v1993 = vpack.c.b16 %v1657, %v1650
      %v1994 = vpack.c.b16 %v1658, %v1651
      %2331 = vmatprep.subr.bf16.mxu0 %v1660
      %2332 = vmatpush1.bf16.msra.mxu0 %v1659
      %2333 = vmatprep.subr.bf16.mxu0 %v1667
      %2334 = vmatpush1.bf16.msra.mxu0 %v1666
      %2335 = vmatprep.subr.bf16.mxu0 %v1674
      %2336 = vmatpush1.bf16.msra.mxu0 %v1673
      %2337 = vmatprep.subr.bf16.mxu0 %v1681
      %2338 = vmatpush1.bf16.msra.mxu0 %v1680
      %2339 = vmatprep.subr.bf16.mxu0 %v1688
      %2340 = vmatpush1.bf16.msra.mxu0 %v1687
      %2341 = vmatprep.subr.bf16.mxu0 %v1695
      %2342 = vmatpush1.bf16.msra.mxu0 %v1694
      %2343 = vmatprep.subr.bf16.mxu0 %v1702
      %2344 = vmatpush1.bf16.msra.mxu0 %v1701
      %2345 = vmatprep.subr.bf16.mxu0 %v1709
      %2346 = vmatpush1.bf16.msra.mxu0 %v1708
      %2347 = vmatprep.subr.bf16.mxu0 %v1716
      %2348 = vmatpush1.bf16.msra.mxu0 %v1715
      %2349 = vmatprep.subr.bf16.mxu0 %v1723
      %2350 = vmatpush1.bf16.msra.mxu0 %v1722
      %2351 = vmatprep.subr.bf16.mxu0 %v1730
      %2352 = vmatpush1.bf16.msra.mxu0 %v1729
      %2353 = vmatprep.subr.bf16.mxu0 %v1737
      %2354 = vmatpush1.bf16.msra.mxu0 %v1736
      %2355 = vmatprep.subr.bf16.mxu0 %v1744
      %2356 = vmatpush1.bf16.msra.mxu0 %v1743
      %2357 = vmatprep.subr.bf16.mxu0 %v1751
      %2358 = vmatpush1.bf16.msra.mxu0 %v1750
      %2359 = vmatprep.subr.bf16.mxu0 %v1758
      %2360 = vmatpush1.bf16.msra.mxu0 %v1757
      %2361 = vmatprep.subr.bf16.mxu0 %v1765
      %2362 = vmatpush1.bf16.msra.mxu0 %v1764
      %2363 = vmatprep.mubr.bf16.mxu0 %v592
      %2364 = vmatmul.mubr.bf16.gmra.mrb[0].mxu0 %v591
      %v2365 = vpop.f32.mrb[0].mxu0
      %v2366 = vadd.f32 %v580, %v2365
      %v2367 = vpop.f32.mrb[0].mxu0
      %v2368 = vadd.f32 %v580, %v2367
      %v2369 = vpop.f32.mrb[0].mxu0
      %v2370 = vpop.f32.mrb[0].mxu0
      %2371 = vdwg.mxu0
      %2372 = vmatprep.subr.bf16.mxu0 %v1772
      %2373 = vmatpush1.bf16.msra.mxu0 %v1771
      %2374 = vmatprep.subr.bf16.mxu0 %v1779
      %2375 = vmatpush1.bf16.msra.mxu0 %v1778
      %2376 = vmatprep.subr.bf16.mxu0 %v1786
      %2377 = vmatpush1.bf16.msra.mxu0 %v1785
      %2378 = vmatprep.subr.bf16.mxu0 %v1793
      %2379 = vmatpush1.bf16.msra.mxu0 %v1792
      %2380 = vmatprep.subr.bf16.mxu0 %v1800
      %2381 = vmatpush1.bf16.msra.mxu0 %v1799
      %2382 = vmatprep.subr.bf16.mxu0 %v1807
      %2383 = vmatpush1.bf16.msra.mxu0 %v1806
      %2384 = vmatprep.subr.bf16.mxu0 %v1814
      %2385 = vmatpush1.bf16.msra.mxu0 %v1813
      %2386 = vmatprep.subr.bf16.mxu0 %v1821
      %2387 = vmatpush1.bf16.msra.mxu0 %v1820
      %2388 = vmatprep.subr.bf16.mxu0 %v1828
      %2389 = vmatpush1.bf16.msra.mxu0 %v1827
      %2390 = vmatprep.subr.bf16.mxu0 %v1835
      %2391 = vmatpush1.bf16.msra.mxu0 %v1834
      %2392 = vmatprep.subr.bf16.mxu0 %v1842
      %2393 = vmatpush1.bf16.msra.mxu0 %v1841
      %2394 = vmatprep.subr.bf16.mxu0 %v1849
      %2395 = vmatpush1.bf16.msra.mxu0 %v1848
      %2396 = vmatprep.subr.bf16.mxu0 %v1856
      %2397 = vmatpush1.bf16.msra.mxu0 %v1855
      %2398 = vmatprep.subr.bf16.mxu0 %v1863
      %2399 = vmatpush1.bf16.msra.mxu0 %v1862
      %2400 = vmatprep.subr.bf16.mxu0 %v1870
      %2401 = vmatpush1.bf16.msra.mxu0 %v1869
      %2402 = vmatprep.subr.bf16.mxu0 %v1877
      %2403 = vmatpush1.bf16.msra.mxu0 %v1876
      %2404 = vmatprep.mubr.bf16.mxu0 %v594
      %2405 = vmatmul.mubr.bf16.gmra.mrb[0].mxu0 %v593
      %v2406 = vpop.f32.mrb[0].mxu0
      %v2407 = vadd.f32 %v2366, %v2406
      %v2408 = vpop.f32.mrb[0].mxu0
      %v2409 = vadd.f32 %v2368, %v2408
      %v2410 = vpop.f32.mrb[0].mxu0
      %v2411 = vpop.f32.mrb[0].mxu0
      %2412 = vdwg.mxu0
      %2413 = vmatprep.subr.bf16.mxu0 %v1884
      %2414 = vmatpush1.bf16.msra.mxu0 %v1883
      %2415 = vmatprep.subr.bf16.mxu0 %v1891
      %2416 = vmatpush1.bf16.msra.mxu0 %v1890
      %2417 = vmatprep.subr.bf16.mxu0 %v1898
      %2418 = vmatpush1.bf16.msra.mxu0 %v1897
      %2419 = vmatprep.subr.bf16.mxu0 %v1905
      %2420 = vmatpush1.bf16.msra.mxu0 %v1904
      %2421 = vmatprep.subr.bf16.mxu0 %v1912
      %2422 = vmatpush1.bf16.msra.mxu0 %v1911
      %2423 = vmatprep.subr.bf16.mxu0 %v1919
      %2424 = vmatpush1.bf16.msra.mxu0 %v1918
      %2425 = vmatprep.subr.bf16.mxu0 %v1926
      %2426 = vmatpush1.bf16.msra.mxu0 %v1925
      %2427 = vmatprep.subr.bf16.mxu0 %v1933
      %2428 = vmatpush1.bf16.msra.mxu0 %v1932
      %2429 = vmatprep.subr.bf16.mxu0 %v1940
      %2430 = vmatpush1.bf16.msra.mxu0 %v1939
      %2431 = vmatprep.subr.bf16.mxu0 %v1947
      %2432 = vmatpush1.bf16.msra.mxu0 %v1946
      %2433 = vmatprep.subr.bf16.mxu0 %v1954
      %2434 = vmatpush1.bf16.msra.mxu0 %v1953
      %2435 = vmatprep.subr.bf16.mxu0 %v1961
      %2436 = vmatpush1.bf16.msra.mxu0 %v1960
      %2437 = vmatprep.subr.bf16.mxu0 %v1968
      %2438 = vmatpush1.bf16.msra.mxu0 %v1967
      %2439 = vmatprep.subr.bf16.mxu0 %v1975
      %2440 = vmatpush1.bf16.msra.mxu0 %v1974
      %2441 = vmatprep.subr.bf16.mxu0 %v1982
      %2442 = vmatpush1.bf16.msra.mxu0 %v1981
      %2443 = vmatprep.subr.bf16.mxu0 %v1989
      %2444 = vmatpush1.bf16.msra.mxu0 %v1988
      %2445 = vmatprep.mubr.bf16.mxu0 %v596
      %2446 = vmatmul.mubr.bf16.gmra.mrb[0].mxu0 %v595
      %v2447 = vpop.f32.mrb[0].mxu0
      %v2448 = vadd.f32 %v2407, %v2447
      %v2449 = vpop.f32.mrb[0].mxu0
      %v2450 = vadd.f32 %v2409, %v2449
      %v2451 = vpop.f32.mrb[0].mxu0
      %v2452 = vpop.f32.mrb[0].mxu0
      %2453 = vdwg.mxu0
      %2454 = vmatprep.subr.bf16.mxu0 %v1662
      %2455 = vmatpush1.bf16.msra.mxu0 %v1661
      %2456 = vmatprep.subr.bf16.mxu0 %v1669
      %2457 = vmatpush1.bf16.msra.mxu0 %v1668
      %2458 = vmatprep.subr.bf16.mxu0 %v1676
      %2459 = vmatpush1.bf16.msra.mxu0 %v1675
      %2460 = vmatprep.subr.bf16.mxu0 %v1683
      %2461 = vmatpush1.bf16.msra.mxu0 %v1682
      %2462 = vmatprep.subr.bf16.mxu0 %v1690
      %2463 = vmatpush1.bf16.msra.mxu0 %v1689
      %2464 = vmatprep.subr.bf16.mxu0 %v1697
      %2465 = vmatpush1.bf16.msra.mxu0 %v1696
      %2466 = vmatprep.subr.bf16.mxu0 %v1704
      %2467 = vmatpush1.bf16.msra.mxu0 %v1703
      %2468 = vmatprep.subr.bf16.mxu0 %v1711
      %2469 = vmatpush1.bf16.msra.mxu0 %v1710
      %2470 = vmatprep.subr.bf16.mxu0 %v1718
      %2471 = vmatpush1.bf16.msra.mxu0 %v1717
      %2472 = vmatprep.subr.bf16.mxu0 %v1725
      %2473 = vmatpush1.bf16.msra.mxu0 %v1724
      %2474 = vmatprep.subr.bf16.mxu0 %v1732
      %2475 = vmatpush1.bf16.msra.mxu0 %v1731
      %2476 = vmatprep.subr.bf16.mxu0 %v1739
      %2477 = vmatpush1.bf16.msra.mxu0 %v1738
      %2478 = vmatprep.subr.bf16.mxu0 %v1746
      %2479 = vmatpush1.bf16.msra.mxu0 %v1745
      %2480 = vmatprep.subr.bf16.mxu0 %v1753
      %2481 = vmatpush1.bf16.msra.mxu0 %v1752
      %2482 = vmatprep.subr.bf16.mxu0 %v1760
      %2483 = vmatpush1.bf16.msra.mxu0 %v1759
      %2484 = vmatprep.subr.bf16.mxu0 %v1767
      %2485 = vmatpush1.bf16.msra.mxu0 %v1766
      %2486 = vmatprep.mubr.bf16.mxu0 %v592
      %2487 = vmatmul.mubr.bf16.gmra.mrb[0].mxu0 %v591
      %v2488 = vpop.f32.mrb[0].mxu0
      %v2489 = vadd.f32 %v580, %v2488
      %v2490 = vpop.f32.mrb[0].mxu0
      %v2491 = vadd.f32 %v580, %v2490
      %v2492 = vpop.f32.mrb[0].mxu0
      %v2493 = vpop.f32.mrb[0].mxu0
      %2494 = vdwg.mxu0
      %2495 = vmatprep.subr.bf16.mxu0 %v1774
      %2496 = vmatpush1.bf16.msra.mxu0 %v1773
      %2497 = vmatprep.subr.bf16.mxu0 %v1781
      %2498 = vmatpush1.bf16.msra.mxu0 %v1780
      %2499 = vmatprep.subr.bf16.mxu0 %v1788
      %2500 = vmatpush1.bf16.msra.mxu0 %v1787
      %2501 = vmatprep.subr.bf16.mxu0 %v1795
      %2502 = vmatpush1.bf16.msra.mxu0 %v1794
      %2503 = vmatprep.subr.bf16.mxu0 %v1802
      %2504 = vmatpush1.bf16.msra.mxu0 %v1801
      %2505 = vmatprep.subr.bf16.mxu0 %v1809
      %2506 = vmatpush1.bf16.msra.mxu0 %v1808
      %2507 = vmatprep.subr.bf16.mxu0 %v1816
      %2508 = vmatpush1.bf16.msra.mxu0 %v1815
      %2509 = vmatprep.subr.bf16.mxu0 %v1823
      %2510 = vmatpush1.bf16.msra.mxu0 %v1822
      %2511 = vmatprep.subr.bf16.mxu0 %v1830
      %2512 = vmatpush1.bf16.msra.mxu0 %v1829
      %2513 = vmatprep.subr.bf16.mxu0 %v1837
      %2514 = vmatpush1.bf16.msra.mxu0 %v1836
      %2515 = vmatprep.subr.bf16.mxu0 %v1844
      %2516 = vmatpush1.bf16.msra.mxu0 %v1843
      %2517 = vmatprep.subr.bf16.mxu0 %v1851
      %2518 = vmatpush1.bf16.msra.mxu0 %v1850
      %2519 = vmatprep.subr.bf16.mxu0 %v1858
      %2520 = vmatpush1.bf16.msra.mxu0 %v1857
      %2521 = vmatprep.subr.bf16.mxu0 %v1865
      %2522 = vmatpush1.bf16.msra.mxu0 %v1864
      %2523 = vmatprep.subr.bf16.mxu0 %v1872
      %2524 = vmatpush1.bf16.msra.mxu0 %v1871
      %2525 = vmatprep.subr.bf16.mxu0 %v1879
      %2526 = vmatpush1.bf16.msra.mxu0 %v1878
      %2527 = vmatprep.mubr.bf16.mxu0 %v594
      %2528 = vmatmul.mubr.bf16.gmra.mrb[0].mxu0 %v593
      %v2529 = vpop.f32.mrb[0].mxu0
      %v2530 = vadd.f32 %v2489, %v2529
      %v2531 = vpop.f32.mrb[0].mxu0
      %v2532 = vadd.f32 %v2491, %v2531
      %v2533 = vpop.f32.mrb[0].mxu0
      %v2534 = vpop.f32.mrb[0].mxu0
      %2535 = vdwg.mxu0
      %2536 = vmatprep.subr.bf16.mxu0 %v1886
      %2537 = vmatpush1.bf16.msra.mxu0 %v1885
      %2538 = vmatprep.subr.bf16.mxu0 %v1893
      %2539 = vmatpush1.bf16.msra.mxu0 %v1892
      %2540 = vmatprep.subr.bf16.mxu0 %v1900
      %2541 = vmatpush1.bf16.msra.mxu0 %v1899
      %2542 = vmatprep.subr.bf16.mxu0 %v1907
      %2543 = vmatpush1.bf16.msra.mxu0 %v1906
      %2544 = vmatprep.subr.bf16.mxu0 %v1914
      %2545 = vmatpush1.bf16.msra.mxu0 %v1913
      %2546 = vmatprep.subr.bf16.mxu0 %v1921
      %2547 = vmatpush1.bf16.msra.mxu0 %v1920
      %2548 = vmatprep.subr.bf16.mxu0 %v1928
      %2549 = vmatpush1.bf16.msra.mxu0 %v1927
      %2550 = vmatprep.subr.bf16.mxu0 %v1935
      %2551 = vmatpush1.bf16.msra.mxu0 %v1934
      %2552 = vmatprep.subr.bf16.mxu0 %v1942
      %2553 = vmatpush1.bf16.msra.mxu0 %v1941
      %2554 = vmatprep.subr.bf16.mxu0 %v1949
      %2555 = vmatpush1.bf16.msra.mxu0 %v1948
      %2556 = vmatprep.subr.bf16.mxu0 %v1956
      %2557 = vmatpush1.bf16.msra.mxu0 %v1955
      %2558 = vmatprep.subr.bf16.mxu0 %v1963
      %2559 = vmatpush1.bf16.msra.mxu0 %v1962
      %2560 = vmatprep.subr.bf16.mxu0 %v1970
      %2561 = vmatpush1.bf16.msra.mxu0 %v1969
      %2562 = vmatprep.subr.bf16.mxu0 %v1977
      %2563 = vmatpush1.bf16.msra.mxu0 %v1976
      %2564 = vmatprep.subr.bf16.mxu0 %v1984
      %2565 = vmatpush1.bf16.msra.mxu0 %v1983
      %2566 = vmatprep.subr.bf16.mxu0 %v1991
      %2567 = vmatpush1.bf16.msra.mxu0 %v1990
      %2568 = vmatprep.mubr.bf16.mxu0 %v596
      %2569 = vmatmul.mubr.bf16.gmra.mrb[0].mxu0 %v595
      %v2570 = vpop.f32.mrb[0].mxu0
      %v2571 = vadd.f32 %v2530, %v2570
      %v2572 = vpop.f32.mrb[0].mxu0
      %v2573 = vadd.f32 %v2532, %v2572
      %v2574 = vpop.f32.mrb[0].mxu0
      %v2575 = vpop.f32.mrb[0].mxu0
      %2576 = vdwg.mxu0
      %2577 = vmatprep.subr.bf16.mxu0 %v1664
      %2578 = vmatpush1.bf16.msra.mxu0 %v1663
      %2579 = vmatprep.subr.bf16.mxu0 %v1671
      %2580 = vmatpush1.bf16.msra.mxu0 %v1670
      %2581 = vmatprep.subr.bf16.mxu0 %v1678
      %2582 = vmatpush1.bf16.msra.mxu0 %v1677
      %2583 = vmatprep.subr.bf16.mxu0 %v1685
      %2584 = vmatpush1.bf16.msra.mxu0 %v1684
      %2585 = vmatprep.subr.bf16.mxu0 %v1692
      %2586 = vmatpush1.bf16.msra.mxu0 %v1691
      %2587 = vmatprep.subr.bf16.mxu0 %v1699
      %2588 = vmatpush1.bf16.msra.mxu0 %v1698
      %2589 = vmatprep.subr.bf16.mxu0 %v1706
      %2590 = vmatpush1.bf16.msra.mxu0 %v1705
      %2591 = vmatprep.subr.bf16.mxu0 %v1713
      %2592 = vmatpush1.bf16.msra.mxu0 %v1712
      %2593 = vmatprep.subr.bf16.mxu0 %v1720
      %2594 = vmatpush1.bf16.msra.mxu0 %v1719
      %2595 = vmatprep.subr.bf16.mxu0 %v1727
      %2596 = vmatpush1.bf16.msra.mxu0 %v1726
      %2597 = vmatprep.subr.bf16.mxu0 %v1734
      %2598 = vmatpush1.bf16.msra.mxu0 %v1733
      %2599 = vmatprep.subr.bf16.mxu0 %v1741
      %2600 = vmatpush1.bf16.msra.mxu0 %v1740
      %2601 = vmatprep.subr.bf16.mxu0 %v1748
      %2602 = vmatpush1.bf16.msra.mxu0 %v1747
      %2603 = vmatprep.subr.bf16.mxu0 %v1755
      %2604 = vmatpush1.bf16.msra.mxu0 %v1754
      %2605 = vmatprep.subr.bf16.mxu0 %v1762
      %2606 = vmatpush1.bf16.msra.mxu0 %v1761
      %2607 = vmatprep.subr.bf16.mxu0 %v1769
      %2608 = vmatpush1.bf16.msra.mxu0 %v1768
      %2609 = vmatprep.mubr.bf16.mxu0 %v592
      %2610 = vmatmul.mubr.bf16.gmra.mrb[0].mxu0 %v591
      %v2611 = vpop.f32.mrb[0].mxu0
      %v2612 = vadd.f32 %v580, %v2611
      %v2613 = vpop.f32.mrb[0].mxu0
      %v2614 = vadd.f32 %v580, %v2613
      %v2615 = vpop.f32.mrb[0].mxu0
      %v2616 = vpop.f32.mrb[0].mxu0
      %2617 = vdwg.mxu0
      %2618 = vmatprep.subr.bf16.mxu0 %v1776
      %2619 = vmatpush1.bf16.msra.mxu0 %v1775
      %2620 = vmatprep.subr.bf16.mxu0 %v1783
      %2621 = vmatpush1.bf16.msra.mxu0 %v1782
      %2622 = vmatprep.subr.bf16.mxu0 %v1790
      %2623 = vmatpush1.bf16.msra.mxu0 %v1789
      %2624 = vmatprep.subr.bf16.mxu0 %v1797
      %2625 = vmatpush1.bf16.msra.mxu0 %v1796
      %2626 = vmatprep.subr.bf16.mxu0 %v1804
      %2627 = vmatpush1.bf16.msra.mxu0 %v1803
      %2628 = vmatprep.subr.bf16.mxu0 %v1811
      %2629 = vmatpush1.bf16.msra.mxu0 %v1810
      %2630 = vmatprep.subr.bf16.mxu0 %v1818
      %2631 = vmatpush1.bf16.msra.mxu0 %v1817
      %2632 = vmatprep.subr.bf16.mxu0 %v1825
      %2633 = vmatpush1.bf16.msra.mxu0 %v1824
      %2634 = vmatprep.subr.bf16.mxu0 %v1832
      %2635 = vmatpush1.bf16.msra.mxu0 %v1831
      %2636 = vmatprep.subr.bf16.mxu0 %v1839
      %2637 = vmatpush1.bf16.msra.mxu0 %v1838
      %2638 = vmatprep.subr.bf16.mxu0 %v1846
      %2639 = vmatpush1.bf16.msra.mxu0 %v1845
      %2640 = vmatprep.subr.bf16.mxu0 %v1853
      %2641 = vmatpush1.bf16.msra.mxu0 %v1852
      %2642 = vmatprep.subr.bf16.mxu0 %v1860
      %2643 = vmatpush1.bf16.msra.mxu0 %v1859
      %2644 = vmatprep.subr.bf16.mxu0 %v1867
      %2645 = vmatpush1.bf16.msra.mxu0 %v1866
      %2646 = vmatprep.subr.bf16.mxu0 %v1874
      %2647 = vmatpush1.bf16.msra.mxu0 %v1873
      %2648 = vmatprep.subr.bf16.mxu0 %v1881
      %2649 = vmatpush1.bf16.msra.mxu0 %v1880
      %2650 = vmatprep.mubr.bf16.mxu0 %v594
      %2651 = vmatmul.mubr.bf16.gmra.mrb[0].mxu0 %v593
      %v2652 = vpop.f32.mrb[0].mxu0
      %v2653 = vadd.f32 %v2612, %v2652
      %v2654 = vpop.f32.mrb[0].mxu0
      %v2655 = vadd.f32 %v2614, %v2654
      %v2656 = vpop.f32.mrb[0].mxu0
      %v2657 = vpop.f32.mrb[0].mxu0
      %2658 = vdwg.mxu0
      %2659 = vmatprep.subr.bf16.mxu0 %v1888
      %2660 = vmatpush1.bf16.msra.mxu0 %v1887
      %2661 = vmatprep.subr.bf16.mxu0 %v1895
      %2662 = vmatpush1.bf16.msra.mxu0 %v1894
      %2663 = vmatprep.subr.bf16.mxu0 %v1902
      %2664 = vmatpush1.bf16.msra.mxu0 %v1901
      %2665 = vmatprep.subr.bf16.mxu0 %v1909
      %2666 = vmatpush1.bf16.msra.mxu0 %v1908
      %2667 = vmatprep.subr.bf16.mxu0 %v1916
      %2668 = vmatpush1.bf16.msra.mxu0 %v1915
      %2669 = vmatprep.subr.bf16.mxu0 %v1923
      %2670 = vmatpush1.bf16.msra.mxu0 %v1922
      %2671 = vmatprep.subr.bf16.mxu0 %v1930
      %2672 = vmatpush1.bf16.msra.mxu0 %v1929
      %2673 = vmatprep.subr.bf16.mxu0 %v1937
      %2674 = vmatpush1.bf16.msra.mxu0 %v1936
      %2675 = vmatprep.subr.bf16.mxu0 %v1944
      %2676 = vmatpush1.bf16.msra.mxu0 %v1943
      %2677 = vmatprep.subr.bf16.mxu0 %v1951
      %2678 = vmatpush1.bf16.msra.mxu0 %v1950
      %2679 = vmatprep.subr.bf16.mxu0 %v1958
      %2680 = vmatpush1.bf16.msra.mxu0 %v1957
      %2681 = vmatprep.subr.bf16.mxu0 %v1965
      %2682 = vmatpush1.bf16.msra.mxu0 %v1964
      %2683 = vmatprep.subr.bf16.mxu0 %v1972
      %2684 = vmatpush1.bf16.msra.mxu0 %v1971
      %2685 = vmatprep.subr.bf16.mxu0 %v1979
      %2686 = vmatpush1.bf16.msra.mxu0 %v1978
      %2687 = vmatprep.subr.bf16.mxu0 %v1986
      %2688 = vmatpush1.bf16.msra.mxu0 %v1985
      %2689 = vmatprep.subr.bf16.mxu0 %v1993
      %2690 = vmatpush1.bf16.msra.mxu0 %v1992
      %2691 = vmatprep.mubr.bf16.mxu0 %v596
      %2692 = vmatmul.mubr.bf16.gmra.mrb[0].mxu0 %v595
      %v2693 = vpop.f32.mrb[0].mxu0
      %v2694 = vadd.f32 %v2653, %v2693
      %v2695 = vpop.f32.mrb[0].mxu0
      %v2696 = vadd.f32 %v2655, %v2695
      %v2697 = vpop.f32.mrb[0].mxu0
      %v2698 = vpop.f32.mrb[0].mxu0
      %2699 = vdwg.mxu0
      %2700 = vmatprep.subr.bf16.mxu0 0
      %2701 = vmatpush1.bf16.msra.mxu0 %v1665
      %2702 = vmatprep.subr.bf16.mxu0 0
      %2703 = vmatpush1.bf16.msra.mxu0 %v1672
      %2704 = vmatprep.subr.bf16.mxu0 0
      %2705 = vmatpush1.bf16.msra.mxu0 %v1679
      %2706 = vmatprep.subr.bf16.mxu0 0
      %2707 = vmatpush1.bf16.msra.mxu0 %v1686
      %2708 = vmatprep.subr.bf16.mxu0 0
      %2709 = vmatpush1.bf16.msra.mxu0 %v1693
      %2710 = vmatprep.subr.bf16.mxu0 0
      %2711 = vmatpush1.bf16.msra.mxu0 %v1700
      %2712 = vmatprep.subr.bf16.mxu0 0
      %2713 = vmatpush1.bf16.msra.mxu0 %v1707
      %2714 = vmatprep.subr.bf16.mxu0 0
      %2715 = vmatpush1.bf16.msra.mxu0 %v1714
      %2716 = vmatprep.subr.bf16.mxu0 0
      %2717 = vmatpush1.bf16.msra.mxu0 %v1721
      %2718 = vmatprep.subr.bf16.mxu0 0
      %2719 = vmatpush1.bf16.msra.mxu0 %v1728
      %2720 = vmatprep.subr.bf16.mxu0 0
      %2721 = vmatpush1.bf16.msra.mxu0 %v1735
      %2722 = vmatprep.subr.bf16.mxu0 0
      %2723 = vmatpush1.bf16.msra.mxu0 %v1742
      %2724 = vmatprep.subr.bf16.mxu0 0
      %2725 = vmatpush1.bf16.msra.mxu0 %v1749
      %2726 = vmatprep.subr.bf16.mxu0 0
      %2727 = vmatpush1.bf16.msra.mxu0 %v1756
      %2728 = vmatprep.subr.bf16.mxu0 0
      %2729 = vmatpush1.bf16.msra.mxu0 %v1763
      %2730 = vmatprep.subr.bf16.mxu0 0
      %2731 = vmatpush1.bf16.msra.mxu0 %v1770
      %2732 = vmatprep.mubr.bf16.mxu0 %v592
      %2733 = vmatmul.mubr.bf16.gmra.mrb[0].mxu0 %v591
      %v2734 = vpop.f32.mrb[0].mxu0
      %v2735 = vadd.f32 %v580, %v2734
      %v2736 = vpop.f32.mrb[0].mxu0
      %v2737 = vpop.f32.mrb[0].mxu0
      %v2738 = vpop.f32.mrb[0].mxu0
      %2739 = vdwg.mxu0
      %2740 = vmatprep.subr.bf16.mxu0 0
      %2741 = vmatpush1.bf16.msra.mxu0 %v1777
      %2742 = vmatprep.subr.bf16.mxu0 0
      %2743 = vmatpush1.bf16.msra.mxu0 %v1784
      %2744 = vmatprep.subr.bf16.mxu0 0
      %2745 = vmatpush1.bf16.msra.mxu0 %v1791
      %2746 = vmatprep.subr.bf16.mxu0 0
      %2747 = vmatpush1.bf16.msra.mxu0 %v1798
      %2748 = vmatprep.subr.bf16.mxu0 0
      %2749 = vmatpush1.bf16.msra.mxu0 %v1805
      %2750 = vmatprep.subr.bf16.mxu0 0
      %2751 = vmatpush1.bf16.msra.mxu0 %v1812
      %2752 = vmatprep.subr.bf16.mxu0 0
      %2753 = vmatpush1.bf16.msra.mxu0 %v1819
      %2754 = vmatprep.subr.bf16.mxu0 0
      %2755 = vmatpush1.bf16.msra.mxu0 %v1826
      %2756 = vmatprep.subr.bf16.mxu0 0
      %2757 = vmatpush1.bf16.msra.mxu0 %v1833
      %2758 = vmatprep.subr.bf16.mxu0 0
      %2759 = vmatpush1.bf16.msra.mxu0 %v1840
      %2760 = vmatprep.subr.bf16.mxu0 0
      %2761 = vmatpush1.bf16.msra.mxu0 %v1847
      %2762 = vmatprep.subr.bf16.mxu0 0
      %2763 = vmatpush1.bf16.msra.mxu0 %v1854
      %2764 = vmatprep.subr.bf16.mxu0 0
      %2765 = vmatpush1.bf16.msra.mxu0 %v1861
      %2766 = vmatprep.subr.bf16.mxu0 0
      %2767 = vmatpush1.bf16.msra.mxu0 %v1868
      %2768 = vmatprep.subr.bf16.mxu0 0
      %2769 = vmatpush1.bf16.msra.mxu0 %v1875
      %2770 = vmatprep.subr.bf16.mxu0 0
      %2771 = vmatpush1.bf16.msra.mxu0 %v1882
      %2772 = vmatprep.mubr.bf16.mxu0 %v594
      %2773 = vmatmul.mubr.bf16.gmra.mrb[0].mxu0 %v593
      %v2774 = vpop.f32.mrb[0].mxu0
      %v2775 = vadd.f32 %v2735, %v2774
      %v2776 = vpop.f32.mrb[0].mxu0
      %v2777 = vpop.f32.mrb[0].mxu0
      %v2778 = vpop.f32.mrb[0].mxu0
      %2779 = vdwg.mxu0
      %2780 = vmatprep.subr.bf16.mxu0 0
      %2781 = vmatpush1.bf16.msra.mxu0 %v1889
      %2782 = vmatprep.subr.bf16.mxu0 0
      %2783 = vmatpush1.bf16.msra.mxu0 %v1896
      %2784 = vmatprep.subr.bf16.mxu0 0
      %2785 = vmatpush1.bf16.msra.mxu0 %v1903
      %2786 = vmatprep.subr.bf16.mxu0 0
      %2787 = vmatpush1.bf16.msra.mxu0 %v1910
      %2788 = vmatprep.subr.bf16.mxu0 0
      %2789 = vmatpush1.bf16.msra.mxu0 %v1917
      %2790 = vmatprep.subr.bf16.mxu0 0
      %2791 = vmatpush1.bf16.msra.mxu0 %v1924
      %2792 = vmatprep.subr.bf16.mxu0 0
      %2793 = vmatpush1.bf16.msra.mxu0 %v1931
      %2794 = vmatprep.subr.bf16.mxu0 0
      %2795 = vmatpush1.bf16.msra.mxu0 %v1938
      %2796 = vmatprep.subr.bf16.mxu0 0
      %2797 = vmatpush1.bf16.msra.mxu0 %v1945
      %2798 = vmatprep.subr.bf16.mxu0 0
      %2799 = vmatpush1.bf16.msra.mxu0 %v1952
      %2800 = vmatprep.subr.bf16.mxu0 0
      %2801 = vmatpush1.bf16.msra.mxu0 %v1959
      %2802 = vmatprep.subr.bf16.mxu0 0
      %2803 = vmatpush1.bf16.msra.mxu0 %v1966
      %2804 = vmatprep.subr.bf16.mxu0 0
      %2805 = vmatpush1.bf16.msra.mxu0 %v1973
      %2806 = vmatprep.subr.bf16.mxu0 0
      %2807 = vmatpush1.bf16.msra.mxu0 %v1980
      %2808 = vmatprep.subr.bf16.mxu0 0
      %2809 = vmatpush1.bf16.msra.mxu0 %v1987
      %2810 = vmatprep.subr.bf16.mxu0 0
      %2811 = vmatpush1.bf16.msra.mxu0 %v1994
      %2812 = vmatprep.mubr.bf16.mxu0 %v596
      %2813 = vmatmul.mubr.bf16.gmra.mrb[0].mxu0 %v595
      %v2814 = vpop.f32.mrb[0].mxu0
      %v2815 = vadd.f32 %v2775, %v2814
      %v2816 = vpop.f32.mrb[0].mxu0
      %v2817 = vpop.f32.mrb[0].mxu0
      %v2818 = vpop.f32.mrb[0].mxu0
      %2819 = vdwg.mxu0
      %vm2820 = vcmp.gt.f32.partialorder %v2448, 0.0
      %vm2821 = vcmp.gt.f32.partialorder %v2450, 0.0
      %vm2822 = vcmp.gt.f32.partialorder %v2571, 0.0
      %vm2823 = vcmp.gt.f32.partialorder %v2573, 0.0
      %vm2824 = vcmp.gt.f32.partialorder %v2694, 0.0
      %vm2825 = vcmp.gt.f32.partialorder %v2696, 0.0
      %vm2826 = vcmp.gt.f32.partialorder %v2815, 0.0
      %v2827 = vmul.f32 %v2448, 0.01
      %v2828 = vmul.f32 %v2450, 0.01
      %v2829 = vmul.f32 %v2571, 0.01
      %v2830 = vmul.f32 %v2573, 0.01
      %v2831 = vmul.f32 %v2694, 0.01
      %v2832 = vmul.f32 %v2696, 0.01
      %v2833 = vmul.f32 %v2815, 0.01
      %v2834 = vsel %vm2820, %v2448, %v2827
      %v2835 = vsel %vm2821, %v2450, %v2828
      %v2836 = vsel %vm2822, %v2571, %v2829
      %v2837 = vsel %vm2823, %v2573, %v2830
      %v2838 = vsel %vm2824, %v2694, %v2831
      %v2839 = vsel %vm2825, %v2696, %v2832
      %v2840 = vsel %vm2826, %v2815, %v2833
      %2841 = vst [vmem:[%s187] sm:$0xff] %v2834
      %2842 = vst [vmem:[%s187 + $0x8] sm:$0xff] %v2835
      %2843 = vst [vmem:[%s187 + $0x10] sm:$0xff] %v2836
      %2844 = vst [vmem:[%s187 + $0x18] sm:$0xff] %v2837
      %2845 = vst [vmem:[%s187 + $0x20] sm:$0xff] %v2838
      %2846 = vst [vmem:[%s187 + $0x28] sm:$0xff] %v2839
      %2847 = vst [vmem:[%s187 + $0x30] sm:$0xff] %v2840
      %p2848 = scmp.lt.s32.totalorder %s14, 1
      %s2849 = scalar_select %p2848, %s14, 1
      %s2850 = smul.addr %s2849, 7
      %s2851 = smul.addr %s2850, 8
      %s2852 = scalar_lea.vmem %s3, %s2851
      // Predicated region
      $region33: #{raw_image_vae_forward.4} parent=31 // pred_check
        %p2853 = pneg %p105
      $region34: #{raw_image_vae_forward.4} parent=31 // pred_check_branch
        %2855 = sbr.rel (%p2853) target = $region36
      $region35: #{raw_image_vae_forward.4} parent=31 // pred_region
        _
      $region36: #{raw_image_vae_forward.4} parent=31 // pred_fallthru
        _
    $region32: #{raw_image_vae_forward.4} parent=5 // pred_fallthru
      _
    %p2856 = scmp.le.s32.totalorder 2, %s9
    // Predicated region
    $region37: #{raw_image_vae_forward.4} parent=5 // pred_check
      %p2857 = pneg %p2856
    $region38: #{raw_image_vae_forward.4} parent=5 // pred_check_branch
      %2859 = sbr.rel (%p2857) target = $region40
    $region39: #{raw_image_vae_forward.4} parent=5 // pred_region
      %s2860 = ssub.s32 %s9, 2
      // Predicated region
      $region41: #{raw_image_vae_forward.4} parent=39 // pred_check
        %p2861 = pneg %p111
      $region42: #{raw_image_vae_forward.4} parent=39 // pred_check_branch
        %2863 = sbr.rel (%p2861) target = $region44
      $region43: #{raw_image_vae_forward.4} parent=39 // pred_region
        %p2864 = scmp.lt.s32.totalorder %s15, 1
        %s2865 = scalar_select %p2864, %s15, 1
        %s2866 = smul.addr %s2865, 7
        %s2867 = smul.addr %s2866, 8
        %s2868 = scalar_lea.vmem %s3, %s2867
      $region44: #{raw_image_vae_forward.4} parent=39 // pred_fallthru
        _
    $region40: #{raw_image_vae_forward.4} parent=5 // pred_fallthru
      _
  $region6: #{raw_image_vae_forward.4} parent=0 // loop_footer
    %s13 = sadd.s32 1, %s9
  $region7: #{raw_image_vae_forward.4} parent=0 // loop_footer_branch
    %8 = sbr.rel target = $region3
  $region8: #{raw_image_vae_forward.4} parent=0 // loop_exit
    _

// kernel: raw_image_vae_forward.5
$region0: #{raw_image_vae_forward.5}
  #allocation0 [shape = 'u32[]', space=smem, size = 0x4, offset = 0x4, fixed_abs, tag = 'smem constant byte address 0x4 - core index']
  #allocation1 [shape = 'u32[144,128]{1,0:T(1,128)}', space=vmem, size = 0x12000, scoped, tag = 'internal scratch']
  %s0 = inlined_call_operand.smem [shape: u32[35], index: -1, kind: input, shape index: {}]
  %s1 = sld [smem:[%s0]]
  %s2 = scalar_lea.smem %s0, 1
  %s3 = sld [smem:[%s2]]
  %s4 = scalar_lea.smem %s0, 2
  %s5 = sld [smem:[%s4]]
  %s6 = scalar_lea.smem %s0, 3
  %s7 = sld [smem:[%s6]]
  %s8 = scalar_lea.smem %s0, 4
  %s9 = sld [smem:[%s8]]
  %s10 = scalar_lea.smem %s0, 5
  %s11 = sld [smem:[%s10]]
  %s12 = scalar_lea.smem %s0, 6
  %s13 = sld [smem:[%s12]]
  %s14 = scalar_lea.smem %s0, 7
  %s15 = sld [smem:[%s14]]
  %s16 = scalar_lea.smem %s0, 8
  %s17 = sld [smem:[%s16]]
  %s18 = scalar_lea.smem %s0, 9
  %s19 = sld [smem:[%s18]]
  %s20 = scalar_lea.smem %s0, 10
  %s21 = sld [smem:[%s20]]
  %s22 = scalar_lea.smem %s0, 11
  %s23 = sld [smem:[%s22]]
  %s24 = scalar_lea.smem %s0, 12
  %s25 = sld [smem:[%s24]]
  %s26 = scalar_lea.smem %s0, 13
  %s27 = sld [smem:[%s26]]
  %s28 = scalar_lea.smem %s0, 14
  %s29 = sld [smem:[%s28]]
  %s30 = scalar_lea.smem %s0, 15
  %s31 = sld [smem:[%s30]]
  %s32 = scalar_lea.smem %s0, 16
  %s33 = sld [smem:[%s32]]
  %s34 = scalar_lea.smem %s0, 17
  %s35 = sld [smem:[%s34]]
  %s36 = scalar_lea.smem %s0, 18
  %s37 = sld [smem:[%s36]]
  %s38 = scalar_lea.smem %s0, 19
  %s39 = sld [smem:[%s38]]
  %s40 = scalar_lea.smem %s0, 20
  %s41 = sld [smem:[%s40]]
  %s42 = scalar_lea.smem %s0, 21
  %s43 = sld [smem:[%s42]]
  %s44 = scalar_lea.smem %s0, 22
  %s45 = sld [smem:[%s44]]
  %s46 = scalar_lea.smem %s0, 23
  %s47 = sld [smem:[%s46]]
  %s48 = scalar_lea.smem %s0, 24
  %s49 = sld [smem:[%s48]]
  %s50 = scalar_lea.smem %s0, 25
  %s51 = sld [smem:[%s50]]
  %s52 = scalar_lea.smem %s0, 26
  %s53 = sld [smem:[%s52]]
  %s54 = scalar_lea.smem %s0, 27
  %s55 = sld [smem:[%s54]]
  %s56 = scalar_lea.smem %s0, 28
  %s57 = sld [smem:[%s56]]
  %s58 = scalar_lea.smem %s0, 29
  %s59 = sld [smem:[%s58]]
  %s60 = scalar_lea.smem %s0, 30
  %s61 = sld [smem:[%s60]]
  %s62 = scalar_lea.smem %s0, 31
  %s63 = sld [smem:[%s62]]
  %s64 = scalar_lea.smem %s0, 32
  %s65 = sld [smem:[%s64]]
  %s66 = scalar_lea.smem %s0, 33
  %s67 = sld [smem:[%s66]]
  %s68 = scalar_lea.smem %s0, 34
  %s69 = sld [smem:[%s68]]
  %70 = xla_tuple %s67, %s69
  %s71 = sld [smem:[#allocation0]]
  $region150: #{raw_image_vae_forward.5} parent=0
    _
  %s73 = ssub.s32 1, %s71
  %s74 = scalar_select 0, %s73, %s71
  $region1: #{raw_image_vae_forward.5} parent=0
    #allocation2 [shape = 'u8[1024]{0}', space=vmem, size = 0x400, scoped, tag = 'output window, operand 0, single buffered']
    #allocation3 [shape = 's32[1]{0}', space=sflag, size = 0x4, scoped, tag = 'scoped memory for raw_image_vae_forward.5']
    %75 = vsyncpa [#allocation3], 0
    // Predicated region
    $region2: #{raw_image_vae_forward.5} parent=1 // pred_check
      _
    $region3: #{raw_image_vae_forward.5} parent=1 // pred_check_branch
      %77 = sbr.rel (0) target = $region5
    $region4: #{raw_image_vae_forward.5} parent=1 // pred_region
      _
    $region5: #{raw_image_vae_forward.5} parent=1 // pred_fallthru
      _
    // Predicated region
    $region6: #{raw_image_vae_forward.5} parent=1 // pred_check
      _
    $region7: #{raw_image_vae_forward.5} parent=1 // pred_check_branch
      %79 = sbr.rel (0) target = $region9
    $region8: #{raw_image_vae_forward.5} parent=1 // pred_region
      _
    $region9: #{raw_image_vae_forward.5} parent=1 // pred_fallthru
      _
    // Predicated region
    $region10: #{raw_image_vae_forward.5} parent=1 // pred_check
      _
    $region11: #{raw_image_vae_forward.5} parent=1 // pred_check_branch
      %81 = sbr.rel (0) target = $region13
    $region12: #{raw_image_vae_forward.5} parent=1 // pred_region
      _
    $region13: #{raw_image_vae_forward.5} parent=1 // pred_fallthru
      _
    // Predicated region
    $region14: #{raw_image_vae_forward.5} parent=1 // pred_check
      _
    $region15: #{raw_image_vae_forward.5} parent=1 // pred_check_branch
      %83 = sbr.rel (0) target = $region17
    $region16: #{raw_image_vae_forward.5} parent=1 // pred_region
      _
    $region17: #{raw_image_vae_forward.5} parent=1 // pred_fallthru
      _
    // Predicated region
    $region18: #{raw_image_vae_forward.5} parent=1 // pred_check
      _
    $region19: #{raw_image_vae_forward.5} parent=1 // pred_check_branch
      %85 = sbr.rel (0) target = $region21
    $region20: #{raw_image_vae_forward.5} parent=1 // pred_region
      _
    $region21: #{raw_image_vae_forward.5} parent=1 // pred_fallthru
      _
    // Predicated region
    $region22: #{raw_image_vae_forward.5} parent=1 // pred_check
      _
    $region23: #{raw_image_vae_forward.5} parent=1 // pred_check_branch
      %87 = sbr.rel (0) target = $region25
    $region24: #{raw_image_vae_forward.5} parent=1 // pred_region
      _
    $region25: #{raw_image_vae_forward.5} parent=1 // pred_fallthru
      _
    // Predicated region
    $region26: #{raw_image_vae_forward.5} parent=1 // pred_check
      _
    $region27: #{raw_image_vae_forward.5} parent=1 // pred_check_branch
      %89 = sbr.rel (0) target = $region29
    $region28: #{raw_image_vae_forward.5} parent=1 // pred_region
      _
    $region29: #{raw_image_vae_forward.5} parent=1 // pred_fallthru
      _
    // Predicated region
    $region30: #{raw_image_vae_forward.5} parent=1 // pred_check
      _
    $region31: #{raw_image_vae_forward.5} parent=1 // pred_check_branch
      %91 = sbr.rel (0) target = $region33
    $region32: #{raw_image_vae_forward.5} parent=1 // pred_region
      _
    $region33: #{raw_image_vae_forward.5} parent=1 // pred_fallthru
      _
    // Predicated region
    $region34: #{raw_image_vae_forward.5} parent=1 // pred_check
      _
    $region35: #{raw_image_vae_forward.5} parent=1 // pred_check_branch
      %93 = sbr.rel (0) target = $region37
    $region36: #{raw_image_vae_forward.5} parent=1 // pred_region
      _
    $region37: #{raw_image_vae_forward.5} parent=1 // pred_fallthru
      _
    // Predicated region
    $region38: #{raw_image_vae_forward.5} parent=1 // pred_check
      _
    $region39: #{raw_image_vae_forward.5} parent=1 // pred_check_branch
      %95 = sbr.rel (0) target = $region41
    $region40: #{raw_image_vae_forward.5} parent=1 // pred_region
      _
    $region41: #{raw_image_vae_forward.5} parent=1 // pred_fallthru
      _
    // Predicated region
    $region42: #{raw_image_vae_forward.5} parent=1 // pred_check
      _
    $region43: #{raw_image_vae_forward.5} parent=1 // pred_check_branch
      %97 = sbr.rel (0) target = $region45
    $region44: #{raw_image_vae_forward.5} parent=1 // pred_region
      _
    $region45: #{raw_image_vae_forward.5} parent=1 // pred_fallthru
      _
    // Predicated region
    $region46: #{raw_image_vae_forward.5} parent=1 // pred_check
      _
    $region47: #{raw_image_vae_forward.5} parent=1 // pred_check_branch
      %99 = sbr.rel (0) target = $region49
    $region48: #{raw_image_vae_forward.5} parent=1 // pred_region
      _
    $region49: #{raw_image_vae_forward.5} parent=1 // pred_fallthru
      _
    // Predicated region
    $region50: #{raw_image_vae_forward.5} parent=1 // pred_check
      _
    $region51: #{raw_image_vae_forward.5} parent=1 // pred_check_branch
      %101 = sbr.rel (0) target = $region53
    $region52: #{raw_image_vae_forward.5} parent=1 // pred_region
      _
    $region53: #{raw_image_vae_forward.5} parent=1 // pred_fallthru
      _
    // Predicated region
    $region54: #{raw_image_vae_forward.5} parent=1 // pred_check
      _
    $region55: #{raw_image_vae_forward.5} parent=1 // pred_check_branch
      %103 = sbr.rel (0) target = $region57
    $region56: #{raw_image_vae_forward.5} parent=1 // pred_region
      _
    $region57: #{raw_image_vae_forward.5} parent=1 // pred_fallthru
      _
    // Predicated region
    $region58: #{raw_image_vae_forward.5} parent=1 // pred_check
      _
    $region59: #{raw_image_vae_forward.5} parent=1 // pred_check_branch
      %105 = sbr.rel (0) target = $region61
    $region60: #{raw_image_vae_forward.5} parent=1 // pred_region
      _
    $region61: #{raw_image_vae_forward.5} parent=1 // pred_fallthru
      _
    // Predicated region
    $region62: #{raw_image_vae_forward.5} parent=1 // pred_check
      _
    $region63: #{raw_image_vae_forward.5} parent=1 // pred_check_branch
      %107 = sbr.rel (0) target = $region65
    $region64: #{raw_image_vae_forward.5} parent=1 // pred_region
      _
    $region65: #{raw_image_vae_forward.5} parent=1 // pred_fallthru
      _
    // Predicated region
    $region66: #{raw_image_vae_forward.5} parent=1 // pred_check
      _
    $region67: #{raw_image_vae_forward.5} parent=1 // pred_check_branch
      %109 = sbr.rel (0) target = $region69
    $region68: #{raw_image_vae_forward.5} parent=1 // pred_region
      _
    $region69: #{raw_image_vae_forward.5} parent=1 // pred_fallthru
      _
    // Predicated region
    $region70: #{raw_image_vae_forward.5} parent=1 // pred_check
      _
    $region71: #{raw_image_vae_forward.5} parent=1 // pred_check_branch
      %111 = sbr.rel (0) target = $region73
    $region72: #{raw_image_vae_forward.5} parent=1 // pred_region
      _
    $region73: #{raw_image_vae_forward.5} parent=1 // pred_fallthru
      _
    // Predicated region
    $region74: #{raw_image_vae_forward.5} parent=1 // pred_check
      _
    $region75: #{raw_image_vae_forward.5} parent=1 // pred_check_branch
      %113 = sbr.rel (0) target = $region77
    $region76: #{raw_image_vae_forward.5} parent=1 // pred_region
      _
    $region77: #{raw_image_vae_forward.5} parent=1 // pred_fallthru
      _
    // Predicated region
    $region78: #{raw_image_vae_forward.5} parent=1 // pred_check
      _
    $region79: #{raw_image_vae_forward.5} parent=1 // pred_check_branch
      %115 = sbr.rel (0) target = $region81
    $region80: #{raw_image_vae_forward.5} parent=1 // pred_region
      _
    $region81: #{raw_image_vae_forward.5} parent=1 // pred_fallthru
      _
    // Predicated region
    $region82: #{raw_image_vae_forward.5} parent=1 // pred_check
      _
    $region83: #{raw_image_vae_forward.5} parent=1 // pred_check_branch
      %117 = sbr.rel (0) target = $region85
    $region84: #{raw_image_vae_forward.5} parent=1 // pred_region
      _
    $region85: #{raw_image_vae_forward.5} parent=1 // pred_fallthru
      _
    // Predicated region
    $region86: #{raw_image_vae_forward.5} parent=1 // pred_check
      _
    $region87: #{raw_image_vae_forward.5} parent=1 // pred_check_branch
      %119 = sbr.rel (0) target = $region89
    $region88: #{raw_image_vae_forward.5} parent=1 // pred_region
      _
    $region89: #{raw_image_vae_forward.5} parent=1 // pred_fallthru
      _
    // Predicated region
    $region90: #{raw_image_vae_forward.5} parent=1 // pred_check
      _
    $region91: #{raw_image_vae_forward.5} parent=1 // pred_check_branch
      %121 = sbr.rel (0) target = $region93
    $region92: #{raw_image_vae_forward.5} parent=1 // pred_region
      _
    $region93: #{raw_image_vae_forward.5} parent=1 // pred_fallthru
      _
    // Predicated region
    $region94: #{raw_image_vae_forward.5} parent=1 // pred_check
      _
    $region95: #{raw_image_vae_forward.5} parent=1 // pred_check_branch
      %123 = sbr.rel (0) target = $region97
    $region96: #{raw_image_vae_forward.5} parent=1 // pred_region
      _
    $region97: #{raw_image_vae_forward.5} parent=1 // pred_fallthru
      _
    // Predicated region
    $region98: #{raw_image_vae_forward.5} parent=1 // pred_check
      _
    $region99: #{raw_image_vae_forward.5} parent=1 // pred_check_branch
      %125 = sbr.rel (0) target = $region101
    $region100: #{raw_image_vae_forward.5} parent=1 // pred_region
      _
    $region101: #{raw_image_vae_forward.5} parent=1 // pred_fallthru
      _
    // Predicated region
    $region102: #{raw_image_vae_forward.5} parent=1 // pred_check
      _
    $region103: #{raw_image_vae_forward.5} parent=1 // pred_check_branch
      %127 = sbr.rel (0) target = $region105
    $region104: #{raw_image_vae_forward.5} parent=1 // pred_region
      _
    $region105: #{raw_image_vae_forward.5} parent=1 // pred_fallthru
      _
    // Predicated region
    $region106: #{raw_image_vae_forward.5} parent=1 // pred_check
      _
    $region107: #{raw_image_vae_forward.5} parent=1 // pred_check_branch
      %129 = sbr.rel (0) target = $region109
    $region108: #{raw_image_vae_forward.5} parent=1 // pred_region
      _
    $region109: #{raw_image_vae_forward.5} parent=1 // pred_fallthru
      _
    // Predicated region
    $region110: #{raw_image_vae_forward.5} parent=1 // pred_check
      _
    $region111: #{raw_image_vae_forward.5} parent=1 // pred_check_branch
      %131 = sbr.rel (0) target = $region113
    $region112: #{raw_image_vae_forward.5} parent=1 // pred_region
      _
    $region113: #{raw_image_vae_forward.5} parent=1 // pred_fallthru
      _
    // Predicated region
    $region114: #{raw_image_vae_forward.5} parent=1 // pred_check
      _
    $region115: #{raw_image_vae_forward.5} parent=1 // pred_check_branch
      %133 = sbr.rel (0) target = $region117
    $region116: #{raw_image_vae_forward.5} parent=1 // pred_region
      _
    $region117: #{raw_image_vae_forward.5} parent=1 // pred_fallthru
      _
    // Predicated region
    $region118: #{raw_image_vae_forward.5} parent=1 // pred_check
      _
    $region119: #{raw_image_vae_forward.5} parent=1 // pred_check_branch
      %135 = sbr.rel (0) target = $region121
    $region120: #{raw_image_vae_forward.5} parent=1 // pred_region
      _
    $region121: #{raw_image_vae_forward.5} parent=1 // pred_fallthru
      _
    // Predicated region
    $region122: #{raw_image_vae_forward.5} parent=1 // pred_check
      _
    $region123: #{raw_image_vae_forward.5} parent=1 // pred_check_branch
      %137 = sbr.rel (0) target = $region125
    $region124: #{raw_image_vae_forward.5} parent=1 // pred_region
      _
    $region125: #{raw_image_vae_forward.5} parent=1 // pred_fallthru
      _
    // Predicated region
    $region126: #{raw_image_vae_forward.5} parent=1 // pred_check
      _
    $region127: #{raw_image_vae_forward.5} parent=1 // pred_check_branch
      %139 = sbr.rel (0) target = $region129
    $region128: #{raw_image_vae_forward.5} parent=1 // pred_region
      _
    $region129: #{raw_image_vae_forward.5} parent=1 // pred_fallthru
      _
    // Predicated region
    $region130: #{raw_image_vae_forward.5} parent=1 // pred_check
      _
    $region131: #{raw_image_vae_forward.5} parent=1 // pred_check_branch
      %141 = sbr.rel (0) target = $region133
    $region132: #{raw_image_vae_forward.5} parent=1 // pred_region
      _
    $region133: #{raw_image_vae_forward.5} parent=1 // pred_fallthru
      _
    %v143 = vld [vmem:[%s1] sm:$0xff]
    %v144 = vld [vmem:[%s1 + $0x8] sm:$0xff]
    %v145 = vld [vmem:[%s1 + $0x10] sm:$0xff]
    %v146 = vld [vmem:[%s1 + $0x18] sm:$0xff]
    %v147 = vld [vmem:[%s1 + $0x20] sm:$0xff]
    %v148 = vld [vmem:[%s1 + $0x28] sm:$0xff]
    %v149 = vld [vmem:[%s1 + $0x30] sm:$0xff]
    %v150 = vld [vmem:[%s1 + $0x38] sm:$0xff]
    %v151 = vld [vmem:[%s1 + $0x40] sm:$0xff]
    %v152 = vld [vmem:[%s1 + $0x48] sm:$0xff]
    %v153 = vld [vmem:[%s1 + $0x50] sm:$0xff]
    %v154 = vld [vmem:[%s1 + $0x58] sm:$0xff]
    %v155 = vld [vmem:[%s1 + $0x60] sm:$0xff]
    %v156 = vld [vmem:[%s1 + $0x68] sm:$0xff]
    %v157 = vld [vmem:[%s1 + $0x70] sm:$0xff]
    %v158 = vld [vmem:[%s1 + $0x78] sm:$0xff]
    %v159 = vld [vmem:[%s3] sm:$0xf]
    %v160 = vld [vmem:[%s3 + $0x4] sm:$0xf]
    %v161 = vld [vmem:[%s3 + $0x8] sm:$0xf]
    %v162 = vld [vmem:[%s3 + $0xc] sm:$0xf]
    %v163 = vld [vmem:[%s3 + $0x10] sm:$0xf]
    %v164 = vld [vmem:[%s3 + $0x14] sm:$0xf]
    %v165 = vld [vmem:[%s3 + $0x18] sm:$0xf]
    %v166 = vld [vmem:[%s3 + $0x1c] sm:$0xf]
    %v167 = vld [vmem:[%s3 + $0x20] sm:$0xf]
    %v168 = vld [vmem:[%s3 + $0x24] sm:$0xf]
    %v169 = vld [vmem:[%s3 + $0x28] sm:$0xf]
    %v170 = vld [vmem:[%s3 + $0x2c] sm:$0xf]
    %v171 = vld [vmem:[%s3 + $0x30] sm:$0xf]
    %v172 = vld [vmem:[%s3 + $0x34] sm:$0xf]
    %v173 = vld [vmem:[%s3 + $0x38] sm:$0xf]
    %v174 = vld [vmem:[%s3 + $0x3c] sm:$0xf]
    %v175 = vld [vmem:[%s3 + $0x40] sm:$0xf]
    %v176 = vld [vmem:[%s3 + $0x44] sm:$0xf]
    %v177 = vld [vmem:[%s3 + $0x48] sm:$0xf]
    %v178 = vld [vmem:[%s3 + $0x4c] sm:$0xf]
    %v179 = vld [vmem:[%s3 + $0x50] sm:$0xf]
    %v180 = vld [vmem:[%s3 + $0x54] sm:$0xf]
    %v181 = vld [vmem:[%s3 + $0x58] sm:$0xf]
    %v182 = vld [vmem:[%s3 + $0x5c] sm:$0xf]
    %v183 = vld [vmem:[%s3 + $0x60] sm:$0xf]
    %v184 = vld [vmem:[%s3 + $0x64] sm:$0xf]
    %v185 = vld [vmem:[%s3 + $0x68] sm:$0xf]
    %v186 = vld [vmem:[%s3 + $0x6c] sm:$0xf]
    %v187 = vld [vmem:[%s3 + $0x70] sm:$0xf]
    %v188 = vld [vmem:[%s3 + $0x74] sm:$0xf]
    %v189 = vld [vmem:[%s3 + $0x78] sm:$0xf]
    %v190 = vld [vmem:[%s3 + $0x7c] sm:$0xf]
    %v191 = vld [vmem:[%s3 + $0x80] sm:$0xf]
    %v192 = vld [vmem:[%s3 + $0x84] sm:$0xf]
    %v193 = vld [vmem:[%s3 + $0x88] sm:$0xf]
    %v194 = vld [vmem:[%s3 + $0x8c] sm:$0xf]
    %v195 = vld [vmem:[%s3 + $0x90] sm:$0xf]
    %v196 = vld [vmem:[%s3 + $0x94] sm:$0xf]
    %v197 = vld [vmem:[%s3 + $0x98] sm:$0xf]
    %v198 = vld [vmem:[%s3 + $0x9c] sm:$0xf]
    %v199 = vld [vmem:[%s3 + $0xa0] sm:$0xf]
    %v200 = vld [vmem:[%s3 + $0xa4] sm:$0xf]
    %v201 = vld [vmem:[%s3 + $0xa8] sm:$0xf]
    %v202 = vld [vmem:[%s3 + $0xac] sm:$0xf]
    %v203 = vld [vmem:[%s3 + $0xb0] sm:$0xf]
    %v204 = vld [vmem:[%s3 + $0xb4] sm:$0xf]
    %v205 = vld [vmem:[%s3 + $0xb8] sm:$0xf]
    %v206 = vld [vmem:[%s3 + $0xbc] sm:$0xf]
    %v207 = vld [vmem:[%s3 + $0xc0] sm:$0xf]
    %v208 = vld [vmem:[%s3 + $0xc4] sm:$0xf]
    %v209 = vld [vmem:[%s3 + $0xc8] sm:$0xf]
    %v210 = vld [vmem:[%s3 + $0xcc] sm:$0xf]
    %v211 = vld [vmem:[%s3 + $0xd0] sm:$0xf]
    %v212 = vld [vmem:[%s3 + $0xd4] sm:$0xf]
    %v213 = vld [vmem:[%s3 + $0xd8] sm:$0xf]
    %v214 = vld [vmem:[%s3 + $0xdc] sm:$0xf]
    %v215 = vld [vmem:[%s3 + $0xe0] sm:$0xf]
    %v216 = vld [vmem:[%s3 + $0xe4] sm:$0xf]
    %v217 = vld [vmem:[%s3 + $0xe8] sm:$0xf]
    %v218 = vld [vmem:[%s3 + $0xec] sm:$0xf]
    %v219 = vld [vmem:[%s3 + $0xf0] sm:$0xf]
    %v220 = vld [vmem:[%s3 + $0xf4] sm:$0xf]
    %v221 = vld [vmem:[%s3 + $0xf8] sm:$0xf]
    %v222 = vld [vmem:[%s3 + $0xfc] sm:$0xf]
    %v223 = vld [vmem:[%s3 + $0x100] sm:$0xf]
    %v224 = vld [vmem:[%s3 + $0x104] sm:$0xf]
    %v225 = vld [vmem:[%s3 + $0x108] sm:$0xf]
    %v226 = vld [vmem:[%s3 + $0x10c] sm:$0xf]
    %v227 = vld [vmem:[%s3 + $0x110] sm:$0xf]
    %v228 = vld [vmem:[%s3 + $0x114] sm:$0xf]
    %v229 = vld [vmem:[%s3 + $0x118] sm:$0xf]
    %v230 = vld [vmem:[%s3 + $0x11c] sm:$0xf]
    %v231 = vld [vmem:[%s3 + $0x120] sm:$0xf]
    %v232 = vld [vmem:[%s3 + $0x124] sm:$0xf]
    %v233 = vld [vmem:[%s3 + $0x128] sm:$0xf]
    %v234 = vld [vmem:[%s3 + $0x12c] sm:$0xf]
    %v235 = vld [vmem:[%s3 + $0x130] sm:$0xf]
    %v236 = vld [vmem:[%s3 + $0x134] sm:$0xf]
    %v237 = vld [vmem:[%s3 + $0x138] sm:$0xf]
    %v238 = vld [vmem:[%s3 + $0x13c] sm:$0xf]
    %v239 = vld [vmem:[%s3 + $0x140] sm:$0xf]
    %v240 = vld [vmem:[%s3 + $0x144] sm:$0xf]
    %v241 = vld [vmem:[%s3 + $0x148] sm:$0xf]
    %v242 = vld [vmem:[%s3 + $0x14c] sm:$0xf]
    %v243 = vld [vmem:[%s3 + $0x150] sm:$0xf]
    %v244 = vld [vmem:[%s3 + $0x154] sm:$0xf]
    %v245 = vld [vmem:[%s3 + $0x158] sm:$0xf]
    %v246 = vld [vmem:[%s3 + $0x15c] sm:$0xf]
    %v247 = vld [vmem:[%s3 + $0x160] sm:$0xf]
    %v248 = vld [vmem:[%s3 + $0x164] sm:$0xf]
    %v249 = vld [vmem:[%s3 + $0x168] sm:$0xf]
    %v250 = vld [vmem:[%s3 + $0x16c] sm:$0xf]
    %v251 = vld [vmem:[%s3 + $0x170] sm:$0xf]
    %v252 = vld [vmem:[%s3 + $0x174] sm:$0xf]
    %v253 = vld [vmem:[%s3 + $0x178] sm:$0xf]
    %v254 = vld [vmem:[%s3 + $0x17c] sm:$0xf]
    %v255 = vld [vmem:[%s3 + $0x180] sm:$0xf]
    %v256 = vld [vmem:[%s3 + $0x184] sm:$0xf]
    %v257 = vld [vmem:[%s3 + $0x188] sm:$0xf]
    %v258 = vld [vmem:[%s3 + $0x18c] sm:$0xf]
    %v259 = vld [vmem:[%s3 + $0x190] sm:$0xf]
    %v260 = vld [vmem:[%s3 + $0x194] sm:$0xf]
    %v261 = vld [vmem:[%s3 + $0x198] sm:$0xf]
    %v262 = vld [vmem:[%s3 + $0x19c] sm:$0xf]
    %v263 = vld [vmem:[%s3 + $0x1a0] sm:$0xf]
    %v264 = vld [vmem:[%s3 + $0x1a4] sm:$0xf]
    %v265 = vld [vmem:[%s3 + $0x1a8] sm:$0xf]
    %v266 = vld [vmem:[%s3 + $0x1ac] sm:$0xf]
    %v267 = vld [vmem:[%s3 + $0x1b0] sm:$0xf]
    %v268 = vld [vmem:[%s3 + $0x1b4] sm:$0xf]
    %v269 = vld [vmem:[%s3 + $0x1b8] sm:$0xf]
    %v270 = vld [vmem:[%s3 + $0x1bc] sm:$0xf]
    %v271 = vld [vmem:[%s3 + $0x1c0] sm:$0xf]
    %v272 = vld [vmem:[%s3 + $0x1c4] sm:$0xf]
    %v273 = vld [vmem:[%s3 + $0x1c8] sm:$0xf]
    %v274 = vld [vmem:[%s3 + $0x1cc] sm:$0xf]
    %v275 = vld [vmem:[%s3 + $0x1d0] sm:$0xf]
    %v276 = vld [vmem:[%s3 + $0x1d4] sm:$0xf]
    %v277 = vld [vmem:[%s3 + $0x1d8] sm:$0xf]
    %v278 = vld [vmem:[%s3 + $0x1dc] sm:$0xf]
    %v279 = vld [vmem:[%s3 + $0x1e0] sm:$0xf]
    %v280 = vld [vmem:[%s3 + $0x1e4] sm:$0xf]
    %v281 = vld [vmem:[%s3 + $0x1e8] sm:$0xf]
    %v282 = vld [vmem:[%s3 + $0x1ec] sm:$0xf]
    %v283 = vld [vmem:[%s3 + $0x1f0] sm:$0xf]
    %v284 = vld [vmem:[%s3 + $0x1f4] sm:$0xf]
    %v285 = vld [vmem:[%s3 + $0x1f8] sm:$0xf]
    %v286 = vld [vmem:[%s3 + $0x1fc] sm:$0xf]
    %v287 = vld [vmem:[%s5] sm:$0x1]
    %v289 = vlaneseq
    %v290 = vshrl.u32 %v289, 7
    %v291 = vsub.s32 0, %v290
    %v292 = vrot.slane %v287, %v291
    %v310 = vunpack.c.l.b16 %v143
    %v311 = vunpack.c.h.b16 %v143
    %v312 = vunpack.c.l.b16 %v144
    %v313 = vunpack.c.h.b16 %v144
    %v314 = vunpack.c.l.b16 %v145
    %v315 = vunpack.c.h.b16 %v145
    %v316 = vunpack.c.l.b16 %v146
    %v317 = vunpack.c.h.b16 %v146
    %v318 = vunpack.c.l.b16 %v147
    %v319 = vunpack.c.h.b16 %v147
    %v320 = vunpack.c.l.b16 %v148
    %v321 = vunpack.c.h.b16 %v148
    %v322 = vunpack.c.l.b16 %v149
    %v323 = vunpack.c.h.b16 %v149
    %v324 = vunpack.c.l.b16 %v150
    %v325 = vunpack.c.h.b16 %v150
    %v326 = vunpack.c.l.b16 %v151
    %v327 = vunpack.c.h.b16 %v151
    %v328 = vunpack.c.l.b16 %v152
    %v329 = vunpack.c.h.b16 %v152
    %v330 = vunpack.c.l.b16 %v153
    %v331 = vunpack.c.h.b16 %v153
    %v332 = vunpack.c.l.b16 %v154
    %v333 = vunpack.c.h.b16 %v154
    %v334 = vunpack.c.l.b16 %v155
    %v335 = vunpack.c.h.b16 %v155
    %v336 = vunpack.c.l.b16 %v156
    %v337 = vunpack.c.h.b16 %v156
    %v338 = vunpack.c.l.b16 %v157
    %v339 = vunpack.c.h.b16 %v157
    %v340 = vunpack.c.l.b16 %v158
    %v341 = vunpack.c.h.b16 %v158
    %v342 = vpack.c.b16 %v318, %v310
    %v343 = vpack.c.b16 %v319, %v311
    %v344 = vpack.c.b16 %v320, %v312
    %v345 = vpack.c.b16 %v321, %v313
    %v346 = vpack.c.b16 %v322, %v314
    %v347 = vpack.c.b16 %v323, %v315
    %v348 = vpack.c.b16 %v324, %v316
    %v349 = vpack.c.b16 %v325, %v317
    %v350 = vpack.c.b16 %v334, %v326
    %v351 = vpack.c.b16 %v335, %v327
    %v352 = vpack.c.b16 %v336, %v328
    %v353 = vpack.c.b16 %v337, %v329
    %v354 = vpack.c.b16 %v338, %v330
    %v355 = vpack.c.b16 %v339, %v331
    %v356 = vpack.c.b16 %v340, %v332
    %v357 = vpack.c.b16 %v341, %v333
    %v502 = vunpack.c.l.b16 %v159
    %v503 = vunpack.c.l.b16 %v160
    %v504 = vunpack.c.l.b16 %v161
    %v505 = vunpack.c.l.b16 %v162
    %v506 = vunpack.c.l.b16 %v163
    %v507 = vunpack.c.l.b16 %v164
    %v508 = vunpack.c.l.b16 %v165
    %v509 = vunpack.c.l.b16 %v166
    %v510 = vunpack.c.l.b16 %v167
    %v511 = vunpack.c.l.b16 %v168
    %v512 = vunpack.c.l.b16 %v169
    %v513 = vunpack.c.l.b16 %v170
    %v514 = vunpack.c.l.b16 %v171
    %v515 = vunpack.c.l.b16 %v172
    %v516 = vunpack.c.l.b16 %v173
    %v517 = vunpack.c.l.b16 %v174
    %v518 = vunpack.c.l.b16 %v175
    %v519 = vunpack.c.l.b16 %v176
    %v520 = vunpack.c.l.b16 %v177
    %v521 = vunpack.c.l.b16 %v178
    %v522 = vunpack.c.l.b16 %v179
    %v523 = vunpack.c.l.b16 %v180
    %v524 = vunpack.c.l.b16 %v181
    %v525 = vunpack.c.l.b16 %v182
    %v526 = vunpack.c.l.b16 %v183
    %v527 = vunpack.c.l.b16 %v184
    %v528 = vunpack.c.l.b16 %v185
    %v529 = vunpack.c.l.b16 %v186
    %v530 = vunpack.c.l.b16 %v187
    %v531 = vunpack.c.l.b16 %v188
    %v532 = vunpack.c.l.b16 %v189
    %v533 = vunpack.c.l.b16 %v190
    %v534 = vunpack.c.l.b16 %v191
    %v535 = vunpack.c.l.b16 %v192
    %v536 = vunpack.c.l.b16 %v193
    %v537 = vunpack.c.l.b16 %v194
    %v538 = vunpack.c.l.b16 %v195
    %v539 = vunpack.c.l.b16 %v196
    %v540 = vunpack.c.l.b16 %v197
    %v541 = vunpack.c.l.b16 %v198
    %v542 = vunpack.c.l.b16 %v199
    %v543 = vunpack.c.l.b16 %v200
    %v544 = vunpack.c.l.b16 %v201
    %v545 = vunpack.c.l.b16 %v202
    %v546 = vunpack.c.l.b16 %v203
    %v547 = vunpack.c.l.b16 %v204
    %v548 = vunpack.c.l.b16 %v205
    %v549 = vunpack.c.l.b16 %v206
    %v550 = vunpack.c.l.b16 %v207
    %v551 = vunpack.c.l.b16 %v208
    %v552 = vunpack.c.l.b16 %v209
    %v553 = vunpack.c.l.b16 %v210
    %v554 = vunpack.c.l.b16 %v211
    %v555 = vunpack.c.l.b16 %v212
    %v556 = vunpack.c.l.b16 %v213
    %v557 = vunpack.c.l.b16 %v214
    %v558 = vunpack.c.l.b16 %v215
    %v559 = vunpack.c.l.b16 %v216
    %v560 = vunpack.c.l.b16 %v217
    %v561 = vunpack.c.l.b16 %v218
    %v562 = vunpack.c.l.b16 %v219
    %v563 = vunpack.c.l.b16 %v220
    %v564 = vunpack.c.l.b16 %v221
    %v565 = vunpack.c.l.b16 %v222
    %v566 = vunpack.c.l.b16 %v223
    %v567 = vunpack.c.l.b16 %v224
    %v568 = vunpack.c.l.b16 %v225
    %v569 = vunpack.c.l.b16 %v226
    %v570 = vunpack.c.l.b16 %v227
    %v571 = vunpack.c.l.b16 %v228
    %v572 = vunpack.c.l.b16 %v229
    %v573 = vunpack.c.l.b16 %v230
    %v574 = vunpack.c.l.b16 %v231
    %v575 = vunpack.c.l.b16 %v232
    %v576 = vunpack.c.l.b16 %v233
    %v577 = vunpack.c.l.b16 %v234
    %v578 = vunpack.c.l.b16 %v235
    %v579 = vunpack.c.l.b16 %v236
    %v580 = vunpack.c.l.b16 %v237
    %v581 = vunpack.c.l.b16 %v238
    %v582 = vunpack.c.l.b16 %v239
    %v583 = vunpack.c.l.b16 %v240
    %v584 = vunpack.c.l.b16 %v241
    %v585 = vunpack.c.l.b16 %v242
    %v586 = vunpack.c.l.b16 %v243
    %v587 = vunpack.c.l.b16 %v244
    %v588 = vunpack.c.l.b16 %v245
    %v589 = vunpack.c.l.b16 %v246
    %v590 = vunpack.c.l.b16 %v247
    %v591 = vunpack.c.l.b16 %v248
    %v592 = vunpack.c.l.b16 %v249
    %v593 = vunpack.c.l.b16 %v250
    %v594 = vunpack.c.l.b16 %v251
    %v595 = vunpack.c.l.b16 %v252
    %v596 = vunpack.c.l.b16 %v253
    %v597 = vunpack.c.l.b16 %v254
    %v598 = vunpack.c.l.b16 %v255
    %v599 = vunpack.c.l.b16 %v256
    %v600 = vunpack.c.l.b16 %v257
    %v601 = vunpack.c.l.b16 %v258
    %v602 = vunpack.c.l.b16 %v259
    %v603 = vunpack.c.l.b16 %v260
    %v604 = vunpack.c.l.b16 %v261
    %v605 = vunpack.c.l.b16 %v262
    %v606 = vunpack.c.l.b16 %v263
    %v607 = vunpack.c.l.b16 %v264
    %v608 = vunpack.c.l.b16 %v265
    %v609 = vunpack.c.l.b16 %v266
    %v610 = vunpack.c.l.b16 %v267
    %v611 = vunpack.c.l.b16 %v268
    %v612 = vunpack.c.l.b16 %v269
    %v613 = vunpack.c.l.b16 %v270
    %v614 = vunpack.c.l.b16 %v271
    %v615 = vunpack.c.l.b16 %v272
    %v616 = vunpack.c.l.b16 %v273
    %v617 = vunpack.c.l.b16 %v274
    %v618 = vunpack.c.l.b16 %v275
    %v619 = vunpack.c.l.b16 %v276
    %v620 = vunpack.c.l.b16 %v277
    %v621 = vunpack.c.l.b16 %v278
    %v622 = vunpack.c.l.b16 %v279
    %v623 = vunpack.c.l.b16 %v280
    %v624 = vunpack.c.l.b16 %v281
    %v625 = vunpack.c.l.b16 %v282
    %v626 = vunpack.c.l.b16 %v283
    %v627 = vunpack.c.l.b16 %v284
    %v628 = vunpack.c.l.b16 %v285
    %v629 = vunpack.c.l.b16 %v286
    %v630 = vpack.c.b16 %v503, %v502
    %v631 = vpack.c.b16 %v505, %v504
    %v632 = vpack.c.b16 %v507, %v506
    %v633 = vpack.c.b16 %v509, %v508
    %v634 = vpack.c.b16 %v511, %v510
    %v635 = vpack.c.b16 %v513, %v512
    %v636 = vpack.c.b16 %v515, %v514
    %v637 = vpack.c.b16 %v517, %v516
    %v638 = vpack.c.b16 %v519, %v518
    %v639 = vpack.c.b16 %v521, %v520
    %v640 = vpack.c.b16 %v523, %v522
    %v641 = vpack.c.b16 %v525, %v524
    %v642 = vpack.c.b16 %v527, %v526
    %v643 = vpack.c.b16 %v529, %v528
    %v644 = vpack.c.b16 %v531, %v530
    %v645 = vpack.c.b16 %v533, %v532
    %v646 = vpack.c.b16 %v535, %v534
    %v647 = vpack.c.b16 %v537, %v536
    %v648 = vpack.c.b16 %v539, %v538
    %v649 = vpack.c.b16 %v541, %v540
    %v650 = vpack.c.b16 %v543, %v542
    %v651 = vpack.c.b16 %v545, %v544
    %v652 = vpack.c.b16 %v547, %v546
    %v653 = vpack.c.b16 %v549, %v548
    %v654 = vpack.c.b16 %v551, %v550
    %v655 = vpack.c.b16 %v553, %v552
    %v656 = vpack.c.b16 %v555, %v554
    %v657 = vpack.c.b16 %v557, %v556
    %v658 = vpack.c.b16 %v559, %v558
    %v659 = vpack.c.b16 %v561, %v560
    %v660 = vpack.c.b16 %v563, %v562
    %v661 = vpack.c.b16 %v565, %v564
    %v662 = vpack.c.b16 %v567, %v566
    %v663 = vpack.c.b16 %v569, %v568
    %v664 = vpack.c.b16 %v571, %v570
    %v665 = vpack.c.b16 %v573, %v572
    %v666 = vpack.c.b16 %v575, %v574
    %v667 = vpack.c.b16 %v577, %v576
    %v668 = vpack.c.b16 %v579, %v578
    %v669 = vpack.c.b16 %v581, %v580
    %v670 = vpack.c.b16 %v583, %v582
    %v671 = vpack.c.b16 %v585, %v584
    %v672 = vpack.c.b16 %v587, %v586
    %v673 = vpack.c.b16 %v589, %v588
    %v674 = vpack.c.b16 %v591, %v590
    %v675 = vpack.c.b16 %v593, %v592
    %v676 = vpack.c.b16 %v595, %v594
    %v677 = vpack.c.b16 %v597, %v596
    %v678 = vpack.c.b16 %v599, %v598
    %v679 = vpack.c.b16 %v601, %v600
    %v680 = vpack.c.b16 %v603, %v602
    %v681 = vpack.c.b16 %v605, %v604
    %v682 = vpack.c.b16 %v607, %v606
    %v683 = vpack.c.b16 %v609, %v608
    %v684 = vpack.c.b16 %v611, %v610
    %v685 = vpack.c.b16 %v613, %v612
    %v686 = vpack.c.b16 %v615, %v614
    %v687 = vpack.c.b16 %v617, %v616
    %v688 = vpack.c.b16 %v619, %v618
    %v689 = vpack.c.b16 %v621, %v620
    %v690 = vpack.c.b16 %v623, %v622
    %v691 = vpack.c.b16 %v625, %v624
    %v692 = vpack.c.b16 %v627, %v626
    %v693 = vpack.c.b16 %v629, %v628
    %758 = vmatprep.subr.bf16.mxu0 0
    %759 = vmatpush1.bf16.msra.mxu0 %v630
    %760 = vmatprep.subr.bf16.mxu0 0
    %761 = vmatpush1.bf16.msra.mxu0 %v631
    %762 = vmatprep.subr.bf16.mxu0 0
    %763 = vmatpush1.bf16.msra.mxu0 %v632
    %764 = vmatprep.subr.bf16.mxu0 0
    %765 = vmatpush1.bf16.msra.mxu0 %v633
    %766 = vmatprep.subr.bf16.mxu0 0
    %767 = vmatpush1.bf16.msra.mxu0 %v634
    %768 = vmatprep.subr.bf16.mxu0 0
    %769 = vmatpush1.bf16.msra.mxu0 %v635
    %770 = vmatprep.subr.bf16.mxu0 0
    %771 = vmatpush1.bf16.msra.mxu0 %v636
    %772 = vmatprep.subr.bf16.mxu0 0
    %773 = vmatpush1.bf16.msra.mxu0 %v637
    %774 = vmatprep.subr.bf16.mxu0 0
    %775 = vmatpush1.bf16.msra.mxu0 %v638
    %776 = vmatprep.subr.bf16.mxu0 0
    %777 = vmatpush1.bf16.msra.mxu0 %v639
    %778 = vmatprep.subr.bf16.mxu0 0
    %779 = vmatpush1.bf16.msra.mxu0 %v640
    %780 = vmatprep.subr.bf16.mxu0 0
    %781 = vmatpush1.bf16.msra.mxu0 %v641
    %782 = vmatprep.subr.bf16.mxu0 0
    %783 = vmatpush1.bf16.msra.mxu0 %v642
    %784 = vmatprep.subr.bf16.mxu0 0
    %785 = vmatpush1.bf16.msra.mxu0 %v643
    %786 = vmatprep.subr.bf16.mxu0 0
    %787 = vmatpush1.bf16.msra.mxu0 %v644
    %788 = vmatprep.subr.bf16.mxu0 0
    %789 = vmatpush1.bf16.msra.mxu0 %v645
    %790 = vmatprep.mubr.bf16.mxu0 %v343
    %791 = vmatmul.mubr.bf16.gmra.mrb[0].mxu0 %v342
    %v792 = vpop.f32.mrb[0].mxu0
    %v793 = vadd.f32 %v292, %v792
    %v794 = vpop.f32.mrb[0].mxu0
    %v795 = vpop.f32.mrb[0].mxu0
    %v796 = vadd.f32 %v292, %v795
    %v797 = vpop.f32.mrb[0].mxu0
    %798 = vmatprep.mubr.bf16.mxu0 %v351
    %799 = vmatmul.mubr.bf16.gmra.mrb[0].mxu0 %v350
    %v800 = vpop.f32.mrb[0].mxu0
    %v801 = vadd.f32 %v292, %v800
    %v802 = vpop.f32.mrb[0].mxu0
    %v803 = vpop.f32.mrb[0].mxu0
    %v804 = vadd.f32 %v292, %v803
    %v805 = vpop.f32.mrb[0].mxu0
    %806 = vdwg.mxu0
    %807 = vmatprep.subr.bf16.mxu0 0
    %808 = vmatpush1.bf16.msra.mxu0 %v646
    %809 = vmatprep.subr.bf16.mxu0 0
    %810 = vmatpush1.bf16.msra.mxu0 %v647
    %811 = vmatprep.subr.bf16.mxu0 0
    %812 = vmatpush1.bf16.msra.mxu0 %v648
    %813 = vmatprep.subr.bf16.mxu0 0
    %814 = vmatpush1.bf16.msra.mxu0 %v649
    %815 = vmatprep.subr.bf16.mxu0 0
    %816 = vmatpush1.bf16.msra.mxu0 %v650
    %817 = vmatprep.subr.bf16.mxu0 0
    %818 = vmatpush1.bf16.msra.mxu0 %v651
    %819 = vmatprep.subr.bf16.mxu0 0
    %820 = vmatpush1.bf16.msra.mxu0 %v652
    %821 = vmatprep.subr.bf16.mxu0 0
    %822 = vmatpush1.bf16.msra.mxu0 %v653
    %823 = vmatprep.subr.bf16.mxu0 0
    %824 = vmatpush1.bf16.msra.mxu0 %v654
    %825 = vmatprep.subr.bf16.mxu0 0
    %826 = vmatpush1.bf16.msra.mxu0 %v655
    %827 = vmatprep.subr.bf16.mxu0 0
    %828 = vmatpush1.bf16.msra.mxu0 %v656
    %829 = vmatprep.subr.bf16.mxu0 0
    %830 = vmatpush1.bf16.msra.mxu0 %v657
    %831 = vmatprep.subr.bf16.mxu0 0
    %832 = vmatpush1.bf16.msra.mxu0 %v658
    %833 = vmatprep.subr.bf16.mxu0 0
    %834 = vmatpush1.bf16.msra.mxu0 %v659
    %835 = vmatprep.subr.bf16.mxu0 0
    %836 = vmatpush1.bf16.msra.mxu0 %v660
    %837 = vmatprep.subr.bf16.mxu0 0
    %838 = vmatpush1.bf16.msra.mxu0 %v661
    %839 = vmatprep.mubr.bf16.mxu0 %v345
    %840 = vmatmul.mubr.bf16.gmra.mrb[0].mxu0 %v344
    %v841 = vpop.f32.mrb[0].mxu0
    %v842 = vadd.f32 %v793, %v841
    %v843 = vpop.f32.mrb[0].mxu0
    %v844 = vpop.f32.mrb[0].mxu0
    %v845 = vadd.f32 %v796, %v844
    %v846 = vpop.f32.mrb[0].mxu0
    %847 = vmatprep.mubr.bf16.mxu0 %v353
    %848 = vmatmul.mubr.bf16.gmra.mrb[0].mxu0 %v352
    %v849 = vpop.f32.mrb[0].mxu0
    %v850 = vadd.f32 %v801, %v849
    %v851 = vpop.f32.mrb[0].mxu0
    %v852 = vpop.f32.mrb[0].mxu0
    %v853 = vadd.f32 %v804, %v852
    %v854 = vpop.f32.mrb[0].mxu0
    %855 = vdwg.mxu0
    %856 = vmatprep.subr.bf16.mxu0 0
    %857 = vmatpush1.bf16.msra.mxu0 %v662
    %858 = vmatprep.subr.bf16.mxu0 0
    %859 = vmatpush1.bf16.msra.mxu0 %v663
    %860 = vmatprep.subr.bf16.mxu0 0
    %861 = vmatpush1.bf16.msra.mxu0 %v664
    %862 = vmatprep.subr.bf16.mxu0 0
    %863 = vmatpush1.bf16.msra.mxu0 %v665
    %864 = vmatprep.subr.bf16.mxu0 0
    %865 = vmatpush1.bf16.msra.mxu0 %v666
    %866 = vmatprep.subr.bf16.mxu0 0
    %867 = vmatpush1.bf16.msra.mxu0 %v667
    %868 = vmatprep.subr.bf16.mxu0 0
    %869 = vmatpush1.bf16.msra.mxu0 %v668
    %870 = vmatprep.subr.bf16.mxu0 0
    %871 = vmatpush1.bf16.msra.mxu0 %v669
    %872 = vmatprep.subr.bf16.mxu0 0
    %873 = vmatpush1.bf16.msra.mxu0 %v670
    %874 = vmatprep.subr.bf16.mxu0 0
    %875 = vmatpush1.bf16.msra.mxu0 %v671
    %876 = vmatprep.subr.bf16.mxu0 0
    %877 = vmatpush1.bf16.msra.mxu0 %v672
    %878 = vmatprep.subr.bf16.mxu0 0
    %879 = vmatpush1.bf16.msra.mxu0 %v673
    %880 = vmatprep.subr.bf16.mxu0 0
    %881 = vmatpush1.bf16.msra.mxu0 %v674
    %882 = vmatprep.subr.bf16.mxu0 0
    %883 = vmatpush1.bf16.msra.mxu0 %v675
    %884 = vmatprep.subr.bf16.mxu0 0
    %885 = vmatpush1.bf16.msra.mxu0 %v676
    %886 = vmatprep.subr.bf16.mxu0 0
    %887 = vmatpush1.bf16.msra.mxu0 %v677
    %888 = vmatprep.mubr.bf16.mxu0 %v347
    %889 = vmatmul.mubr.bf16.gmra.mrb[0].mxu0 %v346
    %v890 = vpop.f32.mrb[0].mxu0
    %v891 = vadd.f32 %v842, %v890
    %v892 = vpop.f32.mrb[0].mxu0
    %v893 = vpop.f32.mrb[0].mxu0
    %v894 = vadd.f32 %v845, %v893
    %v895 = vpop.f32.mrb[0].mxu0
    %896 = vmatprep.mubr.bf16.mxu0 %v355
    %897 = vmatmul.mubr.bf16.gmra.mrb[0].mxu0 %v354
    %v898 = vpop.f32.mrb[0].mxu0
    %v899 = vadd.f32 %v850, %v898
    %v900 = vpop.f32.mrb[0].mxu0
    %v901 = vpop.f32.mrb[0].mxu0
    %v902 = vadd.f32 %v853, %v901
    %v903 = vpop.f32.mrb[0].mxu0
    %904 = vdwg.mxu0
    %905 = vmatprep.subr.bf16.mxu0 0
    %906 = vmatpush1.bf16.msra.mxu0 %v678
    %907 = vmatprep.subr.bf16.mxu0 0
    %908 = vmatpush1.bf16.msra.mxu0 %v679
    %909 = vmatprep.subr.bf16.mxu0 0
    %910 = vmatpush1.bf16.msra.mxu0 %v680
    %911 = vmatprep.subr.bf16.mxu0 0
    %912 = vmatpush1.bf16.msra.mxu0 %v681
    %913 = vmatprep.subr.bf16.mxu0 0
    %914 = vmatpush1.bf16.msra.mxu0 %v682
    %915 = vmatprep.subr.bf16.mxu0 0
    %916 = vmatpush1.bf16.msra.mxu0 %v683
    %917 = vmatprep.subr.bf16.mxu0 0
    %918 = vmatpush1.bf16.msra.mxu0 %v684
    %919 = vmatprep.subr.bf16.mxu0 0
    %920 = vmatpush1.bf16.msra.mxu0 %v685
    %921 = vmatprep.subr.bf16.mxu0 0
    %922 = vmatpush1.bf16.msra.mxu0 %v686
    %923 = vmatprep.subr.bf16.mxu0 0
    %924 = vmatpush1.bf16.msra.mxu0 %v687
    %925 = vmatprep.subr.bf16.mxu0 0
    %926 = vmatpush1.bf16.msra.mxu0 %v688
    %927 = vmatprep.subr.bf16.mxu0 0
    %928 = vmatpush1.bf16.msra.mxu0 %v689
    %929 = vmatprep.subr.bf16.mxu0 0
    %930 = vmatpush1.bf16.msra.mxu0 %v690
    %931 = vmatprep.subr.bf16.mxu0 0
    %932 = vmatpush1.bf16.msra.mxu0 %v691
    %933 = vmatprep.subr.bf16.mxu0 0
    %934 = vmatpush1.bf16.msra.mxu0 %v692
    %935 = vmatprep.subr.bf16.mxu0 0
    %936 = vmatpush1.bf16.msra.mxu0 %v693
    %937 = vmatprep.mubr.bf16.mxu0 %v349
    %938 = vmatmul.mubr.bf16.gmra.mrb[0].mxu0 %v348
    %v939 = vpop.f32.mrb[0].mxu0
    %v940 = vadd.f32 %v891, %v939
    %v941 = vpop.f32.mrb[0].mxu0
    %v942 = vpop.f32.mrb[0].mxu0
    %v943 = vadd.f32 %v894, %v942
    %v944 = vpop.f32.mrb[0].mxu0
    %945 = vmatprep.mubr.bf16.mxu0 %v357
    %946 = vmatmul.mubr.bf16.gmra.mrb[0].mxu0 %v356
    %v947 = vpop.f32.mrb[0].mxu0
    %v948 = vadd.f32 %v899, %v947
    %v949 = vpop.f32.mrb[0].mxu0
    %v950 = vpop.f32.mrb[0].mxu0
    %v951 = vadd.f32 %v902, %v950
    %v952 = vpop.f32.mrb[0].mxu0
    %953 = vdwg.mxu0
    %v954 = vld [vmem:[%s7] sm:$0x1]
    %v955 = vld [vmem:[%s9] sm:$0x1]
    %vm956 = vcmask 261120
    %v957 = vsel %vm956, %v940, 0.0
    %v958 = vsel %vm956, %v943, 0.0
    %v959 = vadd.f32 %v957, %v958
    %v960 = vsel %vm956, %v948, 0.0
    %v961 = vadd.f32 %v959, %v960
    %v962 = vsel %vm956, %v951, 0.0
    %v963 = vadd.f32 %v961, %v962
    %v964 = vrot.slane %v963, 4
    %v965 = vadd.f32 %v963, %v964
    %v966 = vrot.slane %v965, 2
    %v967 = vadd.f32 %v965, %v966
    %v968 = vrot.slane %v967, 1
    %v969 = vadd.f32 %v967, %v968
    %v970 = vrcp.pop 32.0
    %v971 = vmul.f32 %v969, %v970
    %v972 = vsub.f32 %v940, %v971
    %v973 = vsub.f32 %v943, %v971
    %v974 = vsub.f32 %v948, %v971
    %v975 = vsub.f32 %v951, %v971
    %v976 = vmul.f32 %v972, %v972
    %v977 = vmul.f32 %v973, %v973
    %v978 = vmul.f32 %v974, %v974
    %v979 = vmul.f32 %v975, %v975
    %v980 = vsel %vm956, %v976, 0.0
    %v981 = vsel %vm956, %v977, 0.0
    %v982 = vadd.f32 %v980, %v981
    %v983 = vsel %vm956, %v978, 0.0
    %v984 = vadd.f32 %v982, %v983
    %v985 = vsel %vm956, %v979, 0.0
    %v986 = vadd.f32 %v984, %v985
    %v987 = vrot.slane %v986, 4
    %v988 = vadd.f32 %v986, %v987
    %v989 = vrot.slane %v988, 2
    %v990 = vadd.f32 %v988, %v989
    %v991 = vrot.slane %v990, 1
    %v992 = vadd.f32 %v990, %v991
    %v993 = vmul.f32 %v992, %v970
    %v994 = vadd.f32 %v993, 1e-05
    %v995 = vrsqrt.pop %v994
    %v996 = vmul.f32 %v972, %v995
    %v997 = vmul.f32 %v973, %v995
    %v998 = vmul.f32 %v974, %v995
    %v999 = vmul.f32 %v975, %v995
    %v1001 = vlaneseq
    %v1002 = vshrl.u32 %v1001, 7
    %v1003 = vsub.s32 0, %v1002
    %v1004 = vrot.slane %v954, %v1003
    %v1006 = vmul.f32 %v996, %v1004
    %v1007 = vmul.f32 %v997, %v1004
    %v1008 = vmul.f32 %v998, %v1004
    %v1009 = vmul.f32 %v999, %v1004
    %v1011 = vlaneseq
    %v1012 = vshrl.u32 %v1011, 7
    %v1013 = vsub.s32 0, %v1012
    %v1014 = vrot.slane %v955, %v1013
    %v1016 = vadd.f32 %v1006, %v1014
    %v1017 = vadd.f32 %v1007, %v1014
    %v1018 = vadd.f32 %v1008, %v1014
    %v1019 = vadd.f32 %v1009, %v1014
    %vm1020 = vcmp.gt.f32.partialorder %v1016, 0.0
    %vm1021 = vcmp.gt.f32.partialorder %v1017, 0.0
    %vm1022 = vcmp.gt.f32.partialorder %v1018, 0.0
    %vm1023 = vcmp.gt.f32.partialorder %v1019, 0.0
    %v1024 = vmul.f32 %v1016, 0.01
    %v1025 = vmul.f32 %v1017, 0.01
    %v1026 = vmul.f32 %v1018, 0.01
    %v1027 = vmul.f32 %v1019, 0.01
    %v1028 = vsel %vm1020, %v1016, %v1024
    %v1029 = vsel %vm1021, %v1017, %v1025
    %v1030 = vsel %vm1022, %v1018, %v1026
    %v1031 = vsel %vm1023, %v1019, %v1027
    %v1032 = vpack.c.bf16 %v1029, %v1028
    %v1033 = vpack.c.bf16 %v1031, %v1030
    %v1034 = vld [vmem:[%s11] sm:$0xff]
    %v1035 = vld [vmem:[%s11 + $0x8] sm:$0xff]
    %v1036 = vld [vmem:[%s11 + $0x10] sm:$0xff]
    %v1037 = vld [vmem:[%s11 + $0x18] sm:$0xff]
    %v1038 = vld [vmem:[%s11 + $0x20] sm:$0xff]
    %v1039 = vld [vmem:[%s11 + $0x28] sm:$0xff]
    %v1040 = vld [vmem:[%s11 + $0x30] sm:$0xff]
    %v1041 = vld [vmem:[%s11 + $0x38] sm:$0xff]
    %v1042 = vld [vmem:[%s11 + $0x40] sm:$0xff]
    %v1043 = vld [vmem:[%s11 + $0x48] sm:$0xff]
    %v1044 = vld [vmem:[%s11 + $0x50] sm:$0xff]
    %v1045 = vld [vmem:[%s11 + $0x58] sm:$0xff]
    %v1046 = vld [vmem:[%s11 + $0x60] sm:$0xff]
    %v1047 = vld [vmem:[%s11 + $0x68] sm:$0xff]
    %v1048 = vld [vmem:[%s11 + $0x70] sm:$0xff]
    %v1049 = vld [vmem:[%s11 + $0x78] sm:$0xff]
    %v1066 = vunpack.c.l.b16 %v1034
    %v1067 = vunpack.c.h.b16 %v1034
    %v1068 = vunpack.c.l.b16 %v1035
    %v1069 = vunpack.c.h.b16 %v1035
    %v1070 = vunpack.c.l.b16 %v1036
    %v1071 = vunpack.c.h.b16 %v1036
    %v1072 = vunpack.c.l.b16 %v1037
    %v1073 = vunpack.c.h.b16 %v1037
    %v1074 = vunpack.c.l.b16 %v1038
    %v1075 = vunpack.c.h.b16 %v1038
    %v1076 = vunpack.c.l.b16 %v1039
    %v1077 = vunpack.c.h.b16 %v1039
    %v1078 = vunpack.c.l.b16 %v1040
    %v1079 = vunpack.c.h.b16 %v1040
    %v1080 = vunpack.c.l.b16 %v1041
    %v1081 = vunpack.c.h.b16 %v1041
    %v1082 = vunpack.c.l.b16 %v1042
    %v1083 = vunpack.c.h.b16 %v1042
    %v1084 = vunpack.c.l.b16 %v1043
    %v1085 = vunpack.c.h.b16 %v1043
    %v1086 = vunpack.c.l.b16 %v1044
    %v1087 = vunpack.c.h.b16 %v1044
    %v1088 = vunpack.c.l.b16 %v1045
    %v1089 = vunpack.c.h.b16 %v1045
    %v1090 = vunpack.c.l.b16 %v1046
    %v1091 = vunpack.c.h.b16 %v1046
    %v1092 = vunpack.c.l.b16 %v1047
    %v1093 = vunpack.c.h.b16 %v1047
    %v1094 = vunpack.c.l.b16 %v1048
    %v1095 = vunpack.c.h.b16 %v1048
    %v1096 = vunpack.c.l.b16 %v1049
    %v1097 = vunpack.c.h.b16 %v1049
    %v1098 = vpack.c.b16 %v1074, %v1066
    %v1099 = vpack.c.b16 %v1075, %v1067
    %v1100 = vpack.c.b16 %v1076, %v1068
    %v1101 = vpack.c.b16 %v1077, %v1069
    %v1102 = vpack.c.b16 %v1078, %v1070
    %v1103 = vpack.c.b16 %v1079, %v1071
    %v1104 = vpack.c.b16 %v1080, %v1072
    %v1105 = vpack.c.b16 %v1081, %v1073
    %v1106 = vpack.c.b16 %v1090, %v1082
    %v1107 = vpack.c.b16 %v1091, %v1083
    %v1108 = vpack.c.b16 %v1092, %v1084
    %v1109 = vpack.c.b16 %v1093, %v1085
    %v1110 = vpack.c.b16 %v1094, %v1086
    %v1111 = vpack.c.b16 %v1095, %v1087
    %v1112 = vpack.c.b16 %v1096, %v1088
    %v1113 = vpack.c.b16 %v1097, %v1089
    %v1131 = vsel %vm956, %v1032, 0
    %v1134 = vsel %vm956, %v1033, 0
    %1136 = vmatprep.subr.bf16.mxu0 %v1099
    %1137 = vmatpush1.bf16.msra.mxu0 %v1098
    %1138 = vmatprep.subr.bf16.mxu0 %v1107
    %1139 = vmatpush1.bf16.msra.mxu0 %v1106
    %1140 = vmatprep.subr.bf16.mxu0 0
    %1141 = vmatpush1.bf16.msra.mxu0 0
    %1142 = vmatprep.subr.bf16.mxu0 0
    %1143 = vmatpush1.bf16.msra.mxu0 0
    %1144 = vmatprep.subr.bf16.mxu0 0
    %1145 = vmatpush1.bf16.msra.mxu0 0
    %1146 = vmatprep.subr.bf16.mxu0 0
    %1147 = vmatpush1.bf16.msra.mxu0 0
    %1148 = vmatprep.subr.bf16.mxu0 0
    %1149 = vmatpush1.bf16.msra.mxu0 0
    %1150 = vmatprep.subr.bf16.mxu0 0
    %1151 = vmatpush1.bf16.msra.mxu0 0
    %1152 = vmatprep.subr.bf16.mxu0 0
    %1153 = vmatpush1.bf16.msra.mxu0 0
    %1154 = vmatprep.subr.bf16.mxu0 0
    %1155 = vmatpush1.bf16.msra.mxu0 0
    %1156 = vmatprep.subr.bf16.mxu0 0
    %1157 = vmatpush1.bf16.msra.mxu0 0
    %1158 = vmatprep.subr.bf16.mxu0 0
    %1159 = vmatpush1.bf16.msra.mxu0 0
    %1160 = vmatprep.subr.bf16.mxu0 0
    %1161 = vmatpush1.bf16.msra.mxu0 0
    %1162 = vmatprep.subr.bf16.mxu0 0
    %1163 = vmatpush1.bf16.msra.mxu0 0
    %1164 = vmatprep.subr.bf16.mxu0 0
    %1165 = vmatpush1.bf16.msra.mxu0 0
    %1166 = vmatprep.subr.bf16.mxu0 0
    %1167 = vmatpush1.bf16.msra.mxu0 0
    %1168 = vmatprep.mubr.bf16.mxu0 0
    %1169 = vmatmul.mubr.bf16.gmra.mrb[0].mxu0 %v1131
    %v1170 = vpop.f32.mrb[0].mxu0
    %v1171 = vadd.f32 0.0, %v1170
    %v1172 = vpop.f32.mrb[0].mxu0
    %v1173 = vadd.f32 0.0, %v1172
    %v1174 = vpop.f32.mrb[0].mxu0
    %v1175 = vadd.f32 0.0, %v1174
    %v1176 = vpop.f32.mrb[0].mxu0
    %v1177 = vadd.f32 0.0, %v1176
    %1178 = vmatprep.mubr.bf16.mxu0 0
    %1179 = vmatmul.mubr.bf16.gmra.mrb[0].mxu0 %v1134
    %v1180 = vpop.f32.mrb[0].mxu0
    %v1181 = vadd.f32 0.0, %v1180
    %v1182 = vpop.f32.mrb[0].mxu0
    %v1183 = vadd.f32 0.0, %v1182
    %v1184 = vpop.f32.mrb[0].mxu0
    %v1185 = vadd.f32 0.0, %v1184
    %v1186 = vpop.f32.mrb[0].mxu0
    %v1187 = vadd.f32 0.0, %v1186
    %1188 = vdwg.mxu0
    %1189 = vmatprep.subr.bf16.mxu0 %v1101
    %1190 = vmatpush1.bf16.msra.mxu0 %v1100
    %1191 = vmatprep.subr.bf16.mxu0 %v1109
    %1192 = vmatpush1.bf16.msra.mxu0 %v1108
    %1193 = vmatprep.subr.bf16.mxu0 0
    %1194 = vmatpush1.bf16.msra.mxu0 0
    %1195 = vmatprep.subr.bf16.mxu0 0
    %1196 = vmatpush1.bf16.msra.mxu0 0
    %1197 = vmatprep.subr.bf16.mxu0 0
    %1198 = vmatpush1.bf16.msra.mxu0 0
    %1199 = vmatprep.subr.bf16.mxu0 0
    %1200 = vmatpush1.bf16.msra.mxu0 0
    %1201 = vmatprep.subr.bf16.mxu0 0
    %1202 = vmatpush1.bf16.msra.mxu0 0
    %1203 = vmatprep.subr.bf16.mxu0 0
    %1204 = vmatpush1.bf16.msra.mxu0 0
    %1205 = vmatprep.subr.bf16.mxu0 0
    %1206 = vmatpush1.bf16.msra.mxu0 0
    %1207 = vmatprep.subr.bf16.mxu0 0
    %1208 = vmatpush1.bf16.msra.mxu0 0
    %1209 = vmatprep.subr.bf16.mxu0 0
    %1210 = vmatpush1.bf16.msra.mxu0 0
    %1211 = vmatprep.subr.bf16.mxu0 0
    %1212 = vmatpush1.bf16.msra.mxu0 0
    %1213 = vmatprep.subr.bf16.mxu0 0
    %1214 = vmatpush1.bf16.msra.mxu0 0
    %1215 = vmatprep.subr.bf16.mxu0 0
    %1216 = vmatpush1.bf16.msra.mxu0 0
    %1217 = vmatprep.subr.bf16.mxu0 0
    %1218 = vmatpush1.bf16.msra.mxu0 0
    %1219 = vmatprep.subr.bf16.mxu0 0
    %1220 = vmatpush1.bf16.msra.mxu0 0
    %1221 = vmatprep.mubr.bf16.mxu0 0
    %1222 = vmatmul.mubr.bf16.gmra.mrb[0].mxu0 %v1131
    %v1223 = vpop.f32.mrb[0].mxu0
    %v1224 = vadd.f32 0.0, %v1223
    %v1225 = vpop.f32.mrb[0].mxu0
    %v1226 = vadd.f32 0.0, %v1225
    %v1227 = vpop.f32.mrb[0].mxu0
    %v1228 = vadd.f32 0.0, %v1227
    %v1229 = vpop.f32.mrb[0].mxu0
    %v1230 = vadd.f32 0.0, %v1229
    %1231 = vmatprep.mubr.bf16.mxu0 0
    %1232 = vmatmul.mubr.bf16.gmra.mrb[0].mxu0 %v1134
    %v1233 = vpop.f32.mrb[0].mxu0
    %v1234 = vadd.f32 0.0, %v1233
    %v1235 = vpop.f32.mrb[0].mxu0
    %v1236 = vadd.f32 0.0, %v1235
    %v1237 = vpop.f32.mrb[0].mxu0
    %v1238 = vadd.f32 0.0, %v1237
    %v1239 = vpop.f32.mrb[0].mxu0
    %v1240 = vadd.f32 0.0, %v1239
    %1241 = vdwg.mxu0
    %1242 = vmatprep.subr.bf16.mxu0 %v1103
    %1243 = vmatpush1.bf16.msra.mxu0 %v1102
    %1244 = vmatprep.subr.bf16.mxu0 %v1111
    %1245 = vmatpush1.bf16.msra.mxu0 %v1110
    %1246 = vmatprep.subr.bf16.mxu0 0
    %1247 = vmatpush1.bf16.msra.mxu0 0
    %1248 = vmatprep.subr.bf16.mxu0 0
    %1249 = vmatpush1.bf16.msra.mxu0 0
    %1250 = vmatprep.subr.bf16.mxu0 0
    %1251 = vmatpush1.bf16.msra.mxu0 0
    %1252 = vmatprep.subr.bf16.mxu0 0
    %1253 = vmatpush1.bf16.msra.mxu0 0
    %1254 = vmatprep.subr.bf16.mxu0 0
    %1255 = vmatpush1.bf16.msra.mxu0 0
    %1256 = vmatprep.subr.bf16.mxu0 0
    %1257 = vmatpush1.bf16.msra.mxu0 0
    %1258 = vmatprep.subr.bf16.mxu0 0
    %1259 = vmatpush1.bf16.msra.mxu0 0
    %1260 = vmatprep.subr.bf16.mxu0 0
    %1261 = vmatpush1.bf16.msra.mxu0 0
    %1262 = vmatprep.subr.bf16.mxu0 0
    %1263 = vmatpush1.bf16.msra.mxu0 0
    %1264 = vmatprep.subr.bf16.mxu0 0
    %1265 = vmatpush1.bf16.msra.mxu0 0
    %1266 = vmatprep.subr.bf16.mxu0 0
    %1267 = vmatpush1.bf16.msra.mxu0 0
    %1268 = vmatprep.subr.bf16.mxu0 0
    %1269 = vmatpush1.bf16.msra.mxu0 0
    %1270 = vmatprep.subr.bf16.mxu0 0
    %1271 = vmatpush1.bf16.msra.mxu0 0
    %1272 = vmatprep.subr.bf16.mxu0 0
    %1273 = vmatpush1.bf16.msra.mxu0 0
    %1274 = vmatprep.mubr.bf16.mxu0 0
    %1275 = vmatmul.mubr.bf16.gmra.mrb[0].mxu0 %v1131
    %v1276 = vpop.f32.mrb[0].mxu0
    %v1277 = vadd.f32 0.0, %v1276
    %v1278 = vpop.f32.mrb[0].mxu0
    %v1279 = vadd.f32 0.0, %v1278
    %v1280 = vpop.f32.mrb[0].mxu0
    %v1281 = vadd.f32 0.0, %v1280
    %v1282 = vpop.f32.mrb[0].mxu0
    %v1283 = vadd.f32 0.0, %v1282
    %1284 = vmatprep.mubr.bf16.mxu0 0
    %1285 = vmatmul.mubr.bf16.gmra.mrb[0].mxu0 %v1134
    %v1286 = vpop.f32.mrb[0].mxu0
    %v1287 = vadd.f32 0.0, %v1286
    %v1288 = vpop.f32.mrb[0].mxu0
    %v1289 = vadd.f32 0.0, %v1288
    %v1290 = vpop.f32.mrb[0].mxu0
    %v1291 = vadd.f32 0.0, %v1290
    %v1292 = vpop.f32.mrb[0].mxu0
    %v1293 = vadd.f32 0.0, %v1292
    %1294 = vdwg.mxu0
    %1295 = vmatprep.subr.bf16.mxu0 %v1105
    %1296 = vmatpush1.bf16.msra.mxu0 %v1104
    %1297 = vmatprep.subr.bf16.mxu0 %v1113
    %1298 = vmatpush1.bf16.msra.mxu0 %v1112
    %1299 = vmatprep.subr.bf16.mxu0 0
    %1300 = vmatpush1.bf16.msra.mxu0 0
    %1301 = vmatprep.subr.bf16.mxu0 0
    %1302 = vmatpush1.bf16.msra.mxu0 0
    %1303 = vmatprep.subr.bf16.mxu0 0
    %1304 = vmatpush1.bf16.msra.mxu0 0
    %1305 = vmatprep.subr.bf16.mxu0 0
    %1306 = vmatpush1.bf16.msra.mxu0 0
    %1307 = vmatprep.subr.bf16.mxu0 0
    %1308 = vmatpush1.bf16.msra.mxu0 0
    %1309 = vmatprep.subr.bf16.mxu0 0
    %1310 = vmatpush1.bf16.msra.mxu0 0
    %1311 = vmatprep.subr.bf16.mxu0 0
    %1312 = vmatpush1.bf16.msra.mxu0 0
    %1313 = vmatprep.subr.bf16.mxu0 0
    %1314 = vmatpush1.bf16.msra.mxu0 0
    %1315 = vmatprep.subr.bf16.mxu0 0
    %1316 = vmatpush1.bf16.msra.mxu0 0
    %1317 = vmatprep.subr.bf16.mxu0 0
    %1318 = vmatpush1.bf16.msra.mxu0 0
    %1319 = vmatprep.subr.bf16.mxu0 0
    %1320 = vmatpush1.bf16.msra.mxu0 0
    %1321 = vmatprep.subr.bf16.mxu0 0
    %1322 = vmatpush1.bf16.msra.mxu0 0
    %1323 = vmatprep.subr.bf16.mxu0 0
    %1324 = vmatpush1.bf16.msra.mxu0 0
    %1325 = vmatprep.subr.bf16.mxu0 0
    %1326 = vmatpush1.bf16.msra.mxu0 0
    %1327 = vmatprep.mubr.bf16.mxu0 0
    %1328 = vmatmul.mubr.bf16.gmra.mrb[0].mxu0 %v1131
    %v1329 = vpop.f32.mrb[0].mxu0
    %v1330 = vadd.f32 0.0, %v1329
    %v1331 = vpop.f32.mrb[0].mxu0
    %v1332 = vadd.f32 0.0, %v1331
    %v1333 = vpop.f32.mrb[0].mxu0
    %v1334 = vadd.f32 0.0, %v1333
    %v1335 = vpop.f32.mrb[0].mxu0
    %v1336 = vadd.f32 0.0, %v1335
    %1337 = vmatprep.mubr.bf16.mxu0 0
    %1338 = vmatmul.mubr.bf16.gmra.mrb[0].mxu0 %v1134
    %v1339 = vpop.f32.mrb[0].mxu0
    %v1340 = vadd.f32 0.0, %v1339
    %v1341 = vpop.f32.mrb[0].mxu0
    %v1342 = vadd.f32 0.0, %v1341
    %v1343 = vpop.f32.mrb[0].mxu0
    %v1344 = vadd.f32 0.0, %v1343
    %v1345 = vpop.f32.mrb[0].mxu0
    %v1346 = vadd.f32 0.0, %v1345
    %1347 = vdwg.mxu0
    %v1348 = vld [vmem:[%s13] sm:$0xff]
    %v1349 = vld [vmem:[%s13 + $0x8] sm:$0xff]
    %v1350 = vld [vmem:[%s13 + $0x10] sm:$0xff]
    %v1351 = vld [vmem:[%s13 + $0x18] sm:$0xff]
    %v1352 = vld [vmem:[%s13 + $0x20] sm:$0xff]
    %v1353 = vld [vmem:[%s13 + $0x28] sm:$0xff]
    %v1354 = vld [vmem:[%s13 + $0x30] sm:$0xff]
    %v1355 = vld [vmem:[%s13 + $0x38] sm:$0xff]
    %v1356 = vld [vmem:[%s13 + $0x40] sm:$0xff]
    %v1357 = vld [vmem:[%s13 + $0x48] sm:$0xff]
    %v1358 = vld [vmem:[%s13 + $0x50] sm:$0xff]
    %v1359 = vld [vmem:[%s13 + $0x58] sm:$0xff]
    %v1360 = vld [vmem:[%s13 + $0x60] sm:$0xff]
    %v1361 = vld [vmem:[%s13 + $0x68] sm:$0xff]
    %v1362 = vld [vmem:[%s13 + $0x70] sm:$0xff]
    %v1363 = vld [vmem:[%s13 + $0x78] sm:$0xff]
    %v1364 = vld [vmem:[%s13 + $0x80] sm:$0xff]
    %v1365 = vld [vmem:[%s13 + $0x88] sm:$0xff]
    %v1366 = vld [vmem:[%s13 + $0x90] sm:$0xff]
    %v1367 = vld [vmem:[%s13 + $0x98] sm:$0xff]
    %v1368 = vld [vmem:[%s13 + $0xa0] sm:$0xff]
    %v1369 = vld [vmem:[%s13 + $0xa8] sm:$0xff]
    %v1370 = vld [vmem:[%s13 + $0xb0] sm:$0xff]
    %v1371 = vld [vmem:[%s13 + $0xb8] sm:$0xff]
    %v1372 = vld [vmem:[%s13 + $0xc0] sm:$0xff]
    %v1373 = vld [vmem:[%s13 + $0xc8] sm:$0xff]
    %v1374 = vld [vmem:[%s13 + $0xd0] sm:$0xff]
    %v1375 = vld [vmem:[%s13 + $0xd8] sm:$0xff]
    %v1376 = vld [vmem:[%s13 + $0xe0] sm:$0xff]
    %v1377 = vld [vmem:[%s13 + $0xe8] sm:$0xff]
    %v1378 = vld [vmem:[%s13 + $0xf0] sm:$0xff]
    %v1379 = vld [vmem:[%s13 + $0xf8] sm:$0xff]
    %v1380 = vmul.f32 %v1171, %v1348
    %v1381 = vmul.f32 %v1173, %v1349
    %v1382 = vmul.f32 %v1224, %v1350
    %v1383 = vmul.f32 %v1226, %v1351
    %v1384 = vmul.f32 %v1277, %v1352
    %v1385 = vmul.f32 %v1279, %v1353
    %v1386 = vmul.f32 %v1330, %v1354
    %v1387 = vmul.f32 %v1332, %v1355
    %v1388 = vmul.f32 %v1175, %v1356
    %v1389 = vmul.f32 %v1177, %v1357
    %v1390 = vmul.f32 %v1228, %v1358
    %v1391 = vmul.f32 %v1230, %v1359
    %v1392 = vmul.f32 %v1281, %v1360
    %v1393 = vmul.f32 %v1283, %v1361
    %v1394 = vmul.f32 %v1334, %v1362
    %v1395 = vmul.f32 %v1336, %v1363
    %v1396 = vmul.f32 %v1181, %v1364
    %v1397 = vmul.f32 %v1183, %v1365
    %v1398 = vmul.f32 %v1234, %v1366
    %v1399 = vmul.f32 %v1236, %v1367
    %v1400 = vmul.f32 %v1287, %v1368
    %v1401 = vmul.f32 %v1289, %v1369
    %v1402 = vmul.f32 %v1340, %v1370
    %v1403 = vmul.f32 %v1342, %v1371
    %v1404 = vmul.f32 %v1185, %v1372
    %v1405 = vmul.f32 %v1187, %v1373
    %v1406 = vmul.f32 %v1238, %v1374
    %v1407 = vmul.f32 %v1240, %v1375
    %v1408 = vmul.f32 %v1291, %v1376
    %v1409 = vmul.f32 %v1293, %v1377
    %v1410 = vmul.f32 %v1344, %v1378
    %v1411 = vmul.f32 %v1346, %v1379
    %v1412 = vld [vmem:[%s15] sm:$0x3]
    %v1414 = vsel %vm956, %v1412, 0
    %1416 = vmatprep.subr.mxu0 %v1381
    %1417 = vmatpush1.msra.mxu0 %v1380
    %1418 = vmatprep.subr.mxu0 %v1389
    %1419 = vmatpush1.msra.mxu0 %v1388
    %1420 = vmatprep.subr.mxu0 %v1397
    %1421 = vmatpush1.msra.mxu0 %v1396
    %1422 = vmatprep.subr.mxu0 %v1405
    %1423 = vmatpush1.msra.mxu0 %v1404
    %1424 = vmatprep.subr.mxu0 0.0
    %1425 = vmatpush1.msra.mxu0 0.0
    %1426 = vmatprep.subr.mxu0 0.0
    %1427 = vmatpush1.msra.mxu0 0.0
    %1428 = vmatprep.subr.mxu0 0.0
    %1429 = vmatpush1.msra.mxu0 0.0
    %1430 = vmatprep.subr.mxu0 0.0
    %1431 = vmatpush1.msra.mxu0 0.0
    %1432 = vmatprep.subr.mxu0 0.0
    %1433 = vmatpush1.msra.mxu0 0.0
    %1434 = vmatprep.subr.mxu0 0.0
    %1435 = vmatpush1.msra.mxu0 0.0
    %1436 = vmatprep.subr.mxu0 0.0
    %1437 = vmatpush1.msra.mxu0 0.0
    %1438 = vmatprep.subr.mxu0 0.0
    %1439 = vmatpush1.msra.mxu0 0.0
    %1440 = vmatprep.subr.mxu0 0.0
    %1441 = vmatpush1.msra.mxu0 0.0
    %1442 = vmatprep.subr.mxu0 0.0
    %1443 = vmatpush1.msra.mxu0 0.0
    %1444 = vmatprep.subr.mxu0 0.0
    %1445 = vmatpush1.msra.mxu0 0.0
    %1446 = vmatprep.subr.mxu0 0.0
    %1447 = vmatpush1.msra.mxu0 0.0
    %1448 = vmatprep.subr.mxu0 0.0
    %1449 = vmatpush1.msra.mxu0 0.0
    %1450 = vmatprep.subr.mxu0 0.0
    %1451 = vmatpush1.msra.mxu0 0.0
    %1452 = vmatprep.subr.mxu0 0.0
    %1453 = vmatpush1.msra.mxu0 0.0
    %1454 = vmatprep.subr.mxu0 0.0
    %1455 = vmatpush1.msra.mxu0 0.0
    %1456 = vmatprep.subr.mxu0 0.0
    %1457 = vmatpush1.msra.mxu0 0.0
    %1458 = vmatprep.subr.mxu0 0.0
    %1459 = vmatpush1.msra.mxu0 0.0
    %1460 = vmatprep.subr.mxu0 0.0
    %1461 = vmatpush1.msra.mxu0 0.0
    %1462 = vmatprep.subr.mxu0 0.0
    %1463 = vmatpush1.msra.mxu0 0.0
    %1464 = vmatprep.subr.mxu0 0.0
    %1465 = vmatpush1.msra.mxu0 0.0
    %1466 = vmatprep.subr.mxu0 0.0
    %1467 = vmatpush1.msra.mxu0 0.0
    %1468 = vmatprep.subr.mxu0 0.0
    %1469 = vmatpush1.msra.mxu0 0.0
    %1470 = vmatprep.subr.mxu0 0.0
    %1471 = vmatpush1.msra.mxu0 0.0
    %1472 = vmatprep.subr.mxu0 0.0
    %1473 = vmatpush1.msra.mxu0 0.0
    %1474 = vmatprep.subr.mxu0 0.0
    %1475 = vmatpush1.msra.mxu0 0.0
    %1476 = vmatprep.subr.mxu0 0.0
    %1477 = vmatpush1.msra.mxu0 0.0
    %1478 = vmatprep.subr.mxu0 0.0
    %1479 = vmatpush1.msra.mxu0 0.0
    %1480 = vmatprep.mubr.f32.mxu0 0.0
    %1481 = vmatmul.mubr.f32.gmra.mrb[0].mxu0 %v1414
    %v1482 = vpop.f32.mrb[0].mxu0
    %v1483 = vadd.f32 0.0, %v1482
    %v1484 = vpop.f32.mrb[0].mxu0
    %v1485 = vadd.f32 0.0, %v1484
    %1486 = vdwg.mxu0
    %1487 = vmatprep.subr.mxu0 %v1383
    %1488 = vmatpush1.msra.mxu0 %v1382
    %1489 = vmatprep.subr.mxu0 %v1391
    %1490 = vmatpush1.msra.mxu0 %v1390
    %1491 = vmatprep.subr.mxu0 %v1399
    %1492 = vmatpush1.msra.mxu0 %v1398
    %1493 = vmatprep.subr.mxu0 %v1407
    %1494 = vmatpush1.msra.mxu0 %v1406
    %1495 = vmatprep.subr.mxu0 0.0
    %1496 = vmatpush1.msra.mxu0 0.0
    %1497 = vmatprep.subr.mxu0 0.0
    %1498 = vmatpush1.msra.mxu0 0.0
    %1499 = vmatprep.subr.mxu0 0.0
    %1500 = vmatpush1.msra.mxu0 0.0
    %1501 = vmatprep.subr.mxu0 0.0
    %1502 = vmatpush1.msra.mxu0 0.0
    %1503 = vmatprep.subr.mxu0 0.0
    %1504 = vmatpush1.msra.mxu0 0.0
    %1505 = vmatprep.subr.mxu0 0.0
    %1506 = vmatpush1.msra.mxu0 0.0
    %1507 = vmatprep.subr.mxu0 0.0
    %1508 = vmatpush1.msra.mxu0 0.0
    %1509 = vmatprep.subr.mxu0 0.0
    %1510 = vmatpush1.msra.mxu0 0.0
    %1511 = vmatprep.subr.mxu0 0.0
    %1512 = vmatpush1.msra.mxu0 0.0
    %1513 = vmatprep.subr.mxu0 0.0
    %1514 = vmatpush1.msra.mxu0 0.0
    %1515 = vmatprep.subr.mxu0 0.0
    %1516 = vmatpush1.msra.mxu0 0.0
    %1517 = vmatprep.subr.mxu0 0.0
    %1518 = vmatpush1.msra.mxu0 0.0
    %1519 = vmatprep.subr.mxu0 0.0
    %1520 = vmatpush1.msra.mxu0 0.0
    %1521 = vmatprep.subr.mxu0 0.0
    %1522 = vmatpush1.msra.mxu0 0.0
    %1523 = vmatprep.subr.mxu0 0.0
    %1524 = vmatpush1.msra.mxu0 0.0
    %1525 = vmatprep.subr.mxu0 0.0
    %1526 = vmatpush1.msra.mxu0 0.0
    %1527 = vmatprep.subr.mxu0 0.0
    %1528 = vmatpush1.msra.mxu0 0.0
    %1529 = vmatprep.subr.mxu0 0.0
    %1530 = vmatpush1.msra.mxu0 0.0
    %1531 = vmatprep.subr.mxu0 0.0
    %1532 = vmatpush1.msra.mxu0 0.0
    %1533 = vmatprep.subr.mxu0 0.0
    %1534 = vmatpush1.msra.mxu0 0.0
    %1535 = vmatprep.subr.mxu0 0.0
    %1536 = vmatpush1.msra.mxu0 0.0
    %1537 = vmatprep.subr.mxu0 0.0
    %1538 = vmatpush1.msra.mxu0 0.0
    %1539 = vmatprep.subr.mxu0 0.0
    %1540 = vmatpush1.msra.mxu0 0.0
    %1541 = vmatprep.subr.mxu0 0.0
    %1542 = vmatpush1.msra.mxu0 0.0
    %1543 = vmatprep.subr.mxu0 0.0
    %1544 = vmatpush1.msra.mxu0 0.0
    %1545 = vmatprep.subr.mxu0 0.0
    %1546 = vmatpush1.msra.mxu0 0.0
    %1547 = vmatprep.subr.mxu0 0.0
    %1548 = vmatpush1.msra.mxu0 0.0
    %1549 = vmatprep.subr.mxu0 0.0
    %1550 = vmatpush1.msra.mxu0 0.0
    %1551 = vmatprep.mubr.f32.mxu0 0.0
    %1552 = vmatmul.mubr.f32.gmra.mrb[0].mxu0 %v1414
    %v1553 = vpop.f32.mrb[0].mxu0
    %v1554 = vadd.f32 0.0, %v1553
    %v1555 = vpop.f32.mrb[0].mxu0
    %v1556 = vadd.f32 0.0, %v1555
    %1557 = vdwg.mxu0
    %1558 = vmatprep.subr.mxu0 %v1385
    %1559 = vmatpush1.msra.mxu0 %v1384
    %1560 = vmatprep.subr.mxu0 %v1393
    %1561 = vmatpush1.msra.mxu0 %v1392
    %1562 = vmatprep.subr.mxu0 %v1401
    %1563 = vmatpush1.msra.mxu0 %v1400
    %1564 = vmatprep.subr.mxu0 %v1409
    %1565 = vmatpush1.msra.mxu0 %v1408
    %1566 = vmatprep.subr.mxu0 0.0
    %1567 = vmatpush1.msra.mxu0 0.0
    %1568 = vmatprep.subr.mxu0 0.0
    %1569 = vmatpush1.msra.mxu0 0.0
    %1570 = vmatprep.subr.mxu0 0.0
    %1571 = vmatpush1.msra.mxu0 0.0
    %1572 = vmatprep.subr.mxu0 0.0
    %1573 = vmatpush1.msra.mxu0 0.0
    %1574 = vmatprep.subr.mxu0 0.0
    %1575 = vmatpush1.msra.mxu0 0.0
    %1576 = vmatprep.subr.mxu0 0.0
    %1577 = vmatpush1.msra.mxu0 0.0
    %1578 = vmatprep.subr.mxu0 0.0
    %1579 = vmatpush1.msra.mxu0 0.0
    %1580 = vmatprep.subr.mxu0 0.0
    %1581 = vmatpush1.msra.mxu0 0.0
    %1582 = vmatprep.subr.mxu0 0.0
    %1583 = vmatpush1.msra.mxu0 0.0
    %1584 = vmatprep.subr.mxu0 0.0
    %1585 = vmatpush1.msra.mxu0 0.0
    %1586 = vmatprep.subr.mxu0 0.0
    %1587 = vmatpush1.msra.mxu0 0.0
    %1588 = vmatprep.subr.mxu0 0.0
    %1589 = vmatpush1.msra.mxu0 0.0
    %1590 = vmatprep.subr.mxu0 0.0
    %1591 = vmatpush1.msra.mxu0 0.0
    %1592 = vmatprep.subr.mxu0 0.0
    %1593 = vmatpush1.msra.mxu0 0.0
    %1594 = vmatprep.subr.mxu0 0.0
    %1595 = vmatpush1.msra.mxu0 0.0
    %1596 = vmatprep.subr.mxu0 0.0
    %1597 = vmatpush1.msra.mxu0 0.0
    %1598 = vmatprep.subr.mxu0 0.0
    %1599 = vmatpush1.msra.mxu0 0.0
    %1600 = vmatprep.subr.mxu0 0.0
    %1601 = vmatpush1.msra.mxu0 0.0
    %1602 = vmatprep.subr.mxu0 0.0
    %1603 = vmatpush1.msra.mxu0 0.0
    %1604 = vmatprep.subr.mxu0 0.0
    %1605 = vmatpush1.msra.mxu0 0.0
    %1606 = vmatprep.subr.mxu0 0.0
    %1607 = vmatpush1.msra.mxu0 0.0
    %1608 = vmatprep.subr.mxu0 0.0
    %1609 = vmatpush1.msra.mxu0 0.0
    %1610 = vmatprep.subr.mxu0 0.0
    %1611 = vmatpush1.msra.mxu0 0.0
    %1612 = vmatprep.subr.mxu0 0.0
    %1613 = vmatpush1.msra.mxu0 0.0
    %1614 = vmatprep.subr.mxu0 0.0
    %1615 = vmatpush1.msra.mxu0 0.0
    %1616 = vmatprep.subr.mxu0 0.0
    %1617 = vmatpush1.msra.mxu0 0.0
    %1618 = vmatprep.subr.mxu0 0.0
    %1619 = vmatpush1.msra.mxu0 0.0
    %1620 = vmatprep.subr.mxu0 0.0
    %1621 = vmatpush1.msra.mxu0 0.0
    %1622 = vmatprep.mubr.f32.mxu0 0.0
    %1623 = vmatmul.mubr.f32.gmra.mrb[0].mxu0 %v1414
    %v1624 = vpop.f32.mrb[0].mxu0
    %v1625 = vadd.f32 0.0, %v1624
    %v1626 = vpop.f32.mrb[0].mxu0
    %v1627 = vadd.f32 0.0, %v1626
    %1628 = vdwg.mxu0
    %1629 = vmatprep.subr.mxu0 %v1387
    %1630 = vmatpush1.msra.mxu0 %v1386
    %1631 = vmatprep.subr.mxu0 %v1395
    %1632 = vmatpush1.msra.mxu0 %v1394
    %1633 = vmatprep.subr.mxu0 %v1403
    %1634 = vmatpush1.msra.mxu0 %v1402
    %1635 = vmatprep.subr.mxu0 %v1411
    %1636 = vmatpush1.msra.mxu0 %v1410
    %1637 = vmatprep.subr.mxu0 0.0
    %1638 = vmatpush1.msra.mxu0 0.0
    %1639 = vmatprep.subr.mxu0 0.0
    %1640 = vmatpush1.msra.mxu0 0.0
    %1641 = vmatprep.subr.mxu0 0.0
    %1642 = vmatpush1.msra.mxu0 0.0
    %1643 = vmatprep.subr.mxu0 0.0
    %1644 = vmatpush1.msra.mxu0 0.0
    %1645 = vmatprep.subr.mxu0 0.0
    %1646 = vmatpush1.msra.mxu0 0.0
    %1647 = vmatprep.subr.mxu0 0.0
    %1648 = vmatpush1.msra.mxu0 0.0
    %1649 = vmatprep.subr.mxu0 0.0
    %1650 = vmatpush1.msra.mxu0 0.0
    %1651 = vmatprep.subr.mxu0 0.0
    %1652 = vmatpush1.msra.mxu0 0.0
    %1653 = vmatprep.subr.mxu0 0.0
    %1654 = vmatpush1.msra.mxu0 0.0
    %1655 = vmatprep.subr.mxu0 0.0
    %1656 = vmatpush1.msra.mxu0 0.0
    %1657 = vmatprep.subr.mxu0 0.0
    %1658 = vmatpush1.msra.mxu0 0.0
    %1659 = vmatprep.subr.mxu0 0.0
    %1660 = vmatpush1.msra.mxu0 0.0
    %1661 = vmatprep.subr.mxu0 0.0
    %1662 = vmatpush1.msra.mxu0 0.0
    %1663 = vmatprep.subr.mxu0 0.0
    %1664 = vmatpush1.msra.mxu0 0.0
    %1665 = vmatprep.subr.mxu0 0.0
    %1666 = vmatpush1.msra.mxu0 0.0
    %1667 = vmatprep.subr.mxu0 0.0
    %1668 = vmatpush1.msra.mxu0 0.0
    %1669 = vmatprep.subr.mxu0 0.0
    %1670 = vmatpush1.msra.mxu0 0.0
    %1671 = vmatprep.subr.mxu0 0.0
    %1672 = vmatpush1.msra.mxu0 0.0
    %1673 = vmatprep.subr.mxu0 0.0
    %1674 = vmatpush1.msra.mxu0 0.0
    %1675 = vmatprep.subr.mxu0 0.0
    %1676 = vmatpush1.msra.mxu0 0.0
    %1677 = vmatprep.subr.mxu0 0.0
    %1678 = vmatpush1.msra.mxu0 0.0
    %1679 = vmatprep.subr.mxu0 0.0
    %1680 = vmatpush1.msra.mxu0 0.0
    %1681 = vmatprep.subr.mxu0 0.0
    %1682 = vmatpush1.msra.mxu0 0.0
    %1683 = vmatprep.subr.mxu0 0.0
    %1684 = vmatpush1.msra.mxu0 0.0
    %1685 = vmatprep.subr.mxu0 0.0
    %1686 = vmatpush1.msra.mxu0 0.0
    %1687 = vmatprep.subr.mxu0 0.0
    %1688 = vmatpush1.msra.mxu0 0.0
    %1689 = vmatprep.subr.mxu0 0.0
    %1690 = vmatpush1.msra.mxu0 0.0
    %1691 = vmatprep.subr.mxu0 0.0
    %1692 = vmatpush1.msra.mxu0 0.0
    %1693 = vmatprep.mubr.f32.mxu0 0.0
    %1694 = vmatmul.mubr.f32.gmra.mrb[0].mxu0 %v1414
    %v1695 = vpop.f32.mrb[0].mxu0
    %v1696 = vadd.f32 0.0, %v1695
    %v1697 = vpop.f32.mrb[0].mxu0
    %v1698 = vadd.f32 0.0, %v1697
    %1699 = vdwg.mxu0
    %v1700 = vld [vmem:[%s17] sm:$0xff]
    %v1701 = vld [vmem:[%s17 + $0x8] sm:$0xff]
    %v1702 = vld [vmem:[%s17 + $0x10] sm:$0xff]
    %v1703 = vld [vmem:[%s17 + $0x18] sm:$0xff]
    %v1704 = vld [vmem:[%s17 + $0x20] sm:$0xff]
    %v1705 = vld [vmem:[%s17 + $0x28] sm:$0xff]
    %v1706 = vld [vmem:[%s17 + $0x30] sm:$0xff]
    %v1707 = vld [vmem:[%s17 + $0x38] sm:$0xff]
    %v1708 = vld [vmem:[%s17 + $0x40] sm:$0xff]
    %v1709 = vld [vmem:[%s17 + $0x48] sm:$0xff]
    %v1710 = vld [vmem:[%s17 + $0x50] sm:$0xff]
    %v1711 = vld [vmem:[%s17 + $0x58] sm:$0xff]
    %v1712 = vld [vmem:[%s17 + $0x60] sm:$0xff]
    %v1713 = vld [vmem:[%s17 + $0x68] sm:$0xff]
    %v1714 = vld [vmem:[%s17 + $0x70] sm:$0xff]
    %v1715 = vld [vmem:[%s17 + $0x78] sm:$0xff]
    %v1716 = vld [vmem:[%s17 + $0x80] sm:$0xff]
    %v1717 = vld [vmem:[%s17 + $0x88] sm:$0xff]
    %v1718 = vld [vmem:[%s17 + $0x90] sm:$0xff]
    %v1719 = vld [vmem:[%s17 + $0x98] sm:$0xff]
    %v1720 = vld [vmem:[%s17 + $0xa0] sm:$0xff]
    %v1721 = vld [vmem:[%s17 + $0xa8] sm:$0xff]
    %v1722 = vld [vmem:[%s17 + $0xb0] sm:$0xff]
    %v1723 = vld [vmem:[%s17 + $0xb8] sm:$0xff]
    %v1724 = vld [vmem:[%s17 + $0xc0] sm:$0xff]
    %v1725 = vld [vmem:[%s17 + $0xc8] sm:$0xff]
    %v1726 = vld [vmem:[%s17 + $0xd0] sm:$0xff]
    %v1727 = vld [vmem:[%s17 + $0xd8] sm:$0xff]
    %v1728 = vld [vmem:[%s17 + $0xe0] sm:$0xff]
    %v1729 = vld [vmem:[%s17 + $0xe8] sm:$0xff]
    %v1730 = vld [vmem:[%s17 + $0xf0] sm:$0xff]
    %v1731 = vld [vmem:[%s17 + $0xf8] sm:$0xff]
    %v1732 = vld [vmem:[%s17 + $0x100] sm:$0xff]
    %v1733 = vld [vmem:[%s17 + $0x108] sm:$0xff]
    %v1734 = vld [vmem:[%s17 + $0x110] sm:$0xff]
    %v1735 = vld [vmem:[%s17 + $0x118] sm:$0xff]
    %v1736 = vld [vmem:[%s17 + $0x120] sm:$0xff]
    %v1737 = vld [vmem:[%s17 + $0x128] sm:$0xff]
    %v1738 = vld [vmem:[%s17 + $0x130] sm:$0xff]
    %v1739 = vld [vmem:[%s17 + $0x138] sm:$0xff]
    %v1740 = vld [vmem:[%s17 + $0x140] sm:$0xff]
    %v1741 = vld [vmem:[%s17 + $0x148] sm:$0xff]
    %v1742 = vld [vmem:[%s17 + $0x150] sm:$0xff]
    %v1743 = vld [vmem:[%s17 + $0x158] sm:$0xff]
    %v1744 = vld [vmem:[%s17 + $0x160] sm:$0xff]
    %v1745 = vld [vmem:[%s17 + $0x168] sm:$0xff]
    %v1746 = vld [vmem:[%s17 + $0x170] sm:$0xff]
    %v1747 = vld [vmem:[%s17 + $0x178] sm:$0xff]
    %v1748 = vld [vmem:[%s17 + $0x180] sm:$0xff]
    %v1749 = vld [vmem:[%s17 + $0x188] sm:$0xff]
    %v1750 = vld [vmem:[%s17 + $0x190] sm:$0xff]
    %v1751 = vld [vmem:[%s17 + $0x198] sm:$0xff]
    %v1752 = vld [vmem:[%s17 + $0x1a0] sm:$0xff]
    %v1753 = vld [vmem:[%s17 + $0x1a8] sm:$0xff]
    %v1754 = vld [vmem:[%s17 + $0x1b0] sm:$0xff]
    %v1755 = vld [vmem:[%s17 + $0x1b8] sm:$0xff]
    %v1756 = vld [vmem:[%s17 + $0x1c0] sm:$0xff]
    %v1757 = vld [vmem:[%s17 + $0x1c8] sm:$0xff]
    %v1758 = vld [vmem:[%s17 + $0x1d0] sm:$0xff]
    %v1759 = vld [vmem:[%s17 + $0x1d8] sm:$0xff]
    %v1760 = vld [vmem:[%s17 + $0x1e0] sm:$0xff]
    %v1761 = vld [vmem:[%s17 + $0x1e8] sm:$0xff]
    %v1762 = vld [vmem:[%s17 + $0x1f0] sm:$0xff]
    %v1763 = vld [vmem:[%s17 + $0x1f8] sm:$0xff]
    %v1764 = vld [vmem:[%s17 + $0x200] sm:$0xff]
    %v1765 = vld [vmem:[%s17 + $0x208] sm:$0xff]
    %v1766 = vld [vmem:[%s17 + $0x210] sm:$0xff]
    %v1767 = vld [vmem:[%s17 + $0x218] sm:$0xff]
    %v1768 = vld [vmem:[%s17 + $0x220] sm:$0xff]
    %v1769 = vld [vmem:[%s17 + $0x228] sm:$0xff]
    %v1770 = vld [vmem:[%s17 + $0x230] sm:$0xff]
    %v1771 = vld [vmem:[%s17 + $0x238] sm:$0xff]
    %v1772 = vld [vmem:[%s17 + $0x240] sm:$0xff]
    %v1773 = vld [vmem:[%s17 + $0x248] sm:$0xff]
    %v1774 = vld [vmem:[%s17 + $0x250] sm:$0xff]
    %v1775 = vld [vmem:[%s17 + $0x258] sm:$0xff]
    %v1776 = vld [vmem:[%s17 + $0x260] sm:$0xff]
    %v1777 = vld [vmem:[%s17 + $0x268] sm:$0xff]
    %v1778 = vld [vmem:[%s17 + $0x270] sm:$0xff]
    %v1779 = vld [vmem:[%s17 + $0x278] sm:$0xff]
    %v1780 = vld [vmem:[%s17 + $0x280] sm:$0xff]
    %v1781 = vld [vmem:[%s17 + $0x288] sm:$0xff]
    %v1782 = vld [vmem:[%s17 + $0x290] sm:$0xff]
    %v1783 = vld [vmem:[%s17 + $0x298] sm:$0xff]
    %v1784 = vld [vmem:[%s17 + $0x2a0] sm:$0xff]
    %v1785 = vld [vmem:[%s17 + $0x2a8] sm:$0xff]
    %v1786 = vld [vmem:[%s17 + $0x2b0] sm:$0xff]
    %v1787 = vld [vmem:[%s17 + $0x2b8] sm:$0xff]
    %v1788 = vld [vmem:[%s17 + $0x2c0] sm:$0xff]
    %v1789 = vld [vmem:[%s17 + $0x2c8] sm:$0xff]
    %v1790 = vld [vmem:[%s17 + $0x2d0] sm:$0xff]
    %v1791 = vld [vmem:[%s17 + $0x2d8] sm:$0xff]
    %v1792 = vld [vmem:[%s17 + $0x2e0] sm:$0xff]
    %v1793 = vld [vmem:[%s17 + $0x2e8] sm:$0xff]
    %v1794 = vld [vmem:[%s17 + $0x2f0] sm:$0xff]
    %v1795 = vld [vmem:[%s17 + $0x2f8] sm:$0xff]
    %v1796 = vld [vmem:[%s17 + $0x300] sm:$0xff]
    %v1797 = vld [vmem:[%s17 + $0x308] sm:$0xff]
    %v1798 = vld [vmem:[%s17 + $0x310] sm:$0xff]
    %v1799 = vld [vmem:[%s17 + $0x318] sm:$0xff]
    %v1800 = vld [vmem:[%s17 + $0x320] sm:$0xff]
    %v1801 = vld [vmem:[%s17 + $0x328] sm:$0xff]
    %v1802 = vld [vmem:[%s17 + $0x330] sm:$0xff]
    %v1803 = vld [vmem:[%s17 + $0x338] sm:$0xff]
    %v1804 = vld [vmem:[%s17 + $0x340] sm:$0xff]
    %v1805 = vld [vmem:[%s17 + $0x348] sm:$0xff]
    %v1806 = vld [vmem:[%s17 + $0x350] sm:$0xff]
    %v1807 = vld [vmem:[%s17 + $0x358] sm:$0xff]
    %v1808 = vld [vmem:[%s17 + $0x360] sm:$0xff]
    %v1809 = vld [vmem:[%s17 + $0x368] sm:$0xff]
    %v1810 = vld [vmem:[%s17 + $0x370] sm:$0xff]
    %v1811 = vld [vmem:[%s17 + $0x378] sm:$0xff]
    %v1812 = vld [vmem:[%s17 + $0x380] sm:$0xff]
    %v1813 = vld [vmem:[%s17 + $0x388] sm:$0xff]
    %v1814 = vld [vmem:[%s17 + $0x390] sm:$0xff]
    %v1815 = vld [vmem:[%s17 + $0x398] sm:$0xff]
    %v1816 = vld [vmem:[%s17 + $0x3a0] sm:$0xff]
    %v1817 = vld [vmem:[%s17 + $0x3a8] sm:$0xff]
    %v1818 = vld [vmem:[%s17 + $0x3b0] sm:$0xff]
    %v1819 = vld [vmem:[%s17 + $0x3b8] sm:$0xff]
    %v1820 = vld [vmem:[%s17 + $0x3c0] sm:$0xff]
    %v1821 = vld [vmem:[%s17 + $0x3c8] sm:$0xff]
    %v1822 = vld [vmem:[%s17 + $0x3d0] sm:$0xff]
    %v1823 = vld [vmem:[%s17 + $0x3d8] sm:$0xff]
    %v1824 = vld [vmem:[%s17 + $0x3e0] sm:$0xff]
    %v1825 = vld [vmem:[%s17 + $0x3e8] sm:$0xff]
    %v1826 = vld [vmem:[%s17 + $0x3f0] sm:$0xff]
    %v1827 = vld [vmem:[%s17 + $0x3f8] sm:$0xff]
    %v1828 = vld [vmem:[%s19] sm:$0x1]
    %v1830 = vlaneseq
    %v1831 = vshrl.u32 %v1830, 7
    %v1832 = vsub.s32 0, %v1831
    %v1833 = vrot.slane %v1828, %v1832
    %1835 = vmatprep.subr.mxu0 0.0
    %1836 = vmatpush1.msra.mxu0 %v1700
    %1837 = vmatprep.subr.mxu0 0.0
    %1838 = vmatpush1.msra.mxu0 %v1701
    %1839 = vmatprep.subr.mxu0 0.0
    %1840 = vmatpush1.msra.mxu0 %v1702
    %1841 = vmatprep.subr.mxu0 0.0
    %1842 = vmatpush1.msra.mxu0 %v1703
    %1843 = vmatprep.subr.mxu0 0.0
    %1844 = vmatpush1.msra.mxu0 %v1704
    %1845 = vmatprep.subr.mxu0 0.0
    %1846 = vmatpush1.msra.mxu0 %v1705
    %1847 = vmatprep.subr.mxu0 0.0
    %1848 = vmatpush1.msra.mxu0 %v1706
    %1849 = vmatprep.subr.mxu0 0.0
    %1850 = vmatpush1.msra.mxu0 %v1707
    %1851 = vmatprep.subr.mxu0 0.0
    %1852 = vmatpush1.msra.mxu0 %v1708
    %1853 = vmatprep.subr.mxu0 0.0
    %1854 = vmatpush1.msra.mxu0 %v1709
    %1855 = vmatprep.subr.mxu0 0.0
    %1856 = vmatpush1.msra.mxu0 %v1710
    %1857 = vmatprep.subr.mxu0 0.0
    %1858 = vmatpush1.msra.mxu0 %v1711
    %1859 = vmatprep.subr.mxu0 0.0
    %1860 = vmatpush1.msra.mxu0 %v1712
    %1861 = vmatprep.subr.mxu0 0.0
    %1862 = vmatpush1.msra.mxu0 %v1713
    %1863 = vmatprep.subr.mxu0 0.0
    %1864 = vmatpush1.msra.mxu0 %v1714
    %1865 = vmatprep.subr.mxu0 0.0
    %1866 = vmatpush1.msra.mxu0 %v1715
    %1867 = vmatprep.subr.mxu0 0.0
    %1868 = vmatpush1.msra.mxu0 %v1716
    %1869 = vmatprep.subr.mxu0 0.0
    %1870 = vmatpush1.msra.mxu0 %v1717
    %1871 = vmatprep.subr.mxu0 0.0
    %1872 = vmatpush1.msra.mxu0 %v1718
    %1873 = vmatprep.subr.mxu0 0.0
    %1874 = vmatpush1.msra.mxu0 %v1719
    %1875 = vmatprep.subr.mxu0 0.0
    %1876 = vmatpush1.msra.mxu0 %v1720
    %1877 = vmatprep.subr.mxu0 0.0
    %1878 = vmatpush1.msra.mxu0 %v1721
    %1879 = vmatprep.subr.mxu0 0.0
    %1880 = vmatpush1.msra.mxu0 %v1722
    %1881 = vmatprep.subr.mxu0 0.0
    %1882 = vmatpush1.msra.mxu0 %v1723
    %1883 = vmatprep.subr.mxu0 0.0
    %1884 = vmatpush1.msra.mxu0 %v1724
    %1885 = vmatprep.subr.mxu0 0.0
    %1886 = vmatpush1.msra.mxu0 %v1725
    %1887 = vmatprep.subr.mxu0 0.0
    %1888 = vmatpush1.msra.mxu0 %v1726
    %1889 = vmatprep.subr.mxu0 0.0
    %1890 = vmatpush1.msra.mxu0 %v1727
    %1891 = vmatprep.subr.mxu0 0.0
    %1892 = vmatpush1.msra.mxu0 %v1728
    %1893 = vmatprep.subr.mxu0 0.0
    %1894 = vmatpush1.msra.mxu0 %v1729
    %1895 = vmatprep.subr.mxu0 0.0
    %1896 = vmatpush1.msra.mxu0 %v1730
    %1897 = vmatprep.subr.mxu0 0.0
    %1898 = vmatpush1.msra.mxu0 %v1731
    %1899 = vmatprep.mubr.f32.mxu0 %v1485
    %1900 = vmatmul.mubr.f32.gmra.mrb[0].mxu0 %v1483
    %v1901 = vpop.f32.mrb[0].mxu0
    %v1902 = vadd.f32 %v1833, %v1901
    %v1903 = vpop.f32.mrb[0].mxu0
    %1904 = vdwg.mxu0
    %1905 = vmatprep.subr.mxu0 0.0
    %1906 = vmatpush1.msra.mxu0 %v1732
    %1907 = vmatprep.subr.mxu0 0.0
    %1908 = vmatpush1.msra.mxu0 %v1733
    %1909 = vmatprep.subr.mxu0 0.0
    %1910 = vmatpush1.msra.mxu0 %v1734
    %1911 = vmatprep.subr.mxu0 0.0
    %1912 = vmatpush1.msra.mxu0 %v1735
    %1913 = vmatprep.subr.mxu0 0.0
    %1914 = vmatpush1.msra.mxu0 %v1736
    %1915 = vmatprep.subr.mxu0 0.0
    %1916 = vmatpush1.msra.mxu0 %v1737
    %1917 = vmatprep.subr.mxu0 0.0
    %1918 = vmatpush1.msra.mxu0 %v1738
    %1919 = vmatprep.subr.mxu0 0.0
    %1920 = vmatpush1.msra.mxu0 %v1739
    %1921 = vmatprep.subr.mxu0 0.0
    %1922 = vmatpush1.msra.mxu0 %v1740
    %1923 = vmatprep.subr.mxu0 0.0
    %1924 = vmatpush1.msra.mxu0 %v1741
    %1925 = vmatprep.subr.mxu0 0.0
    %1926 = vmatpush1.msra.mxu0 %v1742
    %1927 = vmatprep.subr.mxu0 0.0
    %1928 = vmatpush1.msra.mxu0 %v1743
    %1929 = vmatprep.subr.mxu0 0.0
    %1930 = vmatpush1.msra.mxu0 %v1744
    %1931 = vmatprep.subr.mxu0 0.0
    %1932 = vmatpush1.msra.mxu0 %v1745
    %1933 = vmatprep.subr.mxu0 0.0
    %1934 = vmatpush1.msra.mxu0 %v1746
    %1935 = vmatprep.subr.mxu0 0.0
    %1936 = vmatpush1.msra.mxu0 %v1747
    %1937 = vmatprep.subr.mxu0 0.0
    %1938 = vmatpush1.msra.mxu0 %v1748
    %1939 = vmatprep.subr.mxu0 0.0
    %1940 = vmatpush1.msra.mxu0 %v1749
    %1941 = vmatprep.subr.mxu0 0.0
    %1942 = vmatpush1.msra.mxu0 %v1750
    %1943 = vmatprep.subr.mxu0 0.0
    %1944 = vmatpush1.msra.mxu0 %v1751
    %1945 = vmatprep.subr.mxu0 0.0
    %1946 = vmatpush1.msra.mxu0 %v1752
    %1947 = vmatprep.subr.mxu0 0.0
    %1948 = vmatpush1.msra.mxu0 %v1753
    %1949 = vmatprep.subr.mxu0 0.0
    %1950 = vmatpush1.msra.mxu0 %v1754
    %1951 = vmatprep.subr.mxu0 0.0
    %1952 = vmatpush1.msra.mxu0 %v1755
    %1953 = vmatprep.subr.mxu0 0.0
    %1954 = vmatpush1.msra.mxu0 %v1756
    %1955 = vmatprep.subr.mxu0 0.0
    %1956 = vmatpush1.msra.mxu0 %v1757
    %1957 = vmatprep.subr.mxu0 0.0
    %1958 = vmatpush1.msra.mxu0 %v1758
    %1959 = vmatprep.subr.mxu0 0.0
    %1960 = vmatpush1.msra.mxu0 %v1759
    %1961 = vmatprep.subr.mxu0 0.0
    %1962 = vmatpush1.msra.mxu0 %v1760
    %1963 = vmatprep.subr.mxu0 0.0
    %1964 = vmatpush1.msra.mxu0 %v1761
    %1965 = vmatprep.subr.mxu0 0.0
    %1966 = vmatpush1.msra.mxu0 %v1762
    %1967 = vmatprep.subr.mxu0 0.0
    %1968 = vmatpush1.msra.mxu0 %v1763
    %1969 = vmatprep.mubr.f32.mxu0 %v1556
    %1970 = vmatmul.mubr.f32.gmra.mrb[0].mxu0 %v1554
    %v1971 = vpop.f32.mrb[0].mxu0
    %v1972 = vadd.f32 %v1902, %v1971
    %v1973 = vpop.f32.mrb[0].mxu0
    %1974 = vdwg.mxu0
    %1975 = vmatprep.subr.mxu0 0.0
    %1976 = vmatpush1.msra.mxu0 %v1764
    %1977 = vmatprep.subr.mxu0 0.0
    %1978 = vmatpush1.msra.mxu0 %v1765
    %1979 = vmatprep.subr.mxu0 0.0
    %1980 = vmatpush1.msra.mxu0 %v1766
    %1981 = vmatprep.subr.mxu0 0.0
    %1982 = vmatpush1.msra.mxu0 %v1767
    %1983 = vmatprep.subr.mxu0 0.0
    %1984 = vmatpush1.msra.mxu0 %v1768
    %1985 = vmatprep.subr.mxu0 0.0
    %1986 = vmatpush1.msra.mxu0 %v1769
    %1987 = vmatprep.subr.mxu0 0.0
    %1988 = vmatpush1.msra.mxu0 %v1770
    %1989 = vmatprep.subr.mxu0 0.0
    %1990 = vmatpush1.msra.mxu0 %v1771
    %1991 = vmatprep.subr.mxu0 0.0
    %1992 = vmatpush1.msra.mxu0 %v1772
    %1993 = vmatprep.subr.mxu0 0.0
    %1994 = vmatpush1.msra.mxu0 %v1773
    %1995 = vmatprep.subr.mxu0 0.0
    %1996 = vmatpush1.msra.mxu0 %v1774
    %1997 = vmatprep.subr.mxu0 0.0
    %1998 = vmatpush1.msra.mxu0 %v1775
    %1999 = vmatprep.subr.mxu0 0.0
    %2000 = vmatpush1.msra.mxu0 %v1776
    %2001 = vmatprep.subr.mxu0 0.0
    %2002 = vmatpush1.msra.mxu0 %v1777
    %2003 = vmatprep.subr.mxu0 0.0
    %2004 = vmatpush1.msra.mxu0 %v1778
    %2005 = vmatprep.subr.mxu0 0.0
    %2006 = vmatpush1.msra.mxu0 %v1779
    %2007 = vmatprep.subr.mxu0 0.0
    %2008 = vmatpush1.msra.mxu0 %v1780
    %2009 = vmatprep.subr.mxu0 0.0
    %2010 = vmatpush1.msra.mxu0 %v1781
    %2011 = vmatprep.subr.mxu0 0.0
    %2012 = vmatpush1.msra.mxu0 %v1782
    %2013 = vmatprep.subr.mxu0 0.0
    %2014 = vmatpush1.msra.mxu0 %v1783
    %2015 = vmatprep.subr.mxu0 0.0
    %2016 = vmatpush1.msra.mxu0 %v1784
    %2017 = vmatprep.subr.mxu0 0.0
    %2018 = vmatpush1.msra.mxu0 %v1785
    %2019 = vmatprep.subr.mxu0 0.0
    %2020 = vmatpush1.msra.mxu0 %v1786
    %2021 = vmatprep.subr.mxu0 0.0
    %2022 = vmatpush1.msra.mxu0 %v1787
    %2023 = vmatprep.subr.mxu0 0.0
    %2024 = vmatpush1.msra.mxu0 %v1788
    %2025 = vmatprep.subr.mxu0 0.0
    %2026 = vmatpush1.msra.mxu0 %v1789
    %2027 = vmatprep.subr.mxu0 0.0
    %2028 = vmatpush1.msra.mxu0 %v1790
    %2029 = vmatprep.subr.mxu0 0.0
    %2030 = vmatpush1.msra.mxu0 %v1791
    %2031 = vmatprep.subr.mxu0 0.0
    %2032 = vmatpush1.msra.mxu0 %v1792
    %2033 = vmatprep.subr.mxu0 0.0
    %2034 = vmatpush1.msra.mxu0 %v1793
    %2035 = vmatprep.subr.mxu0 0.0
    %2036 = vmatpush1.msra.mxu0 %v1794
    %2037 = vmatprep.subr.mxu0 0.0
    %2038 = vmatpush1.msra.mxu0 %v1795
    %2039 = vmatprep.mubr.f32.mxu0 %v1627
    %2040 = vmatmul.mubr.f32.gmra.mrb[0].mxu0 %v1625
    %v2041 = vpop.f32.mrb[0].mxu0
    %v2042 = vadd.f32 %v1972, %v2041
    %v2043 = vpop.f32.mrb[0].mxu0
    %2044 = vdwg.mxu0
    %2045 = vmatprep.subr.mxu0 0.0
    %2046 = vmatpush1.msra.mxu0 %v1796
    %2047 = vmatprep.subr.mxu0 0.0
    %2048 = vmatpush1.msra.mxu0 %v1797
    %2049 = vmatprep.subr.mxu0 0.0
    %2050 = vmatpush1.msra.mxu0 %v1798
    %2051 = vmatprep.subr.mxu0 0.0
    %2052 = vmatpush1.msra.mxu0 %v1799
    %2053 = vmatprep.subr.mxu0 0.0
    %2054 = vmatpush1.msra.mxu0 %v1800
    %2055 = vmatprep.subr.mxu0 0.0
    %2056 = vmatpush1.msra.mxu0 %v1801
    %2057 = vmatprep.subr.mxu0 0.0
    %2058 = vmatpush1.msra.mxu0 %v1802
    %2059 = vmatprep.subr.mxu0 0.0
    %2060 = vmatpush1.msra.mxu0 %v1803
    %2061 = vmatprep.subr.mxu0 0.0
    %2062 = vmatpush1.msra.mxu0 %v1804
    %2063 = vmatprep.subr.mxu0 0.0
    %2064 = vmatpush1.msra.mxu0 %v1805
    %2065 = vmatprep.subr.mxu0 0.0
    %2066 = vmatpush1.msra.mxu0 %v1806
    %2067 = vmatprep.subr.mxu0 0.0
    %2068 = vmatpush1.msra.mxu0 %v1807
    %2069 = vmatprep.subr.mxu0 0.0
    %2070 = vmatpush1.msra.mxu0 %v1808
    %2071 = vmatprep.subr.mxu0 0.0
    %2072 = vmatpush1.msra.mxu0 %v1809
    %2073 = vmatprep.subr.mxu0 0.0
    %2074 = vmatpush1.msra.mxu0 %v1810
    %2075 = vmatprep.subr.mxu0 0.0
    %2076 = vmatpush1.msra.mxu0 %v1811
    %2077 = vmatprep.subr.mxu0 0.0
    %2078 = vmatpush1.msra.mxu0 %v1812
    %2079 = vmatprep.subr.mxu0 0.0
    %2080 = vmatpush1.msra.mxu0 %v1813
    %2081 = vmatprep.subr.mxu0 0.0
    %2082 = vmatpush1.msra.mxu0 %v1814
    %2083 = vmatprep.subr.mxu0 0.0
    %2084 = vmatpush1.msra.mxu0 %v1815
    %2085 = vmatprep.subr.mxu0 0.0
    %2086 = vmatpush1.msra.mxu0 %v1816
    %2087 = vmatprep.subr.mxu0 0.0
    %2088 = vmatpush1.msra.mxu0 %v1817
    %2089 = vmatprep.subr.mxu0 0.0
    %2090 = vmatpush1.msra.mxu0 %v1818
    %2091 = vmatprep.subr.mxu0 0.0
    %2092 = vmatpush1.msra.mxu0 %v1819
    %2093 = vmatprep.subr.mxu0 0.0
    %2094 = vmatpush1.msra.mxu0 %v1820
    %2095 = vmatprep.subr.mxu0 0.0
    %2096 = vmatpush1.msra.mxu0 %v1821
    %2097 = vmatprep.subr.mxu0 0.0
    %2098 = vmatpush1.msra.mxu0 %v1822
    %2099 = vmatprep.subr.mxu0 0.0
    %2100 = vmatpush1.msra.mxu0 %v1823
    %2101 = vmatprep.subr.mxu0 0.0
    %2102 = vmatpush1.msra.mxu0 %v1824
    %2103 = vmatprep.subr.mxu0 0.0
    %2104 = vmatpush1.msra.mxu0 %v1825
    %2105 = vmatprep.subr.mxu0 0.0
    %2106 = vmatpush1.msra.mxu0 %v1826
    %2107 = vmatprep.subr.mxu0 0.0
    %2108 = vmatpush1.msra.mxu0 %v1827
    %2109 = vmatprep.mubr.f32.mxu0 %v1698
    %2110 = vmatmul.mubr.f32.gmra.mrb[0].mxu0 %v1696
    %v2111 = vpop.f32.mrb[0].mxu0
    %v2112 = vadd.f32 %v2042, %v2111
    %v2113 = vpop.f32.mrb[0].mxu0
    %2114 = vdwg.mxu0
    %v2115 = vld [vmem:[%s21] sm:$0x1]
    %v2116 = vld [vmem:[%s23] sm:$0x1]
    %vm2117 = vcmask 517120
    %v2118 = vsel %vm2117, %v2112, 0.0
    %v2119 = vrot.slane %v2118, 4
    %v2120 = vadd.f32 %v2118, %v2119
    %v2121 = vrot.slane %v2120, 2
    %v2122 = vadd.f32 %v2120, %v2121
    %v2123 = vrot.slane %v2122, 1
    %v2124 = vadd.f32 %v2122, %v2123
    %v2125 = vrcp.pop 2.0
    %v2126 = vmul.f32 %v2124, %v2125
    %v2127 = vsub.f32 %v2112, %v2126
    %v2128 = vmul.f32 %v2127, %v2127
    %v2129 = vsel %vm2117, %v2128, 0.0
    %v2130 = vrot.slane %v2129, 4
    %v2131 = vadd.f32 %v2129, %v2130
    %v2132 = vrot.slane %v2131, 2
    %v2133 = vadd.f32 %v2131, %v2132
    %v2134 = vrot.slane %v2133, 1
    %v2135 = vadd.f32 %v2133, %v2134
    %v2136 = vmul.f32 %v2135, %v2125
    %v2137 = vadd.f32 %v2136, 1e-05
    %v2138 = vrsqrt.pop %v2137
    %v2139 = vmul.f32 %v2127, %v2138
    %v2141 = vlaneseq
    %v2142 = vshrl.u32 %v2141, 7
    %v2143 = vsub.s32 0, %v2142
    %v2144 = vrot.slane %v2115, %v2143
    %v2146 = vmul.f32 %v2139, %v2144
    %v2148 = vlaneseq
    %v2149 = vshrl.u32 %v2148, 7
    %v2150 = vsub.s32 0, %v2149
    %v2151 = vrot.slane %v2116, %v2150
    %v2153 = vadd.f32 %v2146, %v2151
    %vm2154 = vcmp.gt.f32.partialorder %v2153, 0.0
    %v2155 = vmul.f32 %v2153, 0.01
    %v2156 = vsel %vm2154, %v2153, %v2155
    %v2157 = vpack.c.bf16 %v2156, %v2156
    %v2158 = vld [vmem:[%s25] sm:$0xf]
    %v2159 = vld [vmem:[%s25 + $0x4] sm:$0xf]
    %v2160 = vld [vmem:[%s25 + $0x8] sm:$0xf]
    %v2161 = vld [vmem:[%s25 + $0xc] sm:$0xf]
    %v2162 = vld [vmem:[%s25 + $0x10] sm:$0xf]
    %v2163 = vld [vmem:[%s25 + $0x14] sm:$0xf]
    %v2164 = vld [vmem:[%s25 + $0x18] sm:$0xf]
    %v2165 = vld [vmem:[%s25 + $0x1c] sm:$0xf]
    %v2166 = vld [vmem:[%s27] sm:$0x1]
    %v2168 = vlaneseq
    %v2169 = vshrl.u32 %v2168, 7
    %v2170 = vsub.s32 0, %v2169
    %v2171 = vrot.slane %v2166, %v2170
    %v2181 = vunpack.c.l.b16 %v2158
    %v2182 = vunpack.c.l.b16 %v2159
    %v2183 = vunpack.c.l.b16 %v2160
    %v2184 = vunpack.c.l.b16 %v2161
    %v2185 = vunpack.c.l.b16 %v2162
    %v2186 = vunpack.c.l.b16 %v2163
    %v2187 = vunpack.c.l.b16 %v2164
    %v2188 = vunpack.c.l.b16 %v2165
    %v2189 = vpack.c.b16 %v2182, %v2181
    %v2190 = vpack.c.b16 %v2184, %v2183
    %v2191 = vpack.c.b16 %v2186, %v2185
    %v2192 = vpack.c.b16 %v2188, %v2187
    %vm2197 = vcmask 523264
    %v2199 = vsel %vm2197, %v2157, 0
    %2201 = vmatprep.subr.bf16.mxu0 0
    %2202 = vmatpush1.bf16.msra.mxu0 %v2189
    %2203 = vmatprep.subr.bf16.mxu0 0
    %2204 = vmatpush1.bf16.msra.mxu0 %v2190
    %2205 = vmatprep.subr.bf16.mxu0 0
    %2206 = vmatpush1.bf16.msra.mxu0 %v2191
    %2207 = vmatprep.subr.bf16.mxu0 0
    %2208 = vmatpush1.bf16.msra.mxu0 %v2192
    %2209 = vmatprep.subr.bf16.mxu0 0
    %2210 = vmatpush1.bf16.msra.mxu0 0
    %2211 = vmatprep.subr.bf16.mxu0 0
    %2212 = vmatpush1.bf16.msra.mxu0 0
    %2213 = vmatprep.subr.bf16.mxu0 0
    %2214 = vmatpush1.bf16.msra.mxu0 0
    %2215 = vmatprep.subr.bf16.mxu0 0
    %2216 = vmatpush1.bf16.msra.mxu0 0
    %2217 = vmatprep.subr.bf16.mxu0 0
    %2218 = vmatpush1.bf16.msra.mxu0 0
    %2219 = vmatprep.subr.bf16.mxu0 0
    %2220 = vmatpush1.bf16.msra.mxu0 0
    %2221 = vmatprep.subr.bf16.mxu0 0
    %2222 = vmatpush1.bf16.msra.mxu0 0
    %2223 = vmatprep.subr.bf16.mxu0 0
    %2224 = vmatpush1.bf16.msra.mxu0 0
    %2225 = vmatprep.subr.bf16.mxu0 0
    %2226 = vmatpush1.bf16.msra.mxu0 0
    %2227 = vmatprep.subr.bf16.mxu0 0
    %2228 = vmatpush1.bf16.msra.mxu0 0
    %2229 = vmatprep.subr.bf16.mxu0 0
    %2230 = vmatpush1.bf16.msra.mxu0 0
    %2231 = vmatprep.subr.bf16.mxu0 0
    %2232 = vmatpush1.bf16.msra.mxu0 0
    %2233 = vmatprep.mubr.bf16.mxu0 0
    %2234 = vmatmul.mubr.bf16.gmra.mrb[0].mxu0 %v2199
    %v2235 = vpop.f32.mrb[0].mxu0
    %v2236 = vadd.f32 %v2171, %v2235
    %v2237 = vpop.f32.mrb[0].mxu0
    %v2238 = vpop.f32.mrb[0].mxu0
    %v2239 = vpop.f32.mrb[0].mxu0
    %2240 = vdwg.mxu0
    %v2241 = vmax.f32 %v2236, 0.0
    %v2242 = vpack.c.bf16 %v2241, %v2241
    %v2243 = vld [vmem:[%s29] sm:$0xf]
    %v2244 = vld [vmem:[%s29 + $0x4] sm:$0xf]
    %v2245 = vld [vmem:[%s29 + $0x8] sm:$0xf]
    %v2246 = vld [vmem:[%s29 + $0xc] sm:$0xf]
    %v2247 = vld [vmem:[%s31] sm:$0x1]
    %v2249 = vlaneseq
    %v2250 = vshrl.u32 %v2249, 7
    %v2251 = vsub.s32 0, %v2250
    %v2252 = vrot.slane %v2247, %v2251
    %v2258 = vunpack.c.l.b16 %v2243
    %v2259 = vunpack.c.l.b16 %v2244
    %v2260 = vunpack.c.l.b16 %v2245
    %v2261 = vunpack.c.l.b16 %v2246
    %v2262 = vpack.c.b16 %v2259, %v2258
    %v2263 = vpack.c.b16 %v2261, %v2260
    %v2267 = vsel %vm956, %v2242, 0
    %2269 = vmatprep.subr.bf16.mxu0 0
    %2270 = vmatpush1.bf16.msra.mxu0 %v2262
    %2271 = vmatprep.subr.bf16.mxu0 0
    %2272 = vmatpush1.bf16.msra.mxu0 %v2263
    %2273 = vmatprep.subr.bf16.mxu0 0
    %2274 = vmatpush1.bf16.msra.mxu0 0
    %2275 = vmatprep.subr.bf16.mxu0 0
    %2276 = vmatpush1.bf16.msra.mxu0 0
    %2277 = vmatprep.subr.bf16.mxu0 0
    %2278 = vmatpush1.bf16.msra.mxu0 0
    %2279 = vmatprep.subr.bf16.mxu0 0
    %2280 = vmatpush1.bf16.msra.mxu0 0
    %2281 = vmatprep.subr.bf16.mxu0 0
    %2282 = vmatpush1.bf16.msra.mxu0 0
    %2283 = vmatprep.subr.bf16.mxu0 0
    %2284 = vmatpush1.bf16.msra.mxu0 0
    %2285 = vmatprep.subr.bf16.mxu0 0
    %2286 = vmatpush1.bf16.msra.mxu0 0
    %2287 = vmatprep.subr.bf16.mxu0 0
    %2288 = vmatpush1.bf16.msra.mxu0 0
    %2289 = vmatprep.subr.bf16.mxu0 0
    %2290 = vmatpush1.bf16.msra.mxu0 0
    %2291 = vmatprep.subr.bf16.mxu0 0
    %2292 = vmatpush1.bf16.msra.mxu0 0
    %2293 = vmatprep.subr.bf16.mxu0 0
    %2294 = vmatpush1.bf16.msra.mxu0 0
    %2295 = vmatprep.subr.bf16.mxu0 0
    %2296 = vmatpush1.bf16.msra.mxu0 0
    %2297 = vmatprep.subr.bf16.mxu0 0
    %2298 = vmatpush1.bf16.msra.mxu0 0
    %2299 = vmatprep.subr.bf16.mxu0 0
    %2300 = vmatpush1.bf16.msra.mxu0 0
    %2301 = vmatprep.mubr.bf16.mxu0 0
    %2302 = vmatmul.mubr.bf16.gmra.mrb[0].mxu0 %v2267
    %v2303 = vpop.f32.mrb[0].mxu0
    %v2304 = vadd.f32 %v2252, %v2303
    %v2305 = vpop.f32.mrb[0].mxu0
    %v2306 = vpop.f32.mrb[0].mxu0
    %v2307 = vpop.f32.mrb[0].mxu0
    %2308 = vdwg.mxu0
    %v2309 = vmax.f32 %v2304, 0.0
    %v2310 = vpack.c.bf16 %v2309, %v2309
    %v2311 = vld [vmem:[%s33] sm:$0xf]
    %v2312 = vld [vmem:[%s33 + $0x4] sm:$0xf]
    %v2313 = vld [vmem:[%s33 + $0x8] sm:$0xf]
    %v2314 = vld [vmem:[%s33 + $0xc] sm:$0xf]
    %v2315 = vld [vmem:[%s35] sm:$0x1]
    %v2317 = vlaneseq
    %v2318 = vshrl.u32 %v2317, 7
    %v2319 = vsub.s32 0, %v2318
    %v2320 = vrot.slane %v2315, %v2319
    %v2326 = vunpack.c.l.b16 %v2311
    %v2327 = vunpack.c.l.b16 %v2312
    %v2328 = vunpack.c.l.b16 %v2313
    %v2329 = vunpack.c.l.b16 %v2314
    %v2330 = vpack.c.b16 %v2327, %v2326
    %v2331 = vpack.c.b16 %v2329, %v2328
    %v2335 = vsel %vm956, %v2310, 0
    %2337 = vmatprep.subr.bf16.mxu0 0
    %2338 = vmatpush1.bf16.msra.mxu0 %v2330
    %2339 = vmatprep.subr.bf16.mxu0 0
    %2340 = vmatpush1.bf16.msra.mxu0 %v2331
    %2341 = vmatprep.subr.bf16.mxu0 0
    %2342 = vmatpush1.bf16.msra.mxu0 0
    %2343 = vmatprep.subr.bf16.mxu0 0
    %2344 = vmatpush1.bf16.msra.mxu0 0
    %2345 = vmatprep.subr.bf16.mxu0 0
    %2346 = vmatpush1.bf16.msra.mxu0 0
    %2347 = vmatprep.subr.bf16.mxu0 0
    %2348 = vmatpush1.bf16.msra.mxu0 0
    %2349 = vmatprep.subr.bf16.mxu0 0
    %2350 = vmatpush1.bf16.msra.mxu0 0
    %2351 = vmatprep.subr.bf16.mxu0 0
    %2352 = vmatpush1.bf16.msra.mxu0 0
    %2353 = vmatprep.subr.bf16.mxu0 0
    %2354 = vmatpush1.bf16.msra.mxu0 0
    %2355 = vmatprep.subr.bf16.mxu0 0
    %2356 = vmatpush1.bf16.msra.mxu0 0
    %2357 = vmatprep.subr.bf16.mxu0 0
    %2358 = vmatpush1.bf16.msra.mxu0 0
    %2359 = vmatprep.subr.bf16.mxu0 0
    %2360 = vmatpush1.bf16.msra.mxu0 0
    %2361 = vmatprep.subr.bf16.mxu0 0
    %2362 = vmatpush1.bf16.msra.mxu0 0
    %2363 = vmatprep.subr.bf16.mxu0 0
    %2364 = vmatpush1.bf16.msra.mxu0 0
    %2365 = vmatprep.subr.bf16.mxu0 0
    %2366 = vmatpush1.bf16.msra.mxu0 0
    %2367 = vmatprep.subr.bf16.mxu0 0
    %2368 = vmatpush1.bf16.msra.mxu0 0
    %2369 = vmatprep.mubr.bf16.mxu0 0
    %2370 = vmatmul.mubr.bf16.gmra.mrb[0].mxu0 %v2335
    %v2371 = vpop.f32.mrb[0].mxu0
    %v2372 = vadd.f32 %v2320, %v2371
    %v2373 = vpop.f32.mrb[0].mxu0
    %v2374 = vpop.f32.mrb[0].mxu0
    %v2375 = vpop.f32.mrb[0].mxu0
    %2376 = vdwg.mxu0
    %vm2377 = vcmask 123904
    %2378 = vst.msk [vmem:[#allocation2] sm:$0x3] %vm2377, %v2372
    %v2379 = vmul.f32 %v2372, 1.442695
    %v2380 = vpow.pop %v2379
    %v2381 = vld [vmem:[%s37] sm:$0x3]
    %2383 = vrot.lane.b32.xlu0 %v2381, 8
    %v2384 = vpop.permute.xlu0 %2383
    %v2386 = vmul.f32 %v2380, %v2384
    %2388 = vrot.lane.b32.xlu0 %v2386, 120
    %v2389 = vpop.permute.xlu0 %2388
    %v2391 = vadd.f32 %v2372, %v2389
    %v2392 = vpack.c.bf16 %v2391, %v2391
    %v2393 = vld [vmem:[%s39] sm:$0xf]
    %v2394 = vld [vmem:[%s41] sm:$0x1]
    %v2396 = vlaneseq
    %v2397 = vshrl.u32 %v2396, 7
    %v2398 = vsub.s32 0, %v2397
    %v2399 = vrot.slane %v2394, %v2398
    %vm2401 = vcmask 64512
    %v2403 = vsel %vm2401, %v2392, 0
    %vm2405 = vcmask 1043456
    %v2407 = vsel %vm2405, %v2393, 0
    %2409 = vmatprep.subr.bf16.mxu0 0
    %2410 = vmatpush1.bf16.msra.mxu0 %v2407
    %2411 = vmatprep.subr.bf16.mxu0 0
    %2412 = vmatpush1.bf16.msra.mxu0 0
    %2413 = vmatprep.subr.bf16.mxu0 0
    %2414 = vmatpush1.bf16.msra.mxu0 0
    %2415 = vmatprep.subr.bf16.mxu0 0
    %2416 = vmatpush1.bf16.msra.mxu0 0
    %2417 = vmatprep.subr.bf16.mxu0 0
    %2418 = vmatpush1.bf16.msra.mxu0 0
    %2419 = vmatprep.subr.bf16.mxu0 0
    %2420 = vmatpush1.bf16.msra.mxu0 0
    %2421 = vmatprep.subr.bf16.mxu0 0
    %2422 = vmatpush1.bf16.msra.mxu0 0
    %2423 = vmatprep.subr.bf16.mxu0 0
    %2424 = vmatpush1.bf16.msra.mxu0 0
    %2425 = vmatprep.subr.bf16.mxu0 0
    %2426 = vmatpush1.bf16.msra.mxu0 0
    %2427 = vmatprep.subr.bf16.mxu0 0
    %2428 = vmatpush1.bf16.msra.mxu0 0
    %2429 = vmatprep.subr.bf16.mxu0 0
    %2430 = vmatpush1.bf16.msra.mxu0 0
    %2431 = vmatprep.subr.bf16.mxu0 0
    %2432 = vmatpush1.bf16.msra.mxu0 0
    %2433 = vmatprep.subr.bf16.mxu0 0
    %2434 = vmatpush1.bf16.msra.mxu0 0
    %2435 = vmatprep.subr.bf16.mxu0 0
    %2436 = vmatpush1.bf16.msra.mxu0 0
    %2437 = vmatprep.subr.bf16.mxu0 0
    %2438 = vmatpush1.bf16.msra.mxu0 0
    %2439 = vmatprep.subr.bf16.mxu0 0
    %2440 = vmatpush1.bf16.msra.mxu0 0
    %2441 = vmatprep.mubr.bf16.mxu0 0
    %2442 = vmatmul.mubr.bf16.gmra.mrb[0].mxu0 %v2403
    %v2443 = vpop.f32.mrb[0].mxu0
    %v2444 = vadd.f32 %v2399, %v2443
    %v2445 = vpop.f32.mrb[0].mxu0
    %v2446 = vpop.f32.mrb[0].mxu0
    %v2447 = vpop.f32.mrb[0].mxu0
    %2448 = vdwg.mxu0
    %v2449 = vmax.f32 %v2444, 0.0
    %v2450 = vpack.c.bf16 %v2449, %v2449
    %v2451 = vld [vmem:[%s43] sm:$0xf]
    %v2452 = vld [vmem:[%s43 + $0x4] sm:$0xf]
    %v2453 = vld [vmem:[%s43 + $0x8] sm:$0xf]
    %v2454 = vld [vmem:[%s43 + $0xc] sm:$0xf]
    %v2455 = vld [vmem:[%s45] sm:$0x1]
    %v2457 = vlaneseq
    %v2458 = vshrl.u32 %v2457, 7
    %v2459 = vsub.s32 0, %v2458
    %v2460 = vrot.slane %v2455, %v2459
    %v2466 = vunpack.c.l.b16 %v2451
    %v2467 = vunpack.c.l.b16 %v2452
    %v2468 = vunpack.c.l.b16 %v2453
    %v2469 = vunpack.c.l.b16 %v2454
    %v2470 = vpack.c.b16 %v2467, %v2466
    %v2471 = vpack.c.b16 %v2469, %v2468
    %v2475 = vsel %vm956, %v2450, 0
    %2477 = vmatprep.subr.bf16.mxu0 0
    %2478 = vmatpush1.bf16.msra.mxu0 %v2470
    %2479 = vmatprep.subr.bf16.mxu0 0
    %2480 = vmatpush1.bf16.msra.mxu0 %v2471
    %2481 = vmatprep.subr.bf16.mxu0 0
    %2482 = vmatpush1.bf16.msra.mxu0 0
    %2483 = vmatprep.subr.bf16.mxu0 0
    %2484 = vmatpush1.bf16.msra.mxu0 0
    %2485 = vmatprep.subr.bf16.mxu0 0
    %2486 = vmatpush1.bf16.msra.mxu0 0
    %2487 = vmatprep.subr.bf16.mxu0 0
    %2488 = vmatpush1.bf16.msra.mxu0 0
    %2489 = vmatprep.subr.bf16.mxu0 0
    %2490 = vmatpush1.bf16.msra.mxu0 0
    %2491 = vmatprep.subr.bf16.mxu0 0
    %2492 = vmatpush1.bf16.msra.mxu0 0
    %2493 = vmatprep.subr.bf16.mxu0 0
    %2494 = vmatpush1.bf16.msra.mxu0 0
    %2495 = vmatprep.subr.bf16.mxu0 0
    %2496 = vmatpush1.bf16.msra.mxu0 0
    %2497 = vmatprep.subr.bf16.mxu0 0
    %2498 = vmatpush1.bf16.msra.mxu0 0
    %2499 = vmatprep.subr.bf16.mxu0 0
    %2500 = vmatpush1.bf16.msra.mxu0 0
    %2501 = vmatprep.subr.bf16.mxu0 0
    %2502 = vmatpush1.bf16.msra.mxu0 0
    %2503 = vmatprep.subr.bf16.mxu0 0
    %2504 = vmatpush1.bf16.msra.mxu0 0
    %2505 = vmatprep.subr.bf16.mxu0 0
    %2506 = vmatpush1.bf16.msra.mxu0 0
    %2507 = vmatprep.subr.bf16.mxu0 0
    %2508 = vmatpush1.bf16.msra.mxu0 0
    %2509 = vmatprep.mubr.bf16.mxu0 0
    %2510 = vmatmul.mubr.bf16.gmra.mrb[0].mxu0 %v2475
    %v2511 = vpop.f32.mrb[0].mxu0
    %v2512 = vadd.f32 %v2460, %v2511
    %v2513 = vpop.f32.mrb[0].mxu0
    %v2514 = vpop.f32.mrb[0].mxu0
    %v2515 = vpop.f32.mrb[0].mxu0
    %2516 = vdwg.mxu0
    %v2517 = vmax.f32 %v2512, 0.0
    %v2518 = vpack.c.bf16 %v2517, %v2517
    %v2519 = vld [vmem:[%s47] sm:$0xf]
    %v2520 = vld [vmem:[%s47 + $0x4] sm:$0xf]
    %v2521 = vld [vmem:[%s47 + $0x8] sm:$0xf]
    %v2522 = vld [vmem:[%s47 + $0xc] sm:$0xf]
    %v2523 = vld [vmem:[%s49] sm:$0x1]
    %v2525 = vlaneseq
    %v2526 = vshrl.u32 %v2525, 7
    %v2527 = vsub.s32 0, %v2526
    %v2528 = vrot.slane %v2523, %v2527
    %v2534 = vunpack.c.l.b16 %v2519
    %v2535 = vunpack.c.l.b16 %v2520
    %v2536 = vunpack.c.l.b16 %v2521
    %v2537 = vunpack.c.l.b16 %v2522
    %v2538 = vpack.c.b16 %v2535, %v2534
    %v2539 = vpack.c.b16 %v2537, %v2536
    %v2543 = vsel %vm956, %v2518, 0
    %2545 = vmatprep.subr.bf16.mxu0 0
    %2546 = vmatpush1.bf16.msra.mxu0 %v2538
    %2547 = vmatprep.subr.bf16.mxu0 0
    %2548 = vmatpush1.bf16.msra.mxu0 %v2539
    %2549 = vmatprep.subr.bf16.mxu0 0
    %2550 = vmatpush1.bf16.msra.mxu0 0
    %2551 = vmatprep.subr.bf16.mxu0 0
    %2552 = vmatpush1.bf16.msra.mxu0 0
    %2553 = vmatprep.subr.bf16.mxu0 0
    %2554 = vmatpush1.bf16.msra.mxu0 0
    %2555 = vmatprep.subr.bf16.mxu0 0
    %2556 = vmatpush1.bf16.msra.mxu0 0
    %2557 = vmatprep.subr.bf16.mxu0 0
    %2558 = vmatpush1.bf16.msra.mxu0 0
    %2559 = vmatprep.subr.bf16.mxu0 0
    %2560 = vmatpush1.bf16.msra.mxu0 0
    %2561 = vmatprep.subr.bf16.mxu0 0
    %2562 = vmatpush1.bf16.msra.mxu0 0
    %2563 = vmatprep.subr.bf16.mxu0 0
    %2564 = vmatpush1.bf16.msra.mxu0 0
    %2565 = vmatprep.subr.bf16.mxu0 0
    %2566 = vmatpush1.bf16.msra.mxu0 0
    %2567 = vmatprep.subr.bf16.mxu0 0
    %2568 = vmatpush1.bf16.msra.mxu0 0
    %2569 = vmatprep.subr.bf16.mxu0 0
    %2570 = vmatpush1.bf16.msra.mxu0 0
    %2571 = vmatprep.subr.bf16.mxu0 0
    %2572 = vmatpush1.bf16.msra.mxu0 0
    %2573 = vmatprep.subr.bf16.mxu0 0
    %2574 = vmatpush1.bf16.msra.mxu0 0
    %2575 = vmatprep.subr.bf16.mxu0 0
    %2576 = vmatpush1.bf16.msra.mxu0 0
    %2577 = vmatprep.mubr.bf16.mxu0 0
    %2578 = vmatmul.mubr.bf16.gmra.mrb[0].mxu0 %v2543
    %v2579 = vpop.f32.mrb[0].mxu0
    %v2580 = vadd.f32 %v2528, %v2579
    %v2581 = vpop.f32.mrb[0].mxu0
    %v2582 = vpop.f32.mrb[0].mxu0
    %v2583 = vpop.f32.mrb[0].mxu0
    %2584 = vdwg.mxu0
    %v2585 = vld [vmem:[%s51] sm:$0x1]
    %v2586 = vld [vmem:[%s53] sm:$0x1]
    %v2587 = vsel %vm2117, %v2580, 0.0
    %v2588 = vrot.slane %v2587, 4
    %v2589 = vadd.f32 %v2587, %v2588
    %v2590 = vrot.slane %v2589, 2
    %v2591 = vadd.f32 %v2589, %v2590
    %v2592 = vrot.slane %v2591, 1
    %v2593 = vadd.f32 %v2591, %v2592
    %v2594 = vmul.f32 %v2593, %v2125
    %v2595 = vsub.f32 %v2580, %v2594
    %v2596 = vmul.f32 %v2595, %v2595
    %v2597 = vsel %vm2117, %v2596, 0.0
    %v2598 = vrot.slane %v2597, 4
    %v2599 = vadd.f32 %v2597, %v2598
    %v2600 = vrot.slane %v2599, 2
    %v2601 = vadd.f32 %v2599, %v2600
    %v2602 = vrot.slane %v2601, 1
    %v2603 = vadd.f32 %v2601, %v2602
    %v2604 = vmul.f32 %v2603, %v2125
    %v2605 = vadd.f32 %v2604, 1e-05
    %v2606 = vrsqrt.pop %v2605
    %v2607 = vmul.f32 %v2595, %v2606
    %v2609 = vlaneseq
    %v2610 = vshrl.u32 %v2609, 7
    %v2611 = vsub.s32 0, %v2610
    %v2612 = vrot.slane %v2585, %v2611
    %v2614 = vmul.f32 %v2607, %v2612
    %v2616 = vlaneseq
    %v2617 = vshrl.u32 %v2616, 7
    %v2618 = vsub.s32 0, %v2617
    %v2619 = vrot.slane %v2586, %v2618
    %v2621 = vadd.f32 %v2614, %v2619
    %v2622 = vpack.c.bf16 %v2621, %v2621
    %v2623 = vld [vmem:[%s55] sm:$0xff]
    %v2624 = vld [vmem:[%s55 + $0x8] sm:$0xff]
    %v2625 = vld [vmem:[%s55 + $0x10] sm:$0xff]
    %v2626 = vld [vmem:[%s55 + $0x18] sm:$0xff]
    %v2627 = vld [vmem:[%s55 + $0x20] sm:$0xff]
    %v2628 = vld [vmem:[%s55 + $0x28] sm:$0xff]
    %v2629 = vld [vmem:[%s55 + $0x30] sm:$0xff]
    %v2630 = vld [vmem:[%s55 + $0x38] sm:$0xff]
    %v2631 = vld [vmem:[%s55 + $0x40] sm:$0xff]
    %v2632 = vld [vmem:[%s55 + $0x48] sm:$0xff]
    %v2633 = vld [vmem:[%s55 + $0x50] sm:$0xff]
    %v2634 = vld [vmem:[%s55 + $0x58] sm:$0xff]
    %v2635 = vld [vmem:[%s55 + $0x60] sm:$0xff]
    %v2636 = vld [vmem:[%s55 + $0x68] sm:$0xff]
    %v2637 = vld [vmem:[%s55 + $0x70] sm:$0xff]
    %v2638 = vld [vmem:[%s55 + $0x78] sm:$0xff]
    %v2639 = vld [vmem:[%s57] sm:$0xf]
    %v2641 = vlaneseq
    %v2642 = vshrl.u32 %v2641, 7
    %v2643 = vsub.s32 0, %v2642
    %v2644 = vrot.slane %v2639, %v2643
    %v2645 = vlaneseq
    %v2646 = vshrl.u32 %v2645, 7
    %v2647 = vsub.s32 1, %v2646
    %v2648 = vrot.slane %v2639, %v2647
    %v2649 = vlaneseq
    %v2650 = vshrl.u32 %v2649, 7
    %v2651 = vsub.s32 2, %v2650
    %v2652 = vrot.slane %v2639, %v2651
    %v2653 = vlaneseq
    %v2654 = vshrl.u32 %v2653, 7
    %v2655 = vsub.s32 3, %v2654
    %v2656 = vrot.slane %v2639, %v2655
    %v2677 = vunpack.c.l.b16 %v2623
    %v2678 = vunpack.c.h.b16 %v2623
    %v2679 = vunpack.c.l.b16 %v2624
    %v2680 = vunpack.c.h.b16 %v2624
    %v2681 = vunpack.c.l.b16 %v2625
    %v2682 = vunpack.c.h.b16 %v2625
    %v2683 = vunpack.c.l.b16 %v2626
    %v2684 = vunpack.c.h.b16 %v2626
    %v2685 = vunpack.c.l.b16 %v2627
    %v2686 = vunpack.c.h.b16 %v2627
    %v2687 = vunpack.c.l.b16 %v2628
    %v2688 = vunpack.c.h.b16 %v2628
    %v2689 = vunpack.c.l.b16 %v2629
    %v2690 = vunpack.c.h.b16 %v2629
    %v2691 = vunpack.c.l.b16 %v2630
    %v2692 = vunpack.c.h.b16 %v2630
    %v2693 = vunpack.c.l.b16 %v2631
    %v2694 = vunpack.c.h.b16 %v2631
    %v2695 = vunpack.c.l.b16 %v2632
    %v2696 = vunpack.c.h.b16 %v2632
    %v2697 = vunpack.c.l.b16 %v2633
    %v2698 = vunpack.c.h.b16 %v2633
    %v2699 = vunpack.c.l.b16 %v2634
    %v2700 = vunpack.c.h.b16 %v2634
    %v2701 = vunpack.c.l.b16 %v2635
    %v2702 = vunpack.c.h.b16 %v2635
    %v2703 = vunpack.c.l.b16 %v2636
    %v2704 = vunpack.c.h.b16 %v2636
    %v2705 = vunpack.c.l.b16 %v2637
    %v2706 = vunpack.c.h.b16 %v2637
    %v2707 = vunpack.c.l.b16 %v2638
    %v2708 = vunpack.c.h.b16 %v2638
    %v2709 = vpack.c.b16 %v2681, %v2677
    %v2710 = vpack.c.b16 %v2682, %v2678
    %v2711 = vpack.c.b16 %v2683, %v2679
    %v2712 = vpack.c.b16 %v2684, %v2680
    %v2713 = vpack.c.b16 %v2689, %v2685
    %v2714 = vpack.c.b16 %v2690, %v2686
    %v2715 = vpack.c.b16 %v2691, %v2687
    %v2716 = vpack.c.b16 %v2692, %v2688
    %v2717 = vpack.c.b16 %v2697, %v2693
    %v2718 = vpack.c.b16 %v2698, %v2694
    %v2719 = vpack.c.b16 %v2699, %v2695
    %v2720 = vpack.c.b16 %v2700, %v2696
    %v2721 = vpack.c.b16 %v2705, %v2701
    %v2722 = vpack.c.b16 %v2706, %v2702
    %v2723 = vpack.c.b16 %v2707, %v2703
    %v2724 = vpack.c.b16 %v2708, %v2704
    %v2742 = vsel %vm2197, %v2622, 0
    %2744 = vmatprep.subr.bf16.mxu0 %v2710
    %2745 = vmatpush1.bf16.msra.mxu0 %v2709
    %2746 = vmatprep.subr.bf16.mxu0 %v2714
    %2747 = vmatpush1.bf16.msra.mxu0 %v2713
    %2748 = vmatprep.subr.bf16.mxu0 %v2718
    %2749 = vmatpush1.bf16.msra.mxu0 %v2717
    %2750 = vmatprep.subr.bf16.mxu0 %v2722
    %2751 = vmatpush1.bf16.msra.mxu0 %v2721
    %2752 = vmatprep.subr.bf16.mxu0 0
    %2753 = vmatpush1.bf16.msra.mxu0 0
    %2754 = vmatprep.subr.bf16.mxu0 0
    %2755 = vmatpush1.bf16.msra.mxu0 0
    %2756 = vmatprep.subr.bf16.mxu0 0
    %2757 = vmatpush1.bf16.msra.mxu0 0
    %2758 = vmatprep.subr.bf16.mxu0 0
    %2759 = vmatpush1.bf16.msra.mxu0 0
    %2760 = vmatprep.subr.bf16.mxu0 0
    %2761 = vmatpush1.bf16.msra.mxu0 0
    %2762 = vmatprep.subr.bf16.mxu0 0
    %2763 = vmatpush1.bf16.msra.mxu0 0
    %2764 = vmatprep.subr.bf16.mxu0 0
    %2765 = vmatpush1.bf16.msra.mxu0 0
    %2766 = vmatprep.subr.bf16.mxu0 0
    %2767 = vmatpush1.bf16.msra.mxu0 0
    %2768 = vmatprep.subr.bf16.mxu0 0
    %2769 = vmatpush1.bf16.msra.mxu0 0
    %2770 = vmatprep.subr.bf16.mxu0 0
    %2771 = vmatpush1.bf16.msra.mxu0 0
    %2772 = vmatprep.subr.bf16.mxu0 0
    %2773 = vmatpush1.bf16.msra.mxu0 0
    %2774 = vmatprep.subr.bf16.mxu0 0
    %2775 = vmatpush1.bf16.msra.mxu0 0
    %2776 = vmatprep.mubr.bf16.mxu0 0
    %2777 = vmatmul.mubr.bf16.gmra.mrb[0].mxu0 %v2742
    %v2778 = vpop.f32.mrb[0].mxu0
    %v2779 = vadd.f32 %v2644, %v2778
    %v2780 = vpop.f32.mrb[0].mxu0
    %v2781 = vadd.f32 %v2648, %v2780
    %v2782 = vpop.f32.mrb[0].mxu0
    %v2783 = vpop.f32.mrb[0].mxu0
    %2784 = vdwg.mxu0
    %2785 = vmatprep.subr.bf16.mxu0 %v2712
    %2786 = vmatpush1.bf16.msra.mxu0 %v2711
    %2787 = vmatprep.subr.bf16.mxu0 %v2716
    %2788 = vmatpush1.bf16.msra.mxu0 %v2715
    %2789 = vmatprep.subr.bf16.mxu0 %v2720
    %2790 = vmatpush1.bf16.msra.mxu0 %v2719
    %2791 = vmatprep.subr.bf16.mxu0 %v2724
    %2792 = vmatpush1.bf16.msra.mxu0 %v2723
    %2793 = vmatprep.subr.bf16.mxu0 0
    %2794 = vmatpush1.bf16.msra.mxu0 0
    %2795 = vmatprep.subr.bf16.mxu0 0
    %2796 = vmatpush1.bf16.msra.mxu0 0
    %2797 = vmatprep.subr.bf16.mxu0 0
    %2798 = vmatpush1.bf16.msra.mxu0 0
    %2799 = vmatprep.subr.bf16.mxu0 0
    %2800 = vmatpush1.bf16.msra.mxu0 0
    %2801 = vmatprep.subr.bf16.mxu0 0
    %2802 = vmatpush1.bf16.msra.mxu0 0
    %2803 = vmatprep.subr.bf16.mxu0 0
    %2804 = vmatpush1.bf16.msra.mxu0 0
    %2805 = vmatprep.subr.bf16.mxu0 0
    %2806 = vmatpush1.bf16.msra.mxu0 0
    %2807 = vmatprep.subr.bf16.mxu0 0
    %2808 = vmatpush1.bf16.msra.mxu0 0
    %2809 = vmatprep.subr.bf16.mxu0 0
    %2810 = vmatpush1.bf16.msra.mxu0 0
    %2811 = vmatprep.subr.bf16.mxu0 0
    %2812 = vmatpush1.bf16.msra.mxu0 0
    %2813 = vmatprep.subr.bf16.mxu0 0
    %2814 = vmatpush1.bf16.msra.mxu0 0
    %2815 = vmatprep.subr.bf16.mxu0 0
    %2816 = vmatpush1.bf16.msra.mxu0 0
    %2817 = vmatprep.mubr.bf16.mxu0 0
    %2818 = vmatmul.mubr.bf16.gmra.mrb[0].mxu0 %v2742
    %v2819 = vpop.f32.mrb[0].mxu0
    %v2820 = vadd.f32 %v2652, %v2819
    %v2821 = vpop.f32.mrb[0].mxu0
    %v2822 = vadd.f32 %v2656, %v2821
    %v2823 = vpop.f32.mrb[0].mxu0
    %v2824 = vpop.f32.mrb[0].mxu0
    %2825 = vdwg.mxu0
    %vm2826 = vcmp.gt.f32.partialorder %v2779, 0.0
    %vm2827 = vcmp.gt.f32.partialorder %v2781, 0.0
    %vm2828 = vcmp.gt.f32.partialorder %v2820, 0.0
    %vm2829 = vcmp.gt.f32.partialorder %v2822, 0.0
    %v2830 = vmul.f32 %v2779, 0.01
    %v2831 = vmul.f32 %v2781, 0.01
    %v2832 = vmul.f32 %v2820, 0.01
    %v2833 = vmul.f32 %v2822, 0.01
    %v2834 = vsel %vm2826, %v2779, %v2830
    %v2835 = vsel %vm2827, %v2781, %v2831
    %v2836 = vsel %vm2828, %v2820, %v2832
    %v2837 = vsel %vm2829, %v2822, %v2833
    %v2838 = vld [vmem:[%s59] sm:$0xff]
    %v2839 = vld [vmem:[%s59 + $0x8] sm:$0xff]
    %v2840 = vld [vmem:[%s59 + $0x10] sm:$0xff]
    %v2841 = vld [vmem:[%s59 + $0x18] sm:$0xff]
    %v2842 = vld [vmem:[%s59 + $0x20] sm:$0xff]
    %v2843 = vld [vmem:[%s59 + $0x28] sm:$0xff]
    %v2844 = vld [vmem:[%s59 + $0x30] sm:$0xff]
    %v2845 = vld [vmem:[%s59 + $0x38] sm:$0xff]
    %v2846 = vld [vmem:[%s59 + $0x40] sm:$0xff]
    %v2847 = vld [vmem:[%s59 + $0x48] sm:$0xff]
    %v2848 = vld [vmem:[%s59 + $0x50] sm:$0xff]
    %v2849 = vld [vmem:[%s59 + $0x58] sm:$0xff]
    %v2850 = vld [vmem:[%s59 + $0x60] sm:$0xff]
    %v2851 = vld [vmem:[%s59 + $0x68] sm:$0xff]
    %v2852 = vld [vmem:[%s59 + $0x70] sm:$0xff]
    %v2853 = vld [vmem:[%s59 + $0x78] sm:$0xff]
    %v2854 = vld [vmem:[%s59 + $0x80] sm:$0xff]
    %v2855 = vld [vmem:[%s59 + $0x88] sm:$0xff]
    %v2856 = vld [vmem:[%s59 + $0x90] sm:$0xff]
    %v2857 = vld [vmem:[%s59 + $0x98] sm:$0xff]
    %v2858 = vld [vmem:[%s59 + $0xa0] sm:$0xff]
    %v2859 = vld [vmem:[%s59 + $0xa8] sm:$0xff]
    %v2860 = vld [vmem:[%s59 + $0xb0] sm:$0xff]
    %v2861 = vld [vmem:[%s59 + $0xb8] sm:$0xff]
    %v2862 = vld [vmem:[%s59 + $0xc0] sm:$0xff]
    %v2863 = vld [vmem:[%s59 + $0xc8] sm:$0xff]
    %v2864 = vld [vmem:[%s59 + $0xd0] sm:$0xff]
    %v2865 = vld [vmem:[%s59 + $0xd8] sm:$0xff]
    %v2866 = vld [vmem:[%s59 + $0xe0] sm:$0xff]
    %v2867 = vld [vmem:[%s59 + $0xe8] sm:$0xff]
    %v2868 = vld [vmem:[%s59 + $0xf0] sm:$0xff]
    %v2869 = vld [vmem:[%s59 + $0xf8] sm:$0xff]
    %v2870 = vld [vmem:[%s59 + $0x100] sm:$0xff]
    %v2871 = vld [vmem:[%s59 + $0x108] sm:$0xff]
    %v2872 = vld [vmem:[%s59 + $0x110] sm:$0xff]
    %v2873 = vld [vmem:[%s59 + $0x118] sm:$0xff]
    %v2874 = vld [vmem:[%s59 + $0x120] sm:$0xff]
    %v2875 = vld [vmem:[%s59 + $0x128] sm:$0xff]
    %v2876 = vld [vmem:[%s59 + $0x130] sm:$0xff]
    %v2877 = vld [vmem:[%s59 + $0x138] sm:$0xff]
    %v2878 = vld [vmem:[%s59 + $0x140] sm:$0xff]
    %v2879 = vld [vmem:[%s59 + $0x148] sm:$0xff]
    %v2880 = vld [vmem:[%s59 + $0x150] sm:$0xff]
    %v2881 = vld [vmem:[%s59 + $0x158] sm:$0xff]
    %v2882 = vld [vmem:[%s59 + $0x160] sm:$0xff]
    %v2883 = vld [vmem:[%s59 + $0x168] sm:$0xff]
    %v2884 = vld [vmem:[%s59 + $0x170] sm:$0xff]
    %v2885 = vld [vmem:[%s59 + $0x178] sm:$0xff]
    %v2886 = vld [vmem:[%s59 + $0x180] sm:$0xff]
    %v2887 = vld [vmem:[%s59 + $0x188] sm:$0xff]
    %v2888 = vld [vmem:[%s59 + $0x190] sm:$0xff]
    %v2889 = vld [vmem:[%s59 + $0x198] sm:$0xff]
    %v2890 = vld [vmem:[%s59 + $0x1a0] sm:$0xff]
    %v2891 = vld [vmem:[%s59 + $0x1a8] sm:$0xff]
    %v2892 = vld [vmem:[%s59 + $0x1b0] sm:$0xff]
    %v2893 = vld [vmem:[%s59 + $0x1b8] sm:$0xff]
    %v2894 = vld [vmem:[%s59 + $0x1c0] sm:$0xff]
    %v2895 = vld [vmem:[%s59 + $0x1c8] sm:$0xff]
    %v2896 = vld [vmem:[%s59 + $0x1d0] sm:$0xff]
    %v2897 = vld [vmem:[%s59 + $0x1d8] sm:$0xff]
    %v2898 = vld [vmem:[%s59 + $0x1e0] sm:$0xff]
    %v2899 = vld [vmem:[%s59 + $0x1e8] sm:$0xff]
    %v2900 = vld [vmem:[%s59 + $0x1f0] sm:$0xff]
    %v2901 = vld [vmem:[%s59 + $0x1f8] sm:$0xff]
    %2902 = vmatprep.subr.mxu0 0.0
    %2903 = vmatpush1.msra.mxu0 %v2838
    %2904 = vmatprep.subr.mxu0 0.0
    %2905 = vmatpush1.msra.mxu0 %v2839
    %2906 = vmatprep.subr.mxu0 0.0
    %2907 = vmatpush1.msra.mxu0 %v2840
    %2908 = vmatprep.subr.mxu0 0.0
    %2909 = vmatpush1.msra.mxu0 %v2841
    %2910 = vmatprep.subr.mxu0 0.0
    %2911 = vmatpush1.msra.mxu0 %v2842
    %2912 = vmatprep.subr.mxu0 0.0
    %2913 = vmatpush1.msra.mxu0 %v2843
    %2914 = vmatprep.subr.mxu0 0.0
    %2915 = vmatpush1.msra.mxu0 %v2844
    %2916 = vmatprep.subr.mxu0 0.0
    %2917 = vmatpush1.msra.mxu0 %v2845
    %2918 = vmatprep.subr.mxu0 0.0
    %2919 = vmatpush1.msra.mxu0 %v2846
    %2920 = vmatprep.subr.mxu0 0.0
    %2921 = vmatpush1.msra.mxu0 %v2847
    %2922 = vmatprep.subr.mxu0 0.0
    %2923 = vmatpush1.msra.mxu0 %v2848
    %2924 = vmatprep.subr.mxu0 0.0
    %2925 = vmatpush1.msra.mxu0 %v2849
    %2926 = vmatprep.subr.mxu0 0.0
    %2927 = vmatpush1.msra.mxu0 %v2850
    %2928 = vmatprep.subr.mxu0 0.0
    %2929 = vmatpush1.msra.mxu0 %v2851
    %2930 = vmatprep.subr.mxu0 0.0
    %2931 = vmatpush1.msra.mxu0 %v2852
    %2932 = vmatprep.subr.mxu0 0.0
    %2933 = vmatpush1.msra.mxu0 %v2853
    %2934 = vmatprep.subr.mxu0 0.0
    %2935 = vmatpush1.msra.mxu0 %v2854
    %2936 = vmatprep.subr.mxu0 0.0
    %2937 = vmatpush1.msra.mxu0 %v2855
    %2938 = vmatprep.subr.mxu0 0.0
    %2939 = vmatpush1.msra.mxu0 %v2856
    %2940 = vmatprep.subr.mxu0 0.0
    %2941 = vmatpush1.msra.mxu0 %v2857
    %2942 = vmatprep.subr.mxu0 0.0
    %2943 = vmatpush1.msra.mxu0 %v2858
    %2944 = vmatprep.subr.mxu0 0.0
    %2945 = vmatpush1.msra.mxu0 %v2859
    %2946 = vmatprep.subr.mxu0 0.0
    %2947 = vmatpush1.msra.mxu0 %v2860
    %2948 = vmatprep.subr.mxu0 0.0
    %2949 = vmatpush1.msra.mxu0 %v2861
    %2950 = vmatprep.subr.mxu0 0.0
    %2951 = vmatpush1.msra.mxu0 %v2862
    %2952 = vmatprep.subr.mxu0 0.0
    %2953 = vmatpush1.msra.mxu0 %v2863
    %2954 = vmatprep.subr.mxu0 0.0
    %2955 = vmatpush1.msra.mxu0 %v2864
    %2956 = vmatprep.subr.mxu0 0.0
    %2957 = vmatpush1.msra.mxu0 %v2865
    %2958 = vmatprep.subr.mxu0 0.0
    %2959 = vmatpush1.msra.mxu0 %v2866
    %2960 = vmatprep.subr.mxu0 0.0
    %2961 = vmatpush1.msra.mxu0 %v2867
    %2962 = vmatprep.subr.mxu0 0.0
    %2963 = vmatpush1.msra.mxu0 %v2868
    %2964 = vmatprep.subr.mxu0 0.0
    %2965 = vmatpush1.msra.mxu0 %v2869
    %2966 = vmatprep.mubr.f32.mxu0 %v2835
    %2967 = vmatmul.mubr.f32.gmra.mrb[0].mxu0 %v2834
    %v2968 = vpop.f32.mrb[0].mxu0
    %v2969 = vadd.f32 0.0, %v2968
    %v2970 = vpop.f32.mrb[0].mxu0
    %2971 = vdwg.mxu0
    %2972 = vmatprep.subr.mxu0 0.0
    %2973 = vmatpush1.msra.mxu0 %v2870
    %2974 = vmatprep.subr.mxu0 0.0
    %2975 = vmatpush1.msra.mxu0 %v2871
    %2976 = vmatprep.subr.mxu0 0.0
    %2977 = vmatpush1.msra.mxu0 %v2872
    %2978 = vmatprep.subr.mxu0 0.0
    %2979 = vmatpush1.msra.mxu0 %v2873
    %2980 = vmatprep.subr.mxu0 0.0
    %2981 = vmatpush1.msra.mxu0 %v2874
    %2982 = vmatprep.subr.mxu0 0.0
    %2983 = vmatpush1.msra.mxu0 %v2875
    %2984 = vmatprep.subr.mxu0 0.0
    %2985 = vmatpush1.msra.mxu0 %v2876
    %2986 = vmatprep.subr.mxu0 0.0
    %2987 = vmatpush1.msra.mxu0 %v2877
    %2988 = vmatprep.subr.mxu0 0.0
    %2989 = vmatpush1.msra.mxu0 %v2878
    %2990 = vmatprep.subr.mxu0 0.0
    %2991 = vmatpush1.msra.mxu0 %v2879
    %2992 = vmatprep.subr.mxu0 0.0
    %2993 = vmatpush1.msra.mxu0 %v2880
    %2994 = vmatprep.subr.mxu0 0.0
    %2995 = vmatpush1.msra.mxu0 %v2881
    %2996 = vmatprep.subr.mxu0 0.0
    %2997 = vmatpush1.msra.mxu0 %v2882
    %2998 = vmatprep.subr.mxu0 0.0
    %2999 = vmatpush1.msra.mxu0 %v2883
    %3000 = vmatprep.subr.mxu0 0.0
    %3001 = vmatpush1.msra.mxu0 %v2884
    %3002 = vmatprep.subr.mxu0 0.0
    %3003 = vmatpush1.msra.mxu0 %v2885
    %3004 = vmatprep.subr.mxu0 0.0
    %3005 = vmatpush1.msra.mxu0 %v2886
    %3006 = vmatprep.subr.mxu0 0.0
    %3007 = vmatpush1.msra.mxu0 %v2887
    %3008 = vmatprep.subr.mxu0 0.0
    %3009 = vmatpush1.msra.mxu0 %v2888
    %3010 = vmatprep.subr.mxu0 0.0
    %3011 = vmatpush1.msra.mxu0 %v2889
    %3012 = vmatprep.subr.mxu0 0.0
    %3013 = vmatpush1.msra.mxu0 %v2890
    %3014 = vmatprep.subr.mxu0 0.0
    %3015 = vmatpush1.msra.mxu0 %v2891
    %3016 = vmatprep.subr.mxu0 0.0
    %3017 = vmatpush1.msra.mxu0 %v2892
    %3018 = vmatprep.subr.mxu0 0.0
    %3019 = vmatpush1.msra.mxu0 %v2893
    %3020 = vmatprep.subr.mxu0 0.0
    %3021 = vmatpush1.msra.mxu0 %v2894
    %3022 = vmatprep.subr.mxu0 0.0
    %3023 = vmatpush1.msra.mxu0 %v2895
    %3024 = vmatprep.subr.mxu0 0.0
    %3025 = vmatpush1.msra.mxu0 %v2896
    %3026 = vmatprep.subr.mxu0 0.0
    %3027 = vmatpush1.msra.mxu0 %v2897
    %3028 = vmatprep.subr.mxu0 0.0
    %3029 = vmatpush1.msra.mxu0 %v2898
    %3030 = vmatprep.subr.mxu0 0.0
    %3031 = vmatpush1.msra.mxu0 %v2899
    %3032 = vmatprep.subr.mxu0 0.0
    %3033 = vmatpush1.msra.mxu0 %v2900
    %3034 = vmatprep.subr.mxu0 0.0
    %3035 = vmatpush1.msra.mxu0 %v2901
    %3036 = vmatprep.mubr.f32.mxu0 %v2837
    %3037 = vmatmul.mubr.f32.gmra.mrb[0].mxu0 %v2836
    %v3038 = vpop.f32.mrb[0].mxu0
    %v3039 = vadd.f32 %v2969, %v3038
    %v3040 = vpop.f32.mrb[0].mxu0
    %3041 = vdwg.mxu0
    %vm3042 = vcmask 254976
    %v3043 = vsel %vm3042, %v3039, 0.0
    %v3044 = vrot.slane %v3043, 4
    %v3045 = vadd.f32 %v3043, %v3044
    %v3046 = vrot.slane %v3045, 2
    %v3047 = vadd.f32 %v3045, %v3046
    %v3048 = vrot.slane %v3047, 1
    %v3049 = vadd.f32 %v3047, %v3048
    %v3050 = vmul.f32 %v3049, %v970
    %v3051 = vld [vmem:[%s61] sm:$0xff]
    %v3052 = vld [vmem:[%s61 + $0x8] sm:$0xff]
    %v3053 = vld [vmem:[%s61 + $0x10] sm:$0xff]
    %v3054 = vld [vmem:[%s61 + $0x18] sm:$0xff]
    %v3055 = vld [vmem:[%s61 + $0x20] sm:$0xff]
    %v3056 = vld [vmem:[%s61 + $0x28] sm:$0xff]
    %v3057 = vld [vmem:[%s61 + $0x30] sm:$0xff]
    %v3058 = vld [vmem:[%s61 + $0x38] sm:$0xff]
    %v3059 = vld [vmem:[%s61 + $0x40] sm:$0xff]
    %v3060 = vld [vmem:[%s61 + $0x48] sm:$0xff]
    %v3061 = vld [vmem:[%s61 + $0x50] sm:$0xff]
    %v3062 = vld [vmem:[%s61 + $0x58] sm:$0xff]
    %v3063 = vld [vmem:[%s61 + $0x60] sm:$0xff]
    %v3064 = vld [vmem:[%s61 + $0x68] sm:$0xff]
    %v3065 = vld [vmem:[%s61 + $0x70] sm:$0xff]
    %v3066 = vld [vmem:[%s61 + $0x78] sm:$0xff]
    %v3068 = vsel %vm956, %v3050, 0
    %3070 = vmatprep.subr.mxu0 %v3052
    %3071 = vmatpush1.msra.mxu0 %v3051
    %3072 = vmatprep.subr.mxu0 %v3056
    %3073 = vmatpush1.msra.mxu0 %v3055
    %3074 = vmatprep.subr.mxu0 %v3060
    %3075 = vmatpush1.msra.mxu0 %v3059
    %3076 = vmatprep.subr.mxu0 %v3064
    %3077 = vmatpush1.msra.mxu0 %v3063
    %3078 = vmatprep.subr.mxu0 0.0
    %3079 = vmatpush1.msra.mxu0 0.0
    %3080 = vmatprep.subr.mxu0 0.0
    %3081 = vmatpush1.msra.mxu0 0.0
    %3082 = vmatprep.subr.mxu0 0.0
    %3083 = vmatpush1.msra.mxu0 0.0
    %3084 = vmatprep.subr.mxu0 0.0
    %3085 = vmatpush1.msra.mxu0 0.0
    %3086 = vmatprep.subr.mxu0 0.0
    %3087 = vmatpush1.msra.mxu0 0.0
    %3088 = vmatprep.subr.mxu0 0.0
    %3089 = vmatpush1.msra.mxu0 0.0
    %3090 = vmatprep.subr.mxu0 0.0
    %3091 = vmatpush1.msra.mxu0 0.0
    %3092 = vmatprep.subr.mxu0 0.0
    %3093 = vmatpush1.msra.mxu0 0.0
    %3094 = vmatprep.subr.mxu0 0.0
    %3095 = vmatpush1.msra.mxu0 0.0
    %3096 = vmatprep.subr.mxu0 0.0
    %3097 = vmatpush1.msra.mxu0 0.0
    %3098 = vmatprep.subr.mxu0 0.0
    %3099 = vmatpush1.msra.mxu0 0.0
    %3100 = vmatprep.subr.mxu0 0.0
    %3101 = vmatpush1.msra.mxu0 0.0
    %3102 = vmatprep.subr.mxu0 0.0
    %3103 = vmatpush1.msra.mxu0 0.0
    %3104 = vmatprep.subr.mxu0 0.0
    %3105 = vmatpush1.msra.mxu0 0.0
    %3106 = vmatprep.subr.mxu0 0.0
    %3107 = vmatpush1.msra.mxu0 0.0
    %3108 = vmatprep.subr.mxu0 0.0
    %3109 = vmatpush1.msra.mxu0 0.0
    %3110 = vmatprep.subr.mxu0 0.0
    %3111 = vmatpush1.msra.mxu0 0.0
    %3112 = vmatprep.subr.mxu0 0.0
    %3113 = vmatpush1.msra.mxu0 0.0
    %3114 = vmatprep.subr.mxu0 0.0
    %3115 = vmatpush1.msra.mxu0 0.0
    %3116 = vmatprep.subr.mxu0 0.0
    %3117 = vmatpush1.msra.mxu0 0.0
    %3118 = vmatprep.subr.mxu0 0.0
    %3119 = vmatpush1.msra.mxu0 0.0
    %3120 = vmatprep.subr.mxu0 0.0
    %3121 = vmatpush1.msra.mxu0 0.0
    %3122 = vmatprep.subr.mxu0 0.0
    %3123 = vmatpush1.msra.mxu0 0.0
    %3124 = vmatprep.subr.mxu0 0.0
    %3125 = vmatpush1.msra.mxu0 0.0
    %3126 = vmatprep.subr.mxu0 0.0
    %3127 = vmatpush1.msra.mxu0 0.0
    %3128 = vmatprep.subr.mxu0 0.0
    %3129 = vmatpush1.msra.mxu0 0.0
    %3130 = vmatprep.subr.mxu0 0.0
    %3131 = vmatpush1.msra.mxu0 0.0
    %3132 = vmatprep.subr.mxu0 0.0
    %3133 = vmatpush1.msra.mxu0 0.0
    %3134 = vmatprep.mubr.f32.mxu0 0.0
    %3135 = vmatmul.mubr.f32.gmra.mrb[0].mxu0 %v3068
    %v3136 = vpop.f32.mrb[0].mxu0
    %v3137 = vadd.f32 0.0, %v3136
    %v3138 = vpop.f32.mrb[0].mxu0
    %v3139 = vadd.f32 0.0, %v3138
    %3140 = vdwg.mxu0
    %3141 = vmatprep.subr.mxu0 %v3054
    %3142 = vmatpush1.msra.mxu0 %v3053
    %3143 = vmatprep.subr.mxu0 %v3058
    %3144 = vmatpush1.msra.mxu0 %v3057
    %3145 = vmatprep.subr.mxu0 %v3062
    %3146 = vmatpush1.msra.mxu0 %v3061
    %3147 = vmatprep.subr.mxu0 %v3066
    %3148 = vmatpush1.msra.mxu0 %v3065
    %3149 = vmatprep.subr.mxu0 0.0
    %3150 = vmatpush1.msra.mxu0 0.0
    %3151 = vmatprep.subr.mxu0 0.0
    %3152 = vmatpush1.msra.mxu0 0.0
    %3153 = vmatprep.subr.mxu0 0.0
    %3154 = vmatpush1.msra.mxu0 0.0
    %3155 = vmatprep.subr.mxu0 0.0
    %3156 = vmatpush1.msra.mxu0 0.0
    %3157 = vmatprep.subr.mxu0 0.0
    %3158 = vmatpush1.msra.mxu0 0.0
    %3159 = vmatprep.subr.mxu0 0.0
    %3160 = vmatpush1.msra.mxu0 0.0
    %3161 = vmatprep.subr.mxu0 0.0
    %3162 = vmatpush1.msra.mxu0 0.0
    %3163 = vmatprep.subr.mxu0 0.0
    %3164 = vmatpush1.msra.mxu0 0.0
    %3165 = vmatprep.subr.mxu0 0.0
    %3166 = vmatpush1.msra.mxu0 0.0
    %3167 = vmatprep.subr.mxu0 0.0
    %3168 = vmatpush1.msra.mxu0 0.0
    %3169 = vmatprep.subr.mxu0 0.0
    %3170 = vmatpush1.msra.mxu0 0.0
    %3171 = vmatprep.subr.mxu0 0.0
    %3172 = vmatpush1.msra.mxu0 0.0
    %3173 = vmatprep.subr.mxu0 0.0
    %3174 = vmatpush1.msra.mxu0 0.0
    %3175 = vmatprep.subr.mxu0 0.0
    %3176 = vmatpush1.msra.mxu0 0.0
    %3177 = vmatprep.subr.mxu0 0.0
    %3178 = vmatpush1.msra.mxu0 0.0
    %3179 = vmatprep.subr.mxu0 0.0
    %3180 = vmatpush1.msra.mxu0 0.0
    %3181 = vmatprep.subr.mxu0 0.0
    %3182 = vmatpush1.msra.mxu0 0.0
    %3183 = vmatprep.subr.mxu0 0.0
    %3184 = vmatpush1.msra.mxu0 0.0
    %3185 = vmatprep.subr.mxu0 0.0
    %3186 = vmatpush1.msra.mxu0 0.0
    %3187 = vmatprep.subr.mxu0 0.0
    %3188 = vmatpush1.msra.mxu0 0.0
    %3189 = vmatprep.subr.mxu0 0.0
    %3190 = vmatpush1.msra.mxu0 0.0
    %3191 = vmatprep.subr.mxu0 0.0
    %3192 = vmatpush1.msra.mxu0 0.0
    %3193 = vmatprep.subr.mxu0 0.0
    %3194 = vmatpush1.msra.mxu0 0.0
    %3195 = vmatprep.subr.mxu0 0.0
    %3196 = vmatpush1.msra.mxu0 0.0
    %3197 = vmatprep.subr.mxu0 0.0
    %3198 = vmatpush1.msra.mxu0 0.0
    %3199 = vmatprep.subr.mxu0 0.0
    %3200 = vmatpush1.msra.mxu0 0.0
    %3201 = vmatprep.subr.mxu0 0.0
    %3202 = vmatpush1.msra.mxu0 0.0
    %3203 = vmatprep.subr.mxu0 0.0
    %3204 = vmatpush1.msra.mxu0 0.0
    %3205 = vmatprep.mubr.f32.mxu0 0.0
    %3206 = vmatmul.mubr.f32.gmra.mrb[0].mxu0 %v3068
    %v3207 = vpop.f32.mrb[0].mxu0
    %v3208 = vadd.f32 0.0, %v3207
    %v3209 = vpop.f32.mrb[0].mxu0
    %v3210 = vadd.f32 0.0, %v3209
    %3211 = vdwg.mxu0
    %v3212 = vlaneseq
    %v3213 = vshrl.u32 %v3212, 7
    %v3214 = vsub.s32 0, %v3213
    %v3215 = vrot.slane %v3137, %v3214
    %v3216 = vlaneseq
    %v3217 = vshrl.u32 %v3216, 7
    %v3218 = vsub.s32 0, %v3217
    %v3219 = vrot.slane %v3139, %v3218
    %v3220 = vlaneseq
    %v3221 = vshrl.u32 %v3220, 7
    %v3222 = vsub.s32 0, %v3221
    %v3223 = vrot.slane %v3208, %v3222
    %v3224 = vlaneseq
    %v3225 = vshrl.u32 %v3224, 7
    %v3226 = vsub.s32 0, %v3225
    %v3227 = vrot.slane %v3210, %v3226
    %v3228 = vsub.f32 %v2834, %v3215
    %v3229 = vsub.f32 %v2835, %v3219
    %v3230 = vsub.f32 %v2836, %v3223
    %v3231 = vsub.f32 %v2837, %v3227
    %v3232 = vmul.f32 %v3228, %v3228
    %v3233 = vmul.f32 %v3229, %v3229
    %v3234 = vmul.f32 %v3230, %v3230
    %v3235 = vmul.f32 %v3231, %v3231
    %3236 = vmatprep.subr.mxu0 0.0
    %3237 = vmatpush1.msra.mxu0 %v2838
    %3238 = vmatprep.subr.mxu0 0.0
    %3239 = vmatpush1.msra.mxu0 %v2839
    %3240 = vmatprep.subr.mxu0 0.0
    %3241 = vmatpush1.msra.mxu0 %v2840
    %3242 = vmatprep.subr.mxu0 0.0
    %3243 = vmatpush1.msra.mxu0 %v2841
    %3244 = vmatprep.subr.mxu0 0.0
    %3245 = vmatpush1.msra.mxu0 %v2842
    %3246 = vmatprep.subr.mxu0 0.0
    %3247 = vmatpush1.msra.mxu0 %v2843
    %3248 = vmatprep.subr.mxu0 0.0
    %3249 = vmatpush1.msra.mxu0 %v2844
    %3250 = vmatprep.subr.mxu0 0.0
    %3251 = vmatpush1.msra.mxu0 %v2845
    %3252 = vmatprep.subr.mxu0 0.0
    %3253 = vmatpush1.msra.mxu0 %v2846
    %3254 = vmatprep.subr.mxu0 0.0
    %3255 = vmatpush1.msra.mxu0 %v2847
    %3256 = vmatprep.subr.mxu0 0.0
    %3257 = vmatpush1.msra.mxu0 %v2848
    %3258 = vmatprep.subr.mxu0 0.0
    %3259 = vmatpush1.msra.mxu0 %v2849
    %3260 = vmatprep.subr.mxu0 0.0
    %3261 = vmatpush1.msra.mxu0 %v2850
    %3262 = vmatprep.subr.mxu0 0.0
    %3263 = vmatpush1.msra.mxu0 %v2851
    %3264 = vmatprep.subr.mxu0 0.0
    %3265 = vmatpush1.msra.mxu0 %v2852
    %3266 = vmatprep.subr.mxu0 0.0
    %3267 = vmatpush1.msra.mxu0 %v2853
    %3268 = vmatprep.subr.mxu0 0.0
    %3269 = vmatpush1.msra.mxu0 %v2854
    %3270 = vmatprep.subr.mxu0 0.0
    %3271 = vmatpush1.msra.mxu0 %v2855
    %3272 = vmatprep.subr.mxu0 0.0
    %3273 = vmatpush1.msra.mxu0 %v2856
    %3274 = vmatprep.subr.mxu0 0.0
    %3275 = vmatpush1.msra.mxu0 %v2857
    %3276 = vmatprep.subr.mxu0 0.0
    %3277 = vmatpush1.msra.mxu0 %v2858
    %3278 = vmatprep.subr.mxu0 0.0
    %3279 = vmatpush1.msra.mxu0 %v2859
    %3280 = vmatprep.subr.mxu0 0.0
    %3281 = vmatpush1.msra.mxu0 %v2860
    %3282 = vmatprep.subr.mxu0 0.0
    %3283 = vmatpush1.msra.mxu0 %v2861
    %3284 = vmatprep.subr.mxu0 0.0
    %3285 = vmatpush1.msra.mxu0 %v2862
    %3286 = vmatprep.subr.mxu0 0.0
    %3287 = vmatpush1.msra.mxu0 %v2863
    %3288 = vmatprep.subr.mxu0 0.0
    %3289 = vmatpush1.msra.mxu0 %v2864
    %3290 = vmatprep.subr.mxu0 0.0
    %3291 = vmatpush1.msra.mxu0 %v2865
    %3292 = vmatprep.subr.mxu0 0.0
    %3293 = vmatpush1.msra.mxu0 %v2866
    %3294 = vmatprep.subr.mxu0 0.0
    %3295 = vmatpush1.msra.mxu0 %v2867
    %3296 = vmatprep.subr.mxu0 0.0
    %3297 = vmatpush1.msra.mxu0 %v2868
    %3298 = vmatprep.subr.mxu0 0.0
    %3299 = vmatpush1.msra.mxu0 %v2869
    %3300 = vmatprep.mubr.f32.mxu0 %v3233
    %3301 = vmatmul.mubr.f32.gmra.mrb[0].mxu0 %v3232
    %v3302 = vpop.f32.mrb[0].mxu0
    %v3303 = vadd.f32 0.0, %v3302
    %v3304 = vpop.f32.mrb[0].mxu0
    %3305 = vdwg.mxu0
    %3306 = vmatprep.subr.mxu0 0.0
    %3307 = vmatpush1.msra.mxu0 %v2870
    %3308 = vmatprep.subr.mxu0 0.0
    %3309 = vmatpush1.msra.mxu0 %v2871
    %3310 = vmatprep.subr.mxu0 0.0
    %3311 = vmatpush1.msra.mxu0 %v2872
    %3312 = vmatprep.subr.mxu0 0.0
    %3313 = vmatpush1.msra.mxu0 %v2873
    %3314 = vmatprep.subr.mxu0 0.0
    %3315 = vmatpush1.msra.mxu0 %v2874
    %3316 = vmatprep.subr.mxu0 0.0
    %3317 = vmatpush1.msra.mxu0 %v2875
    %3318 = vmatprep.subr.mxu0 0.0
    %3319 = vmatpush1.msra.mxu0 %v2876
    %3320 = vmatprep.subr.mxu0 0.0
    %3321 = vmatpush1.msra.mxu0 %v2877
    %3322 = vmatprep.subr.mxu0 0.0
    %3323 = vmatpush1.msra.mxu0 %v2878
    %3324 = vmatprep.subr.mxu0 0.0
    %3325 = vmatpush1.msra.mxu0 %v2879
    %3326 = vmatprep.subr.mxu0 0.0
    %3327 = vmatpush1.msra.mxu0 %v2880
    %3328 = vmatprep.subr.mxu0 0.0
    %3329 = vmatpush1.msra.mxu0 %v2881
    %3330 = vmatprep.subr.mxu0 0.0
    %3331 = vmatpush1.msra.mxu0 %v2882
    %3332 = vmatprep.subr.mxu0 0.0
    %3333 = vmatpush1.msra.mxu0 %v2883
    %3334 = vmatprep.subr.mxu0 0.0
    %3335 = vmatpush1.msra.mxu0 %v2884
    %3336 = vmatprep.subr.mxu0 0.0
    %3337 = vmatpush1.msra.mxu0 %v2885
    %3338 = vmatprep.subr.mxu0 0.0
    %3339 = vmatpush1.msra.mxu0 %v2886
    %3340 = vmatprep.subr.mxu0 0.0
    %3341 = vmatpush1.msra.mxu0 %v2887
    %3342 = vmatprep.subr.mxu0 0.0
    %3343 = vmatpush1.msra.mxu0 %v2888
    %3344 = vmatprep.subr.mxu0 0.0
    %3345 = vmatpush1.msra.mxu0 %v2889
    %3346 = vmatprep.subr.mxu0 0.0
    %3347 = vmatpush1.msra.mxu0 %v2890
    %3348 = vmatprep.subr.mxu0 0.0
    %3349 = vmatpush1.msra.mxu0 %v2891
    %3350 = vmatprep.subr.mxu0 0.0
    %3351 = vmatpush1.msra.mxu0 %v2892
    %3352 = vmatprep.subr.mxu0 0.0
    %3353 = vmatpush1.msra.mxu0 %v2893
    %3354 = vmatprep.subr.mxu0 0.0
    %3355 = vmatpush1.msra.mxu0 %v2894
    %3356 = vmatprep.subr.mxu0 0.0
    %3357 = vmatpush1.msra.mxu0 %v2895
    %3358 = vmatprep.subr.mxu0 0.0
    %3359 = vmatpush1.msra.mxu0 %v2896
    %3360 = vmatprep.subr.mxu0 0.0
    %3361 = vmatpush1.msra.mxu0 %v2897
    %3362 = vmatprep.subr.mxu0 0.0
    %3363 = vmatpush1.msra.mxu0 %v2898
    %3364 = vmatprep.subr.mxu0 0.0
    %3365 = vmatpush1.msra.mxu0 %v2899
    %3366 = vmatprep.subr.mxu0 0.0
    %3367 = vmatpush1.msra.mxu0 %v2900
    %3368 = vmatprep.subr.mxu0 0.0
    %3369 = vmatpush1.msra.mxu0 %v2901
    %3370 = vmatprep.mubr.f32.mxu0 %v3235
    %3371 = vmatmul.mubr.f32.gmra.mrb[0].mxu0 %v3234
    %v3372 = vpop.f32.mrb[0].mxu0
    %v3373 = vadd.f32 %v3303, %v3372
    %v3374 = vpop.f32.mrb[0].mxu0
    %3375 = vdwg.mxu0
    %v3376 = vsel %vm3042, %v3373, 0.0
    %v3377 = vrot.slane %v3376, 4
    %v3378 = vadd.f32 %v3376, %v3377
    %v3379 = vrot.slane %v3378, 2
    %v3380 = vadd.f32 %v3378, %v3379
    %v3381 = vrot.slane %v3380, 1
    %v3382 = vadd.f32 %v3380, %v3381
    %v3383 = vmul.f32 %v3382, %v970
    %v3384 = vadd.f32 %v3383, 1e-05
    %v3385 = vrsqrt.pop %v3384
    %v3387 = vsel %vm956, %v3385, 0
    %3389 = vmatprep.subr.mxu0 %v3052
    %3390 = vmatpush1.msra.mxu0 %v3051
    %3391 = vmatprep.subr.mxu0 %v3056
    %3392 = vmatpush1.msra.mxu0 %v3055
    %3393 = vmatprep.subr.mxu0 %v3060
    %3394 = vmatpush1.msra.mxu0 %v3059
    %3395 = vmatprep.subr.mxu0 %v3064
    %3396 = vmatpush1.msra.mxu0 %v3063
    %3397 = vmatprep.subr.mxu0 0.0
    %3398 = vmatpush1.msra.mxu0 0.0
    %3399 = vmatprep.subr.mxu0 0.0
    %3400 = vmatpush1.msra.mxu0 0.0
    %3401 = vmatprep.subr.mxu0 0.0
    %3402 = vmatpush1.msra.mxu0 0.0
    %3403 = vmatprep.subr.mxu0 0.0
    %3404 = vmatpush1.msra.mxu0 0.0
    %3405 = vmatprep.subr.mxu0 0.0
    %3406 = vmatpush1.msra.mxu0 0.0
    %3407 = vmatprep.subr.mxu0 0.0
    %3408 = vmatpush1.msra.mxu0 0.0
    %3409 = vmatprep.subr.mxu0 0.0
    %3410 = vmatpush1.msra.mxu0 0.0
    %3411 = vmatprep.subr.mxu0 0.0
    %3412 = vmatpush1.msra.mxu0 0.0
    %3413 = vmatprep.subr.mxu0 0.0
    %3414 = vmatpush1.msra.mxu0 0.0
    %3415 = vmatprep.subr.mxu0 0.0
    %3416 = vmatpush1.msra.mxu0 0.0
    %3417 = vmatprep.subr.mxu0 0.0
    %3418 = vmatpush1.msra.mxu0 0.0
    %3419 = vmatprep.subr.mxu0 0.0
    %3420 = vmatpush1.msra.mxu0 0.0
    %3421 = vmatprep.subr.mxu0 0.0
    %3422 = vmatpush1.msra.mxu0 0.0
    %3423 = vmatprep.subr.mxu0 0.0
    %3424 = vmatpush1.msra.mxu0 0.0
    %3425 = vmatprep.subr.mxu0 0.0
    %3426 = vmatpush1.msra.mxu0 0.0
    %3427 = vmatprep.subr.mxu0 0.0
    %3428 = vmatpush1.msra.mxu0 0.0
    %3429 = vmatprep.subr.mxu0 0.0
    %3430 = vmatpush1.msra.mxu0 0.0
    %3431 = vmatprep.subr.mxu0 0.0
    %3432 = vmatpush1.msra.mxu0 0.0
    %3433 = vmatprep.subr.mxu0 0.0
    %3434 = vmatpush1.msra.mxu0 0.0
    %3435 = vmatprep.subr.mxu0 0.0
    %3436 = vmatpush1.msra.mxu0 0.0
    %3437 = vmatprep.subr.mxu0 0.0
    %3438 = vmatpush1.msra.mxu0 0.0
    %3439 = vmatprep.subr.mxu0 0.0
    %3440 = vmatpush1.msra.mxu0 0.0
    %3441 = vmatprep.subr.mxu0 0.0
    %3442 = vmatpush1.msra.mxu0 0.0
    %3443 = vmatprep.subr.mxu0 0.0
    %3444 = vmatpush1.msra.mxu0 0.0
    %3445 = vmatprep.subr.mxu0 0.0
    %3446 = vmatpush1.msra.mxu0 0.0
    %3447 = vmatprep.subr.mxu0 0.0
    %3448 = vmatpush1.msra.mxu0 0.0
    %3449 = vmatprep.subr.mxu0 0.0
    %3450 = vmatpush1.msra.mxu0 0.0
    %3451 = vmatprep.subr.mxu0 0.0
    %3452 = vmatpush1.msra.mxu0 0.0
    %3453 = vmatprep.mubr.f32.mxu0 0.0
    %3454 = vmatmul.mubr.f32.gmra.mrb[0].mxu0 %v3387
    %v3455 = vpop.f32.mrb[0].mxu0
    %v3456 = vadd.f32 0.0, %v3455
    %v3457 = vpop.f32.mrb[0].mxu0
    %v3458 = vadd.f32 0.0, %v3457
    %3459 = vdwg.mxu0
    %3460 = vmatprep.subr.mxu0 %v3054
    %3461 = vmatpush1.msra.mxu0 %v3053
    %3462 = vmatprep.subr.mxu0 %v3058
    %3463 = vmatpush1.msra.mxu0 %v3057
    %3464 = vmatprep.subr.mxu0 %v3062
    %3465 = vmatpush1.msra.mxu0 %v3061
    %3466 = vmatprep.subr.mxu0 %v3066
    %3467 = vmatpush1.msra.mxu0 %v3065
    %3468 = vmatprep.subr.mxu0 0.0
    %3469 = vmatpush1.msra.mxu0 0.0
    %3470 = vmatprep.subr.mxu0 0.0
    %3471 = vmatpush1.msra.mxu0 0.0
    %3472 = vmatprep.subr.mxu0 0.0
    %3473 = vmatpush1.msra.mxu0 0.0
    %3474 = vmatprep.subr.mxu0 0.0
    %3475 = vmatpush1.msra.mxu0 0.0
    %3476 = vmatprep.subr.mxu0 0.0
    %3477 = vmatpush1.msra.mxu0 0.0
    %3478 = vmatprep.subr.mxu0 0.0
    %3479 = vmatpush1.msra.mxu0 0.0
    %3480 = vmatprep.subr.mxu0 0.0
    %3481 = vmatpush1.msra.mxu0 0.0
    %3482 = vmatprep.subr.mxu0 0.0
    %3483 = vmatpush1.msra.mxu0 0.0
    %3484 = vmatprep.subr.mxu0 0.0
    %3485 = vmatpush1.msra.mxu0 0.0
    %3486 = vmatprep.subr.mxu0 0.0
    %3487 = vmatpush1.msra.mxu0 0.0
    %3488 = vmatprep.subr.mxu0 0.0
    %3489 = vmatpush1.msra.mxu0 0.0
    %3490 = vmatprep.subr.mxu0 0.0
    %3491 = vmatpush1.msra.mxu0 0.0
    %3492 = vmatprep.subr.mxu0 0.0
    %3493 = vmatpush1.msra.mxu0 0.0
    %3494 = vmatprep.subr.mxu0 0.0
    %3495 = vmatpush1.msra.mxu0 0.0
    %3496 = vmatprep.subr.mxu0 0.0
    %3497 = vmatpush1.msra.mxu0 0.0
    %3498 = vmatprep.subr.mxu0 0.0
    %3499 = vmatpush1.msra.mxu0 0.0
    %3500 = vmatprep.subr.mxu0 0.0
    %3501 = vmatpush1.msra.mxu0 0.0
    %3502 = vmatprep.subr.mxu0 0.0
    %3503 = vmatpush1.msra.mxu0 0.0
    %3504 = vmatprep.subr.mxu0 0.0
    %3505 = vmatpush1.msra.mxu0 0.0
    %3506 = vmatprep.subr.mxu0 0.0
    %3507 = vmatpush1.msra.mxu0 0.0
    %3508 = vmatprep.subr.mxu0 0.0
    %3509 = vmatpush1.msra.mxu0 0.0
    %3510 = vmatprep.subr.mxu0 0.0
    %3511 = vmatpush1.msra.mxu0 0.0
    %3512 = vmatprep.subr.mxu0 0.0
    %3513 = vmatpush1.msra.mxu0 0.0
    %3514 = vmatprep.subr.mxu0 0.0
    %3515 = vmatpush1.msra.mxu0 0.0
    %3516 = vmatprep.subr.mxu0 0.0
    %3517 = vmatpush1.msra.mxu0 0.0
    %3518 = vmatprep.subr.mxu0 0.0
    %3519 = vmatpush1.msra.mxu0 0.0
    %3520 = vmatprep.subr.mxu0 0.0
    %3521 = vmatpush1.msra.mxu0 0.0
    %3522 = vmatprep.subr.mxu0 0.0
    %3523 = vmatpush1.msra.mxu0 0.0
    %3524 = vmatprep.mubr.f32.mxu0 0.0
    %3525 = vmatmul.mubr.f32.gmra.mrb[0].mxu0 %v3387
    %v3526 = vpop.f32.mrb[0].mxu0
    %v3527 = vadd.f32 0.0, %v3526
    %v3528 = vpop.f32.mrb[0].mxu0
    %v3529 = vadd.f32 0.0, %v3528
    %3530 = vdwg.mxu0
    %v3531 = vlaneseq
    %v3532 = vshrl.u32 %v3531, 7
    %v3533 = vsub.s32 0, %v3532
    %v3534 = vrot.slane %v3456, %v3533
    %v3535 = vlaneseq
    %v3536 = vshrl.u32 %v3535, 7
    %v3537 = vsub.s32 0, %v3536
    %v3538 = vrot.slane %v3458, %v3537
    %v3539 = vlaneseq
    %v3540 = vshrl.u32 %v3539, 7
    %v3541 = vsub.s32 0, %v3540
    %v3542 = vrot.slane %v3527, %v3541
    %v3543 = vlaneseq
    %v3544 = vshrl.u32 %v3543, 7
    %v3545 = vsub.s32 0, %v3544
    %v3546 = vrot.slane %v3529, %v3545
    %v3547 = vmul.f32 %v3228, %v3534
    %v3548 = vmul.f32 %v3229, %v3538
    %v3549 = vmul.f32 %v3230, %v3542
    %v3550 = vmul.f32 %v3231, %v3546
    %v3551 = vld [vmem:[%s63] sm:$0xf]
    %v3553 = vlaneseq
    %v3554 = vshrl.u32 %v3553, 7
    %v3555 = vsub.s32 0, %v3554
    %v3556 = vrot.slane %v3551, %v3555
    %v3557 = vlaneseq
    %v3558 = vshrl.u32 %v3557, 7
    %v3559 = vsub.s32 1, %v3558
    %v3560 = vrot.slane %v3551, %v3559
    %v3561 = vlaneseq
    %v3562 = vshrl.u32 %v3561, 7
    %v3563 = vsub.s32 2, %v3562
    %v3564 = vrot.slane %v3551, %v3563
    %v3565 = vlaneseq
    %v3566 = vshrl.u32 %v3565, 7
    %v3567 = vsub.s32 3, %v3566
    %v3568 = vrot.slane %v3551, %v3567
    %v3573 = vmul.f32 %v3547, %v3556
    %v3574 = vmul.f32 %v3548, %v3560
    %v3575 = vmul.f32 %v3549, %v3564
    %v3576 = vmul.f32 %v3550, %v3568
    %v3577 = vld [vmem:[%s65] sm:$0xf]
    %v3579 = vlaneseq
    %v3580 = vshrl.u32 %v3579, 7
    %v3581 = vsub.s32 0, %v3580
    %v3582 = vrot.slane %v3577, %v3581
    %v3583 = vlaneseq
    %v3584 = vshrl.u32 %v3583, 7
    %v3585 = vsub.s32 1, %v3584
    %v3586 = vrot.slane %v3577, %v3585
    %v3587 = vlaneseq
    %v3588 = vshrl.u32 %v3587, 7
    %v3589 = vsub.s32 2, %v3588
    %v3590 = vrot.slane %v3577, %v3589
    %v3591 = vlaneseq
    %v3592 = vshrl.u32 %v3591, 7
    %v3593 = vsub.s32 3, %v3592
    %v3594 = vrot.slane %v3577, %v3593
    %v3599 = vadd.f32 %v3573, %v3582
    %v3600 = vadd.f32 %v3574, %v3586
    %v3601 = vadd.f32 %v3575, %v3590
    %v3602 = vadd.f32 %v3576, %v3594
    %v3603 = vpack.c.bf16 %v3599, %v3599
    %v3604 = vpack.c.bf16 %v3600, %v3600
    %v3605 = vpack.c.bf16 %v3601, %v3601
    %v3606 = vpack.c.bf16 %v3602, %v3602
    %v3611 = vcombine.low %v3603, %v3604
    %v3612 = vcombine.low %v3605, %v3606
    %v3614 = vunpack.c.l.s4 1966171168
    %v3615 = vunpack.c.0.s8 %v3614
    %v3616 = vlaneseq
    %v3617 = vshrl.u32 %v3616, 7
    %v3618 = vsub.s32 %v3615, %v3617
    %v3619 = vrot.slane %v3611, %v3618
    %v3621 = vunpack.c.l.s4 1966171168
    %v3622 = vunpack.c.0.s8 %v3621
    %v3623 = vlaneseq
    %v3624 = vshrl.u32 %v3623, 7
    %v3625 = vsub.s32 %v3622, %v3624
    %v3626 = vrot.slane %v3612, %v3625
    %v3627 = vcombine.low %v3619, %v3626
    %v3629 = vunpack.c.l.s4 1966171168
    %v3630 = vunpack.c.0.s8 %v3629
    %v3631 = vlaneseq
    %v3632 = vshrl.u32 %v3631, 7
    %v3633 = vsub.s32 %v3630, %v3632
    %v3634 = vrot.slane %v3627, %v3633
    %3636 = vst [vmem:[%s69] sm:$0xf] %v3634
    // Predicated region
    $region134: #{raw_image_vae_forward.5} parent=1 // pred_check
      _
    $region135: #{raw_image_vae_forward.5} parent=1 // pred_check_branch
      %3638 = sbr.rel (0) target = $region137
    $region136: #{raw_image_vae_forward.5} parent=1 // pred_region
      %s3640 = ssub.s32 32, 32
      %3641 = vsyncadd [#allocation3], %s3640
      %s3643 = sshll.u32 [#allocation2], 4
      %s3644 = int_to_ptr.vmem [resolvable:$true] %s3643
      %3646 = dma.vmem_to_hbm [thread:$0]  %s3644, 32, %s67, [#allocation3]
    $region137: #{raw_image_vae_forward.5} parent=1 // pred_fallthru
      _
    // Predicated region
    $region138: #{raw_image_vae_forward.5} parent=1 // pred_check
      _
    $region139: #{raw_image_vae_forward.5} parent=1 // pred_check_branch
      %3648 = sbr.rel (0) target = $region141
    $region140: #{raw_image_vae_forward.5} parent=1 // pred_region
      _
    $region141: #{raw_image_vae_forward.5} parent=1 // pred_fallthru
      _
    // Predicated region
    $region142: #{raw_image_vae_forward.5} parent=1 // pred_check
      _
    $region143: #{raw_image_vae_forward.5} parent=1 // pred_check_branch
      %3650 = sbr.rel (0) target = $region145
    $region144: #{raw_image_vae_forward.5} parent=1 // pred_region
      %3651 = dma.done [#allocation3], 32
    $region145: #{raw_image_vae_forward.5} parent=1 // pred_fallthru
      _
    // Predicated region
    $region146: #{raw_image_vae_forward.5} parent=1 // pred_check
      _
    $region147: #{raw_image_vae_forward.5} parent=1 // pred_check_branch
      %3653 = sbr.rel (0) target = $region149
    $region148: #{raw_image_vae_forward.5} parent=1 // pred_region
      _
    $region149: #{raw_image_vae_forward.5} parent=1 // pred_fallthru
      _
    %3654 = vsyncpa [#allocation3], 1

// kernel: tile.13
$region0: #{tile.13}
  #allocation0 [shape = 's32[1]{0}', space=sflag, size = 0x4, scoped, tag = 'scoped memory for tile.13']
  %s0 = inlined_call_operand.vmem [shape: f32[16], index: 0, kind: input, shape index: {}]
  %s1 = inlined_call_operand.vmem [shape: f32[16,16], index: 1, kind: output, shape index: {}]
  // Predicated region
  $region2: #{tile.13} parent=0 // pred_check
    _
  $region3: #{tile.13} parent=0 // pred_check_branch
    %3 = sbr.rel (0) target = $region5
  $region4: #{tile.13} parent=0 // pred_region
    _
  $region5: #{tile.13} parent=0 // pred_fallthru
    _
  %v4 = vld [vmem:[%s0] ss:$0 sm:$0xff]
  %5 = vst [vmem:[%s1] sm:$0xff] %v4
  %s6 = scalar_lea.vmem %s1, 8
  %7 = vst [vmem:[%s6] sm:$0xff] %v4

// kernel: tile.14
$region0: #{tile.14}
  %s0 = inlined_call_operand.vmem [shape: f32[16,16], index: 0, kind: input, shape index: {}]
  %s1 = inlined_call_operand.vmem [shape: f32[1,256], index: 1, kind: output, shape index: {}]
  $region1: #{tile.14} parent=0
    #allocation0 [shape = 'u8[8192]{0}', space=vmem, size = 0x2000, scoped, tag = 'scoped mem for output reshape']
    %s2 = smov 3
    %v3 = vld [vmem:[%s0] ss:$8 sm:%s2]
    %vm4 = vcmask 130048
    %5 = vst.msk [vmem:[#allocation0] ss:$8 sm:$0x3] %vm4, %v3
    %s6 = scalar_lea.vmem %s0, 7
    %s7 = smov 3
    %v8 = vld [vmem:[%s6] ss:$8 sm:%s7]
    %9 = vrot.lane.b32.xlu0 %v8, 112
    %v10 = vpop.permute.xlu0 %9
    %vm11 = vcmask 1048448
    %12 = vst.msk [vmem:[#allocation0] ss:$8 sm:$0x3] %vm11, %v10
    %s13 = scalar_lea.vmem %s0, 6
    %s14 = smov 3
    %v15 = vld [vmem:[%s13] ss:$8 sm:%s14]
    %16 = vrot.lane.b32.xlu0 %v15, 96
    %v17 = vpop.permute.xlu0 %16
    %vm18 = vcmask 917248
    %19 = vst.msk [vmem:[#allocation0] ss:$8 sm:$0x3] %vm18, %v17
    %s20 = scalar_lea.vmem %s0, 5
    %s21 = smov 3
    %v22 = vld [vmem:[%s20] ss:$8 sm:%s21]
    %23 = vrot.lane.b32.xlu0 %v22, 80
    %v24 = vpop.permute.xlu0 %23
    %vm25 = vcmask 786048
    %26 = vst.msk [vmem:[#allocation0] ss:$8 sm:$0x3] %vm25, %v24
    %s27 = scalar_lea.vmem %s0, 4
    %s28 = smov 3
    %v29 = vld [vmem:[%s27] ss:$8 sm:%s28]
    %30 = vrot.lane.b32.xlu0 %v29, 64
    %v31 = vpop.permute.xlu0 %30
    %vm32 = vcmask 654848
    %33 = vst.msk [vmem:[#allocation0] ss:$8 sm:$0x3] %vm32, %v31
    %s34 = scalar_lea.vmem %s0, 3
    %s35 = smov 3
    %v36 = vld [vmem:[%s34] ss:$8 sm:%s35]
    %37 = vrot.lane.b32.xlu0 %v36, 48
    %v38 = vpop.permute.xlu0 %37
    %vm39 = vcmask 523648
    %40 = vst.msk [vmem:[#allocation0] ss:$8 sm:$0x3] %vm39, %v38
    %s41 = scalar_lea.vmem %s0, 2
    %s42 = smov 3
    %v43 = vld [vmem:[%s41] ss:$8 sm:%s42]
    %44 = vrot.lane.b32.xlu0 %v43, 32
    %v45 = vpop.permute.xlu0 %44
    %vm46 = vcmask 392448
    %47 = vst.msk [vmem:[#allocation0] ss:$8 sm:$0x3] %vm46, %v45
    %s48 = scalar_lea.vmem %s0, 1
    %s49 = smov 3
    %v50 = vld [vmem:[%s48] ss:$8 sm:%s49]
    %51 = vrot.lane.b32.xlu0 %v50, 16
    %v52 = vpop.permute.xlu0 %51
    %vm53 = vcmask 261248
    %54 = vst.msk [vmem:[#allocation0] ss:$8 sm:$0x3] %vm53, %v52
    %s56 = sshllo.u32 0, 1
    %v58 = vld [vmem:[#allocation0] sm:%s56]
    %s59 = sshllo.u32 0, 1
    %60 = vst [vmem:[%s1] sm:%s59] %v58
    %s61 = scalar_lea.vmem [#allocation0], 8
    %v62 = vld [vmem:[%s61] sm:%s56]
    %s63 = sshllo.u32 0, 1
    %s64 = scalar_lea.vmem %s1, 1
    %65 = vst [vmem:[%s64] sm:%s63] %v62

// kernel: raw_image_vae_forward.6
$region0: #{raw_image_vae_forward.6}
  #allocation0 [shape = 'u32[]', space=smem, size = 0x4, offset = 0x4, fixed_abs, tag = 'smem constant byte address 0x4 - core index']
  #allocation1 [shape = 'u32[144,128]{1,0:T(1,128)}', space=vmem, size = 0x12000, scoped, tag = 'internal scratch']
  %s0 = inlined_call_operand.vmem [shape: bf16[72,128], index: 0, kind: input, shape index: {}]
  %s1 = inlined_call_operand.vmem [shape: bf16[128,256], index: 1, kind: input, shape index: {}]
  %s2 = inlined_call_operand.vmem [shape: f32[1,256], index: 2, kind: input, shape index: {}]
  %s3 = inlined_call_operand.vmem [shape: bf16[72,256], index: 3, kind: output, shape index: {}]
  %s4 = sld [smem:[#allocation0]]
  $region22: #{raw_image_vae_forward.6} parent=0
    _
  %s6 = ssub.s32 1, %s4
  %s7 = scalar_select 0, %s6, %s4
  // Predicated region
  $region2: #{raw_image_vae_forward.6} parent=0 // pred_check
    _
  $region3: #{raw_image_vae_forward.6} parent=0 // pred_check_branch
    %9 = sbr.rel (0) target = $region5
  $region4: #{raw_image_vae_forward.6} parent=0 // pred_region
    _
  $region5: #{raw_image_vae_forward.6} parent=0 // pred_fallthru
    _
  // Predicated region
  $region6: #{raw_image_vae_forward.6} parent=0 // pred_check
    _
  $region7: #{raw_image_vae_forward.6} parent=0 // pred_check_branch
    %11 = sbr.rel (0) target = $region9
  $region8: #{raw_image_vae_forward.6} parent=0 // pred_region
    _
  $region9: #{raw_image_vae_forward.6} parent=0 // pred_fallthru
    _
  // Predicated region
  $region10: #{raw_image_vae_forward.6} parent=0 // pred_check
    _
  $region11: #{raw_image_vae_forward.6} parent=0 // pred_check_branch
    %13 = sbr.rel (0) target = $region13
  $region12: #{raw_image_vae_forward.6} parent=0 // pred_region
    _
  $region13: #{raw_image_vae_forward.6} parent=0 // pred_fallthru
    _
  %v15 = vld [vmem:[%s0] sm:$0xf]
  %v16 = vld [vmem:[%s0 + $0x4] sm:$0xf]
  %v17 = vld [vmem:[%s0 + $0x8] sm:$0xf]
  %v18 = vld [vmem:[%s0 + $0xc] sm:$0xf]
  %v19 = vld [vmem:[%s0 + $0x10] sm:$0xf]
  %v20 = vld [vmem:[%s0 + $0x14] sm:$0xf]
  %v21 = vld [vmem:[%s0 + $0x18] sm:$0xf]
  %v22 = vld [vmem:[%s0 + $0x1c] sm:$0xf]
  %v23 = vld [vmem:[%s0 + $0x20] sm:$0xf]
  %v24 = vld [vmem:[%s1] sm:$0xff]
  %v25 = vld [vmem:[%s1 + $0x8] sm:$0xff]
  %v26 = vld [vmem:[%s1 + $0x10] sm:$0xff]
  %v27 = vld [vmem:[%s1 + $0x18] sm:$0xff]
  %v28 = vld [vmem:[%s1 + $0x20] sm:$0xff]
  %v29 = vld [vmem:[%s1 + $0x28] sm:$0xff]
  %v30 = vld [vmem:[%s1 + $0x30] sm:$0xff]
  %v31 = vld [vmem:[%s1 + $0x38] sm:$0xff]
  %v32 = vld [vmem:[%s1 + $0x40] sm:$0xff]
  %v33 = vld [vmem:[%s1 + $0x48] sm:$0xff]
  %v34 = vld [vmem:[%s1 + $0x50] sm:$0xff]
  %v35 = vld [vmem:[%s1 + $0x58] sm:$0xff]
  %v36 = vld [vmem:[%s1 + $0x60] sm:$0xff]
  %v37 = vld [vmem:[%s1 + $0x68] sm:$0xff]
  %v38 = vld [vmem:[%s1 + $0x70] sm:$0xff]
  %v39 = vld [vmem:[%s1 + $0x78] sm:$0xff]
  %v40 = vld [vmem:[%s2] sm:$0x3]
  %v42 = vlaneseq
  %v43 = vshrl.u32 %v42, 7
  %v44 = vsub.s32 0, %v43
  %v45 = vrot.slane %v40, %v44
  %v46 = vlaneseq
  %v47 = vshrl.u32 %v46, 7
  %v48 = vsub.s32 1, %v47
  %v49 = vrot.slane %v40, %v48
  %v61 = vunpack.c.l.b16 %v15
  %v62 = vunpack.c.l.b16 %v16
  %v63 = vunpack.c.l.b16 %v17
  %v64 = vunpack.c.l.b16 %v18
  %v65 = vunpack.c.l.b16 %v19
  %v66 = vunpack.c.l.b16 %v20
  %v67 = vunpack.c.l.b16 %v21
  %v68 = vunpack.c.l.b16 %v22
  %v69 = vunpack.c.l.b16 %v23
  %v70 = vpack.c.b16 %v62, %v61
  %v71 = vpack.c.b16 %v64, %v63
  %v72 = vpack.c.b16 %v66, %v65
  %v73 = vpack.c.b16 %v68, %v67
  %v74 = vpack.c.b16 %v69, %v69
  %v96 = vunpack.c.l.b16 %v24
  %v97 = vunpack.c.h.b16 %v24
  %v98 = vunpack.c.l.b16 %v25
  %v99 = vunpack.c.h.b16 %v25
  %v100 = vunpack.c.l.b16 %v26
  %v101 = vunpack.c.h.b16 %v26
  %v102 = vunpack.c.l.b16 %v27
  %v103 = vunpack.c.h.b16 %v27
  %v104 = vunpack.c.l.b16 %v28
  %v105 = vunpack.c.h.b16 %v28
  %v106 = vunpack.c.l.b16 %v29
  %v107 = vunpack.c.h.b16 %v29
  %v108 = vunpack.c.l.b16 %v30
  %v109 = vunpack.c.h.b16 %v30
  %v110 = vunpack.c.l.b16 %v31
  %v111 = vunpack.c.h.b16 %v31
  %v112 = vunpack.c.l.b16 %v32
  %v113 = vunpack.c.h.b16 %v32
  %v114 = vunpack.c.l.b16 %v33
  %v115 = vunpack.c.h.b16 %v33
  %v116 = vunpack.c.l.b16 %v34
  %v117 = vunpack.c.h.b16 %v34
  %v118 = vunpack.c.l.b16 %v35
  %v119 = vunpack.c.h.b16 %v35
  %v120 = vunpack.c.l.b16 %v36
  %v121 = vunpack.c.h.b16 %v36
  %v122 = vunpack.c.l.b16 %v37
  %v123 = vunpack.c.h.b16 %v37
  %v124 = vunpack.c.l.b16 %v38
  %v125 = vunpack.c.h.b16 %v38
  %v126 = vunpack.c.l.b16 %v39
  %v127 = vunpack.c.h.b16 %v39
  %v128 = vpack.c.b16 %v98, %v96
  %v129 = vpack.c.b16 %v99, %v97
  %v130 = vpack.c.b16 %v102, %v100
  %v131 = vpack.c.b16 %v103, %v101
  %v132 = vpack.c.b16 %v106, %v104
  %v133 = vpack.c.b16 %v107, %v105
  %v134 = vpack.c.b16 %v110, %v108
  %v135 = vpack.c.b16 %v111, %v109
  %v136 = vpack.c.b16 %v114, %v112
  %v137 = vpack.c.b16 %v115, %v113
  %v138 = vpack.c.b16 %v118, %v116
  %v139 = vpack.c.b16 %v119, %v117
  %v140 = vpack.c.b16 %v122, %v120
  %v141 = vpack.c.b16 %v123, %v121
  %v142 = vpack.c.b16 %v126, %v124
  %v143 = vpack.c.b16 %v127, %v125
  %160 = vmatprep.subr.bf16.mxu0 %v129
  %161 = vmatpush1.bf16.msra.mxu0 %v128
  %162 = vmatprep.subr.bf16.mxu0 %v131
  %163 = vmatpush1.bf16.msra.mxu0 %v130
  %164 = vmatprep.subr.bf16.mxu0 %v133
  %165 = vmatpush1.bf16.msra.mxu0 %v132
  %166 = vmatprep.subr.bf16.mxu0 %v135
  %167 = vmatpush1.bf16.msra.mxu0 %v134
  %168 = vmatprep.subr.bf16.mxu0 %v137
  %169 = vmatpush1.bf16.msra.mxu0 %v136
  %170 = vmatprep.subr.bf16.mxu0 %v139
  %171 = vmatpush1.bf16.msra.mxu0 %v138
  %172 = vmatprep.subr.bf16.mxu0 %v141
  %173 = vmatpush1.bf16.msra.mxu0 %v140
  %174 = vmatprep.subr.bf16.mxu0 %v143
  %175 = vmatpush1.bf16.msra.mxu0 %v142
  %176 = vmatprep.subr.bf16.mxu0 0
  %177 = vmatpush1.bf16.msra.mxu0 0
  %178 = vmatprep.subr.bf16.mxu0 0
  %179 = vmatpush1.bf16.msra.mxu0 0
  %180 = vmatprep.subr.bf16.mxu0 0
  %181 = vmatpush1.bf16.msra.mxu0 0
  %182 = vmatprep.subr.bf16.mxu0 0
  %183 = vmatpush1.bf16.msra.mxu0 0
  %184 = vmatprep.subr.bf16.mxu0 0
  %185 = vmatpush1.bf16.msra.mxu0 0
  %186 = vmatprep.subr.bf16.mxu0 0
  %187 = vmatpush1.bf16.msra.mxu0 0
  %188 = vmatprep.subr.bf16.mxu0 0
  %189 = vmatpush1.bf16.msra.mxu0 0
  %190 = vmatprep.subr.bf16.mxu0 0
  %191 = vmatpush1.bf16.msra.mxu0 0
  %192 = vmatprep.mubr.bf16.mxu0 0
  %193 = vmatmul.mubr.bf16.gmra.mrb[0].mxu0 %v70
  %v194 = vpop.f32.mrb[0].mxu0
  %v195 = vadd.f32 %v45, %v194
  %v196 = vpop.f32.mrb[0].mxu0
  %v197 = vadd.f32 %v49, %v196
  %v198 = vpop.f32.mrb[0].mxu0
  %v199 = vadd.f32 %v45, %v198
  %v200 = vpop.f32.mrb[0].mxu0
  %v201 = vadd.f32 %v49, %v200
  %202 = vmatprep.mubr.bf16.mxu0 0
  %203 = vmatmul.mubr.bf16.gmra.mrb[0].mxu0 %v71
  %v204 = vpop.f32.mrb[0].mxu0
  %v205 = vadd.f32 %v45, %v204
  %v206 = vpop.f32.mrb[0].mxu0
  %v207 = vadd.f32 %v49, %v206
  %v208 = vpop.f32.mrb[0].mxu0
  %v209 = vadd.f32 %v45, %v208
  %v210 = vpop.f32.mrb[0].mxu0
  %v211 = vadd.f32 %v49, %v210
  %212 = vmatprep.mubr.bf16.mxu0 0
  %213 = vmatmul.mubr.bf16.gmra.mrb[0].mxu0 %v72
  %v214 = vpop.f32.mrb[0].mxu0
  %v215 = vadd.f32 %v45, %v214
  %v216 = vpop.f32.mrb[0].mxu0
  %v217 = vadd.f32 %v49, %v216
  %v218 = vpop.f32.mrb[0].mxu0
  %v219 = vadd.f32 %v45, %v218
  %v220 = vpop.f32.mrb[0].mxu0
  %v221 = vadd.f32 %v49, %v220
  %222 = vmatprep.mubr.bf16.mxu0 0
  %223 = vmatmul.mubr.bf16.gmra.mrb[0].mxu0 %v73
  %v224 = vpop.f32.mrb[0].mxu0
  %v225 = vadd.f32 %v45, %v224
  %v226 = vpop.f32.mrb[0].mxu0
  %v227 = vadd.f32 %v49, %v226
  %v228 = vpop.f32.mrb[0].mxu0
  %v229 = vadd.f32 %v45, %v228
  %v230 = vpop.f32.mrb[0].mxu0
  %v231 = vadd.f32 %v49, %v230
  %232 = vmatprep.mubr.bf16.mxu0 0
  %233 = vmatmul.mubr.bf16.gmra.mrb[0].mxu0 %v74
  %v234 = vpop.f32.mrb[0].mxu0
  %v235 = vadd.f32 %v45, %v234
  %v236 = vpop.f32.mrb[0].mxu0
  %v237 = vadd.f32 %v49, %v236
  %v238 = vpop.f32.mrb[0].mxu0
  %v239 = vpop.f32.mrb[0].mxu0
  %240 = vdwg.mxu0
  %vm241 = vcmp.gt.f32.partialorder %v195, 0.0
  %vm242 = vcmp.gt.f32.partialorder %v197, 0.0
  %vm243 = vcmp.gt.f32.partialorder %v199, 0.0
  %vm244 = vcmp.gt.f32.partialorder %v201, 0.0
  %vm245 = vcmp.gt.f32.partialorder %v205, 0.0
  %vm246 = vcmp.gt.f32.partialorder %v207, 0.0
  %vm247 = vcmp.gt.f32.partialorder %v209, 0.0
  %vm248 = vcmp.gt.f32.partialorder %v211, 0.0
  %vm249 = vcmp.gt.f32.partialorder %v215, 0.0
  %vm250 = vcmp.gt.f32.partialorder %v217, 0.0
  %vm251 = vcmp.gt.f32.partialorder %v219, 0.0
  %vm252 = vcmp.gt.f32.partialorder %v221, 0.0
  %vm253 = vcmp.gt.f32.partialorder %v225, 0.0
  %vm254 = vcmp.gt.f32.partialorder %v227, 0.0
  %vm255 = vcmp.gt.f32.partialorder %v229, 0.0
  %vm256 = vcmp.gt.f32.partialorder %v231, 0.0
  %vm257 = vcmp.gt.f32.partialorder %v235, 0.0
  %vm258 = vcmp.gt.f32.partialorder %v237, 0.0
  %v259 = vmul.f32 %v195, 0.01
  %v260 = vmul.f32 %v197, 0.01
  %v261 = vmul.f32 %v199, 0.01
  %v262 = vmul.f32 %v201, 0.01
  %v263 = vmul.f32 %v205, 0.01
  %v264 = vmul.f32 %v207, 0.01
  %v265 = vmul.f32 %v209, 0.01
  %v266 = vmul.f32 %v211, 0.01
  %v267 = vmul.f32 %v215, 0.01
  %v268 = vmul.f32 %v217, 0.01
  %v269 = vmul.f32 %v219, 0.01
  %v270 = vmul.f32 %v221, 0.01
  %v271 = vmul.f32 %v225, 0.01
  %v272 = vmul.f32 %v227, 0.01
  %v273 = vmul.f32 %v229, 0.01
  %v274 = vmul.f32 %v231, 0.01
  %v275 = vmul.f32 %v235, 0.01
  %v276 = vmul.f32 %v237, 0.01
  %v277 = vsel %vm241, %v195, %v259
  %v278 = vsel %vm242, %v197, %v260
  %v279 = vsel %vm243, %v199, %v261
  %v280 = vsel %vm244, %v201, %v262
  %v281 = vsel %vm245, %v205, %v263
  %v282 = vsel %vm246, %v207, %v264
  %v283 = vsel %vm247, %v209, %v265
  %v284 = vsel %vm248, %v211, %v266
  %v285 = vsel %vm249, %v215, %v267
  %v286 = vsel %vm250, %v217, %v268
  %v287 = vsel %vm251, %v219, %v269
  %v288 = vsel %vm252, %v221, %v270
  %v289 = vsel %vm253, %v225, %v271
  %v290 = vsel %vm254, %v227, %v272
  %v291 = vsel %vm255, %v229, %v273
  %v292 = vsel %vm256, %v231, %v274
  %v293 = vsel %vm257, %v235, %v275
  %v294 = vsel %vm258, %v237, %v276
  %v295 = vpack.c.bf16 %v279, %v277
  %v296 = vpack.c.bf16 %v280, %v278
  %v297 = vpack.c.bf16 %v283, %v281
  %v298 = vpack.c.bf16 %v284, %v282
  %v299 = vpack.c.bf16 %v287, %v285
  %v300 = vpack.c.bf16 %v288, %v286
  %v301 = vpack.c.bf16 %v291, %v289
  %v302 = vpack.c.bf16 %v292, %v290
  %v303 = vpack.c.bf16 %v293, %v293
  %v304 = vpack.c.bf16 %v294, %v294
  %v315 = vunpack.c.l.b16 %v295
  %v316 = vunpack.c.l.b16 %v296
  %v317 = vunpack.c.h.b16 %v295
  %v318 = vunpack.c.h.b16 %v296
  %v319 = vunpack.c.l.b16 %v297
  %v320 = vunpack.c.l.b16 %v298
  %v321 = vunpack.c.h.b16 %v297
  %v322 = vunpack.c.h.b16 %v298
  %v323 = vunpack.c.l.b16 %v299
  %v324 = vunpack.c.l.b16 %v300
  %v325 = vunpack.c.h.b16 %v299
  %v326 = vunpack.c.h.b16 %v300
  %v327 = vunpack.c.l.b16 %v301
  %v328 = vunpack.c.l.b16 %v302
  %v329 = vunpack.c.h.b16 %v301
  %v330 = vunpack.c.h.b16 %v302
  %v331 = vunpack.c.l.b16 %v303
  %v332 = vunpack.c.l.b16 %v304
  %v333 = vpack.c.b16 %v316, %v315
  %v334 = vpack.c.b16 %v318, %v317
  %v335 = vpack.c.b16 %v320, %v319
  %v336 = vpack.c.b16 %v322, %v321
  %v337 = vpack.c.b16 %v324, %v323
  %v338 = vpack.c.b16 %v326, %v325
  %v339 = vpack.c.b16 %v328, %v327
  %v340 = vpack.c.b16 %v330, %v329
  %v341 = vpack.c.b16 %v332, %v331
  %351 = vst [vmem:[%s3] sm:$0xff] %v333
  %352 = vst [vmem:[%s3 + $0x8] sm:$0xff] %v334
  %353 = vst [vmem:[%s3 + $0x10] sm:$0xff] %v335
  %354 = vst [vmem:[%s3 + $0x18] sm:$0xff] %v336
  %355 = vst [vmem:[%s3 + $0x20] sm:$0xff] %v337
  %356 = vst [vmem:[%s3 + $0x28] sm:$0xff] %v338
  %357 = vst [vmem:[%s3 + $0x30] sm:$0xff] %v339
  %358 = vst [vmem:[%s3 + $0x38] sm:$0xff] %v340
  %359 = vst [vmem:[%s3 + $0x40] sm:$0xff] %v341
  // Predicated region
  $region14: #{raw_image_vae_forward.6} parent=0 // pred_check
    _
  $region15: #{raw_image_vae_forward.6} parent=0 // pred_check_branch
    %361 = sbr.rel (0) target = $region17
  $region16: #{raw_image_vae_forward.6} parent=0 // pred_region
    _
  $region17: #{raw_image_vae_forward.6} parent=0 // pred_fallthru
    _
  // Predicated region
  $region18: #{raw_image_vae_forward.6} parent=0 // pred_check
    _
  $region19: #{raw_image_vae_forward.6} parent=0 // pred_check_branch
    %363 = sbr.rel (0) target = $region21
  $region20: #{raw_image_vae_forward.6} parent=0 // pred_region
    _
  $region21: #{raw_image_vae_forward.6} parent=0 // pred_fallthru
    _

// kernel: tile.18
$region0: #{tile.18}
  #allocation0 [shape = 's32[1]{0}', space=sflag, size = 0x4, scoped, tag = 'scoped memory for tile.18']
  %s0 = inlined_call_operand.vmem [shape: f32[3], index: 0, kind: input, shape index: {}]
  %s1 = inlined_call_operand.vmem [shape: f32[16,3], index: 1, kind: output, shape index: {}]
  // Predicated region
  $region2: #{tile.18} parent=0 // pred_check
    _
  $region3: #{tile.18} parent=0 // pred_check_branch
    %3 = sbr.rel (0) target = $region5
  $region4: #{tile.18} parent=0 // pred_region
    _
  $region5: #{tile.18} parent=0 // pred_fallthru
    _
  %v4 = vld [vmem:[%s0] ss:$0 sm:$0xff]
  %5 = vst [vmem:[%s1] sm:$0xff] %v4
  %s6 = scalar_lea.vmem %s1, 8
  %7 = vst [vmem:[%s6] sm:$0xff] %v4

// kernel: tile.0
$region0: #{tile.0}
  %s0 = inlined_call_operand.vmem [shape: f32[16,3], index: 0, kind: input, shape index: {}]
  %s1 = inlined_call_operand.vmem [shape: f32[48,1], index: 1, kind: output, shape index: {}]
  %v2 = vld [vmem:[%s0] sm:$0xff]
  %vm3 = vcmask 7168
  %4 = vst.msk [vmem:[%s1] ss:$3 sm:$0xff] %vm3, %v2
  %s5 = scalar_lea.vmem %s0, 8
  %v6 = vld [vmem:[%s5] sm:$0xff]
  %vm7 = vcmask 7168
  %s8 = scalar_lea.vmem %s1, 24
  %9 = vst.msk [vmem:[%s8] ss:$3 sm:$0xff] %vm7, %v6
  %v10 = vld.sshfl [vmem:[%s0] sm:$0xff pattern:$0xe3d2c1b0]
  %11 = vrot.lane.b32.xlu0 %v10, 127
  %v12 = vpop.permute.xlu0 %11
  %vm13 = vcmask 7168
  %s14 = scalar_lea.vmem %s1, 1
  %15 = vst.msk [vmem:[%s14] ss:$33 sm:$0x3] %vm13, %v12
  %s16 = scalar_lea.vmem %s1, 4294967234
  %17 = vst.msk [vmem:[%s16] ss:$33 sm:$0xc] %vm13, %v12
  %s18 = scalar_lea.vmem %s1, 4294967171
  %19 = vst.msk [vmem:[%s18] ss:$33 sm:$0x30] %vm13, %v12
  %s20 = scalar_lea.vmem %s1, 4294967108
  %21 = vst.msk [vmem:[%s20] ss:$33 sm:$0xc0] %vm13, %v12
  %s22 = scalar_lea.vmem %s0, 4
  %v23 = vld.sshfl [vmem:[%s22] sm:$0xff pattern:$0x654321b0]
  %24 = vrot.lane.b32.xlu0 %v23, 127
  %v25 = vpop.permute.xlu0 %24
  %vm26 = vcmask 7168
  %s27 = scalar_lea.vmem %s1, 13
  %28 = vst.msk [vmem:[%s27] ss:$33 sm:$0x3] %vm26, %v25
  %s29 = scalar_lea.vmem %s1, 10
  %30 = vst.msk [vmem:[%s29] ss:$3 sm:$0xfc] %vm26, %v25
  %v31 = vld.sshfl [vmem:[%s0] sm:$0xff pattern:$0x3d2c1b0a]
  %32 = vrot.lane.b32.xlu0 %v31, 126
  %v33 = vpop.permute.xlu0 %32
  %vm34 = vcmask 7168
  %s35 = scalar_lea.vmem %s1, 32
  %36 = vst.msk [vmem:[%s35] ss:$-30 sm:$0x3] %vm34, %v33
  %s37 = scalar_lea.vmem %s1, 95
  %38 = vst.msk [vmem:[%s37] ss:$-30 sm:$0xc] %vm34, %v33
  %s39 = scalar_lea.vmem %s1, 158
  %40 = vst.msk [vmem:[%s39] ss:$-30 sm:$0x30] %vm34, %v33
  %s41 = scalar_lea.vmem %s1, 221
  %42 = vst.msk [vmem:[%s41] ss:$-30 sm:$0xc0] %vm34, %v33
  %s43 = scalar_lea.vmem %s0, 4
  %v44 = vld.sshfl [vmem:[%s43] sm:$0xff pattern:$0x54321b0a]
  %45 = vrot.lane.b32.xlu0 %v44, 126
  %v46 = vpop.permute.xlu0 %45
  %vm47 = vcmask 7168
  %s48 = scalar_lea.vmem %s1, 44
  %49 = vst.msk [vmem:[%s48] ss:$-30 sm:$0x3] %vm47, %v46
  %s50 = scalar_lea.vmem %s1, 107
  %51 = vst.msk [vmem:[%s50] ss:$-30 sm:$0xc] %vm47, %v46
  %s52 = scalar_lea.vmem %s1, 8
  %53 = vst.msk [vmem:[%s52] ss:$3 sm:$0xf0] %vm47, %v46

// kernel: raw_image_vae_forward.7
$region0: #{raw_image_vae_forward.7}
  #allocation0 [shape = 'u32[]', space=smem, size = 0x4, offset = 0x4, fixed_abs, tag = 'smem constant byte address 0x4 - core index']
  #allocation1 [shape = 'u32[144,128]{1,0:T(1,128)}', space=vmem, size = 0x12000, scoped, tag = 'internal scratch']
  %s0 = inlined_call_operand.vmem [shape: bf16[48,256], index: 0, kind: input, shape index: {}]
  %s1 = inlined_call_operand.vmem [shape: bf16[256,1152], index: 1, kind: input, shape index: {}]
  %s2 = inlined_call_operand.vmem [shape: f32[48,1], index: 2, kind: input, shape index: {}]
  %s3 = inlined_call_operand.vmem [shape: f32[48,1152], index: 3, kind: output, shape index: {}]
  %s4 = sld [smem:[#allocation0]]
  $region45: #{raw_image_vae_forward.7} parent=0
    _
  %s6 = ssub.s32 1, %s4
  %s7 = scalar_select 0, %s6, %s4
  loop: start=0, step=1, limit=4
  $region2: #{raw_image_vae_forward.7} parent=0 // loop_pre_header
    _
  $region3: #{raw_image_vae_forward.7} parent=0 // loop_header
    %s9 = sphi 0, %s13
    %p10 = scmp.ge.s32.totalorder %s9, 4
    %s19 = sphi 0, %s21
    %s22 = sphi 0, %s19
    %s23 = sphi 0, %s22
    %s39 = sphi 0, %s23
    %s43 = sphi 0, %s43
    %s45 = sphi 0, %s43
    %s46 = sphi 0, %s45
    %s60 = sphi 0, %s46
    %s66 = sphi 0, %s68
    %s69 = sphi 0, %s66
    %s70 = sphi 0, %s69
    %s86 = sphi 0, %s70
    %s92 = sphi 0, %s94
    %s95 = sphi 0, %s92
    %s96 = sphi 0, %s95
    %s112 = sphi 0, %s96
  $region4: #{raw_image_vae_forward.7} parent=0 // loop_header_branch
    %12 = sbr.rel (%p10) target = $region8
  $region5: #{raw_image_vae_forward.7} parent=0 // loop_body
    %s14 = ssub.s32 %s9, 1
    %s15 = ssub.s32 %s9, 2
    %s16 = sadd.s32 %s9, 1
    %s17 = ssub.s32 %s9, %s16
    %p18 = scmp.eq.s32.totalorder %s17, 0
    %s20 = sadd.s32 %s19, 1
    %s21 = scalar_select %p18, %s19, %s20
    %p24 = pneg %p18
    %p25 = scmp.eq.s32.totalorder %s9, 1
    %p26 = por %p24, %p25
    %p27 = scmp.ne.s32.totalorder %s19, %s22
    %p28 = scmp.eq.s32.totalorder %s9, 0
    %p29 = por %p27, %p28
    %p30 = scmp.ne.s32.totalorder %s19, %s22
    %p31 = scmp.eq.s32.totalorder %s14, 1
    %p32 = por %p30, %p31
    %p33 = scmp.ne.s32.totalorder %s22, %s23
    %p34 = scmp.eq.s32.totalorder %s14, 0
    %p35 = por %p33, %p34
    %p36 = scmp.ne.s32.totalorder %s22, %s23
    %p37 = scmp.eq.s32.totalorder %s15, 1
    %p38 = por %p36, %p37
    %p40 = scmp.ne.s32.totalorder %s23, %s39
    %p41 = scmp.eq.s32.totalorder %s15, 0
    %p42 = por %p40, %p41
    %s44 = sadd.s32 %s43, 1
    %p47 = scmp.eq.s32.totalorder %s9, 1
    %p48 = scmp.ne.s32.totalorder %s43, %s45
    %p49 = scmp.eq.s32.totalorder %s9, 0
    %p50 = por %p48, %p49
    %p51 = scmp.ne.s32.totalorder %s43, %s45
    %p52 = scmp.eq.s32.totalorder %s14, 1
    %p53 = por %p51, %p52
    %p54 = scmp.ne.s32.totalorder %s45, %s46
    %p55 = scmp.eq.s32.totalorder %s14, 0
    %p56 = por %p54, %p55
    %p57 = scmp.ne.s32.totalorder %s45, %s46
    %p58 = scmp.eq.s32.totalorder %s15, 1
    %p59 = por %p57, %p58
    %p61 = scmp.ne.s32.totalorder %s46, %s60
    %p62 = scmp.eq.s32.totalorder %s15, 0
    %p63 = por %p61, %p62
    %s64 = ssub.s32 %s9, %s16
    %p65 = scmp.eq.s32.totalorder %s64, 0
    %s67 = sadd.s32 %s66, 1
    %s68 = scalar_select %p65, %s66, %s67
    %p71 = pneg %p65
    %p72 = scmp.eq.s32.totalorder %s9, 1
    %p73 = por %p71, %p72
    %p74 = scmp.ne.s32.totalorder %s66, %s69
    %p75 = scmp.eq.s32.totalorder %s9, 0
    %p76 = por %p74, %p75
    %p77 = scmp.ne.s32.totalorder %s66, %s69
    %p78 = scmp.eq.s32.totalorder %s14, 1
    %p79 = por %p77, %p78
    %p80 = scmp.ne.s32.totalorder %s69, %s70
    %p81 = scmp.eq.s32.totalorder %s14, 0
    %p82 = por %p80, %p81
    %p83 = scmp.ne.s32.totalorder %s69, %s70
    %p84 = scmp.eq.s32.totalorder %s15, 1
    %p85 = por %p83, %p84
    %p87 = scmp.ne.s32.totalorder %s70, %s86
    %p88 = scmp.eq.s32.totalorder %s15, 0
    %p89 = por %p87, %p88
    %s90 = ssub.s32 %s9, %s16
    %p91 = scmp.eq.s32.totalorder %s90, 0
    %s93 = sadd.s32 %s92, 1
    %s94 = scalar_select %p91, %s92, %s93
    %p97 = pneg %p91
    %p98 = scmp.eq.s32.totalorder %s9, 1
    %p99 = por %p97, %p98
    %p100 = scmp.ne.s32.totalorder %s92, %s95
    %p101 = scmp.eq.s32.totalorder %s9, 0
    %p102 = por %p100, %p101
    %p103 = scmp.ne.s32.totalorder %s92, %s95
    %p104 = scmp.eq.s32.totalorder %s14, 1
    %p105 = por %p103, %p104
    %p106 = scmp.ne.s32.totalorder %s95, %s96
    %p107 = scmp.eq.s32.totalorder %s14, 0
    %p108 = por %p106, %p107
    %p109 = scmp.ne.s32.totalorder %s95, %s96
    %p110 = scmp.eq.s32.totalorder %s15, 1
    %p111 = por %p109, %p110
    %p113 = scmp.ne.s32.totalorder %s96, %s112
    %p114 = scmp.eq.s32.totalorder %s15, 0
    %p115 = por %p113, %p114
    %p116 = scmp.le.s32.totalorder 1, %s9
    %p117 = scmp.lt.s32.totalorder %s9, 3
    %p118 = pnand %p116, %p117
    %p119 = pneg %p118
    // Predicated region
    $region9: #{raw_image_vae_forward.7} parent=5 // pred_check
      _
    $region10: #{raw_image_vae_forward.7} parent=5 // pred_check_branch
      %121 = sbr.rel (%p118) target = $region12
    $region11: #{raw_image_vae_forward.7} parent=5 // pred_region
      %s122 = ssub.s32 %s9, 1
      // Predicated region
      $region13: #{raw_image_vae_forward.7} parent=11 // pred_check
        %p123 = pneg %p56
      $region14: #{raw_image_vae_forward.7} parent=11 // pred_check_branch
        %125 = sbr.rel (%p123) target = $region16
      $region15: #{raw_image_vae_forward.7} parent=11 // pred_region
        _
      $region16: #{raw_image_vae_forward.7} parent=11 // pred_fallthru
        _
    $region12: #{raw_image_vae_forward.7} parent=5 // pred_fallthru
      _
    %p126 = scmp.lt.s32.totalorder %s9, 2
    // Predicated region
    $region17: #{raw_image_vae_forward.7} parent=5 // pred_check
      %p127 = pneg %p126
    $region18: #{raw_image_vae_forward.7} parent=5 // pred_check_branch
      %129 = sbr.rel (%p127) target = $region20
    $region19: #{raw_image_vae_forward.7} parent=5 // pred_region
      // Predicated region
      $region21: #{raw_image_vae_forward.7} parent=19 // pred_check
        %p130 = pneg %p29
      $region22: #{raw_image_vae_forward.7} parent=19 // pred_check_branch
        %132 = sbr.rel (%p130) target = $region24
      $region23: #{raw_image_vae_forward.7} parent=19 // pred_region
        %s133 = smul.u32 3, %s9
        %p134 = scmp.lt.s32.totalorder %s133, 5
        %s135 = scalar_select %p134, %s133, 5
        %s136 = smul.addr %s135, 2
        %s137 = smul.addr %s136, 4
        %s138 = scalar_lea.vmem %s0, %s137
        %s139 = smul.u32 3, %s9
      $region24: #{raw_image_vae_forward.7} parent=19 // pred_fallthru
        _
      // Predicated region
      $region25: #{raw_image_vae_forward.7} parent=19 // pred_check
        %p140 = pneg %p76
      $region26: #{raw_image_vae_forward.7} parent=19 // pred_check_branch
        %142 = sbr.rel (%p140) target = $region28
      $region27: #{raw_image_vae_forward.7} parent=19 // pred_region
        %s143 = smul.u32 3, %s9
        %p144 = scmp.lt.s32.totalorder %s143, 5
        %s145 = scalar_select %p144, %s143, 5
        %s146 = smul.addr %s145, 8
        %s147 = scalar_lea.vmem %s2, %s146
        %s148 = smul.u32 3, %s9
      $region28: #{raw_image_vae_forward.7} parent=19 // pred_fallthru
        _
    $region20: #{raw_image_vae_forward.7} parent=5 // pred_fallthru
      _
    %p149 = scmp.le.s32.totalorder 1, %s9
    %p150 = scmp.lt.s32.totalorder %s9, 3
    %p151 = pnand %p149, %p150
    %p152 = pneg %p151
    // Predicated region
    $region29: #{raw_image_vae_forward.7} parent=5 // pred_check
      _
    $region30: #{raw_image_vae_forward.7} parent=5 // pred_check_branch
      %154 = sbr.rel (%p151) target = $region32
    $region31: #{raw_image_vae_forward.7} parent=5 // pred_region
      %s155 = ssub.s32 %s9, 1
      %s156 = smul.u32 3, %s14
      %p157 = scmp.lt.s32.totalorder %s156, 5
      %s158 = scalar_select %p157, %s156, 5
      %s159 = smul.addr %s158, 2
      %s160 = smul.addr %s159, 4
      %s161 = scalar_lea.vmem %s0, %s160
      %p162 = pneg %p35
      %p163 = pneg %p32
      %p164 = pneg %p56
      %p165 = pneg %p53
      %s166 = smul.u32 3, %s14
      %p167 = scmp.lt.s32.totalorder %s166, 5
      %s168 = scalar_select %p167, %s166, 5
      %s169 = smul.addr %s168, 8
      %s170 = scalar_lea.vmem %s2, %s169
      %p171 = pneg %p82
      %p172 = pneg %p79
      %p173 = pneg %p108
      %p174 = pneg %p105
      %s175 = smul.u32 3, %s14
      %p176 = scmp.lt.s32.totalorder %s175, 5
      %s177 = scalar_select %p176, %s175, 5
      %s178 = smul.addr %s177, 9
      %s179 = smul.addr %s178, 8
      %s180 = scalar_lea.vmem %s3, %s179
      %s181 = smul.u32 3, %s14
      %p182 = scmp.lt.s32.totalorder %s181, 5
      %s183 = scalar_select %p182, %s181, 5
      %s184 = smul.addr %s183, 2
      %s185 = smul.addr %s184, 4
      %s186 = scalar_lea.vmem %s0, %s185
      %s187 = smul.u32 3, %s14
      %s188 = smul.u32 3, %s14
      %p189 = scmp.lt.s32.totalorder %s188, 5
      %s190 = scalar_select %p189, %s188, 5
      %s191 = smul.addr %s190, 8
      %s192 = scalar_lea.vmem %s2, %s191
      %s193 = smul.u32 3, %s14
      %s194 = smul.u32 3, %s14
      %p195 = scmp.lt.s32.totalorder %s194, 5
      %s196 = scalar_select %p195, %s194, 5
      %s197 = smul.addr %s196, 9
      %s198 = smul.addr %s197, 8
      %s199 = scalar_lea.vmem %s3, %s198
      %s200 = smul.u32 3, %s14
      %v202 = vld [vmem:[%s186] sm:$0xff]
      %v203 = vld [vmem:[%s186 + $0x8] sm:$0xff]
      %v204 = vld [vmem:[%s186 + $0x10] sm:$0xff]
      %v205 = vld [vmem:[%s1] sm:$0xff]
      %v206 = vld [vmem:[%s1 + $0x8] sm:$0xff]
      %v207 = vld [vmem:[%s1 + $0x10] sm:$0xff]
      %v208 = vld [vmem:[%s1 + $0x18] sm:$0xff]
      %v209 = vld [vmem:[%s1 + $0x20] sm:$0xf]
      %v210 = vld [vmem:[%s1 + $0x24] sm:$0xff]
      %v211 = vld [vmem:[%s1 + $0x2c] sm:$0xff]
      %v212 = vld [vmem:[%s1 + $0x34] sm:$0xff]
      %v213 = vld [vmem:[%s1 + $0x3c] sm:$0xff]
      %v214 = vld [vmem:[%s1 + $0x44] sm:$0xf]
      %v215 = vld [vmem:[%s1 + $0x48] sm:$0xff]
      %v216 = vld [vmem:[%s1 + $0x50] sm:$0xff]
      %v217 = vld [vmem:[%s1 + $0x58] sm:$0xff]
      %v218 = vld [vmem:[%s1 + $0x60] sm:$0xff]
      %v219 = vld [vmem:[%s1 + $0x68] sm:$0xf]
      %v220 = vld [vmem:[%s1 + $0x6c] sm:$0xff]
      %v221 = vld [vmem:[%s1 + $0x74] sm:$0xff]
      %v222 = vld [vmem:[%s1 + $0x7c] sm:$0xff]
      %v223 = vld [vmem:[%s1 + $0x84] sm:$0xff]
      %v224 = vld [vmem:[%s1 + $0x8c] sm:$0xf]
      %v225 = vld [vmem:[%s1 + $0x90] sm:$0xff]
      %v226 = vld [vmem:[%s1 + $0x98] sm:$0xff]
      %v227 = vld [vmem:[%s1 + $0xa0] sm:$0xff]
      %v228 = vld [vmem:[%s1 + $0xa8] sm:$0xff]
      %v229 = vld [vmem:[%s1 + $0xb0] sm:$0xf]
      %v230 = vld [vmem:[%s1 + $0xb4] sm:$0xff]
      %v231 = vld [vmem:[%s1 + $0xbc] sm:$0xff]
      %v232 = vld [vmem:[%s1 + $0xc4] sm:$0xff]
      %v233 = vld [vmem:[%s1 + $0xcc] sm:$0xff]
      %v234 = vld [vmem:[%s1 + $0xd4] sm:$0xf]
      %v235 = vld [vmem:[%s1 + $0xd8] sm:$0xff]
      %v236 = vld [vmem:[%s1 + $0xe0] sm:$0xff]
      %v237 = vld [vmem:[%s1 + $0xe8] sm:$0xff]
      %v238 = vld [vmem:[%s1 + $0xf0] sm:$0xff]
      %v239 = vld [vmem:[%s1 + $0xf8] sm:$0xf]
      %v240 = vld [vmem:[%s1 + $0xfc] sm:$0xff]
      %v241 = vld [vmem:[%s1 + $0x104] sm:$0xff]
      %v242 = vld [vmem:[%s1 + $0x10c] sm:$0xff]
      %v243 = vld [vmem:[%s1 + $0x114] sm:$0xff]
      %v244 = vld [vmem:[%s1 + $0x11c] sm:$0xf]
      %v245 = vld [vmem:[%s1 + $0x120] sm:$0xff]
      %v246 = vld [vmem:[%s1 + $0x128] sm:$0xff]
      %v247 = vld [vmem:[%s1 + $0x130] sm:$0xff]
      %v248 = vld [vmem:[%s1 + $0x138] sm:$0xff]
      %v249 = vld [vmem:[%s1 + $0x140] sm:$0xf]
      %v250 = vld [vmem:[%s1 + $0x144] sm:$0xff]
      %v251 = vld [vmem:[%s1 + $0x14c] sm:$0xff]
      %v252 = vld [vmem:[%s1 + $0x154] sm:$0xff]
      %v253 = vld [vmem:[%s1 + $0x15c] sm:$0xff]
      %v254 = vld [vmem:[%s1 + $0x164] sm:$0xf]
      %v255 = vld [vmem:[%s1 + $0x168] sm:$0xff]
      %v256 = vld [vmem:[%s1 + $0x170] sm:$0xff]
      %v257 = vld [vmem:[%s1 + $0x178] sm:$0xff]
      %v258 = vld [vmem:[%s1 + $0x180] sm:$0xff]
      %v259 = vld [vmem:[%s1 + $0x188] sm:$0xf]
      %v260 = vld [vmem:[%s1 + $0x18c] sm:$0xff]
      %v261 = vld [vmem:[%s1 + $0x194] sm:$0xff]
      %v262 = vld [vmem:[%s1 + $0x19c] sm:$0xff]
      %v263 = vld [vmem:[%s1 + $0x1a4] sm:$0xff]
      %v264 = vld [vmem:[%s1 + $0x1ac] sm:$0xf]
      %v265 = vld [vmem:[%s1 + $0x1b0] sm:$0xff]
      %v266 = vld [vmem:[%s1 + $0x1b8] sm:$0xff]
      %v267 = vld [vmem:[%s1 + $0x1c0] sm:$0xff]
      %v268 = vld [vmem:[%s1 + $0x1c8] sm:$0xff]
      %v269 = vld [vmem:[%s1 + $0x1d0] sm:$0xf]
      %v270 = vld [vmem:[%s1 + $0x1d4] sm:$0xff]
      %v271 = vld [vmem:[%s1 + $0x1dc] sm:$0xff]
      %v272 = vld [vmem:[%s1 + $0x1e4] sm:$0xff]
      %v273 = vld [vmem:[%s1 + $0x1ec] sm:$0xff]
      %v274 = vld [vmem:[%s1 + $0x1f4] sm:$0xf]
      %v275 = vld [vmem:[%s1 + $0x1f8] sm:$0xff]
      %v276 = vld [vmem:[%s1 + $0x200] sm:$0xff]
      %v277 = vld [vmem:[%s1 + $0x208] sm:$0xff]
      %v278 = vld [vmem:[%s1 + $0x210] sm:$0xff]
      %v279 = vld [vmem:[%s1 + $0x218] sm:$0xf]
      %v280 = vld [vmem:[%s1 + $0x21c] sm:$0xff]
      %v281 = vld [vmem:[%s1 + $0x224] sm:$0xff]
      %v282 = vld [vmem:[%s1 + $0x22c] sm:$0xff]
      %v283 = vld [vmem:[%s1 + $0x234] sm:$0xff]
      %v284 = vld [vmem:[%s1 + $0x23c] sm:$0xf]
      %v285 = vld [vmem:[%s1 + $0x240] sm:$0xff]
      %v286 = vld [vmem:[%s1 + $0x248] sm:$0xff]
      %v287 = vld [vmem:[%s1 + $0x250] sm:$0xff]
      %v288 = vld [vmem:[%s1 + $0x258] sm:$0xff]
      %v289 = vld [vmem:[%s1 + $0x260] sm:$0xf]
      %v290 = vld [vmem:[%s1 + $0x264] sm:$0xff]
      %v291 = vld [vmem:[%s1 + $0x26c] sm:$0xff]
      %v292 = vld [vmem:[%s1 + $0x274] sm:$0xff]
      %v293 = vld [vmem:[%s1 + $0x27c] sm:$0xff]
      %v294 = vld [vmem:[%s1 + $0x284] sm:$0xf]
      %v295 = vld [vmem:[%s1 + $0x288] sm:$0xff]
      %v296 = vld [vmem:[%s1 + $0x290] sm:$0xff]
      %v297 = vld [vmem:[%s1 + $0x298] sm:$0xff]
      %v298 = vld [vmem:[%s1 + $0x2a0] sm:$0xff]
      %v299 = vld [vmem:[%s1 + $0x2a8] sm:$0xf]
      %v300 = vld [vmem:[%s1 + $0x2ac] sm:$0xff]
      %v301 = vld [vmem:[%s1 + $0x2b4] sm:$0xff]
      %v302 = vld [vmem:[%s1 + $0x2bc] sm:$0xff]
      %v303 = vld [vmem:[%s1 + $0x2c4] sm:$0xff]
      %v304 = vld [vmem:[%s1 + $0x2cc] sm:$0xf]
      %v305 = vld [vmem:[%s1 + $0x2d0] sm:$0xff]
      %v306 = vld [vmem:[%s1 + $0x2d8] sm:$0xff]
      %v307 = vld [vmem:[%s1 + $0x2e0] sm:$0xff]
      %v308 = vld [vmem:[%s1 + $0x2e8] sm:$0xff]
      %v309 = vld [vmem:[%s1 + $0x2f0] sm:$0xf]
      %v310 = vld [vmem:[%s1 + $0x2f4] sm:$0xff]
      %v311 = vld [vmem:[%s1 + $0x2fc] sm:$0xff]
      %v312 = vld [vmem:[%s1 + $0x304] sm:$0xff]
      %v313 = vld [vmem:[%s1 + $0x30c] sm:$0xff]
      %v314 = vld [vmem:[%s1 + $0x314] sm:$0xf]
      %v315 = vld [vmem:[%s1 + $0x318] sm:$0xff]
      %v316 = vld [vmem:[%s1 + $0x320] sm:$0xff]
      %v317 = vld [vmem:[%s1 + $0x328] sm:$0xff]
      %v318 = vld [vmem:[%s1 + $0x330] sm:$0xff]
      %v319 = vld [vmem:[%s1 + $0x338] sm:$0xf]
      %v320 = vld [vmem:[%s1 + $0x33c] sm:$0xff]
      %v321 = vld [vmem:[%s1 + $0x344] sm:$0xff]
      %v322 = vld [vmem:[%s1 + $0x34c] sm:$0xff]
      %v323 = vld [vmem:[%s1 + $0x354] sm:$0xff]
      %v324 = vld [vmem:[%s1 + $0x35c] sm:$0xf]
      %v325 = vld [vmem:[%s1 + $0x360] sm:$0xff]
      %v326 = vld [vmem:[%s1 + $0x368] sm:$0xff]
      %v327 = vld [vmem:[%s1 + $0x370] sm:$0xff]
      %v328 = vld [vmem:[%s1 + $0x378] sm:$0xff]
      %v329 = vld [vmem:[%s1 + $0x380] sm:$0xf]
      %v330 = vld [vmem:[%s1 + $0x384] sm:$0xff]
      %v331 = vld [vmem:[%s1 + $0x38c] sm:$0xff]
      %v332 = vld [vmem:[%s1 + $0x394] sm:$0xff]
      %v333 = vld [vmem:[%s1 + $0x39c] sm:$0xff]
      %v334 = vld [vmem:[%s1 + $0x3a4] sm:$0xf]
      %v335 = vld [vmem:[%s1 + $0x3a8] sm:$0xff]
      %v336 = vld [vmem:[%s1 + $0x3b0] sm:$0xff]
      %v337 = vld [vmem:[%s1 + $0x3b8] sm:$0xff]
      %v338 = vld [vmem:[%s1 + $0x3c0] sm:$0xff]
      %v339 = vld [vmem:[%s1 + $0x3c8] sm:$0xf]
      %v340 = vld [vmem:[%s1 + $0x3cc] sm:$0xff]
      %v341 = vld [vmem:[%s1 + $0x3d4] sm:$0xff]
      %v342 = vld [vmem:[%s1 + $0x3dc] sm:$0xff]
      %v343 = vld [vmem:[%s1 + $0x3e4] sm:$0xff]
      %v344 = vld [vmem:[%s1 + $0x3ec] sm:$0xf]
      %v345 = vld [vmem:[%s1 + $0x3f0] sm:$0xff]
      %v346 = vld [vmem:[%s1 + $0x3f8] sm:$0xff]
      %v347 = vld [vmem:[%s1 + $0x400] sm:$0xff]
      %v348 = vld [vmem:[%s1 + $0x408] sm:$0xff]
      %v349 = vld [vmem:[%s1 + $0x410] sm:$0xf]
      %v350 = vld [vmem:[%s1 + $0x414] sm:$0xff]
      %v351 = vld [vmem:[%s1 + $0x41c] sm:$0xff]
      %v352 = vld [vmem:[%s1 + $0x424] sm:$0xff]
      %v353 = vld [vmem:[%s1 + $0x42c] sm:$0xff]
      %v354 = vld [vmem:[%s1 + $0x434] sm:$0xf]
      %v355 = vld [vmem:[%s1 + $0x438] sm:$0xff]
      %v356 = vld [vmem:[%s1 + $0x440] sm:$0xff]
      %v357 = vld [vmem:[%s1 + $0x448] sm:$0xff]
      %v358 = vld [vmem:[%s1 + $0x450] sm:$0xff]
      %v359 = vld [vmem:[%s1 + $0x458] sm:$0xf]
      %v360 = vld [vmem:[%s1 + $0x45c] sm:$0xff]
      %v361 = vld [vmem:[%s1 + $0x464] sm:$0xff]
      %v362 = vld [vmem:[%s1 + $0x46c] sm:$0xff]
      %v363 = vld [vmem:[%s1 + $0x474] sm:$0xff]
      %v364 = vld [vmem:[%s1 + $0x47c] sm:$0xf]
      %v365 = vld [vmem:[%s192] sm:$0xff]
      %v366 = vld [vmem:[%s192 + $0x8] sm:$0xff]
      %v367 = vld [vmem:[%s192 + $0x10] sm:$0xff]
      %369 = vset.pattern.permute.xlu0 0
      %370 = vperm.xlu0 %369, %v365
      %v371 = vpop.permute.xlu0 %370
      %374 = vset.pattern.permute.xlu0 0
      %375 = vperm.xlu0 %374, %v366
      %v376 = vpop.permute.xlu0 %375
      %379 = vset.pattern.permute.xlu0 0
      %380 = vperm.xlu0 %379, %v367
      %v381 = vpop.permute.xlu0 %380
      %v386 = vunpack.c.l.b16 %v202
      %v387 = vunpack.c.h.b16 %v202
      %v388 = vunpack.c.l.b16 %v203
      %v389 = vunpack.c.h.b16 %v203
      %v390 = vunpack.c.l.b16 %v204
      %v391 = vunpack.c.h.b16 %v204
      %v392 = vpack.c.b16 %v388, %v386
      %v393 = vpack.c.b16 %v389, %v387
      %v394 = vpack.c.b16 %v390, %v390
      %v395 = vpack.c.b16 %v391, %v391
      %v560 = vunpack.c.l.b16 %v205
      %v561 = vunpack.c.h.b16 %v205
      %v562 = vunpack.c.l.b16 %v206
      %v563 = vunpack.c.h.b16 %v206
      %v564 = vunpack.c.l.b16 %v207
      %v565 = vunpack.c.h.b16 %v207
      %v566 = vunpack.c.l.b16 %v208
      %v567 = vunpack.c.h.b16 %v208
      %v568 = vunpack.c.l.b16 %v209
      %v569 = vunpack.c.l.b16 %v210
      %v570 = vunpack.c.h.b16 %v210
      %v571 = vunpack.c.l.b16 %v211
      %v572 = vunpack.c.h.b16 %v211
      %v573 = vunpack.c.l.b16 %v212
      %v574 = vunpack.c.h.b16 %v212
      %v575 = vunpack.c.l.b16 %v213
      %v576 = vunpack.c.h.b16 %v213
      %v577 = vunpack.c.l.b16 %v214
      %v578 = vunpack.c.l.b16 %v215
      %v579 = vunpack.c.h.b16 %v215
      %v580 = vunpack.c.l.b16 %v216
      %v581 = vunpack.c.h.b16 %v216
      %v582 = vunpack.c.l.b16 %v217
      %v583 = vunpack.c.h.b16 %v217
      %v584 = vunpack.c.l.b16 %v218
      %v585 = vunpack.c.h.b16 %v218
      %v586 = vunpack.c.l.b16 %v219
      %v587 = vunpack.c.l.b16 %v220
      %v588 = vunpack.c.h.b16 %v220
      %v589 = vunpack.c.l.b16 %v221
      %v590 = vunpack.c.h.b16 %v221
      %v591 = vunpack.c.l.b16 %v222
      %v592 = vunpack.c.h.b16 %v222
      %v593 = vunpack.c.l.b16 %v223
      %v594 = vunpack.c.h.b16 %v223
      %v595 = vunpack.c.l.b16 %v224
      %v596 = vunpack.c.l.b16 %v225
      %v597 = vunpack.c.h.b16 %v225
      %v598 = vunpack.c.l.b16 %v226
      %v599 = vunpack.c.h.b16 %v226
      %v600 = vunpack.c.l.b16 %v227
      %v601 = vunpack.c.h.b16 %v227
      %v602 = vunpack.c.l.b16 %v228
      %v603 = vunpack.c.h.b16 %v228
      %v604 = vunpack.c.l.b16 %v229
      %v605 = vunpack.c.l.b16 %v230
      %v606 = vunpack.c.h.b16 %v230
      %v607 = vunpack.c.l.b16 %v231
      %v608 = vunpack.c.h.b16 %v231
      %v609 = vunpack.c.l.b16 %v232
      %v610 = vunpack.c.h.b16 %v232
      %v611 = vunpack.c.l.b16 %v233
      %v612 = vunpack.c.h.b16 %v233
      %v613 = vunpack.c.l.b16 %v234
      %v614 = vunpack.c.l.b16 %v235
      %v615 = vunpack.c.h.b16 %v235
      %v616 = vunpack.c.l.b16 %v236
      %v617 = vunpack.c.h.b16 %v236
      %v618 = vunpack.c.l.b16 %v237
      %v619 = vunpack.c.h.b16 %v237
      %v620 = vunpack.c.l.b16 %v238
      %v621 = vunpack.c.h.b16 %v238
      %v622 = vunpack.c.l.b16 %v239
      %v623 = vunpack.c.l.b16 %v240
      %v624 = vunpack.c.h.b16 %v240
      %v625 = vunpack.c.l.b16 %v241
      %v626 = vunpack.c.h.b16 %v241
      %v627 = vunpack.c.l.b16 %v242
      %v628 = vunpack.c.h.b16 %v242
      %v629 = vunpack.c.l.b16 %v243
      %v630 = vunpack.c.h.b16 %v243
      %v631 = vunpack.c.l.b16 %v244
      %v632 = vunpack.c.l.b16 %v245
      %v633 = vunpack.c.h.b16 %v245
      %v634 = vunpack.c.l.b16 %v246
      %v635 = vunpack.c.h.b16 %v246
      %v636 = vunpack.c.l.b16 %v247
      %v637 = vunpack.c.h.b16 %v247
      %v638 = vunpack.c.l.b16 %v248
      %v639 = vunpack.c.h.b16 %v248
      %v640 = vunpack.c.l.b16 %v249
      %v641 = vunpack.c.l.b16 %v250
      %v642 = vunpack.c.h.b16 %v250
      %v643 = vunpack.c.l.b16 %v251
      %v644 = vunpack.c.h.b16 %v251
      %v645 = vunpack.c.l.b16 %v252
      %v646 = vunpack.c.h.b16 %v252
      %v647 = vunpack.c.l.b16 %v253
      %v648 = vunpack.c.h.b16 %v253
      %v649 = vunpack.c.l.b16 %v254
      %v650 = vunpack.c.l.b16 %v255
      %v651 = vunpack.c.h.b16 %v255
      %v652 = vunpack.c.l.b16 %v256
      %v653 = vunpack.c.h.b16 %v256
      %v654 = vunpack.c.l.b16 %v257
      %v655 = vunpack.c.h.b16 %v257
      %v656 = vunpack.c.l.b16 %v258
      %v657 = vunpack.c.h.b16 %v258
      %v658 = vunpack.c.l.b16 %v259
      %v659 = vunpack.c.l.b16 %v260
      %v660 = vunpack.c.h.b16 %v260
      %v661 = vunpack.c.l.b16 %v261
      %v662 = vunpack.c.h.b16 %v261
      %v663 = vunpack.c.l.b16 %v262
      %v664 = vunpack.c.h.b16 %v262
      %v665 = vunpack.c.l.b16 %v263
      %v666 = vunpack.c.h.b16 %v263
      %v667 = vunpack.c.l.b16 %v264
      %v668 = vunpack.c.l.b16 %v265
      %v669 = vunpack.c.h.b16 %v265
      %v670 = vunpack.c.l.b16 %v266
      %v671 = vunpack.c.h.b16 %v266
      %v672 = vunpack.c.l.b16 %v267
      %v673 = vunpack.c.h.b16 %v267
      %v674 = vunpack.c.l.b16 %v268
      %v675 = vunpack.c.h.b16 %v268
      %v676 = vunpack.c.l.b16 %v269
      %v677 = vunpack.c.l.b16 %v270
      %v678 = vunpack.c.h.b16 %v270
      %v679 = vunpack.c.l.b16 %v271
      %v680 = vunpack.c.h.b16 %v271
      %v681 = vunpack.c.l.b16 %v272
      %v682 = vunpack.c.h.b16 %v272
      %v683 = vunpack.c.l.b16 %v273
      %v684 = vunpack.c.h.b16 %v273
      %v685 = vunpack.c.l.b16 %v274
      %v686 = vunpack.c.l.b16 %v275
      %v687 = vunpack.c.h.b16 %v275
      %v688 = vunpack.c.l.b16 %v276
      %v689 = vunpack.c.h.b16 %v276
      %v690 = vunpack.c.l.b16 %v277
      %v691 = vunpack.c.h.b16 %v277
      %v692 = vunpack.c.l.b16 %v278
      %v693 = vunpack.c.h.b16 %v278
      %v694 = vunpack.c.l.b16 %v279
      %v695 = vunpack.c.l.b16 %v280
      %v696 = vunpack.c.h.b16 %v280
      %v697 = vunpack.c.l.b16 %v281
      %v698 = vunpack.c.h.b16 %v281
      %v699 = vunpack.c.l.b16 %v282
      %v700 = vunpack.c.h.b16 %v282
      %v701 = vunpack.c.l.b16 %v283
      %v702 = vunpack.c.h.b16 %v283
      %v703 = vunpack.c.l.b16 %v284
      %v704 = vunpack.c.l.b16 %v285
      %v705 = vunpack.c.h.b16 %v285
      %v706 = vunpack.c.l.b16 %v286
      %v707 = vunpack.c.h.b16 %v286
      %v708 = vunpack.c.l.b16 %v287
      %v709 = vunpack.c.h.b16 %v287
      %v710 = vunpack.c.l.b16 %v288
      %v711 = vunpack.c.h.b16 %v288
      %v712 = vunpack.c.l.b16 %v289
      %v713 = vunpack.c.l.b16 %v290
      %v714 = vunpack.c.h.b16 %v290
      %v715 = vunpack.c.l.b16 %v291
      %v716 = vunpack.c.h.b16 %v291
      %v717 = vunpack.c.l.b16 %v292
      %v718 = vunpack.c.h.b16 %v292
      %v719 = vunpack.c.l.b16 %v293
      %v720 = vunpack.c.h.b16 %v293
      %v721 = vunpack.c.l.b16 %v294
      %v722 = vunpack.c.l.b16 %v295
      %v723 = vunpack.c.h.b16 %v295
      %v724 = vunpack.c.l.b16 %v296
      %v725 = vunpack.c.h.b16 %v296
      %v726 = vunpack.c.l.b16 %v297
      %v727 = vunpack.c.h.b16 %v297
      %v728 = vunpack.c.l.b16 %v298
      %v729 = vunpack.c.h.b16 %v298
      %v730 = vunpack.c.l.b16 %v299
      %v731 = vunpack.c.l.b16 %v300
      %v732 = vunpack.c.h.b16 %v300
      %v733 = vunpack.c.l.b16 %v301
      %v734 = vunpack.c.h.b16 %v301
      %v735 = vunpack.c.l.b16 %v302
      %v736 = vunpack.c.h.b16 %v302
      %v737 = vunpack.c.l.b16 %v303
      %v738 = vunpack.c.h.b16 %v303
      %v739 = vunpack.c.l.b16 %v304
      %v740 = vunpack.c.l.b16 %v305
      %v741 = vunpack.c.h.b16 %v305
      %v742 = vunpack.c.l.b16 %v306
      %v743 = vunpack.c.h.b16 %v306
      %v744 = vunpack.c.l.b16 %v307
      %v745 = vunpack.c.h.b16 %v307
      %v746 = vunpack.c.l.b16 %v308
      %v747 = vunpack.c.h.b16 %v308
      %v748 = vunpack.c.l.b16 %v309
      %v749 = vunpack.c.l.b16 %v310
      %v750 = vunpack.c.h.b16 %v310
      %v751 = vunpack.c.l.b16 %v311
      %v752 = vunpack.c.h.b16 %v311
      %v753 = vunpack.c.l.b16 %v312
      %v754 = vunpack.c.h.b16 %v312
      %v755 = vunpack.c.l.b16 %v313
      %v756 = vunpack.c.h.b16 %v313
      %v757 = vunpack.c.l.b16 %v314
      %v758 = vunpack.c.l.b16 %v315
      %v759 = vunpack.c.h.b16 %v315
      %v760 = vunpack.c.l.b16 %v316
      %v761 = vunpack.c.h.b16 %v316
      %v762 = vunpack.c.l.b16 %v317
      %v763 = vunpack.c.h.b16 %v317
      %v764 = vunpack.c.l.b16 %v318
      %v765 = vunpack.c.h.b16 %v318
      %v766 = vunpack.c.l.b16 %v319
      %v767 = vunpack.c.l.b16 %v320
      %v768 = vunpack.c.h.b16 %v320
      %v769 = vunpack.c.l.b16 %v321
      %v770 = vunpack.c.h.b16 %v321
      %v771 = vunpack.c.l.b16 %v322
      %v772 = vunpack.c.h.b16 %v322
      %v773 = vunpack.c.l.b16 %v323
      %v774 = vunpack.c.h.b16 %v323
      %v775 = vunpack.c.l.b16 %v324
      %v776 = vunpack.c.l.b16 %v325
      %v777 = vunpack.c.h.b16 %v325
      %v778 = vunpack.c.l.b16 %v326
      %v779 = vunpack.c.h.b16 %v326
      %v780 = vunpack.c.l.b16 %v327
      %v781 = vunpack.c.h.b16 %v327
      %v782 = vunpack.c.l.b16 %v328
      %v783 = vunpack.c.h.b16 %v328
      %v784 = vunpack.c.l.b16 %v329
      %v785 = vunpack.c.l.b16 %v330
      %v786 = vunpack.c.h.b16 %v330
      %v787 = vunpack.c.l.b16 %v331
      %v788 = vunpack.c.h.b16 %v331
      %v789 = vunpack.c.l.b16 %v332
      %v790 = vunpack.c.h.b16 %v332
      %v791 = vunpack.c.l.b16 %v333
      %v792 = vunpack.c.h.b16 %v333
      %v793 = vunpack.c.l.b16 %v334
      %v794 = vunpack.c.l.b16 %v335
      %v795 = vunpack.c.h.b16 %v335
      %v796 = vunpack.c.l.b16 %v336
      %v797 = vunpack.c.h.b16 %v336
      %v798 = vunpack.c.l.b16 %v337
      %v799 = vunpack.c.h.b16 %v337
      %v800 = vunpack.c.l.b16 %v338
      %v801 = vunpack.c.h.b16 %v338
      %v802 = vunpack.c.l.b16 %v339
      %v803 = vunpack.c.l.b16 %v340
      %v804 = vunpack.c.h.b16 %v340
      %v805 = vunpack.c.l.b16 %v341
      %v806 = vunpack.c.h.b16 %v341
      %v807 = vunpack.c.l.b16 %v342
      %v808 = vunpack.c.h.b16 %v342
      %v809 = vunpack.c.l.b16 %v343
      %v810 = vunpack.c.h.b16 %v343
      %v811 = vunpack.c.l.b16 %v344
      %v812 = vunpack.c.l.b16 %v345
      %v813 = vunpack.c.h.b16 %v345
      %v814 = vunpack.c.l.b16 %v346
      %v815 = vunpack.c.h.b16 %v346
      %v816 = vunpack.c.l.b16 %v347
      %v817 = vunpack.c.h.b16 %v347
      %v818 = vunpack.c.l.b16 %v348
      %v819 = vunpack.c.h.b16 %v348
      %v820 = vunpack.c.l.b16 %v349
      %v821 = vunpack.c.l.b16 %v350
      %v822 = vunpack.c.h.b16 %v350
      %v823 = vunpack.c.l.b16 %v351
      %v824 = vunpack.c.h.b16 %v351
      %v825 = vunpack.c.l.b16 %v352
      %v826 = vunpack.c.h.b16 %v352
      %v827 = vunpack.c.l.b16 %v353
      %v828 = vunpack.c.h.b16 %v353
      %v829 = vunpack.c.l.b16 %v354
      %v830 = vunpack.c.l.b16 %v355
      %v831 = vunpack.c.h.b16 %v355
      %v832 = vunpack.c.l.b16 %v356
      %v833 = vunpack.c.h.b16 %v356
      %v834 = vunpack.c.l.b16 %v357
      %v835 = vunpack.c.h.b16 %v357
      %v836 = vunpack.c.l.b16 %v358
      %v837 = vunpack.c.h.b16 %v358
      %v838 = vunpack.c.l.b16 %v359
      %v839 = vunpack.c.l.b16 %v360
      %v840 = vunpack.c.h.b16 %v360
      %v841 = vunpack.c.l.b16 %v361
      %v842 = vunpack.c.h.b16 %v361
      %v843 = vunpack.c.l.b16 %v362
      %v844 = vunpack.c.h.b16 %v362
      %v845 = vunpack.c.l.b16 %v363
      %v846 = vunpack.c.h.b16 %v363
      %v847 = vunpack.c.l.b16 %v364
      %v848 = vpack.c.b16 %v569, %v560
      %v849 = vpack.c.b16 %v570, %v561
      %v850 = vpack.c.b16 %v571, %v562
      %v851 = vpack.c.b16 %v572, %v563
      %v852 = vpack.c.b16 %v573, %v564
      %v853 = vpack.c.b16 %v574, %v565
      %v854 = vpack.c.b16 %v575, %v566
      %v855 = vpack.c.b16 %v576, %v567
      %v856 = vpack.c.b16 %v577, %v568
      %v857 = vpack.c.b16 %v587, %v578
      %v858 = vpack.c.b16 %v588, %v579
      %v859 = vpack.c.b16 %v589, %v580
      %v860 = vpack.c.b16 %v590, %v581
      %v861 = vpack.c.b16 %v591, %v582
      %v862 = vpack.c.b16 %v592, %v583
      %v863 = vpack.c.b16 %v593, %v584
      %v864 = vpack.c.b16 %v594, %v585
      %v865 = vpack.c.b16 %v595, %v586
      %v866 = vpack.c.b16 %v605, %v596
      %v867 = vpack.c.b16 %v606, %v597
      %v868 = vpack.c.b16 %v607, %v598
      %v869 = vpack.c.b16 %v608, %v599
      %v870 = vpack.c.b16 %v609, %v600
      %v871 = vpack.c.b16 %v610, %v601
      %v872 = vpack.c.b16 %v611, %v602
      %v873 = vpack.c.b16 %v612, %v603
      %v874 = vpack.c.b16 %v613, %v604
      %v875 = vpack.c.b16 %v623, %v614
      %v876 = vpack.c.b16 %v624, %v615
      %v877 = vpack.c.b16 %v625, %v616
      %v878 = vpack.c.b16 %v626, %v617
      %v879 = vpack.c.b16 %v627, %v618
      %v880 = vpack.c.b16 %v628, %v619
      %v881 = vpack.c.b16 %v629, %v620
      %v882 = vpack.c.b16 %v630, %v621
      %v883 = vpack.c.b16 %v631, %v622
      %v884 = vpack.c.b16 %v641, %v632
      %v885 = vpack.c.b16 %v642, %v633
      %v886 = vpack.c.b16 %v643, %v634
      %v887 = vpack.c.b16 %v644, %v635
      %v888 = vpack.c.b16 %v645, %v636
      %v889 = vpack.c.b16 %v646, %v637
      %v890 = vpack.c.b16 %v647, %v638
      %v891 = vpack.c.b16 %v648, %v639
      %v892 = vpack.c.b16 %v649, %v640
      %v893 = vpack.c.b16 %v659, %v650
      %v894 = vpack.c.b16 %v660, %v651
      %v895 = vpack.c.b16 %v661, %v652
      %v896 = vpack.c.b16 %v662, %v653
      %v897 = vpack.c.b16 %v663, %v654
      %v898 = vpack.c.b16 %v664, %v655
      %v899 = vpack.c.b16 %v665, %v656
      %v900 = vpack.c.b16 %v666, %v657
      %v901 = vpack.c.b16 %v667, %v658
      %v902 = vpack.c.b16 %v677, %v668
      %v903 = vpack.c.b16 %v678, %v669
      %v904 = vpack.c.b16 %v679, %v670
      %v905 = vpack.c.b16 %v680, %v671
      %v906 = vpack.c.b16 %v681, %v672
      %v907 = vpack.c.b16 %v682, %v673
      %v908 = vpack.c.b16 %v683, %v674
      %v909 = vpack.c.b16 %v684, %v675
      %v910 = vpack.c.b16 %v685, %v676
      %v911 = vpack.c.b16 %v695, %v686
      %v912 = vpack.c.b16 %v696, %v687
      %v913 = vpack.c.b16 %v697, %v688
      %v914 = vpack.c.b16 %v698, %v689
      %v915 = vpack.c.b16 %v699, %v690
      %v916 = vpack.c.b16 %v700, %v691
      %v917 = vpack.c.b16 %v701, %v692
      %v918 = vpack.c.b16 %v702, %v693
      %v919 = vpack.c.b16 %v703, %v694
      %v920 = vpack.c.b16 %v713, %v704
      %v921 = vpack.c.b16 %v714, %v705
      %v922 = vpack.c.b16 %v715, %v706
      %v923 = vpack.c.b16 %v716, %v707
      %v924 = vpack.c.b16 %v717, %v708
      %v925 = vpack.c.b16 %v718, %v709
      %v926 = vpack.c.b16 %v719, %v710
      %v927 = vpack.c.b16 %v720, %v711
      %v928 = vpack.c.b16 %v721, %v712
      %v929 = vpack.c.b16 %v731, %v722
      %v930 = vpack.c.b16 %v732, %v723
      %v931 = vpack.c.b16 %v733, %v724
      %v932 = vpack.c.b16 %v734, %v725
      %v933 = vpack.c.b16 %v735, %v726
      %v934 = vpack.c.b16 %v736, %v727
      %v935 = vpack.c.b16 %v737, %v728
      %v936 = vpack.c.b16 %v738, %v729
      %v937 = vpack.c.b16 %v739, %v730
      %v938 = vpack.c.b16 %v749, %v740
      %v939 = vpack.c.b16 %v750, %v741
      %v940 = vpack.c.b16 %v751, %v742
      %v941 = vpack.c.b16 %v752, %v743
      %v942 = vpack.c.b16 %v753, %v744
      %v943 = vpack.c.b16 %v754, %v745
      %v944 = vpack.c.b16 %v755, %v746
      %v945 = vpack.c.b16 %v756, %v747
      %v946 = vpack.c.b16 %v757, %v748
      %v947 = vpack.c.b16 %v767, %v758
      %v948 = vpack.c.b16 %v768, %v759
      %v949 = vpack.c.b16 %v769, %v760
      %v950 = vpack.c.b16 %v770, %v761
      %v951 = vpack.c.b16 %v771, %v762
      %v952 = vpack.c.b16 %v772, %v763
      %v953 = vpack.c.b16 %v773, %v764
      %v954 = vpack.c.b16 %v774, %v765
      %v955 = vpack.c.b16 %v775, %v766
      %v956 = vpack.c.b16 %v785, %v776
      %v957 = vpack.c.b16 %v786, %v777
      %v958 = vpack.c.b16 %v787, %v778
      %v959 = vpack.c.b16 %v788, %v779
      %v960 = vpack.c.b16 %v789, %v780
      %v961 = vpack.c.b16 %v790, %v781
      %v962 = vpack.c.b16 %v791, %v782
      %v963 = vpack.c.b16 %v792, %v783
      %v964 = vpack.c.b16 %v793, %v784
      %v965 = vpack.c.b16 %v803, %v794
      %v966 = vpack.c.b16 %v804, %v795
      %v967 = vpack.c.b16 %v805, %v796
      %v968 = vpack.c.b16 %v806, %v797
      %v969 = vpack.c.b16 %v807, %v798
      %v970 = vpack.c.b16 %v808, %v799
      %v971 = vpack.c.b16 %v809, %v800
      %v972 = vpack.c.b16 %v810, %v801
      %v973 = vpack.c.b16 %v811, %v802
      %v974 = vpack.c.b16 %v821, %v812
      %v975 = vpack.c.b16 %v822, %v813
      %v976 = vpack.c.b16 %v823, %v814
      %v977 = vpack.c.b16 %v824, %v815
      %v978 = vpack.c.b16 %v825, %v816
      %v979 = vpack.c.b16 %v826, %v817
      %v980 = vpack.c.b16 %v827, %v818
      %v981 = vpack.c.b16 %v828, %v819
      %v982 = vpack.c.b16 %v829, %v820
      %v983 = vpack.c.b16 %v839, %v830
      %v984 = vpack.c.b16 %v840, %v831
      %v985 = vpack.c.b16 %v841, %v832
      %v986 = vpack.c.b16 %v842, %v833
      %v987 = vpack.c.b16 %v843, %v834
      %v988 = vpack.c.b16 %v844, %v835
      %v989 = vpack.c.b16 %v845, %v836
      %v990 = vpack.c.b16 %v846, %v837
      %v991 = vpack.c.b16 %v847, %v838
      %1136 = vmatprep.subr.bf16.mxu0 %v849
      %1137 = vmatpush1.bf16.msra.mxu0 %v848
      %1138 = vmatprep.subr.bf16.mxu0 %v858
      %1139 = vmatpush1.bf16.msra.mxu0 %v857
      %1140 = vmatprep.subr.bf16.mxu0 %v867
      %1141 = vmatpush1.bf16.msra.mxu0 %v866
      %1142 = vmatprep.subr.bf16.mxu0 %v876
      %1143 = vmatpush1.bf16.msra.mxu0 %v875
      %1144 = vmatprep.subr.bf16.mxu0 %v885
      %1145 = vmatpush1.bf16.msra.mxu0 %v884
      %1146 = vmatprep.subr.bf16.mxu0 %v894
      %1147 = vmatpush1.bf16.msra.mxu0 %v893
      %1148 = vmatprep.subr.bf16.mxu0 %v903
      %1149 = vmatpush1.bf16.msra.mxu0 %v902
      %1150 = vmatprep.subr.bf16.mxu0 %v912
      %1151 = vmatpush1.bf16.msra.mxu0 %v911
      %1152 = vmatprep.subr.bf16.mxu0 %v921
      %1153 = vmatpush1.bf16.msra.mxu0 %v920
      %1154 = vmatprep.subr.bf16.mxu0 %v930
      %1155 = vmatpush1.bf16.msra.mxu0 %v929
      %1156 = vmatprep.subr.bf16.mxu0 %v939
      %1157 = vmatpush1.bf16.msra.mxu0 %v938
      %1158 = vmatprep.subr.bf16.mxu0 %v948
      %1159 = vmatpush1.bf16.msra.mxu0 %v947
      %1160 = vmatprep.subr.bf16.mxu0 %v957
      %1161 = vmatpush1.bf16.msra.mxu0 %v956
      %1162 = vmatprep.subr.bf16.mxu0 %v966
      %1163 = vmatpush1.bf16.msra.mxu0 %v965
      %1164 = vmatprep.subr.bf16.mxu0 %v975
      %1165 = vmatpush1.bf16.msra.mxu0 %v974
      %1166 = vmatprep.subr.bf16.mxu0 %v984
      %1167 = vmatpush1.bf16.msra.mxu0 %v983
      %1168 = vmatprep.mubr.bf16.mxu0 %v393
      %1169 = vmatmul.mubr.bf16.gmra.mrb[0].mxu0 %v392
      %v1170 = vpop.f32.mrb[0].mxu0
      %v1171 = vadd.f32 %v371, %v1170
      %v1172 = vpop.f32.mrb[0].mxu0
      %v1173 = vadd.f32 %v371, %v1172
      %v1174 = vpop.f32.mrb[0].mxu0
      %v1175 = vadd.f32 %v376, %v1174
      %v1176 = vpop.f32.mrb[0].mxu0
      %v1177 = vadd.f32 %v376, %v1176
      %1178 = vmatprep.mubr.bf16.mxu0 %v395
      %1179 = vmatmul.mubr.bf16.gmra.mrb[0].mxu0 %v394
      %v1180 = vpop.f32.mrb[0].mxu0
      %v1181 = vadd.f32 %v381, %v1180
      %v1182 = vpop.f32.mrb[0].mxu0
      %v1183 = vadd.f32 %v381, %v1182
      %v1184 = vpop.f32.mrb[0].mxu0
      %v1185 = vpop.f32.mrb[0].mxu0
      %1186 = vdwg.mxu0
      %1187 = vmatprep.subr.bf16.mxu0 %v851
      %1188 = vmatpush1.bf16.msra.mxu0 %v850
      %1189 = vmatprep.subr.bf16.mxu0 %v860
      %1190 = vmatpush1.bf16.msra.mxu0 %v859
      %1191 = vmatprep.subr.bf16.mxu0 %v869
      %1192 = vmatpush1.bf16.msra.mxu0 %v868
      %1193 = vmatprep.subr.bf16.mxu0 %v878
      %1194 = vmatpush1.bf16.msra.mxu0 %v877
      %1195 = vmatprep.subr.bf16.mxu0 %v887
      %1196 = vmatpush1.bf16.msra.mxu0 %v886
      %1197 = vmatprep.subr.bf16.mxu0 %v896
      %1198 = vmatpush1.bf16.msra.mxu0 %v895
      %1199 = vmatprep.subr.bf16.mxu0 %v905
      %1200 = vmatpush1.bf16.msra.mxu0 %v904
      %1201 = vmatprep.subr.bf16.mxu0 %v914
      %1202 = vmatpush1.bf16.msra.mxu0 %v913
      %1203 = vmatprep.subr.bf16.mxu0 %v923
      %1204 = vmatpush1.bf16.msra.mxu0 %v922
      %1205 = vmatprep.subr.bf16.mxu0 %v932
      %1206 = vmatpush1.bf16.msra.mxu0 %v931
      %1207 = vmatprep.subr.bf16.mxu0 %v941
      %1208 = vmatpush1.bf16.msra.mxu0 %v940
      %1209 = vmatprep.subr.bf16.mxu0 %v950
      %1210 = vmatpush1.bf16.msra.mxu0 %v949
      %1211 = vmatprep.subr.bf16.mxu0 %v959
      %1212 = vmatpush1.bf16.msra.mxu0 %v958
      %1213 = vmatprep.subr.bf16.mxu0 %v968
      %1214 = vmatpush1.bf16.msra.mxu0 %v967
      %1215 = vmatprep.subr.bf16.mxu0 %v977
      %1216 = vmatpush1.bf16.msra.mxu0 %v976
      %1217 = vmatprep.subr.bf16.mxu0 %v986
      %1218 = vmatpush1.bf16.msra.mxu0 %v985
      %1219 = vmatprep.mubr.bf16.mxu0 %v393
      %1220 = vmatmul.mubr.bf16.gmra.mrb[0].mxu0 %v392
      %v1221 = vpop.f32.mrb[0].mxu0
      %v1222 = vadd.f32 %v371, %v1221
      %v1223 = vpop.f32.mrb[0].mxu0
      %v1224 = vadd.f32 %v371, %v1223
      %v1225 = vpop.f32.mrb[0].mxu0
      %v1226 = vadd.f32 %v376, %v1225
      %v1227 = vpop.f32.mrb[0].mxu0
      %v1228 = vadd.f32 %v376, %v1227
      %1229 = vmatprep.mubr.bf16.mxu0 %v395
      %1230 = vmatmul.mubr.bf16.gmra.mrb[0].mxu0 %v394
      %v1231 = vpop.f32.mrb[0].mxu0
      %v1232 = vadd.f32 %v381, %v1231
      %v1233 = vpop.f32.mrb[0].mxu0
      %v1234 = vadd.f32 %v381, %v1233
      %v1235 = vpop.f32.mrb[0].mxu0
      %v1236 = vpop.f32.mrb[0].mxu0
      %1237 = vdwg.mxu0
      %1238 = vmatprep.subr.bf16.mxu0 %v853
      %1239 = vmatpush1.bf16.msra.mxu0 %v852
      %1240 = vmatprep.subr.bf16.mxu0 %v862
      %1241 = vmatpush1.bf16.msra.mxu0 %v861
      %1242 = vmatprep.subr.bf16.mxu0 %v871
      %1243 = vmatpush1.bf16.msra.mxu0 %v870
      %1244 = vmatprep.subr.bf16.mxu0 %v880
      %1245 = vmatpush1.bf16.msra.mxu0 %v879
      %1246 = vmatprep.subr.bf16.mxu0 %v889
      %1247 = vmatpush1.bf16.msra.mxu0 %v888
      %1248 = vmatprep.subr.bf16.mxu0 %v898
      %1249 = vmatpush1.bf16.msra.mxu0 %v897
      %1250 = vmatprep.subr.bf16.mxu0 %v907
      %1251 = vmatpush1.bf16.msra.mxu0 %v906
      %1252 = vmatprep.subr.bf16.mxu0 %v916
      %1253 = vmatpush1.bf16.msra.mxu0 %v915
      %1254 = vmatprep.subr.bf16.mxu0 %v925
      %1255 = vmatpush1.bf16.msra.mxu0 %v924
      %1256 = vmatprep.subr.bf16.mxu0 %v934
      %1257 = vmatpush1.bf16.msra.mxu0 %v933
      %1258 = vmatprep.subr.bf16.mxu0 %v943
      %1259 = vmatpush1.bf16.msra.mxu0 %v942
      %1260 = vmatprep.subr.bf16.mxu0 %v952
      %1261 = vmatpush1.bf16.msra.mxu0 %v951
      %1262 = vmatprep.subr.bf16.mxu0 %v961
      %1263 = vmatpush1.bf16.msra.mxu0 %v960
      %1264 = vmatprep.subr.bf16.mxu0 %v970
      %1265 = vmatpush1.bf16.msra.mxu0 %v969
      %1266 = vmatprep.subr.bf16.mxu0 %v979
      %1267 = vmatpush1.bf16.msra.mxu0 %v978
      %1268 = vmatprep.subr.bf16.mxu0 %v988
      %1269 = vmatpush1.bf16.msra.mxu0 %v987
      %1270 = vmatprep.mubr.bf16.mxu0 %v393
      %1271 = vmatmul.mubr.bf16.gmra.mrb[0].mxu0 %v392
      %v1272 = vpop.f32.mrb[0].mxu0
      %v1273 = vadd.f32 %v371, %v1272
      %v1274 = vpop.f32.mrb[0].mxu0
      %v1275 = vadd.f32 %v371, %v1274
      %v1276 = vpop.f32.mrb[0].mxu0
      %v1277 = vadd.f32 %v376, %v1276
      %v1278 = vpop.f32.mrb[0].mxu0
      %v1279 = vadd.f32 %v376, %v1278
      %1280 = vmatprep.mubr.bf16.mxu0 %v395
      %1281 = vmatmul.mubr.bf16.gmra.mrb[0].mxu0 %v394
      %v1282 = vpop.f32.mrb[0].mxu0
      %v1283 = vadd.f32 %v381, %v1282
      %v1284 = vpop.f32.mrb[0].mxu0
      %v1285 = vadd.f32 %v381, %v1284
      %v1286 = vpop.f32.mrb[0].mxu0
      %v1287 = vpop.f32.mrb[0].mxu0
      %1288 = vdwg.mxu0
      %1289 = vmatprep.subr.bf16.mxu0 %v855
      %1290 = vmatpush1.bf16.msra.mxu0 %v854
      %1291 = vmatprep.subr.bf16.mxu0 %v864
      %1292 = vmatpush1.bf16.msra.mxu0 %v863
      %1293 = vmatprep.subr.bf16.mxu0 %v873
      %1294 = vmatpush1.bf16.msra.mxu0 %v872
      %1295 = vmatprep.subr.bf16.mxu0 %v882
      %1296 = vmatpush1.bf16.msra.mxu0 %v881
      %1297 = vmatprep.subr.bf16.mxu0 %v891
      %1298 = vmatpush1.bf16.msra.mxu0 %v890
      %1299 = vmatprep.subr.bf16.mxu0 %v900
      %1300 = vmatpush1.bf16.msra.mxu0 %v899
      %1301 = vmatprep.subr.bf16.mxu0 %v909
      %1302 = vmatpush1.bf16.msra.mxu0 %v908
      %1303 = vmatprep.subr.bf16.mxu0 %v918
      %1304 = vmatpush1.bf16.msra.mxu0 %v917
      %1305 = vmatprep.subr.bf16.mxu0 %v927
      %1306 = vmatpush1.bf16.msra.mxu0 %v926
      %1307 = vmatprep.subr.bf16.mxu0 %v936
      %1308 = vmatpush1.bf16.msra.mxu0 %v935
      %1309 = vmatprep.subr.bf16.mxu0 %v945
      %1310 = vmatpush1.bf16.msra.mxu0 %v944
      %1311 = vmatprep.subr.bf16.mxu0 %v954
      %1312 = vmatpush1.bf16.msra.mxu0 %v953
      %1313 = vmatprep.subr.bf16.mxu0 %v963
      %1314 = vmatpush1.bf16.msra.mxu0 %v962
      %1315 = vmatprep.subr.bf16.mxu0 %v972
      %1316 = vmatpush1.bf16.msra.mxu0 %v971
      %1317 = vmatprep.subr.bf16.mxu0 %v981
      %1318 = vmatpush1.bf16.msra.mxu0 %v980
      %1319 = vmatprep.subr.bf16.mxu0 %v990
      %1320 = vmatpush1.bf16.msra.mxu0 %v989
      %1321 = vmatprep.mubr.bf16.mxu0 %v393
      %1322 = vmatmul.mubr.bf16.gmra.mrb[0].mxu0 %v392
      %v1323 = vpop.f32.mrb[0].mxu0
      %v1324 = vadd.f32 %v371, %v1323
      %v1325 = vpop.f32.mrb[0].mxu0
      %v1326 = vadd.f32 %v371, %v1325
      %v1327 = vpop.f32.mrb[0].mxu0
      %v1328 = vadd.f32 %v376, %v1327
      %v1329 = vpop.f32.mrb[0].mxu0
      %v1330 = vadd.f32 %v376, %v1329
      %1331 = vmatprep.mubr.bf16.mxu0 %v395
      %1332 = vmatmul.mubr.bf16.gmra.mrb[0].mxu0 %v394
      %v1333 = vpop.f32.mrb[0].mxu0
      %v1334 = vadd.f32 %v381, %v1333
      %v1335 = vpop.f32.mrb[0].mxu0
      %v1336 = vadd.f32 %v381, %v1335
      %v1337 = vpop.f32.mrb[0].mxu0
      %v1338 = vpop.f32.mrb[0].mxu0
      %1339 = vdwg.mxu0
      %1340 = vmatprep.subr.bf16.mxu0 0
      %1341 = vmatpush1.bf16.msra.mxu0 %v856
      %1342 = vmatprep.subr.bf16.mxu0 0
      %1343 = vmatpush1.bf16.msra.mxu0 %v865
      %1344 = vmatprep.subr.bf16.mxu0 0
      %1345 = vmatpush1.bf16.msra.mxu0 %v874
      %1346 = vmatprep.subr.bf16.mxu0 0
      %1347 = vmatpush1.bf16.msra.mxu0 %v883
      %1348 = vmatprep.subr.bf16.mxu0 0
      %1349 = vmatpush1.bf16.msra.mxu0 %v892
      %1350 = vmatprep.subr.bf16.mxu0 0
      %1351 = vmatpush1.bf16.msra.mxu0 %v901
      %1352 = vmatprep.subr.bf16.mxu0 0
      %1353 = vmatpush1.bf16.msra.mxu0 %v910
      %1354 = vmatprep.subr.bf16.mxu0 0
      %1355 = vmatpush1.bf16.msra.mxu0 %v919
      %1356 = vmatprep.subr.bf16.mxu0 0
      %1357 = vmatpush1.bf16.msra.mxu0 %v928
      %1358 = vmatprep.subr.bf16.mxu0 0
      %1359 = vmatpush1.bf16.msra.mxu0 %v937
      %1360 = vmatprep.subr.bf16.mxu0 0
      %1361 = vmatpush1.bf16.msra.mxu0 %v946
      %1362 = vmatprep.subr.bf16.mxu0 0
      %1363 = vmatpush1.bf16.msra.mxu0 %v955
      %1364 = vmatprep.subr.bf16.mxu0 0
      %1365 = vmatpush1.bf16.msra.mxu0 %v964
      %1366 = vmatprep.subr.bf16.mxu0 0
      %1367 = vmatpush1.bf16.msra.mxu0 %v973
      %1368 = vmatprep.subr.bf16.mxu0 0
      %1369 = vmatpush1.bf16.msra.mxu0 %v982
      %1370 = vmatprep.subr.bf16.mxu0 0
      %1371 = vmatpush1.bf16.msra.mxu0 %v991
      %1372 = vmatprep.mubr.bf16.mxu0 %v393
      %1373 = vmatmul.mubr.bf16.gmra.mrb[0].mxu0 %v392
      %v1374 = vpop.f32.mrb[0].mxu0
      %v1375 = vadd.f32 %v371, %v1374
      %v1376 = vpop.f32.mrb[0].mxu0
      %v1377 = vpop.f32.mrb[0].mxu0
      %v1378 = vadd.f32 %v376, %v1377
      %v1379 = vpop.f32.mrb[0].mxu0
      %1380 = vmatprep.mubr.bf16.mxu0 %v395
      %1381 = vmatmul.mubr.bf16.gmra.mrb[0].mxu0 %v394
      %v1382 = vpop.f32.mrb[0].mxu0
      %v1383 = vadd.f32 %v381, %v1382
      %v1384 = vpop.f32.mrb[0].mxu0
      %v1385 = vpop.f32.mrb[0].mxu0
      %v1386 = vpop.f32.mrb[0].mxu0
      %1387 = vdwg.mxu0
      %v1388 = vxor.u32 %v1171, 2147483648
      %v1389 = vxor.u32 %v1173, 2147483648
      %v1390 = vxor.u32 %v1222, 2147483648
      %v1391 = vxor.u32 %v1224, 2147483648
      %v1392 = vxor.u32 %v1273, 2147483648
      %v1393 = vxor.u32 %v1275, 2147483648
      %v1394 = vxor.u32 %v1324, 2147483648
      %v1395 = vxor.u32 %v1326, 2147483648
      %v1396 = vxor.u32 %v1375, 2147483648
      %v1397 = vxor.u32 %v1175, 2147483648
      %v1398 = vxor.u32 %v1177, 2147483648
      %v1399 = vxor.u32 %v1226, 2147483648
      %v1400 = vxor.u32 %v1228, 2147483648
      %v1401 = vxor.u32 %v1277, 2147483648
      %v1402 = vxor.u32 %v1279, 2147483648
      %v1403 = vxor.u32 %v1328, 2147483648
      %v1404 = vxor.u32 %v1330, 2147483648
      %v1405 = vxor.u32 %v1378, 2147483648
      %v1406 = vxor.u32 %v1181, 2147483648
      %v1407 = vxor.u32 %v1183, 2147483648
      %v1408 = vxor.u32 %v1232, 2147483648
      %v1409 = vxor.u32 %v1234, 2147483648
      %v1410 = vxor.u32 %v1283, 2147483648
      %v1411 = vxor.u32 %v1285, 2147483648
      %v1412 = vxor.u32 %v1334, 2147483648
      %v1413 = vxor.u32 %v1336, 2147483648
      %v1414 = vxor.u32 %v1383, 2147483648
      %v1415 = vmul.f32 %v1388, 1.442695
      %v1416 = vpow.pop %v1415
      %v1417 = vmul.f32 %v1389, 1.442695
      %v1418 = vpow.pop %v1417
      %v1419 = vmul.f32 %v1390, 1.442695
      %v1420 = vpow.pop %v1419
      %v1421 = vmul.f32 %v1391, 1.442695
      %v1422 = vpow.pop %v1421
      %v1423 = vmul.f32 %v1392, 1.442695
      %v1424 = vpow.pop %v1423
      %v1425 = vmul.f32 %v1393, 1.442695
      %v1426 = vpow.pop %v1425
      %v1427 = vmul.f32 %v1394, 1.442695
      %v1428 = vpow.pop %v1427
      %v1429 = vmul.f32 %v1395, 1.442695
      %v1430 = vpow.pop %v1429
      %v1431 = vmul.f32 %v1396, 1.442695
      %v1432 = vpow.pop %v1431
      %v1433 = vmul.f32 %v1397, 1.442695
      %v1434 = vpow.pop %v1433
      %v1435 = vmul.f32 %v1398, 1.442695
      %v1436 = vpow.pop %v1435
      %v1437 = vmul.f32 %v1399, 1.442695
      %v1438 = vpow.pop %v1437
      %v1439 = vmul.f32 %v1400, 1.442695
      %v1440 = vpow.pop %v1439
      %v1441 = vmul.f32 %v1401, 1.442695
      %v1442 = vpow.pop %v1441
      %v1443 = vmul.f32 %v1402, 1.442695
      %v1444 = vpow.pop %v1443
      %v1445 = vmul.f32 %v1403, 1.442695
      %v1446 = vpow.pop %v1445
      %v1447 = vmul.f32 %v1404, 1.442695
      %v1448 = vpow.pop %v1447
      %v1449 = vmul.f32 %v1405, 1.442695
      %v1450 = vpow.pop %v1449
      %v1451 = vmul.f32 %v1406, 1.442695
      %v1452 = vpow.pop %v1451
      %v1453 = vmul.f32 %v1407, 1.442695
      %v1454 = vpow.pop %v1453
      %v1455 = vmul.f32 %v1408, 1.442695
      %v1456 = vpow.pop %v1455
      %v1457 = vmul.f32 %v1409, 1.442695
      %v1458 = vpow.pop %v1457
      %v1459 = vmul.f32 %v1410, 1.442695
      %v1460 = vpow.pop %v1459
      %v1461 = vmul.f32 %v1411, 1.442695
      %v1462 = vpow.pop %v1461
      %v1463 = vmul.f32 %v1412, 1.442695
      %v1464 = vpow.pop %v1463
      %v1465 = vmul.f32 %v1413, 1.442695
      %v1466 = vpow.pop %v1465
      %v1467 = vmul.f32 %v1414, 1.442695
      %v1468 = vpow.pop %v1467
      %v1469 = vadd.f32 %v1416, 1.0
      %v1470 = vadd.f32 %v1418, 1.0
      %v1471 = vadd.f32 %v1420, 1.0
      %v1472 = vadd.f32 %v1422, 1.0
      %v1473 = vadd.f32 %v1424, 1.0
      %v1474 = vadd.f32 %v1426, 1.0
      %v1475 = vadd.f32 %v1428, 1.0
      %v1476 = vadd.f32 %v1430, 1.0
      %v1477 = vadd.f32 %v1432, 1.0
      %v1478 = vadd.f32 %v1434, 1.0
      %v1479 = vadd.f32 %v1436, 1.0
      %v1480 = vadd.f32 %v1438, 1.0
      %v1481 = vadd.f32 %v1440, 1.0
      %v1482 = vadd.f32 %v1442, 1.0
      %v1483 = vadd.f32 %v1444, 1.0
      %v1484 = vadd.f32 %v1446, 1.0
      %v1485 = vadd.f32 %v1448, 1.0
      %v1486 = vadd.f32 %v1450, 1.0
      %v1487 = vadd.f32 %v1452, 1.0
      %v1488 = vadd.f32 %v1454, 1.0
      %v1489 = vadd.f32 %v1456, 1.0
      %v1490 = vadd.f32 %v1458, 1.0
      %v1491 = vadd.f32 %v1460, 1.0
      %v1492 = vadd.f32 %v1462, 1.0
      %v1493 = vadd.f32 %v1464, 1.0
      %v1494 = vadd.f32 %v1466, 1.0
      %v1495 = vadd.f32 %v1468, 1.0
      %v1496 = vrcp.pop %v1469
      %v1497 = vmul.f32 1.0, %v1496
      %v1498 = vrcp.pop %v1470
      %v1499 = vmul.f32 1.0, %v1498
      %v1500 = vrcp.pop %v1471
      %v1501 = vmul.f32 1.0, %v1500
      %v1502 = vrcp.pop %v1472
      %v1503 = vmul.f32 1.0, %v1502
      %v1504 = vrcp.pop %v1473
      %v1505 = vmul.f32 1.0, %v1504
      %v1506 = vrcp.pop %v1474
      %v1507 = vmul.f32 1.0, %v1506
      %v1508 = vrcp.pop %v1475
      %v1509 = vmul.f32 1.0, %v1508
      %v1510 = vrcp.pop %v1476
      %v1511 = vmul.f32 1.0, %v1510
      %v1512 = vrcp.pop %v1477
      %v1513 = vmul.f32 1.0, %v1512
      %v1514 = vrcp.pop %v1478
      %v1515 = vmul.f32 1.0, %v1514
      %v1516 = vrcp.pop %v1479
      %v1517 = vmul.f32 1.0, %v1516
      %v1518 = vrcp.pop %v1480
      %v1519 = vmul.f32 1.0, %v1518
      %v1520 = vrcp.pop %v1481
      %v1521 = vmul.f32 1.0, %v1520
      %v1522 = vrcp.pop %v1482
      %v1523 = vmul.f32 1.0, %v1522
      %v1524 = vrcp.pop %v1483
      %v1525 = vmul.f32 1.0, %v1524
      %v1526 = vrcp.pop %v1484
      %v1527 = vmul.f32 1.0, %v1526
      %v1528 = vrcp.pop %v1485
      %v1529 = vmul.f32 1.0, %v1528
      %v1530 = vrcp.pop %v1486
      %v1531 = vmul.f32 1.0, %v1530
      %v1532 = vrcp.pop %v1487
      %v1533 = vmul.f32 1.0, %v1532
      %v1534 = vrcp.pop %v1488
      %v1535 = vmul.f32 1.0, %v1534
      %v1536 = vrcp.pop %v1489
      %v1537 = vmul.f32 1.0, %v1536
      %v1538 = vrcp.pop %v1490
      %v1539 = vmul.f32 1.0, %v1538
      %v1540 = vrcp.pop %v1491
      %v1541 = vmul.f32 1.0, %v1540
      %v1542 = vrcp.pop %v1492
      %v1543 = vmul.f32 1.0, %v1542
      %v1544 = vrcp.pop %v1493
      %v1545 = vmul.f32 1.0, %v1544
      %v1546 = vrcp.pop %v1494
      %v1547 = vmul.f32 1.0, %v1546
      %v1548 = vrcp.pop %v1495
      %v1549 = vmul.f32 1.0, %v1548
      %1550 = vst [vmem:[%s199] sm:$0xff] %v1497
      %1551 = vst [vmem:[%s199 + $0x8] sm:$0xff] %v1499
      %1552 = vst [vmem:[%s199 + $0x10] sm:$0xff] %v1501
      %1553 = vst [vmem:[%s199 + $0x18] sm:$0xff] %v1503
      %1554 = vst [vmem:[%s199 + $0x20] sm:$0xff] %v1505
      %1555 = vst [vmem:[%s199 + $0x28] sm:$0xff] %v1507
      %1556 = vst [vmem:[%s199 + $0x30] sm:$0xff] %v1509
      %1557 = vst [vmem:[%s199 + $0x38] sm:$0xff] %v1511
      %1558 = vst [vmem:[%s199 + $0x40] sm:$0xff] %v1513
      %1559 = vst [vmem:[%s199 + $0x48] sm:$0xff] %v1515
      %1560 = vst [vmem:[%s199 + $0x50] sm:$0xff] %v1517
      %1561 = vst [vmem:[%s199 + $0x58] sm:$0xff] %v1519
      %1562 = vst [vmem:[%s199 + $0x60] sm:$0xff] %v1521
      %1563 = vst [vmem:[%s199 + $0x68] sm:$0xff] %v1523
      %1564 = vst [vmem:[%s199 + $0x70] sm:$0xff] %v1525
      %1565 = vst [vmem:[%s199 + $0x78] sm:$0xff] %v1527
      %1566 = vst [vmem:[%s199 + $0x80] sm:$0xff] %v1529
      %1567 = vst [vmem:[%s199 + $0x88] sm:$0xff] %v1531
      %1568 = vst [vmem:[%s199 + $0x90] sm:$0xff] %v1533
      %1569 = vst [vmem:[%s199 + $0x98] sm:$0xff] %v1535
      %1570 = vst [vmem:[%s199 + $0xa0] sm:$0xff] %v1537
      %1571 = vst [vmem:[%s199 + $0xa8] sm:$0xff] %v1539
      %1572 = vst [vmem:[%s199 + $0xb0] sm:$0xff] %v1541
      %1573 = vst [vmem:[%s199 + $0xb8] sm:$0xff] %v1543
      %1574 = vst [vmem:[%s199 + $0xc0] sm:$0xff] %v1545
      %1575 = vst [vmem:[%s199 + $0xc8] sm:$0xff] %v1547
      %1576 = vst [vmem:[%s199 + $0xd0] sm:$0xff] %v1549
      %s1577 = smul.u32 3, %s14
      %p1578 = scmp.lt.s32.totalorder %s1577, 5
      %s1579 = scalar_select %p1578, %s1577, 5
      %s1580 = smul.addr %s1579, 9
      %s1581 = smul.addr %s1580, 8
      %s1582 = scalar_lea.vmem %s3, %s1581
      // Predicated region
      $region33: #{raw_image_vae_forward.7} parent=31 // pred_check
        %p1583 = pneg %p105
      $region34: #{raw_image_vae_forward.7} parent=31 // pred_check_branch
        %1585 = sbr.rel (%p1583) target = $region36
      $region35: #{raw_image_vae_forward.7} parent=31 // pred_region
        %s1586 = smul.u32 3, %s14
      $region36: #{raw_image_vae_forward.7} parent=31 // pred_fallthru
        _
    $region32: #{raw_image_vae_forward.7} parent=5 // pred_fallthru
      _
    %p1587 = scmp.le.s32.totalorder 2, %s9
    // Predicated region
    $region37: #{raw_image_vae_forward.7} parent=5 // pred_check
      %p1588 = pneg %p1587
    $region38: #{raw_image_vae_forward.7} parent=5 // pred_check_branch
      %1590 = sbr.rel (%p1588) target = $region40
    $region39: #{raw_image_vae_forward.7} parent=5 // pred_region
      %s1591 = ssub.s32 %s9, 2
      // Predicated region
      $region41: #{raw_image_vae_forward.7} parent=39 // pred_check
        %p1592 = pneg %p111
      $region42: #{raw_image_vae_forward.7} parent=39 // pred_check_branch
        %1594 = sbr.rel (%p1592) target = $region44
      $region43: #{raw_image_vae_forward.7} parent=39 // pred_region
        %s1595 = smul.u32 3, %s15
        %p1596 = scmp.lt.s32.totalorder %s1595, 5
        %s1597 = scalar_select %p1596, %s1595, 5
        %s1598 = smul.addr %s1597, 9
        %s1599 = smul.addr %s1598, 8
        %s1600 = scalar_lea.vmem %s3, %s1599
      $region44: #{raw_image_vae_forward.7} parent=39 // pred_fallthru
        _
    $region40: #{raw_image_vae_forward.7} parent=5 // pred_fallthru
      _
  $region6: #{raw_image_vae_forward.7} parent=0 // loop_footer
    %s13 = sadd.s32 1, %s9
  $region7: #{raw_image_vae_forward.7} parent=0 // loop_footer_branch
    %8 = sbr.rel target = $region3
  $region8: #{raw_image_vae_forward.7} parent=0 // loop_exit
    _

</llo_original>
